<compile_context>
chip_gen: v5e
topology: v5e:2x2
jax: 0.10.0
libtpu: 0.0.40
codegen_flags: <defaults>
</compile_context>

<pallas_src>
import functools

import jax
import jax.numpy as jnp
from jax.experimental import pallas as pl
from jax.experimental.pallas import tpu as pltpu


# ------------------------- conv matmul Pallas kernel ------------------------

def _mm_bias_relu_kernel(relu, x_ref, w_ref, b_ref, o_ref):
    acc = jnp.dot(x_ref[...], w_ref[...], preferred_element_type=jnp.float32)
    acc = acc + b_ref[...]                      # b is (1, N), broadcasts over rows
    if relu:
        acc = jnp.maximum(acc, 0.0)
    o_ref[...] = acc.astype(o_ref.dtype)


def matmul_bias_relu(x, w, b, relu, block_m=None):
    """o = relu?(x @ w + b). x:[M,K] (bf16 ok), w:[K,N], b:[N] -> [M,N] f32.

    Optional parallel grid over M (block_m rows per step) so megacore parts
    (v7x) can split the work; falls back to a single block when block_m does
    not divide M.
    """
    M, K = x.shape
    K2, N = w.shape
    assert K == K2
    if block_m is None or block_m >= M or (M % block_m) != 0:
        block_m = M
    grid = (M // block_m,)
    kern = functools.partial(_mm_bias_relu_kernel, relu)
    cost = pl.CostEstimate(
        flops=2 * M * K * N,
        transcendentals=0,
        bytes_accessed=(x.size * x.dtype.itemsize
                        + w.size * w.dtype.itemsize
                        + 4 * (N + M * N)),
    )
    return pl.pallas_call(
        kern,
        out_shape=jax.ShapeDtypeStruct((M, N), jnp.float32),
        grid=grid,
        in_specs=[
            pl.BlockSpec((block_m, K), lambda i: (i, 0)),
            pl.BlockSpec((K, N), lambda i: (0, 0)),
            pl.BlockSpec((1, N), lambda i: (0, 0)),
        ],
        out_specs=pl.BlockSpec((block_m, N), lambda i: (i, 0)),
        compiler_params=pltpu.CompilerParams(dimension_semantics=("parallel",)),
        cost_estimate=cost,
    )(x, w, b.reshape(1, N).astype(jnp.float32))


# --------- fused head kernel: conv6 + 4-layer MLP + min(softmax) -------------

def _head_kernel(prev_ref, next_ref, w6_ref, b6_ref,
                 w1a_ref, w1b_ref, b1_ref, w2_ref, b2_ref,
                 w3_ref, b3_ref, w4_ref, b4_ref,
                 scores_ref, probs_ref):
    f32 = jnp.float32
    P, Q = scores_ref.shape

    # conv6 folded as a dense linear (no ReLU after the last conv).
    fp = jnp.dot(prev_ref[...], w6_ref[...], preferred_element_type=f32) + b6_ref[...]
    fn = jnp.dot(next_ref[...], w6_ref[...], preferred_element_type=f32) + b6_ref[...]

    # Linear1 split: pairs @ W1 == prev_feat @ W1[:64] + next_feat @ W1[64:].
    U = jnp.dot(fp, w1a_ref[...], preferred_element_type=f32)   # (P, 256)
    V = jnp.dot(fn, w1b_ref[...], preferred_element_type=f32)   # (Q, 256)

    # One score column per "next" item; Q is a small static shape.
    for q in range(Q):
        h = jnp.maximum(U + V[q:q + 1, :] + b1_ref[...], 0.0)                      # (P, 256)
        h = jnp.maximum(jnp.dot(h, w2_ref[...], preferred_element_type=f32)
                        + b2_ref[...], 0.0)
        h = jnp.maximum(jnp.dot(h, w3_ref[...], preferred_element_type=f32)
                        + b3_ref[...], 0.0)
        s = jnp.dot(h, w4_ref[...], preferred_element_type=f32) + b4_ref[...]      # (P, 1)
        scores_ref[:, q:q + 1] = s

    # min(row_softmax, col_softmax) on the (P, Q) score tile, all in VMEM.
    sc = scores_ref[...]
    rm = jnp.max(sc, axis=1, keepdims=True)
    re = jnp.exp(sc - rm)
    row = re / jnp.sum(re, axis=1, keepdims=True)
    cm = jnp.max(sc, axis=0, keepdims=True)
    ce = jnp.exp(sc - cm)
    col = ce / jnp.sum(ce, axis=0, keepdims=True)
    probs_ref[...] = jnp.minimum(row, col)


def head_call(prev5, next5, w6eq, b6, w1, b1, w2, b2, w3, b3, w4, b4):
    P, Q = prev5.shape[0], next5.shape[0]
    f32 = jnp.float32
    args = (prev5.astype(f32), next5.astype(f32),
            w6eq.astype(f32), b6.reshape(1, -1).astype(f32),
            w1[:64].astype(f32), w1[64:].astype(f32), b1.reshape(1, -1).astype(f32),
            w2.astype(f32), b2.reshape(1, -1).astype(f32),
            w3.astype(f32), b3.reshape(1, -1).astype(f32),
            w4.astype(f32), b4.reshape(1, -1).astype(f32))
    vmem = pl.BlockSpec(memory_space=pltpu.MemorySpace.VMEM)
    return pl.pallas_call(
        _head_kernel,
        out_shape=(jax.ShapeDtypeStruct((P, Q), f32),
                   jax.ShapeDtypeStruct((P, Q), f32)),
        in_specs=[vmem] * len(args),
        out_specs=(vmem, vmem),
    )(*args)


# ------------------------------- JAX glue ----------------------------------

def im2col_nhwc(x, kh, kw, stride, pad):
    """x:[N,H,W,C] -> patches [N*OH*OW, kh*kw*C]; feature order (ky, kx, c)."""
    x = jnp.pad(x, ((0, 0), (pad, pad), (pad, pad), (0, 0)))
    N, H, W, C = x.shape
    OH = (H - kh) // stride + 1
    OW = (W - kw) // stride + 1
    cols = [x[:, i:i + stride * OH:stride, j:j + stride * OW:stride, :]
            for i in range(kh) for j in range(kw)]
    patches = jnp.concatenate(cols, axis=-1)          # [N, OH, OW, kh*kw*C]
    return patches.reshape(N * OH * OW, kh * kw * C), N, OH, OW


def init_params(key):
    conv_io = [(32, 3), (64, 32), (64, 64), (64, 64), (64, 64), (64, 64)]
    lin_io = [(128, 256), (256, 256), (256, 256), (256, 1)]
    params = {"conv": [], "lin": []}
    for oc, ic in conv_io:
        key, k1, k2 = jax.random.split(key, 3)
        bound = 1.0 / ((ic * 16) ** 0.5)
        w = jax.random.uniform(k1, (oc, ic, 4, 4), jnp.float32, -bound, bound)
        b = jax.random.uniform(k2, (oc,), jnp.float32, -bound, bound)
        params["conv"].append((w, b))
    for fi, fo in lin_io:
        key, k1, k2 = jax.random.split(key, 3)
        bound = 1.0 / (fi ** 0.5)
        w = jax.random.uniform(k1, (fi, fo), jnp.float32, -bound, bound)
        b = jax.random.uniform(k2, (fo,), jnp.float32, -bound, bound)
        params["lin"].append((w, b))
    return params


def reid_forward(params, prev_images, next_images):
    P, Q = prev_images.shape[0], next_images.shape[0]
    assert prev_images.shape[2:] == (64, 64) and next_images.shape[2:] == (64, 64), (
        "Reid conv stack expects 64x64 inputs (6 stride-2 convs -> 1x1 feature map).")

    # Batch prev+next through one conv pass; NCHW -> NHWC once.
    x = jnp.concatenate([prev_images, next_images], axis=0).astype(jnp.float32) / 255.0
    x = x.transpose(0, 2, 3, 1)                                # (P+Q, 64, 64, 3)

    # conv1..conv5: im2col (NHWC, transpose-free) + fused matmul+bias+ReLU.
    # Grid over per-image row blocks for the two big layers (megacore on v7x).
    block_rows = [1024, 256, None, None, None]
    for idx in range(5):
        w, b = params["conv"][idx]
        out_ch = w.shape[0]
        patches, n, oh, ow = im2col_nhwc(x, 4, 4, stride=2, pad=1)
        w2 = w.transpose(2, 3, 1, 0).reshape(-1, out_ch)       # (kh*kw*in, out)
        y = matmul_bias_relu(patches.astype(jnp.bfloat16),
                             w2.astype(jnp.bfloat16),
                             b, relu=True, block_m=block_rows[idx])
        x = y.reshape(n, oh, ow, out_ch)                       # stays NHWC

    # conv6 (2x2 -> 1x1, pad 1): only the centre 2x2 taps see real data, so it
    # is exactly a dense (2*2*64 -> 64) linear; fold it into the head kernel.
    w6, b6 = params["conv"][5]
    w6eq = w6[:, :, 1:3, 1:3].transpose(2, 3, 1, 0).reshape(2 * 2 * 64, 64)
    feats5 = x.reshape(P + Q, 2 * 2 * 64)                      # (oy, ox, c) order
    prev5, next5 = feats5[:P], feats5[P:]

    (w1, b1), (w2_, b2), (w3, b3), (w4, b4) = params["lin"]
    scores, probs = head_call(prev5, next5, w6eq, b6,
                              w1, b1, w2_, b2, w3, b3, w4, b4)
    # TODO(synk): optional `targets` loss branch not implemented (forward default targets=None).
    return {"scores": scores, "probs": probs}


if __name__ == "__main__":
    key = jax.random.PRNGKey(0)
    pkey, k1, k2 = jax.random.split(key, 3)
    params = init_params(pkey)

    # 64x64 inputs so that 6 stride-2 convs reduce spatial dims to 1x1.
    prev_images = jax.random.randint(k1, (2, 3, 64, 64), 0, 256, jnp.int32).astype(jnp.uint8)
    next_images = jax.random.randint(k2, (3, 3, 64, 64), 0, 256, jnp.int32).astype(jnp.uint8)

    out = jax.jit(reid_forward)(params, prev_images, next_images)
    out = jax.block_until_ready(out)

    assert out["scores"].shape == (2, 3)
    assert out["probs"].shape == (2, 3)
    assert bool(jnp.all(jnp.isfinite(out["probs"])))
    print("KERNEL_OK")
</pallas_src>

<mosaic_0001>
module attributes {stable_mosaic.version = 11 : i64} {
  func.func @_mm_bias_relu_kernel(%arg0: i32, %arg1: memref<1024x48xbf16, #tpu.memory_space<vmem>>, %arg2: memref<48x32xbf16, #tpu.memory_space<vmem>>, %arg3: memref<1x32xf32, #tpu.memory_space<vmem>>, %arg4: memref<1024x32xf32, #tpu.memory_space<vmem>>) attributes {dimension_semantics = [#tpu.dimension_semantics<parallel>], iteration_bounds = array<i64: 5>, scalar_prefetch = 0 : i64, scratch_operands = 0 : i64, tpu.core_type = #tpu.core_type<tc>, window_params = [{transform_indices = @transform_0, window_bounds = array<i64: 1024, 48>}, {pipeline_mode = #tpu.pipeline_mode<synchronous>, transform_indices = @transform_1, window_bounds = array<i64: 48, 32>}, {pipeline_mode = #tpu.pipeline_mode<synchronous>, transform_indices = @transform_2, window_bounds = array<i64: 1, 32>}, {transform_indices = @transform_3, window_bounds = array<i64: 1024, 32>}]} {
    %c0 = arith.constant 0 : index
    %c0_0 = arith.constant 0 : index
    %0 = vector.load %arg1[%c0, %c0_0] : memref<1024x48xbf16, #tpu.memory_space<vmem>>, vector<1024x48xbf16>
    %c0_1 = arith.constant 0 : index
    %c0_2 = arith.constant 0 : index
    %1 = vector.load %arg2[%c0_1, %c0_2] : memref<48x32xbf16, #tpu.memory_space<vmem>>, vector<48x32xbf16>
    %cst = arith.constant dense<0.000000e+00> : vector<1024x32xf32>
    %2 = tpu.matmul %0, %1, %cst {dimension_numbers = #tpu.dot_dimension_numbers<[1], [0], [0], [1], [0, 0, 1, 1], [], []>} : vector<1024x48xbf16>, vector<48x32xbf16>, vector<1024x32xf32> -> vector<1024x32xf32>
    %c0_3 = arith.constant 0 : index
    %c0_4 = arith.constant 0 : index
    %3 = vector.load %arg3[%c0_3, %c0_4] : memref<1x32xf32, #tpu.memory_space<vmem>>, vector<1x32xf32>
    %4 = vector.broadcast %3 : vector<1x32xf32> to vector<1024x32xf32>
    %5 = arith.addf %2, %4 : vector<1024x32xf32>
    %cst_5 = arith.constant 0.000000e+00 : f32
    %6 = vector.broadcast %cst_5 : f32 to vector<1024x32xf32>
    %7 = arith.maximumf %5, %6 : vector<1024x32xf32>
    %c0_6 = arith.constant 0 : index
    %c0_7 = arith.constant 0 : index
    %8 = vector.load %arg4[%c0_6, %c0_7] : memref<1024x32xf32, #tpu.memory_space<vmem>>, vector<1024x32xf32>
    tpu.vector_store %arg4[%c0_6, %c0_7], %7 {strides = array<i32>} : memref<1024x32xf32, #tpu.memory_space<vmem>>, vector<1024x32xf32>,
    return
  }
  func.func @transform_0(%arg0: i32) -> (i32, i32) {
    %c0_i32 = arith.constant 0 : i32
    %c0_i32_0 = arith.constant 0 : i32
    return %arg0, %c0_i32 : i32, i32
  }
  func.func @transform_1(%arg0: i32) -> (i32, i32) {
    %c0_i32 = arith.constant 0 : i32
    %c0_i32_0 = arith.constant 0 : i32
    %c0_i32_1 = arith.constant 0 : i32
    return %c0_i32, %c0_i32_0 : i32, i32
  }
  func.func @transform_2(%arg0: i32) -> (i32, i32) {
    %c0_i32 = arith.constant 0 : i32
    %c0_i32_0 = arith.constant 0 : i32
    %c0_i32_1 = arith.constant 0 : i32
    return %c0_i32, %c0_i32_0 : i32, i32
  }
  func.func @transform_3(%arg0: i32) -> (i32, i32) {
    %c0_i32 = arith.constant 0 : i32
    %c0_i32_0 = arith.constant 0 : i32
    return %arg0, %c0_i32 : i32, i32
  }
}

module attributes {stable_mosaic.version = 11 : i64} {
  func.func @_mm_bias_relu_kernel(%arg0: i32, %arg1: memref<256x512xbf16, #tpu.memory_space<vmem>>, %arg2: memref<512x64xbf16, #tpu.memory_space<vmem>>, %arg3: memref<1x64xf32, #tpu.memory_space<vmem>>, %arg4: memref<256x64xf32, #tpu.memory_space<vmem>>) attributes {dimension_semantics = [#tpu.dimension_semantics<parallel>], iteration_bounds = array<i64: 5>, scalar_prefetch = 0 : i64, scratch_operands = 0 : i64, tpu.core_type = #tpu.core_type<tc>, window_params = [{transform_indices = @transform_0, window_bounds = array<i64: 256, 512>}, {pipeline_mode = #tpu.pipeline_mode<synchronous>, transform_indices = @transform_1, window_bounds = array<i64: 512, 64>}, {pipeline_mode = #tpu.pipeline_mode<synchronous>, transform_indices = @transform_2, window_bounds = array<i64: 1, 64>}, {transform_indices = @transform_3, window_bounds = array<i64: 256, 64>}]} {
    %c0 = arith.constant 0 : index
    %c0_0 = arith.constant 0 : index
    %0 = vector.load %arg1[%c0, %c0_0] : memref<256x512xbf16, #tpu.memory_space<vmem>>, vector<256x512xbf16>
    %c0_1 = arith.constant 0 : index
    %c0_2 = arith.constant 0 : index
    %1 = vector.load %arg2[%c0_1, %c0_2] : memref<512x64xbf16, #tpu.memory_space<vmem>>, vector<512x64xbf16>
    %cst = arith.constant dense<0.000000e+00> : vector<256x64xf32>
    %2 = tpu.matmul %0, %1, %cst {dimension_numbers = #tpu.dot_dimension_numbers<[1], [0], [0], [1], [0, 0, 1, 1], [], []>} : vector<256x512xbf16>, vector<512x64xbf16>, vector<256x64xf32> -> vector<256x64xf32>
    %c0_3 = arith.constant 0 : index
    %c0_4 = arith.constant 0 : index
    %3 = vector.load %arg3[%c0_3, %c0_4] : memref<1x64xf32, #tpu.memory_space<vmem>>, vector<1x64xf32>
    %4 = vector.broadcast %3 : vector<1x64xf32> to vector<256x64xf32>
    %5 = arith.addf %2, %4 : vector<256x64xf32>
    %cst_5 = arith.constant 0.000000e+00 : f32
    %6 = vector.broadcast %cst_5 : f32 to vector<256x64xf32>
    %7 = arith.maximumf %5, %6 : vector<256x64xf32>
    %c0_6 = arith.constant 0 : index
    %c0_7 = arith.constant 0 : index
    %8 = vector.load %arg4[%c0_6, %c0_7] : memref<256x64xf32, #tpu.memory_space<vmem>>, vector<256x64xf32>
    tpu.vector_store %arg4[%c0_6, %c0_7], %7 {strides = array<i32>} : memref<256x64xf32, #tpu.memory_space<vmem>>, vector<256x64xf32>,
    return
  }
  func.func @transform_0(%arg0: i32) -> (i32, i32) {
    %c0_i32 = arith.constant 0 : i32
    %c0_i32_0 = arith.constant 0 : i32
    return %arg0, %c0_i32 : i32, i32
  }
  func.func @transform_1(%arg0: i32) -> (i32, i32) {
    %c0_i32 = arith.constant 0 : i32
    %c0_i32_0 = arith.constant 0 : i32
    %c0_i32_1 = arith.constant 0 : i32
    return %c0_i32, %c0_i32_0 : i32, i32
  }
  func.func @transform_2(%arg0: i32) -> (i32, i32) {
    %c0_i32 = arith.constant 0 : i32
    %c0_i32_0 = arith.constant 0 : i32
    %c0_i32_1 = arith.constant 0 : i32
    return %c0_i32, %c0_i32_0 : i32, i32
  }
  func.func @transform_3(%arg0: i32) -> (i32, i32) {
    %c0_i32 = arith.constant 0 : i32
    %c0_i32_0 = arith.constant 0 : i32
    return %arg0, %c0_i32 : i32, i32
  }
}

module attributes {stable_mosaic.version = 11 : i64} {
  func.func @_mm_bias_relu_kernel(%arg0: i32, %arg1: memref<320x1024xbf16, #tpu.memory_space<vmem>>, %arg2: memref<1024x64xbf16, #tpu.memory_space<vmem>>, %arg3: memref<1x64xf32, #tpu.memory_space<vmem>>, %arg4: memref<320x64xf32, #tpu.memory_space<vmem>>) attributes {dimension_semantics = [#tpu.dimension_semantics<parallel>], iteration_bounds = array<i64: 1>, scalar_prefetch = 0 : i64, scratch_operands = 0 : i64, tpu.core_type = #tpu.core_type<tc>, window_params = [{transform_indices = @transform_0, window_bounds = array<i64: 320, 1024>}, {pipeline_mode = #tpu.pipeline_mode<synchronous>, transform_indices = @transform_1, window_bounds = array<i64: 1024, 64>}, {pipeline_mode = #tpu.pipeline_mode<synchronous>, transform_indices = @transform_2, window_bounds = array<i64: 1, 64>}, {transform_indices = @transform_3, window_bounds = array<i64: 320, 64>}]} {
    %c0 = arith.constant 0 : index
    %c0_0 = arith.constant 0 : index
    %0 = vector.load %arg1[%c0, %c0_0] : memref<320x1024xbf16, #tpu.memory_space<vmem>>, vector<320x1024xbf16>
    %c0_1 = arith.constant 0 : index
    %c0_2 = arith.constant 0 : index
    %1 = vector.load %arg2[%c0_1, %c0_2] : memref<1024x64xbf16, #tpu.memory_space<vmem>>, vector<1024x64xbf16>
    %cst = arith.constant dense<0.000000e+00> : vector<320x64xf32>
    %2 = tpu.matmul %0, %1, %cst {dimension_numbers = #tpu.dot_dimension_numbers<[1], [0], [0], [1], [0, 0, 1, 1], [], []>} : vector<320x1024xbf16>, vector<1024x64xbf16>, vector<320x64xf32> -> vector<320x64xf32>
    %c0_3 = arith.constant 0 : index
    %c0_4 = arith.constant 0 : index
    %3 = vector.load %arg3[%c0_3, %c0_4] : memref<1x64xf32, #tpu.memory_space<vmem>>, vector<1x64xf32>
    %4 = vector.broadcast %3 : vector<1x64xf32> to vector<320x64xf32>
    %5 = arith.addf %2, %4 : vector<320x64xf32>
    %cst_5 = arith.constant 0.000000e+00 : f32
    %6 = vector.broadcast %cst_5 : f32 to vector<320x64xf32>
    %7 = arith.maximumf %5, %6 : vector<320x64xf32>
    %c0_6 = arith.constant 0 : index
    %c0_7 = arith.constant 0 : index
    %8 = vector.load %arg4[%c0_6, %c0_7] : memref<320x64xf32, #tpu.memory_space<vmem>>, vector<320x64xf32>
    tpu.vector_store %arg4[%c0_6, %c0_7], %7 {strides = array<i32>} : memref<320x64xf32, #tpu.memory_space<vmem>>, vector<320x64xf32>,
    return
  }
  func.func @transform_0(%arg0: i32) -> (i32, i32) {
    %c0_i32 = arith.constant 0 : i32
    %c0_i32_0 = arith.constant 0 : i32
    return %arg0, %c0_i32 : i32, i32
  }
  func.func @transform_1(%arg0: i32) -> (i32, i32) {
    %c0_i32 = arith.constant 0 : i32
    %c0_i32_0 = arith.constant 0 : i32
    %c0_i32_1 = arith.constant 0 : i32
    return %c0_i32, %c0_i32_0 : i32, i32
  }
  func.func @transform_2(%arg0: i32) -> (i32, i32) {
    %c0_i32 = arith.constant 0 : i32
    %c0_i32_0 = arith.constant 0 : i32
    %c0_i32_1 = arith.constant 0 : i32
    return %c0_i32, %c0_i32_0 : i32, i32
  }
  func.func @transform_3(%arg0: i32) -> (i32, i32) {
    %c0_i32 = arith.constant 0 : i32
    %c0_i32_0 = arith.constant 0 : i32
    return %arg0, %c0_i32 : i32, i32
  }
}

module attributes {stable_mosaic.version = 11 : i64} {
  func.func @_mm_bias_relu_kernel(%arg0: i32, %arg1: memref<80x1024xbf16, #tpu.memory_space<vmem>>, %arg2: memref<1024x64xbf16, #tpu.memory_space<vmem>>, %arg3: memref<1x64xf32, #tpu.memory_space<vmem>>, %arg4: memref<80x64xf32, #tpu.memory_space<vmem>>) attributes {dimension_semantics = [#tpu.dimension_semantics<parallel>], iteration_bounds = array<i64: 1>, scalar_prefetch = 0 : i64, scratch_operands = 0 : i64, tpu.core_type = #tpu.core_type<tc>, window_params = [{transform_indices = @transform_0, window_bounds = array<i64: 80, 1024>}, {pipeline_mode = #tpu.pipeline_mode<synchronous>, transform_indices = @transform_1, window_bounds = array<i64: 1024, 64>}, {pipeline_mode = #tpu.pipeline_mode<synchronous>, transform_indices = @transform_2, window_bounds = array<i64: 1, 64>}, {transform_indices = @transform_3, window_bounds = array<i64: 80, 64>}]} {
    %c0 = arith.constant 0 : index
    %c0_0 = arith.constant 0 : index
    %0 = vector.load %arg1[%c0, %c0_0] : memref<80x1024xbf16, #tpu.memory_space<vmem>>, vector<80x1024xbf16>
    %c0_1 = arith.constant 0 : index
    %c0_2 = arith.constant 0 : index
    %1 = vector.load %arg2[%c0_1, %c0_2] : memref<1024x64xbf16, #tpu.memory_space<vmem>>, vector<1024x64xbf16>
    %cst = arith.constant dense<0.000000e+00> : vector<80x64xf32>
    %2 = tpu.matmul %0, %1, %cst {dimension_numbers = #tpu.dot_dimension_numbers<[1], [0], [0], [1], [0, 0, 1, 1], [], []>} : vector<80x1024xbf16>, vector<1024x64xbf16>, vector<80x64xf32> -> vector<80x64xf32>
    %c0_3 = arith.constant 0 : index
    %c0_4 = arith.constant 0 : index
    %3 = vector.load %arg3[%c0_3, %c0_4] : memref<1x64xf32, #tpu.memory_space<vmem>>, vector<1x64xf32>
    %4 = vector.broadcast %3 : vector<1x64xf32> to vector<80x64xf32>
    %5 = arith.addf %2, %4 : vector<80x64xf32>
    %cst_5 = arith.constant 0.000000e+00 : f32
    %6 = vector.broadcast %cst_5 : f32 to vector<80x64xf32>
    %7 = arith.maximumf %5, %6 : vector<80x64xf32>
    %c0_6 = arith.constant 0 : index
    %c0_7 = arith.constant 0 : index
    %8 = vector.load %arg4[%c0_6, %c0_7] : memref<80x64xf32, #tpu.memory_space<vmem>>, vector<80x64xf32>
    tpu.vector_store %arg4[%c0_6, %c0_7], %7 {strides = array<i32>} : memref<80x64xf32, #tpu.memory_space<vmem>>, vector<80x64xf32>,
    return
  }
  func.func @transform_0(%arg0: i32) -> (i32, i32) {
    %c0_i32 = arith.constant 0 : i32
    %c0_i32_0 = arith.constant 0 : i32
    return %arg0, %c0_i32 : i32, i32
  }
  func.func @transform_1(%arg0: i32) -> (i32, i32) {
    %c0_i32 = arith.constant 0 : i32
    %c0_i32_0 = arith.constant 0 : i32
    %c0_i32_1 = arith.constant 0 : i32
    return %c0_i32, %c0_i32_0 : i32, i32
  }
  func.func @transform_2(%arg0: i32) -> (i32, i32) {
    %c0_i32 = arith.constant 0 : i32
    %c0_i32_0 = arith.constant 0 : i32
    %c0_i32_1 = arith.constant 0 : i32
    return %c0_i32, %c0_i32_0 : i32, i32
  }
  func.func @transform_3(%arg0: i32) -> (i32, i32) {
    %c0_i32 = arith.constant 0 : i32
    %c0_i32_0 = arith.constant 0 : i32
    return %arg0, %c0_i32 : i32, i32
  }
}

module attributes {stable_mosaic.version = 11 : i64} {
  func.func @_mm_bias_relu_kernel(%arg0: i32, %arg1: memref<20x1024xbf16, #tpu.memory_space<vmem>>, %arg2: memref<1024x64xbf16, #tpu.memory_space<vmem>>, %arg3: memref<1x64xf32, #tpu.memory_space<vmem>>, %arg4: memref<20x64xf32, #tpu.memory_space<vmem>>) attributes {dimension_semantics = [#tpu.dimension_semantics<parallel>], iteration_bounds = array<i64: 1>, scalar_prefetch = 0 : i64, scratch_operands = 0 : i64, tpu.core_type = #tpu.core_type<tc>, window_params = [{transform_indices = @transform_0, window_bounds = array<i64: 20, 1024>}, {pipeline_mode = #tpu.pipeline_mode<synchronous>, transform_indices = @transform_1, window_bounds = array<i64: 1024, 64>}, {pipeline_mode = #tpu.pipeline_mode<synchronous>, transform_indices = @transform_2, window_bounds = array<i64: 1, 64>}, {transform_indices = @transform_3, window_bounds = array<i64: 20, 64>}]} {
    %c0 = arith.constant 0 : index
    %c0_0 = arith.constant 0 : index
    %0 = vector.load %arg1[%c0, %c0_0] : memref<20x1024xbf16, #tpu.memory_space<vmem>>, vector<20x1024xbf16>
    %c0_1 = arith.constant 0 : index
    %c0_2 = arith.constant 0 : index
    %1 = vector.load %arg2[%c0_1, %c0_2] : memref<1024x64xbf16, #tpu.memory_space<vmem>>, vector<1024x64xbf16>
    %cst = arith.constant dense<0.000000e+00> : vector<20x64xf32>
    %2 = tpu.matmul %0, %1, %cst {dimension_numbers = #tpu.dot_dimension_numbers<[1], [0], [0], [1], [0, 0, 1, 1], [], []>} : vector<20x1024xbf16>, vector<1024x64xbf16>, vector<20x64xf32> -> vector<20x64xf32>
    %c0_3 = arith.constant 0 : index
    %c0_4 = arith.constant 0 : index
    %3 = vector.load %arg3[%c0_3, %c0_4] : memref<1x64xf32, #tpu.memory_space<vmem>>, vector<1x64xf32>
    %4 = vector.broadcast %3 : vector<1x64xf32> to vector<20x64xf32>
    %5 = arith.addf %2, %4 : vector<20x64xf32>
    %cst_5 = arith.constant 0.000000e+00 : f32
    %6 = vector.broadcast %cst_5 : f32 to vector<20x64xf32>
    %7 = arith.maximumf %5, %6 : vector<20x64xf32>
    %c0_6 = arith.constant 0 : index
    %c0_7 = arith.constant 0 : index
    %8 = vector.load %arg4[%c0_6, %c0_7] : memref<20x64xf32, #tpu.memory_space<vmem>>, vector<20x64xf32>
    tpu.vector_store %arg4[%c0_6, %c0_7], %7 {strides = array<i32>} : memref<20x64xf32, #tpu.memory_space<vmem>>, vector<20x64xf32>,
    return
  }
  func.func @transform_0(%arg0: i32) -> (i32, i32) {
    %c0_i32 = arith.constant 0 : i32
    %c0_i32_0 = arith.constant 0 : i32
    return %arg0, %c0_i32 : i32, i32
  }
  func.func @transform_1(%arg0: i32) -> (i32, i32) {
    %c0_i32 = arith.constant 0 : i32
    %c0_i32_0 = arith.constant 0 : i32
    %c0_i32_1 = arith.constant 0 : i32
    return %c0_i32, %c0_i32_0 : i32, i32
  }
  func.func @transform_2(%arg0: i32) -> (i32, i32) {
    %c0_i32 = arith.constant 0 : i32
    %c0_i32_0 = arith.constant 0 : i32
    %c0_i32_1 = arith.constant 0 : i32
    return %c0_i32, %c0_i32_0 : i32, i32
  }
  func.func @transform_3(%arg0: i32) -> (i32, i32) {
    %c0_i32 = arith.constant 0 : i32
    %c0_i32_0 = arith.constant 0 : i32
    return %arg0, %c0_i32 : i32, i32
  }
}

module attributes {stable_mosaic.version = 11 : i64} {
  func.func @_head_kernel(%arg0: memref<2x256xf32, #tpu.memory_space<vmem>>, %arg1: memref<3x256xf32, #tpu.memory_space<vmem>>, %arg2: memref<256x64xf32, #tpu.memory_space<vmem>>, %arg3: memref<1x64xf32, #tpu.memory_space<vmem>>, %arg4: memref<64x256xf32, #tpu.memory_space<vmem>>, %arg5: memref<64x256xf32, #tpu.memory_space<vmem>>, %arg6: memref<1x256xf32, #tpu.memory_space<vmem>>, %arg7: memref<256x256xf32, #tpu.memory_space<vmem>>, %arg8: memref<1x256xf32, #tpu.memory_space<vmem>>, %arg9: memref<256x256xf32, #tpu.memory_space<vmem>>, %arg10: memref<1x256xf32, #tpu.memory_space<vmem>>, %arg11: memref<256x1xf32, #tpu.memory_space<vmem>>, %arg12: memref<1x1xf32, #tpu.memory_space<vmem>>, %arg13: memref<2x3xf32, #tpu.memory_space<vmem>>, %arg14: memref<2x3xf32, #tpu.memory_space<vmem>>) attributes {dimension_semantics = [], scalar_prefetch = 0 : i64, scratch_operands = 0 : i64, tpu.core_type = #tpu.core_type<tc>} {
    %c0 = arith.constant 0 : index
    %c0_0 = arith.constant 0 : index
    %0 = vector.load %arg0[%c0, %c0_0] : memref<2x256xf32, #tpu.memory_space<vmem>>, vector<2x256xf32>
    %c0_1 = arith.constant 0 : index
    %c0_2 = arith.constant 0 : index
    %1 = vector.load %arg2[%c0_1, %c0_2] : memref<256x64xf32, #tpu.memory_space<vmem>>, vector<256x64xf32>
    %cst = arith.constant dense<0.000000e+00> : vector<2x64xf32>
    %2 = tpu.matmul %0, %1, %cst {dimension_numbers = #tpu.dot_dimension_numbers<[1], [0], [0], [1], [0, 0, 1, 1], [], []>} : vector<2x256xf32>, vector<256x64xf32>, vector<2x64xf32> -> vector<2x64xf32>
    %c0_3 = arith.constant 0 : index
    %c0_4 = arith.constant 0 : index
    %3 = vector.load %arg3[%c0_3, %c0_4] : memref<1x64xf32, #tpu.memory_space<vmem>>, vector<1x64xf32>
    %4 = vector.broadcast %3 : vector<1x64xf32> to vector<2x64xf32>
    %5 = arith.addf %2, %4 : vector<2x64xf32>
    %c0_5 = arith.constant 0 : index
    %c0_6 = arith.constant 0 : index
    %6 = vector.load %arg1[%c0_5, %c0_6] : memref<3x256xf32, #tpu.memory_space<vmem>>, vector<3x256xf32>
    %c0_7 = arith.constant 0 : index
    %c0_8 = arith.constant 0 : index
    %7 = vector.load %arg2[%c0_7, %c0_8] : memref<256x64xf32, #tpu.memory_space<vmem>>, vector<256x64xf32>
    %cst_9 = arith.constant dense<0.000000e+00> : vector<3x64xf32>
    %8 = tpu.matmul %6, %7, %cst_9 {dimension_numbers = #tpu.dot_dimension_numbers<[1], [0], [0], [1], [0, 0, 1, 1], [], []>} : vector<3x256xf32>, vector<256x64xf32>, vector<3x64xf32> -> vector<3x64xf32>
    %c0_10 = arith.constant 0 : index
    %c0_11 = arith.constant 0 : index
    %9 = vector.load %arg3[%c0_10, %c0_11] : memref<1x64xf32, #tpu.memory_space<vmem>>, vector<1x64xf32>
    %10 = vector.broadcast %9 : vector<1x64xf32> to vector<3x64xf32>
    %11 = arith.addf %8, %10 : vector<3x64xf32>
    %c0_12 = arith.constant 0 : index
    %c0_13 = arith.constant 0 : index
    %12 = vector.load %arg4[%c0_12, %c0_13] : memref<64x256xf32, #tpu.memory_space<vmem>>, vector<64x256xf32>
    %cst_14 = arith.constant dense<0.000000e+00> : vector<2x256xf32>
    %13 = tpu.matmul %5, %12, %cst_14 {dimension_numbers = #tpu.dot_dimension_numbers<[1], [0], [0], [1], [0, 0, 1, 1], [], []>} : vector<2x64xf32>, vector<64x256xf32>, vector<2x256xf32> -> vector<2x256xf32>
    %c0_15 = arith.constant 0 : index
    %c0_16 = arith.constant 0 : index
    %14 = vector.load %arg5[%c0_15, %c0_16] : memref<64x256xf32, #tpu.memory_space<vmem>>, vector<64x256xf32>
    %cst_17 = arith.constant dense<0.000000e+00> : vector<3x256xf32>
    %15 = tpu.matmul %11, %14, %cst_17 {dimension_numbers = #tpu.dot_dimension_numbers<[1], [0], [0], [1], [0, 0, 1, 1], [], []>} : vector<3x64xf32>, vector<64x256xf32>, vector<3x256xf32> -> vector<3x256xf32>
    %16 = vector.extract_strided_slice %15 {offsets = [0, 0], sizes = [1, 256], strides = [1, 1]} : vector<3x256xf32> to vector<1x256xf32>
    %17 = vector.broadcast %16 : vector<1x256xf32> to vector<2x256xf32>
    %18 = arith.addf %13, %17 : vector<2x256xf32>
    %c0_18 = arith.constant 0 : index
    %c0_19 = arith.constant 0 : index
    %19 = vector.load %arg6[%c0_18, %c0_19] : memref<1x256xf32, #tpu.memory_space<vmem>>, vector<1x256xf32>
    %20 = vector.broadcast %19 : vector<1x256xf32> to vector<2x256xf32>
    %21 = arith.addf %18, %20 : vector<2x256xf32>
    %cst_20 = arith.constant 0.000000e+00 : f32
    %22 = vector.broadcast %cst_20 : f32 to vector<2x256xf32>
    %23 = arith.maximumf %21, %22 : vector<2x256xf32>
    %c0_21 = arith.constant 0 : index
    %c0_22 = arith.constant 0 : index
    %24 = vector.load %arg7[%c0_21, %c0_22] : memref<256x256xf32, #tpu.memory_space<vmem>>, vector<256x256xf32>
    %cst_23 = arith.constant dense<0.000000e+00> : vector<2x256xf32>
    %25 = tpu.matmul %23, %24, %cst_23 {dimension_numbers = #tpu.dot_dimension_numbers<[1], [0], [0], [1], [0, 0, 1, 1], [], []>} : vector<2x256xf32>, vector<256x256xf32>, vector<2x256xf32> -> vector<2x256xf32>
    %c0_24 = arith.constant 0 : index
    %c0_25 = arith.constant 0 : index
    %26 = vector.load %arg8[%c0_24, %c0_25] : memref<1x256xf32, #tpu.memory_space<vmem>>, vector<1x256xf32>
    %27 = vector.broadcast %26 : vector<1x256xf32> to vector<2x256xf32>
    %28 = arith.addf %25, %27 : vector<2x256xf32>
    %cst_26 = arith.constant 0.000000e+00 : f32
    %29 = vector.broadcast %cst_26 : f32 to vector<2x256xf32>
    %30 = arith.maximumf %28, %29 : vector<2x256xf32>
    %c0_27 = arith.constant 0 : index
    %c0_28 = arith.constant 0 : index
    %31 = vector.load %arg9[%c0_27, %c0_28] : memref<256x256xf32, #tpu.memory_space<vmem>>, vector<256x256xf32>
    %cst_29 = arith.constant dense<0.000000e+00> : vector<2x256xf32>
    %32 = tpu.matmul %30, %31, %cst_29 {dimension_numbers = #tpu.dot_dimension_numbers<[1], [0], [0], [1], [0, 0, 1, 1], [], []>} : vector<2x256xf32>, vector<256x256xf32>, vector<2x256xf32> -> vector<2x256xf32>
    %c0_30 = arith.constant 0 : index
    %c0_31 = arith.constant 0 : index
    %33 = vector.load %arg10[%c0_30, %c0_31] : memref<1x256xf32, #tpu.memory_space<vmem>>, vector<1x256xf32>
    %34 = vector.broadcast %33 : vector<1x256xf32> to vector<2x256xf32>
    %35 = arith.addf %32, %34 : vector<2x256xf32>
    %cst_32 = arith.constant 0.000000e+00 : f32
    %36 = vector.broadcast %cst_32 : f32 to vector<2x256xf32>
    %37 = arith.maximumf %35, %36 : vector<2x256xf32>
    %c0_33 = arith.constant 0 : index
    %c0_34 = arith.constant 0 : index
    %38 = vector.load %arg11[%c0_33, %c0_34] : memref<256x1xf32, #tpu.memory_space<vmem>>, vector<256x1xf32>
    %cst_35 = arith.constant dense<0.000000e+00> : vector<2x1xf32>
    %39 = tpu.matmul %37, %38, %cst_35 {dimension_numbers = #tpu.dot_dimension_numbers<[1], [0], [0], [1], [0, 0, 1, 1], [], []>} : vector<2x256xf32>, vector<256x1xf32>, vector<2x1xf32> -> vector<2x1xf32>
    %c0_36 = arith.constant 0 : index
    %c0_37 = arith.constant 0 : index
    %40 = vector.load %arg12[%c0_36, %c0_37] : memref<1x1xf32, #tpu.memory_space<vmem>>, vector<1x1xf32>
    %41 = vector.broadcast %40 : vector<1x1xf32> to vector<2x1xf32>
    %42 = arith.addf %39, %41 : vector<2x1xf32>
    %c0_38 = arith.constant 0 : index
    %c0_39 = arith.constant 0 : index
    %43 = vector.load %arg13[%c0_38, %c0_39] : memref<2x3xf32, #tpu.memory_space<vmem>>, vector<2x1xf32>
    tpu.vector_store %arg13[%c0_38, %c0_39], %42 {strides = array<i32>} : memref<2x3xf32, #tpu.memory_space<vmem>>, vector<2x1xf32>,
    %44 = vector.extract_strided_slice %15 {offsets = [1, 0], sizes = [1, 256], strides = [1, 1]} : vector<3x256xf32> to vector<1x256xf32>
    %45 = vector.broadcast %44 : vector<1x256xf32> to vector<2x256xf32>
    %46 = arith.addf %13, %45 : vector<2x256xf32>
    %c0_40 = arith.constant 0 : index
    %c0_41 = arith.constant 0 : index
    %47 = vector.load %arg6[%c0_40, %c0_41] : memref<1x256xf32, #tpu.memory_space<vmem>>, vector<1x256xf32>
    %48 = vector.broadcast %47 : vector<1x256xf32> to vector<2x256xf32>
    %49 = arith.addf %46, %48 : vector<2x256xf32>
    %cst_42 = arith.constant 0.000000e+00 : f32
    %50 = vector.broadcast %cst_42 : f32 to vector<2x256xf32>
    %51 = arith.maximumf %49, %50 : vector<2x256xf32>
    %c0_43 = arith.constant 0 : index
    %c0_44 = arith.constant 0 : index
    %52 = vector.load %arg7[%c0_43, %c0_44] : memref<256x256xf32, #tpu.memory_space<vmem>>, vector<256x256xf32>
    %cst_45 = arith.constant dense<0.000000e+00> : vector<2x256xf32>
    %53 = tpu.matmul %51, %52, %cst_45 {dimension_numbers = #tpu.dot_dimension_numbers<[1], [0], [0], [1], [0, 0, 1, 1], [], []>} : vector<2x256xf32>, vector<256x256xf32>, vector<2x256xf32> -> vector<2x256xf32>
    %c0_46 = arith.constant 0 : index
    %c0_47 = arith.constant 0 : index
    %54 = vector.load %arg8[%c0_46, %c0_47] : memref<1x256xf32, #tpu.memory_space<vmem>>, vector<1x256xf32>
    %55 = vector.broadcast %54 : vector<1x256xf32> to vector<2x256xf32>
    %56 = arith.addf %53, %55 : vector<2x256xf32>
    %cst_48 = arith.constant 0.000000e+00 : f32
    %57 = vector.broadcast %cst_48 : f32 to vector<2x256xf32>
    %58 = arith.maximumf %56, %57 : vector<2x256xf32>
    %c0_49 = arith.constant 0 : index
    %c0_50 = arith.constant 0 : index
    %59 = vector.load %arg9[%c0_49, %c0_50] : memref<256x256xf32, #tpu.memory_space<vmem>>, vector<256x256xf32>
    %cst_51 = arith.constant dense<0.000000e+00> : vector<2x256xf32>
    %60 = tpu.matmul %58, %59, %cst_51 {dimension_numbers = #tpu.dot_dimension_numbers<[1], [0], [0], [1], [0, 0, 1, 1], [], []>} : vector<2x256xf32>, vector<256x256xf32>, vector<2x256xf32> -> vector<2x256xf32>
    %c0_52 = arith.constant 0 : index
    %c0_53 = arith.constant 0 : index
    %61 = vector.load %arg10[%c0_52, %c0_53] : memref<1x256xf32, #tpu.memory_space<vmem>>, vector<1x256xf32>
    %62 = vector.broadcast %61 : vector<1x256xf32> to vector<2x256xf32>
    %63 = arith.addf %60, %62 : vector<2x256xf32>
    %cst_54 = arith.constant 0.000000e+00 : f32
    %64 = vector.broadcast %cst_54 : f32 to vector<2x256xf32>
    %65 = arith.maximumf %63, %64 : vector<2x256xf32>
    %c0_55 = arith.constant 0 : index
    %c0_56 = arith.constant 0 : index
    %66 = vector.load %arg11[%c0_55, %c0_56] : memref<256x1xf32, #tpu.memory_space<vmem>>, vector<256x1xf32>
    %cst_57 = arith.constant dense<0.000000e+00> : vector<2x1xf32>
    %67 = tpu.matmul %65, %66, %cst_57 {dimension_numbers = #tpu.dot_dimension_numbers<[1], [0], [0], [1], [0, 0, 1, 1], [], []>} : vector<2x256xf32>, vector<256x1xf32>, vector<2x1xf32> -> vector<2x1xf32>
    %c0_58 = arith.constant 0 : index
    %c0_59 = arith.constant 0 : index
    %68 = vector.load %arg12[%c0_58, %c0_59] : memref<1x1xf32, #tpu.memory_space<vmem>>, vector<1x1xf32>
    %69 = vector.broadcast %68 : vector<1x1xf32> to vector<2x1xf32>
    %70 = arith.addf %67, %69 : vector<2x1xf32>
    %c0_60 = arith.constant 0 : index
    %c1 = arith.constant 1 : index
    %71 = vector.load %arg13[%c0_60, %c1] : memref<2x3xf32, #tpu.memory_space<vmem>>, vector<2x1xf32>
    tpu.vector_store %arg13[%c0_60, %c1], %70 {strides = array<i32>} : memref<2x3xf32, #tpu.memory_space<vmem>>, vector<2x1xf32>,
    %72 = vector.extract_strided_slice %15 {offsets = [2, 0], sizes = [1, 256], strides = [1, 1]} : vector<3x256xf32> to vector<1x256xf32>
    %73 = vector.broadcast %72 : vector<1x256xf32> to vector<2x256xf32>
    %74 = arith.addf %13, %73 : vector<2x256xf32>
    %c0_61 = arith.constant 0 : index
    %c0_62 = arith.constant 0 : index
    %75 = vector.load %arg6[%c0_61, %c0_62] : memref<1x256xf32, #tpu.memory_space<vmem>>, vector<1x256xf32>
    %76 = vector.broadcast %75 : vector<1x256xf32> to vector<2x256xf32>
    %77 = arith.addf %74, %76 : vector<2x256xf32>
    %cst_63 = arith.constant 0.000000e+00 : f32
    %78 = vector.broadcast %cst_63 : f32 to vector<2x256xf32>
    %79 = arith.maximumf %77, %78 : vector<2x256xf32>
    %c0_64 = arith.constant 0 : index
    %c0_65 = arith.constant 0 : index
    %80 = vector.load %arg7[%c0_64, %c0_65] : memref<256x256xf32, #tpu.memory_space<vmem>>, vector<256x256xf32>
    %cst_66 = arith.constant dense<0.000000e+00> : vector<2x256xf32>
    %81 = tpu.matmul %79, %80, %cst_66 {dimension_numbers = #tpu.dot_dimension_numbers<[1], [0], [0], [1], [0, 0, 1, 1], [], []>} : vector<2x256xf32>, vector<256x256xf32>, vector<2x256xf32> -> vector<2x256xf32>
    %c0_67 = arith.constant 0 : index
    %c0_68 = arith.constant 0 : index
    %82 = vector.load %arg8[%c0_67, %c0_68] : memref<1x256xf32, #tpu.memory_space<vmem>>, vector<1x256xf32>
    %83 = vector.broadcast %82 : vector<1x256xf32> to vector<2x256xf32>
    %84 = arith.addf %81, %83 : vector<2x256xf32>
    %cst_69 = arith.constant 0.000000e+00 : f32
    %85 = vector.broadcast %cst_69 : f32 to vector<2x256xf32>
    %86 = arith.maximumf %84, %85 : vector<2x256xf32>
    %c0_70 = arith.constant 0 : index
    %c0_71 = arith.constant 0 : index
    %87 = vector.load %arg9[%c0_70, %c0_71] : memref<256x256xf32, #tpu.memory_space<vmem>>, vector<256x256xf32>
    %cst_72 = arith.constant dense<0.000000e+00> : vector<2x256xf32>
    %88 = tpu.matmul %86, %87, %cst_72 {dimension_numbers = #tpu.dot_dimension_numbers<[1], [0], [0], [1], [0, 0, 1, 1], [], []>} : vector<2x256xf32>, vector<256x256xf32>, vector<2x256xf32> -> vector<2x256xf32>
    %c0_73 = arith.constant 0 : index
    %c0_74 = arith.constant 0 : index
    %89 = vector.load %arg10[%c0_73, %c0_74] : memref<1x256xf32, #tpu.memory_space<vmem>>, vector<1x256xf32>
    %90 = vector.broadcast %89 : vector<1x256xf32> to vector<2x256xf32>
    %91 = arith.addf %88, %90 : vector<2x256xf32>
    %cst_75 = arith.constant 0.000000e+00 : f32
    %92 = vector.broadcast %cst_75 : f32 to vector<2x256xf32>
    %93 = arith.maximumf %91, %92 : vector<2x256xf32>
    %c0_76 = arith.constant 0 : index
    %c0_77 = arith.constant 0 : index
    %94 = vector.load %arg11[%c0_76, %c0_77] : memref<256x1xf32, #tpu.memory_space<vmem>>, vector<256x1xf32>
    %cst_78 = arith.constant dense<0.000000e+00> : vector<2x1xf32>
    %95 = tpu.matmul %93, %94, %cst_78 {dimension_numbers = #tpu.dot_dimension_numbers<[1], [0], [0], [1], [0, 0, 1, 1], [], []>} : vector<2x256xf32>, vector<256x1xf32>, vector<2x1xf32> -> vector<2x1xf32>
    %c0_79 = arith.constant 0 : index
    %c0_80 = arith.constant 0 : index
    %96 = vector.load %arg12[%c0_79, %c0_80] : memref<1x1xf32, #tpu.memory_space<vmem>>, vector<1x1xf32>
    %97 = vector.broadcast %96 : vector<1x1xf32> to vector<2x1xf32>
    %98 = arith.addf %95, %97 : vector<2x1xf32>
    %c0_81 = arith.constant 0 : index
    %c2 = arith.constant 2 : index
    %99 = vector.load %arg13[%c0_81, %c2] : memref<2x3xf32, #tpu.memory_space<vmem>>, vector<2x1xf32>
    tpu.vector_store %arg13[%c0_81, %c2], %98 {strides = array<i32>} : memref<2x3xf32, #tpu.memory_space<vmem>>, vector<2x1xf32>,
    %c0_82 = arith.constant 0 : index
    %c0_83 = arith.constant 0 : index
    %100 = vector.load %arg13[%c0_82, %c0_83] : memref<2x3xf32, #tpu.memory_space<vmem>>, vector<2x3xf32>
    %cst_84 = arith.constant dense<0xFF800000> : vector<2xf32>
    %101 = vector.multi_reduction <maximumf>, %100, %cst_84 [1] : vector<2x3xf32> to vector<2xf32>
    %102 = vector.shape_cast %101 : vector<2xf32> to vector<2x1xf32>
    %103 = vector.broadcast %102 : vector<2x1xf32> to vector<2x3xf32>
    %104 = arith.subf %100, %103 : vector<2x3xf32>
    %105 = math.exp %104 : vector<2x3xf32>
    %cst_85 = arith.constant dense<0.000000e+00> : vector<2xf32>
    %106 = vector.multi_reduction <add>, %105, %cst_85 [1] : vector<2x3xf32> to vector<2xf32>
    %107 = vector.shape_cast %106 : vector<2xf32> to vector<2x1xf32>
    %108 = vector.broadcast %107 : vector<2x1xf32> to vector<2x3xf32>
    %109 = arith.divf %105, %108 : vector<2x3xf32>
    %cst_86 = arith.constant dense<0xFF800000> : vector<3xf32>
    %110 = vector.multi_reduction <maximumf>, %100, %cst_86 [0] : vector<2x3xf32> to vector<3xf32>
    %111 = vector.shape_cast %110 : vector<3xf32> to vector<1x3xf32>
    %112 = vector.broadcast %111 : vector<1x3xf32> to vector<2x3xf32>
    %113 = arith.subf %100, %112 : vector<2x3xf32>
    %114 = math.exp %113 : vector<2x3xf32>
    %cst_87 = arith.constant dense<0.000000e+00> : vector<3xf32>
    %115 = vector.multi_reduction <add>, %114, %cst_87 [0] : vector<2x3xf32> to vector<3xf32>
    %116 = vector.shape_cast %115 : vector<3xf32> to vector<1x3xf32>
    %117 = vector.broadcast %116 : vector<1x3xf32> to vector<2x3xf32>
    %118 = arith.divf %114, %117 : vector<2x3xf32>
    %119 = arith.minimumf %109, %118 : vector<2x3xf32>
    %c0_88 = arith.constant 0 : index
    %c0_89 = arith.constant 0 : index
    %120 = vector.load %arg14[%c0_88, %c0_89] : memref<2x3xf32, #tpu.memory_space<vmem>>, vector<2x3xf32>
    tpu.vector_store %arg14[%c0_88, %c0_89], %119 {strides = array<i32>} : memref<2x3xf32, #tpu.memory_space<vmem>>, vector<2x3xf32>,
    return
  }
}

</mosaic_0001>

<llo_original>
// kernel: reid_forward.6
$region0: #{reid_forward.6}
  #allocation0 [shape = 'u32[]', space=smem, size = 0x4, offset = 0x4, fixed_abs, tag = 'smem constant byte address 0x4 - core index']
  #allocation1 [shape = 'u32[72,128]{1,0:T(1,128)}', space=vmem, size = 0x9000, scoped, tag = 'internal scratch']
  %s0 = inlined_call_operand.vmem [shape: bf16[5120,48], index: 0, kind: input, shape index: {}]
  %s1 = inlined_call_operand.vmem [shape: bf16[48,32], index: 1, kind: input, shape index: {}]
  %s2 = inlined_call_operand.vmem [shape: f32[1,32], index: 2, kind: input, shape index: {}]
  %s3 = inlined_call_operand.vmem [shape: f32[5120,32], index: 3, kind: output, shape index: {}]
  %s4 = sld [smem:[#allocation0]]
  $region45: #{reid_forward.6} parent=0
    _
  %s6 = ssub.s32 1, %s4
  %s7 = scalar_select 0, %s6, %s4
  loop: start=0, step=1, limit=7
  $region2: #{reid_forward.6} parent=0 // loop_pre_header
    _
  $region3: #{reid_forward.6} parent=0 // loop_header
    %s9 = sphi 0, %s13
    %p10 = scmp.ge.s32.totalorder %s9, 7
    %s19 = sphi 0, %s21
    %s22 = sphi 0, %s19
    %s23 = sphi 0, %s22
    %s39 = sphi 0, %s23
    %s43 = sphi 0, %s43
    %s45 = sphi 0, %s43
    %s46 = sphi 0, %s45
    %s60 = sphi 0, %s46
    %s64 = sphi 0, %s64
    %s66 = sphi 0, %s64
    %s67 = sphi 0, %s66
    %s81 = sphi 0, %s67
    %s87 = sphi 0, %s89
    %s90 = sphi 0, %s87
    %s91 = sphi 0, %s90
    %s107 = sphi 0, %s91
  $region4: #{reid_forward.6} parent=0 // loop_header_branch
    %12 = sbr.rel (%p10) target = $region8
  $region5: #{reid_forward.6} parent=0 // loop_body
    %s14 = ssub.s32 %s9, 1
    %s15 = ssub.s32 %s9, 2
    %s16 = sadd.s32 %s9, 1
    %s17 = ssub.s32 %s9, %s16
    %p18 = scmp.eq.s32.totalorder %s17, 0
    %s20 = sadd.s32 %s19, 1
    %s21 = scalar_select %p18, %s19, %s20
    %p24 = pneg %p18
    %p25 = scmp.eq.s32.totalorder %s9, 4
    %p26 = por %p24, %p25
    %p27 = scmp.ne.s32.totalorder %s19, %s22
    %p28 = scmp.eq.s32.totalorder %s9, 0
    %p29 = por %p27, %p28
    %p30 = scmp.ne.s32.totalorder %s19, %s22
    %p31 = scmp.eq.s32.totalorder %s14, 4
    %p32 = por %p30, %p31
    %p33 = scmp.ne.s32.totalorder %s22, %s23
    %p34 = scmp.eq.s32.totalorder %s14, 0
    %p35 = por %p33, %p34
    %p36 = scmp.ne.s32.totalorder %s22, %s23
    %p37 = scmp.eq.s32.totalorder %s15, 4
    %p38 = por %p36, %p37
    %p40 = scmp.ne.s32.totalorder %s23, %s39
    %p41 = scmp.eq.s32.totalorder %s15, 0
    %p42 = por %p40, %p41
    %s44 = sadd.s32 %s43, 1
    %p47 = scmp.eq.s32.totalorder %s9, 4
    %p48 = scmp.ne.s32.totalorder %s43, %s45
    %p49 = scmp.eq.s32.totalorder %s9, 0
    %p50 = por %p48, %p49
    %p51 = scmp.ne.s32.totalorder %s43, %s45
    %p52 = scmp.eq.s32.totalorder %s14, 4
    %p53 = por %p51, %p52
    %p54 = scmp.ne.s32.totalorder %s45, %s46
    %p55 = scmp.eq.s32.totalorder %s14, 0
    %p56 = por %p54, %p55
    %p57 = scmp.ne.s32.totalorder %s45, %s46
    %p58 = scmp.eq.s32.totalorder %s15, 4
    %p59 = por %p57, %p58
    %p61 = scmp.ne.s32.totalorder %s46, %s60
    %p62 = scmp.eq.s32.totalorder %s15, 0
    %p63 = por %p61, %p62
    %s65 = sadd.s32 %s64, 1
    %p68 = scmp.eq.s32.totalorder %s9, 4
    %p69 = scmp.ne.s32.totalorder %s64, %s66
    %p70 = scmp.eq.s32.totalorder %s9, 0
    %p71 = por %p69, %p70
    %p72 = scmp.ne.s32.totalorder %s64, %s66
    %p73 = scmp.eq.s32.totalorder %s14, 4
    %p74 = por %p72, %p73
    %p75 = scmp.ne.s32.totalorder %s66, %s67
    %p76 = scmp.eq.s32.totalorder %s14, 0
    %p77 = por %p75, %p76
    %p78 = scmp.ne.s32.totalorder %s66, %s67
    %p79 = scmp.eq.s32.totalorder %s15, 4
    %p80 = por %p78, %p79
    %p82 = scmp.ne.s32.totalorder %s67, %s81
    %p83 = scmp.eq.s32.totalorder %s15, 0
    %p84 = por %p82, %p83
    %s85 = ssub.s32 %s9, %s16
    %p86 = scmp.eq.s32.totalorder %s85, 0
    %s88 = sadd.s32 %s87, 1
    %s89 = scalar_select %p86, %s87, %s88
    %p92 = pneg %p86
    %p93 = scmp.eq.s32.totalorder %s9, 4
    %p94 = por %p92, %p93
    %p95 = scmp.ne.s32.totalorder %s87, %s90
    %p96 = scmp.eq.s32.totalorder %s9, 0
    %p97 = por %p95, %p96
    %p98 = scmp.ne.s32.totalorder %s87, %s90
    %p99 = scmp.eq.s32.totalorder %s14, 4
    %p100 = por %p98, %p99
    %p101 = scmp.ne.s32.totalorder %s90, %s91
    %p102 = scmp.eq.s32.totalorder %s14, 0
    %p103 = por %p101, %p102
    %p104 = scmp.ne.s32.totalorder %s90, %s91
    %p105 = scmp.eq.s32.totalorder %s15, 4
    %p106 = por %p104, %p105
    %p108 = scmp.ne.s32.totalorder %s91, %s107
    %p109 = scmp.eq.s32.totalorder %s15, 0
    %p110 = por %p108, %p109
    %p111 = scmp.le.s32.totalorder 1, %s9
    %p112 = scmp.lt.s32.totalorder %s9, 6
    %p113 = pnand %p111, %p112
    %p114 = pneg %p113
    // Predicated region
    $region9: #{reid_forward.6} parent=5 // pred_check
      _
    $region10: #{reid_forward.6} parent=5 // pred_check_branch
      %116 = sbr.rel (%p113) target = $region12
    $region11: #{reid_forward.6} parent=5 // pred_region
      %s117 = ssub.s32 %s9, 1
      // Predicated region
      $region13: #{reid_forward.6} parent=11 // pred_check
        %p118 = pneg %p56
      $region14: #{reid_forward.6} parent=11 // pred_check_branch
        %120 = sbr.rel (%p118) target = $region16
      $region15: #{reid_forward.6} parent=11 // pred_region
        _
      $region16: #{reid_forward.6} parent=11 // pred_fallthru
        _
      // Predicated region
      $region17: #{reid_forward.6} parent=11 // pred_check
        %p121 = pneg %p77
      $region18: #{reid_forward.6} parent=11 // pred_check_branch
        %123 = sbr.rel (%p121) target = $region20
      $region19: #{reid_forward.6} parent=11 // pred_region
        _
      $region20: #{reid_forward.6} parent=11 // pred_fallthru
        _
    $region12: #{reid_forward.6} parent=5 // pred_fallthru
      _
    %p124 = scmp.lt.s32.totalorder %s9, 5
    // Predicated region
    $region21: #{reid_forward.6} parent=5 // pred_check
      %p125 = pneg %p124
    $region22: #{reid_forward.6} parent=5 // pred_check_branch
      %127 = sbr.rel (%p125) target = $region24
    $region23: #{reid_forward.6} parent=5 // pred_region
      // Predicated region
      $region25: #{reid_forward.6} parent=23 // pred_check
        %p128 = pneg %p29
      $region26: #{reid_forward.6} parent=23 // pred_check_branch
        %130 = sbr.rel (%p128) target = $region28
      $region27: #{reid_forward.6} parent=23 // pred_region
        %s131 = smul.u32 128, %s9
        %p132 = scmp.lt.s32.totalorder %s131, 639
        %s133 = scalar_select %p132, %s131, 639
        %s134 = smul.addr %s133, 4
        %s135 = scalar_lea.vmem %s0, %s134
        %s136 = smul.u32 128, %s9
      $region28: #{reid_forward.6} parent=23 // pred_fallthru
        _
    $region24: #{reid_forward.6} parent=5 // pred_fallthru
      _
    %p137 = scmp.le.s32.totalorder 1, %s9
    %p138 = scmp.lt.s32.totalorder %s9, 6
    %p139 = pnand %p137, %p138
    %p140 = pneg %p139
    // Predicated region
    $region29: #{reid_forward.6} parent=5 // pred_check
      _
    $region30: #{reid_forward.6} parent=5 // pred_check_branch
      %142 = sbr.rel (%p139) target = $region32
    $region31: #{reid_forward.6} parent=5 // pred_region
      %s143 = ssub.s32 %s9, 1
      %s144 = smul.u32 128, %s14
      %p145 = scmp.lt.s32.totalorder %s144, 639
      %s146 = scalar_select %p145, %s144, 639
      %s147 = smul.addr %s146, 4
      %s148 = scalar_lea.vmem %s0, %s147
      %p149 = pneg %p35
      %p150 = pneg %p32
      %p151 = pneg %p56
      %p152 = pneg %p53
      %p153 = pneg %p77
      %p154 = pneg %p74
      %p155 = pneg %p103
      %p156 = pneg %p100
      %s157 = smul.u32 128, %s14
      %p158 = scmp.lt.s32.totalorder %s157, 639
      %s159 = scalar_select %p158, %s157, 639
      %s160 = smul.addr %s159, 8
      %s161 = scalar_lea.vmem %s3, %s160
      %s162 = smul.u32 128, %s14
      %p163 = scmp.lt.s32.totalorder %s162, 639
      %s164 = scalar_select %p163, %s162, 639
      %s165 = smul.addr %s164, 4
      %s166 = scalar_lea.vmem %s0, %s165
      %s167 = smul.u32 128, %s14
      %s168 = smul.u32 128, %s14
      %p169 = scmp.lt.s32.totalorder %s168, 639
      %s170 = scalar_select %p169, %s168, 639
      %s171 = smul.addr %s170, 8
      %s172 = scalar_lea.vmem %s3, %s171
      %s173 = smul.u32 128, %s14
      %v175 = vld [vmem:[%s166] sm:$0xf]
      %v176 = vld [vmem:[%s166 + $0x4] sm:$0xf]
      %v177 = vld [vmem:[%s166 + $0x8] sm:$0xf]
      %v178 = vld [vmem:[%s166 + $0xc] sm:$0xf]
      %v179 = vld [vmem:[%s166 + $0x10] sm:$0xf]
      %v180 = vld [vmem:[%s166 + $0x14] sm:$0xf]
      %v181 = vld [vmem:[%s166 + $0x18] sm:$0xf]
      %v182 = vld [vmem:[%s166 + $0x1c] sm:$0xf]
      %v183 = vld [vmem:[%s166 + $0x20] sm:$0xf]
      %v184 = vld [vmem:[%s166 + $0x24] sm:$0xf]
      %v185 = vld [vmem:[%s166 + $0x28] sm:$0xf]
      %v186 = vld [vmem:[%s166 + $0x2c] sm:$0xf]
      %v187 = vld [vmem:[%s166 + $0x30] sm:$0xf]
      %v188 = vld [vmem:[%s166 + $0x34] sm:$0xf]
      %v189 = vld [vmem:[%s166 + $0x38] sm:$0xf]
      %v190 = vld [vmem:[%s166 + $0x3c] sm:$0xf]
      %v191 = vld [vmem:[%s166 + $0x40] sm:$0xf]
      %v192 = vld [vmem:[%s166 + $0x44] sm:$0xf]
      %v193 = vld [vmem:[%s166 + $0x48] sm:$0xf]
      %v194 = vld [vmem:[%s166 + $0x4c] sm:$0xf]
      %v195 = vld [vmem:[%s166 + $0x50] sm:$0xf]
      %v196 = vld [vmem:[%s166 + $0x54] sm:$0xf]
      %v197 = vld [vmem:[%s166 + $0x58] sm:$0xf]
      %v198 = vld [vmem:[%s166 + $0x5c] sm:$0xf]
      %v199 = vld [vmem:[%s166 + $0x60] sm:$0xf]
      %v200 = vld [vmem:[%s166 + $0x64] sm:$0xf]
      %v201 = vld [vmem:[%s166 + $0x68] sm:$0xf]
      %v202 = vld [vmem:[%s166 + $0x6c] sm:$0xf]
      %v203 = vld [vmem:[%s166 + $0x70] sm:$0xf]
      %v204 = vld [vmem:[%s166 + $0x74] sm:$0xf]
      %v205 = vld [vmem:[%s166 + $0x78] sm:$0xf]
      %v206 = vld [vmem:[%s166 + $0x7c] sm:$0xf]
      %v207 = vld [vmem:[%s166 + $0x80] sm:$0xf]
      %v208 = vld [vmem:[%s166 + $0x84] sm:$0xf]
      %v209 = vld [vmem:[%s166 + $0x88] sm:$0xf]
      %v210 = vld [vmem:[%s166 + $0x8c] sm:$0xf]
      %v211 = vld [vmem:[%s166 + $0x90] sm:$0xf]
      %v212 = vld [vmem:[%s166 + $0x94] sm:$0xf]
      %v213 = vld [vmem:[%s166 + $0x98] sm:$0xf]
      %v214 = vld [vmem:[%s166 + $0x9c] sm:$0xf]
      %v215 = vld [vmem:[%s166 + $0xa0] sm:$0xf]
      %v216 = vld [vmem:[%s166 + $0xa4] sm:$0xf]
      %v217 = vld [vmem:[%s166 + $0xa8] sm:$0xf]
      %v218 = vld [vmem:[%s166 + $0xac] sm:$0xf]
      %v219 = vld [vmem:[%s166 + $0xb0] sm:$0xf]
      %v220 = vld [vmem:[%s166 + $0xb4] sm:$0xf]
      %v221 = vld [vmem:[%s166 + $0xb8] sm:$0xf]
      %v222 = vld [vmem:[%s166 + $0xbc] sm:$0xf]
      %v223 = vld [vmem:[%s166 + $0xc0] sm:$0xf]
      %v224 = vld [vmem:[%s166 + $0xc4] sm:$0xf]
      %v225 = vld [vmem:[%s166 + $0xc8] sm:$0xf]
      %v226 = vld [vmem:[%s166 + $0xcc] sm:$0xf]
      %v227 = vld [vmem:[%s166 + $0xd0] sm:$0xf]
      %v228 = vld [vmem:[%s166 + $0xd4] sm:$0xf]
      %v229 = vld [vmem:[%s166 + $0xd8] sm:$0xf]
      %v230 = vld [vmem:[%s166 + $0xdc] sm:$0xf]
      %v231 = vld [vmem:[%s166 + $0xe0] sm:$0xf]
      %v232 = vld [vmem:[%s166 + $0xe4] sm:$0xf]
      %v233 = vld [vmem:[%s166 + $0xe8] sm:$0xf]
      %v234 = vld [vmem:[%s166 + $0xec] sm:$0xf]
      %v235 = vld [vmem:[%s166 + $0xf0] sm:$0xf]
      %v236 = vld [vmem:[%s166 + $0xf4] sm:$0xf]
      %v237 = vld [vmem:[%s166 + $0xf8] sm:$0xf]
      %v238 = vld [vmem:[%s166 + $0xfc] sm:$0xf]
      %v239 = vld [vmem:[%s166 + $0x100] sm:$0xf]
      %v240 = vld [vmem:[%s166 + $0x104] sm:$0xf]
      %v241 = vld [vmem:[%s166 + $0x108] sm:$0xf]
      %v242 = vld [vmem:[%s166 + $0x10c] sm:$0xf]
      %v243 = vld [vmem:[%s166 + $0x110] sm:$0xf]
      %v244 = vld [vmem:[%s166 + $0x114] sm:$0xf]
      %v245 = vld [vmem:[%s166 + $0x118] sm:$0xf]
      %v246 = vld [vmem:[%s166 + $0x11c] sm:$0xf]
      %v247 = vld [vmem:[%s166 + $0x120] sm:$0xf]
      %v248 = vld [vmem:[%s166 + $0x124] sm:$0xf]
      %v249 = vld [vmem:[%s166 + $0x128] sm:$0xf]
      %v250 = vld [vmem:[%s166 + $0x12c] sm:$0xf]
      %v251 = vld [vmem:[%s166 + $0x130] sm:$0xf]
      %v252 = vld [vmem:[%s166 + $0x134] sm:$0xf]
      %v253 = vld [vmem:[%s166 + $0x138] sm:$0xf]
      %v254 = vld [vmem:[%s166 + $0x13c] sm:$0xf]
      %v255 = vld [vmem:[%s166 + $0x140] sm:$0xf]
      %v256 = vld [vmem:[%s166 + $0x144] sm:$0xf]
      %v257 = vld [vmem:[%s166 + $0x148] sm:$0xf]
      %v258 = vld [vmem:[%s166 + $0x14c] sm:$0xf]
      %v259 = vld [vmem:[%s166 + $0x150] sm:$0xf]
      %v260 = vld [vmem:[%s166 + $0x154] sm:$0xf]
      %v261 = vld [vmem:[%s166 + $0x158] sm:$0xf]
      %v262 = vld [vmem:[%s166 + $0x15c] sm:$0xf]
      %v263 = vld [vmem:[%s166 + $0x160] sm:$0xf]
      %v264 = vld [vmem:[%s166 + $0x164] sm:$0xf]
      %v265 = vld [vmem:[%s166 + $0x168] sm:$0xf]
      %v266 = vld [vmem:[%s166 + $0x16c] sm:$0xf]
      %v267 = vld [vmem:[%s166 + $0x170] sm:$0xf]
      %v268 = vld [vmem:[%s166 + $0x174] sm:$0xf]
      %v269 = vld [vmem:[%s166 + $0x178] sm:$0xf]
      %v270 = vld [vmem:[%s166 + $0x17c] sm:$0xf]
      %v271 = vld [vmem:[%s166 + $0x180] sm:$0xf]
      %v272 = vld [vmem:[%s166 + $0x184] sm:$0xf]
      %v273 = vld [vmem:[%s166 + $0x188] sm:$0xf]
      %v274 = vld [vmem:[%s166 + $0x18c] sm:$0xf]
      %v275 = vld [vmem:[%s166 + $0x190] sm:$0xf]
      %v276 = vld [vmem:[%s166 + $0x194] sm:$0xf]
      %v277 = vld [vmem:[%s166 + $0x198] sm:$0xf]
      %v278 = vld [vmem:[%s166 + $0x19c] sm:$0xf]
      %v279 = vld [vmem:[%s166 + $0x1a0] sm:$0xf]
      %v280 = vld [vmem:[%s166 + $0x1a4] sm:$0xf]
      %v281 = vld [vmem:[%s166 + $0x1a8] sm:$0xf]
      %v282 = vld [vmem:[%s166 + $0x1ac] sm:$0xf]
      %v283 = vld [vmem:[%s166 + $0x1b0] sm:$0xf]
      %v284 = vld [vmem:[%s166 + $0x1b4] sm:$0xf]
      %v285 = vld [vmem:[%s166 + $0x1b8] sm:$0xf]
      %v286 = vld [vmem:[%s166 + $0x1bc] sm:$0xf]
      %v287 = vld [vmem:[%s166 + $0x1c0] sm:$0xf]
      %v288 = vld [vmem:[%s166 + $0x1c4] sm:$0xf]
      %v289 = vld [vmem:[%s166 + $0x1c8] sm:$0xf]
      %v290 = vld [vmem:[%s166 + $0x1cc] sm:$0xf]
      %v291 = vld [vmem:[%s166 + $0x1d0] sm:$0xf]
      %v292 = vld [vmem:[%s166 + $0x1d4] sm:$0xf]
      %v293 = vld [vmem:[%s166 + $0x1d8] sm:$0xf]
      %v294 = vld [vmem:[%s166 + $0x1dc] sm:$0xf]
      %v295 = vld [vmem:[%s166 + $0x1e0] sm:$0xf]
      %v296 = vld [vmem:[%s166 + $0x1e4] sm:$0xf]
      %v297 = vld [vmem:[%s166 + $0x1e8] sm:$0xf]
      %v298 = vld [vmem:[%s166 + $0x1ec] sm:$0xf]
      %v299 = vld [vmem:[%s166 + $0x1f0] sm:$0xf]
      %v300 = vld [vmem:[%s166 + $0x1f4] sm:$0xf]
      %v301 = vld [vmem:[%s166 + $0x1f8] sm:$0xf]
      %v302 = vld [vmem:[%s166 + $0x1fc] sm:$0xf]
      %v303 = vld [vmem:[%s1] sm:$0xf]
      %v304 = vld [vmem:[%s1 + $0x4] sm:$0xf]
      %v305 = vld [vmem:[%s1 + $0x8] sm:$0xf]
      %v306 = vld [vmem:[%s1 + $0xc] sm:$0xf]
      %v307 = vld [vmem:[%s1 + $0x10] sm:$0xf]
      %v308 = vld [vmem:[%s1 + $0x14] sm:$0xf]
      %v309 = vld [vmem:[%s2] sm:$0x1]
      %v311 = vperm.slane %v309, 0
      %v441 = vunpack.c.l.b16 %v175
      %v442 = vunpack.c.l.b16 %v176
      %v443 = vunpack.c.l.b16 %v177
      %v444 = vunpack.c.l.b16 %v178
      %v445 = vunpack.c.l.b16 %v179
      %v446 = vunpack.c.l.b16 %v180
      %v447 = vunpack.c.l.b16 %v181
      %v448 = vunpack.c.l.b16 %v182
      %v449 = vunpack.c.l.b16 %v183
      %v450 = vunpack.c.l.b16 %v184
      %v451 = vunpack.c.l.b16 %v185
      %v452 = vunpack.c.l.b16 %v186
      %v453 = vunpack.c.l.b16 %v187
      %v454 = vunpack.c.l.b16 %v188
      %v455 = vunpack.c.l.b16 %v189
      %v456 = vunpack.c.l.b16 %v190
      %v457 = vunpack.c.l.b16 %v191
      %v458 = vunpack.c.l.b16 %v192
      %v459 = vunpack.c.l.b16 %v193
      %v460 = vunpack.c.l.b16 %v194
      %v461 = vunpack.c.l.b16 %v195
      %v462 = vunpack.c.l.b16 %v196
      %v463 = vunpack.c.l.b16 %v197
      %v464 = vunpack.c.l.b16 %v198
      %v465 = vunpack.c.l.b16 %v199
      %v466 = vunpack.c.l.b16 %v200
      %v467 = vunpack.c.l.b16 %v201
      %v468 = vunpack.c.l.b16 %v202
      %v469 = vunpack.c.l.b16 %v203
      %v470 = vunpack.c.l.b16 %v204
      %v471 = vunpack.c.l.b16 %v205
      %v472 = vunpack.c.l.b16 %v206
      %v473 = vunpack.c.l.b16 %v207
      %v474 = vunpack.c.l.b16 %v208
      %v475 = vunpack.c.l.b16 %v209
      %v476 = vunpack.c.l.b16 %v210
      %v477 = vunpack.c.l.b16 %v211
      %v478 = vunpack.c.l.b16 %v212
      %v479 = vunpack.c.l.b16 %v213
      %v480 = vunpack.c.l.b16 %v214
      %v481 = vunpack.c.l.b16 %v215
      %v482 = vunpack.c.l.b16 %v216
      %v483 = vunpack.c.l.b16 %v217
      %v484 = vunpack.c.l.b16 %v218
      %v485 = vunpack.c.l.b16 %v219
      %v486 = vunpack.c.l.b16 %v220
      %v487 = vunpack.c.l.b16 %v221
      %v488 = vunpack.c.l.b16 %v222
      %v489 = vunpack.c.l.b16 %v223
      %v490 = vunpack.c.l.b16 %v224
      %v491 = vunpack.c.l.b16 %v225
      %v492 = vunpack.c.l.b16 %v226
      %v493 = vunpack.c.l.b16 %v227
      %v494 = vunpack.c.l.b16 %v228
      %v495 = vunpack.c.l.b16 %v229
      %v496 = vunpack.c.l.b16 %v230
      %v497 = vunpack.c.l.b16 %v231
      %v498 = vunpack.c.l.b16 %v232
      %v499 = vunpack.c.l.b16 %v233
      %v500 = vunpack.c.l.b16 %v234
      %v501 = vunpack.c.l.b16 %v235
      %v502 = vunpack.c.l.b16 %v236
      %v503 = vunpack.c.l.b16 %v237
      %v504 = vunpack.c.l.b16 %v238
      %v505 = vunpack.c.l.b16 %v239
      %v506 = vunpack.c.l.b16 %v240
      %v507 = vunpack.c.l.b16 %v241
      %v508 = vunpack.c.l.b16 %v242
      %v509 = vunpack.c.l.b16 %v243
      %v510 = vunpack.c.l.b16 %v244
      %v511 = vunpack.c.l.b16 %v245
      %v512 = vunpack.c.l.b16 %v246
      %v513 = vunpack.c.l.b16 %v247
      %v514 = vunpack.c.l.b16 %v248
      %v515 = vunpack.c.l.b16 %v249
      %v516 = vunpack.c.l.b16 %v250
      %v517 = vunpack.c.l.b16 %v251
      %v518 = vunpack.c.l.b16 %v252
      %v519 = vunpack.c.l.b16 %v253
      %v520 = vunpack.c.l.b16 %v254
      %v521 = vunpack.c.l.b16 %v255
      %v522 = vunpack.c.l.b16 %v256
      %v523 = vunpack.c.l.b16 %v257
      %v524 = vunpack.c.l.b16 %v258
      %v525 = vunpack.c.l.b16 %v259
      %v526 = vunpack.c.l.b16 %v260
      %v527 = vunpack.c.l.b16 %v261
      %v528 = vunpack.c.l.b16 %v262
      %v529 = vunpack.c.l.b16 %v263
      %v530 = vunpack.c.l.b16 %v264
      %v531 = vunpack.c.l.b16 %v265
      %v532 = vunpack.c.l.b16 %v266
      %v533 = vunpack.c.l.b16 %v267
      %v534 = vunpack.c.l.b16 %v268
      %v535 = vunpack.c.l.b16 %v269
      %v536 = vunpack.c.l.b16 %v270
      %v537 = vunpack.c.l.b16 %v271
      %v538 = vunpack.c.l.b16 %v272
      %v539 = vunpack.c.l.b16 %v273
      %v540 = vunpack.c.l.b16 %v274
      %v541 = vunpack.c.l.b16 %v275
      %v542 = vunpack.c.l.b16 %v276
      %v543 = vunpack.c.l.b16 %v277
      %v544 = vunpack.c.l.b16 %v278
      %v545 = vunpack.c.l.b16 %v279
      %v546 = vunpack.c.l.b16 %v280
      %v547 = vunpack.c.l.b16 %v281
      %v548 = vunpack.c.l.b16 %v282
      %v549 = vunpack.c.l.b16 %v283
      %v550 = vunpack.c.l.b16 %v284
      %v551 = vunpack.c.l.b16 %v285
      %v552 = vunpack.c.l.b16 %v286
      %v553 = vunpack.c.l.b16 %v287
      %v554 = vunpack.c.l.b16 %v288
      %v555 = vunpack.c.l.b16 %v289
      %v556 = vunpack.c.l.b16 %v290
      %v557 = vunpack.c.l.b16 %v291
      %v558 = vunpack.c.l.b16 %v292
      %v559 = vunpack.c.l.b16 %v293
      %v560 = vunpack.c.l.b16 %v294
      %v561 = vunpack.c.l.b16 %v295
      %v562 = vunpack.c.l.b16 %v296
      %v563 = vunpack.c.l.b16 %v297
      %v564 = vunpack.c.l.b16 %v298
      %v565 = vunpack.c.l.b16 %v299
      %v566 = vunpack.c.l.b16 %v300
      %v567 = vunpack.c.l.b16 %v301
      %v568 = vunpack.c.l.b16 %v302
      %v569 = vpack.c.b16 %v442, %v441
      %v570 = vpack.c.b16 %v444, %v443
      %v571 = vpack.c.b16 %v446, %v445
      %v572 = vpack.c.b16 %v448, %v447
      %v573 = vpack.c.b16 %v450, %v449
      %v574 = vpack.c.b16 %v452, %v451
      %v575 = vpack.c.b16 %v454, %v453
      %v576 = vpack.c.b16 %v456, %v455
      %v577 = vpack.c.b16 %v458, %v457
      %v578 = vpack.c.b16 %v460, %v459
      %v579 = vpack.c.b16 %v462, %v461
      %v580 = vpack.c.b16 %v464, %v463
      %v581 = vpack.c.b16 %v466, %v465
      %v582 = vpack.c.b16 %v468, %v467
      %v583 = vpack.c.b16 %v470, %v469
      %v584 = vpack.c.b16 %v472, %v471
      %v585 = vpack.c.b16 %v474, %v473
      %v586 = vpack.c.b16 %v476, %v475
      %v587 = vpack.c.b16 %v478, %v477
      %v588 = vpack.c.b16 %v480, %v479
      %v589 = vpack.c.b16 %v482, %v481
      %v590 = vpack.c.b16 %v484, %v483
      %v591 = vpack.c.b16 %v486, %v485
      %v592 = vpack.c.b16 %v488, %v487
      %v593 = vpack.c.b16 %v490, %v489
      %v594 = vpack.c.b16 %v492, %v491
      %v595 = vpack.c.b16 %v494, %v493
      %v596 = vpack.c.b16 %v496, %v495
      %v597 = vpack.c.b16 %v498, %v497
      %v598 = vpack.c.b16 %v500, %v499
      %v599 = vpack.c.b16 %v502, %v501
      %v600 = vpack.c.b16 %v504, %v503
      %v601 = vpack.c.b16 %v506, %v505
      %v602 = vpack.c.b16 %v508, %v507
      %v603 = vpack.c.b16 %v510, %v509
      %v604 = vpack.c.b16 %v512, %v511
      %v605 = vpack.c.b16 %v514, %v513
      %v606 = vpack.c.b16 %v516, %v515
      %v607 = vpack.c.b16 %v518, %v517
      %v608 = vpack.c.b16 %v520, %v519
      %v609 = vpack.c.b16 %v522, %v521
      %v610 = vpack.c.b16 %v524, %v523
      %v611 = vpack.c.b16 %v526, %v525
      %v612 = vpack.c.b16 %v528, %v527
      %v613 = vpack.c.b16 %v530, %v529
      %v614 = vpack.c.b16 %v532, %v531
      %v615 = vpack.c.b16 %v534, %v533
      %v616 = vpack.c.b16 %v536, %v535
      %v617 = vpack.c.b16 %v538, %v537
      %v618 = vpack.c.b16 %v540, %v539
      %v619 = vpack.c.b16 %v542, %v541
      %v620 = vpack.c.b16 %v544, %v543
      %v621 = vpack.c.b16 %v546, %v545
      %v622 = vpack.c.b16 %v548, %v547
      %v623 = vpack.c.b16 %v550, %v549
      %v624 = vpack.c.b16 %v552, %v551
      %v625 = vpack.c.b16 %v554, %v553
      %v626 = vpack.c.b16 %v556, %v555
      %v627 = vpack.c.b16 %v558, %v557
      %v628 = vpack.c.b16 %v560, %v559
      %v629 = vpack.c.b16 %v562, %v561
      %v630 = vpack.c.b16 %v564, %v563
      %v631 = vpack.c.b16 %v566, %v565
      %v632 = vpack.c.b16 %v568, %v567
      %v639 = vunpack.c.l.b16 %v303
      %v640 = vunpack.c.l.b16 %v304
      %v641 = vunpack.c.l.b16 %v305
      %v642 = vunpack.c.l.b16 %v306
      %v643 = vunpack.c.l.b16 %v307
      %v644 = vunpack.c.l.b16 %v308
      %v645 = vpack.c.b16 %v640, %v639
      %v646 = vpack.c.b16 %v642, %v641
      %v647 = vpack.c.b16 %v644, %v643
      %vm651 = vcmask 392192
      %v653 = vsel %vm651, %v569, 0
      %v656 = vsel %vm651, %v570, 0
      %v659 = vsel %vm651, %v571, 0
      %v662 = vsel %vm651, %v572, 0
      %v665 = vsel %vm651, %v573, 0
      %v668 = vsel %vm651, %v574, 0
      %v671 = vsel %vm651, %v575, 0
      %v674 = vsel %vm651, %v576, 0
      %v677 = vsel %vm651, %v577, 0
      %v680 = vsel %vm651, %v578, 0
      %v683 = vsel %vm651, %v579, 0
      %v686 = vsel %vm651, %v580, 0
      %v689 = vsel %vm651, %v581, 0
      %v692 = vsel %vm651, %v582, 0
      %v695 = vsel %vm651, %v583, 0
      %v698 = vsel %vm651, %v584, 0
      %v701 = vsel %vm651, %v585, 0
      %v704 = vsel %vm651, %v586, 0
      %v707 = vsel %vm651, %v587, 0
      %v710 = vsel %vm651, %v588, 0
      %v713 = vsel %vm651, %v589, 0
      %v716 = vsel %vm651, %v590, 0
      %v719 = vsel %vm651, %v591, 0
      %v722 = vsel %vm651, %v592, 0
      %v725 = vsel %vm651, %v593, 0
      %v728 = vsel %vm651, %v594, 0
      %v731 = vsel %vm651, %v595, 0
      %v734 = vsel %vm651, %v596, 0
      %v737 = vsel %vm651, %v597, 0
      %v740 = vsel %vm651, %v598, 0
      %v743 = vsel %vm651, %v599, 0
      %v746 = vsel %vm651, %v600, 0
      %v749 = vsel %vm651, %v601, 0
      %v752 = vsel %vm651, %v602, 0
      %v755 = vsel %vm651, %v603, 0
      %v758 = vsel %vm651, %v604, 0
      %v761 = vsel %vm651, %v605, 0
      %v764 = vsel %vm651, %v606, 0
      %v767 = vsel %vm651, %v607, 0
      %v770 = vsel %vm651, %v608, 0
      %v773 = vsel %vm651, %v609, 0
      %v776 = vsel %vm651, %v610, 0
      %v779 = vsel %vm651, %v611, 0
      %v782 = vsel %vm651, %v612, 0
      %v785 = vsel %vm651, %v613, 0
      %v788 = vsel %vm651, %v614, 0
      %v791 = vsel %vm651, %v615, 0
      %v794 = vsel %vm651, %v616, 0
      %v797 = vsel %vm651, %v617, 0
      %v800 = vsel %vm651, %v618, 0
      %v803 = vsel %vm651, %v619, 0
      %v806 = vsel %vm651, %v620, 0
      %v809 = vsel %vm651, %v621, 0
      %v812 = vsel %vm651, %v622, 0
      %v815 = vsel %vm651, %v623, 0
      %v818 = vsel %vm651, %v624, 0
      %v821 = vsel %vm651, %v625, 0
      %v824 = vsel %vm651, %v626, 0
      %v827 = vsel %vm651, %v627, 0
      %v830 = vsel %vm651, %v628, 0
      %v833 = vsel %vm651, %v629, 0
      %v836 = vsel %vm651, %v630, 0
      %v839 = vsel %vm651, %v631, 0
      %v842 = vsel %vm651, %v632, 0
      %844 = vmatpush.bf16.msra.mxu0 0
      %845 = vmatpush.bf16.msra.mxu0 0
      %846 = vmatpush.bf16.msra.mxu0 0
      %847 = vmatpush.bf16.msra.mxu0 0
      %848 = vmatpush.bf16.msra.mxu0 0
      %849 = vmatpush.bf16.msra.mxu0 %v647
      %850 = vmatpush.bf16.msra.mxu0 %v646
      %851 = vmatpush.bf16.msra.mxu0 %v645
      %852 = vmatmul.bf16.gmra.mxu0 %v653
      %v853 = vpop.f32.mrf.mxu0
      %v854 = vadd.f32 %v311, %v853
      %v855 = vpop.f32.mrf.mxu0
      %v856 = vadd.f32 %v311, %v855
      %857 = vmatmul.bf16.gmra.mxu0 %v656
      %v858 = vpop.f32.mrf.mxu0
      %v859 = vadd.f32 %v311, %v858
      %v860 = vpop.f32.mrf.mxu0
      %v861 = vadd.f32 %v311, %v860
      %862 = vmatmul.bf16.gmra.mxu0 %v659
      %v863 = vpop.f32.mrf.mxu0
      %v864 = vadd.f32 %v311, %v863
      %v865 = vpop.f32.mrf.mxu0
      %v866 = vadd.f32 %v311, %v865
      %867 = vmatmul.bf16.gmra.mxu0 %v662
      %v868 = vpop.f32.mrf.mxu0
      %v869 = vadd.f32 %v311, %v868
      %v870 = vpop.f32.mrf.mxu0
      %v871 = vadd.f32 %v311, %v870
      %872 = vmatmul.bf16.gmra.mxu0 %v665
      %v873 = vpop.f32.mrf.mxu0
      %v874 = vadd.f32 %v311, %v873
      %v875 = vpop.f32.mrf.mxu0
      %v876 = vadd.f32 %v311, %v875
      %877 = vmatmul.bf16.gmra.mxu0 %v668
      %v878 = vpop.f32.mrf.mxu0
      %v879 = vadd.f32 %v311, %v878
      %v880 = vpop.f32.mrf.mxu0
      %v881 = vadd.f32 %v311, %v880
      %882 = vmatmul.bf16.gmra.mxu0 %v671
      %v883 = vpop.f32.mrf.mxu0
      %v884 = vadd.f32 %v311, %v883
      %v885 = vpop.f32.mrf.mxu0
      %v886 = vadd.f32 %v311, %v885
      %887 = vmatmul.bf16.gmra.mxu0 %v674
      %v888 = vpop.f32.mrf.mxu0
      %v889 = vadd.f32 %v311, %v888
      %v890 = vpop.f32.mrf.mxu0
      %v891 = vadd.f32 %v311, %v890
      %892 = vmatmul.bf16.gmra.mxu0 %v677
      %v893 = vpop.f32.mrf.mxu0
      %v894 = vadd.f32 %v311, %v893
      %v895 = vpop.f32.mrf.mxu0
      %v896 = vadd.f32 %v311, %v895
      %897 = vmatmul.bf16.gmra.mxu0 %v680
      %v898 = vpop.f32.mrf.mxu0
      %v899 = vadd.f32 %v311, %v898
      %v900 = vpop.f32.mrf.mxu0
      %v901 = vadd.f32 %v311, %v900
      %902 = vmatmul.bf16.gmra.mxu0 %v683
      %v903 = vpop.f32.mrf.mxu0
      %v904 = vadd.f32 %v311, %v903
      %v905 = vpop.f32.mrf.mxu0
      %v906 = vadd.f32 %v311, %v905
      %907 = vmatmul.bf16.gmra.mxu0 %v686
      %v908 = vpop.f32.mrf.mxu0
      %v909 = vadd.f32 %v311, %v908
      %v910 = vpop.f32.mrf.mxu0
      %v911 = vadd.f32 %v311, %v910
      %912 = vmatmul.bf16.gmra.mxu0 %v689
      %v913 = vpop.f32.mrf.mxu0
      %v914 = vadd.f32 %v311, %v913
      %v915 = vpop.f32.mrf.mxu0
      %v916 = vadd.f32 %v311, %v915
      %917 = vmatmul.bf16.gmra.mxu0 %v692
      %v918 = vpop.f32.mrf.mxu0
      %v919 = vadd.f32 %v311, %v918
      %v920 = vpop.f32.mrf.mxu0
      %v921 = vadd.f32 %v311, %v920
      %922 = vmatmul.bf16.gmra.mxu0 %v695
      %v923 = vpop.f32.mrf.mxu0
      %v924 = vadd.f32 %v311, %v923
      %v925 = vpop.f32.mrf.mxu0
      %v926 = vadd.f32 %v311, %v925
      %927 = vmatmul.bf16.gmra.mxu0 %v698
      %v928 = vpop.f32.mrf.mxu0
      %v929 = vadd.f32 %v311, %v928
      %v930 = vpop.f32.mrf.mxu0
      %v931 = vadd.f32 %v311, %v930
      %932 = vmatmul.bf16.gmra.mxu0 %v701
      %v933 = vpop.f32.mrf.mxu0
      %v934 = vadd.f32 %v311, %v933
      %v935 = vpop.f32.mrf.mxu0
      %v936 = vadd.f32 %v311, %v935
      %937 = vmatmul.bf16.gmra.mxu0 %v704
      %v938 = vpop.f32.mrf.mxu0
      %v939 = vadd.f32 %v311, %v938
      %v940 = vpop.f32.mrf.mxu0
      %v941 = vadd.f32 %v311, %v940
      %942 = vmatmul.bf16.gmra.mxu0 %v707
      %v943 = vpop.f32.mrf.mxu0
      %v944 = vadd.f32 %v311, %v943
      %v945 = vpop.f32.mrf.mxu0
      %v946 = vadd.f32 %v311, %v945
      %947 = vmatmul.bf16.gmra.mxu0 %v710
      %v948 = vpop.f32.mrf.mxu0
      %v949 = vadd.f32 %v311, %v948
      %v950 = vpop.f32.mrf.mxu0
      %v951 = vadd.f32 %v311, %v950
      %952 = vmatmul.bf16.gmra.mxu0 %v713
      %v953 = vpop.f32.mrf.mxu0
      %v954 = vadd.f32 %v311, %v953
      %v955 = vpop.f32.mrf.mxu0
      %v956 = vadd.f32 %v311, %v955
      %957 = vmatmul.bf16.gmra.mxu0 %v716
      %v958 = vpop.f32.mrf.mxu0
      %v959 = vadd.f32 %v311, %v958
      %v960 = vpop.f32.mrf.mxu0
      %v961 = vadd.f32 %v311, %v960
      %962 = vmatmul.bf16.gmra.mxu0 %v719
      %v963 = vpop.f32.mrf.mxu0
      %v964 = vadd.f32 %v311, %v963
      %v965 = vpop.f32.mrf.mxu0
      %v966 = vadd.f32 %v311, %v965
      %967 = vmatmul.bf16.gmra.mxu0 %v722
      %v968 = vpop.f32.mrf.mxu0
      %v969 = vadd.f32 %v311, %v968
      %v970 = vpop.f32.mrf.mxu0
      %v971 = vadd.f32 %v311, %v970
      %972 = vmatmul.bf16.gmra.mxu0 %v725
      %v973 = vpop.f32.mrf.mxu0
      %v974 = vadd.f32 %v311, %v973
      %v975 = vpop.f32.mrf.mxu0
      %v976 = vadd.f32 %v311, %v975
      %977 = vmatmul.bf16.gmra.mxu0 %v728
      %v978 = vpop.f32.mrf.mxu0
      %v979 = vadd.f32 %v311, %v978
      %v980 = vpop.f32.mrf.mxu0
      %v981 = vadd.f32 %v311, %v980
      %982 = vmatmul.bf16.gmra.mxu0 %v731
      %v983 = vpop.f32.mrf.mxu0
      %v984 = vadd.f32 %v311, %v983
      %v985 = vpop.f32.mrf.mxu0
      %v986 = vadd.f32 %v311, %v985
      %987 = vmatmul.bf16.gmra.mxu0 %v734
      %v988 = vpop.f32.mrf.mxu0
      %v989 = vadd.f32 %v311, %v988
      %v990 = vpop.f32.mrf.mxu0
      %v991 = vadd.f32 %v311, %v990
      %992 = vmatmul.bf16.gmra.mxu0 %v737
      %v993 = vpop.f32.mrf.mxu0
      %v994 = vadd.f32 %v311, %v993
      %v995 = vpop.f32.mrf.mxu0
      %v996 = vadd.f32 %v311, %v995
      %997 = vmatmul.bf16.gmra.mxu0 %v740
      %v998 = vpop.f32.mrf.mxu0
      %v999 = vadd.f32 %v311, %v998
      %v1000 = vpop.f32.mrf.mxu0
      %v1001 = vadd.f32 %v311, %v1000
      %1002 = vmatmul.bf16.gmra.mxu0 %v743
      %v1003 = vpop.f32.mrf.mxu0
      %v1004 = vadd.f32 %v311, %v1003
      %v1005 = vpop.f32.mrf.mxu0
      %v1006 = vadd.f32 %v311, %v1005
      %1007 = vmatmul.bf16.gmra.mxu0 %v746
      %v1008 = vpop.f32.mrf.mxu0
      %v1009 = vadd.f32 %v311, %v1008
      %v1010 = vpop.f32.mrf.mxu0
      %v1011 = vadd.f32 %v311, %v1010
      %1012 = vmatmul.bf16.gmra.mxu0 %v749
      %v1013 = vpop.f32.mrf.mxu0
      %v1014 = vadd.f32 %v311, %v1013
      %v1015 = vpop.f32.mrf.mxu0
      %v1016 = vadd.f32 %v311, %v1015
      %1017 = vmatmul.bf16.gmra.mxu0 %v752
      %v1018 = vpop.f32.mrf.mxu0
      %v1019 = vadd.f32 %v311, %v1018
      %v1020 = vpop.f32.mrf.mxu0
      %v1021 = vadd.f32 %v311, %v1020
      %1022 = vmatmul.bf16.gmra.mxu0 %v755
      %v1023 = vpop.f32.mrf.mxu0
      %v1024 = vadd.f32 %v311, %v1023
      %v1025 = vpop.f32.mrf.mxu0
      %v1026 = vadd.f32 %v311, %v1025
      %1027 = vmatmul.bf16.gmra.mxu0 %v758
      %v1028 = vpop.f32.mrf.mxu0
      %v1029 = vadd.f32 %v311, %v1028
      %v1030 = vpop.f32.mrf.mxu0
      %v1031 = vadd.f32 %v311, %v1030
      %1032 = vmatmul.bf16.gmra.mxu0 %v761
      %v1033 = vpop.f32.mrf.mxu0
      %v1034 = vadd.f32 %v311, %v1033
      %v1035 = vpop.f32.mrf.mxu0
      %v1036 = vadd.f32 %v311, %v1035
      %1037 = vmatmul.bf16.gmra.mxu0 %v764
      %v1038 = vpop.f32.mrf.mxu0
      %v1039 = vadd.f32 %v311, %v1038
      %v1040 = vpop.f32.mrf.mxu0
      %v1041 = vadd.f32 %v311, %v1040
      %1042 = vmatmul.bf16.gmra.mxu0 %v767
      %v1043 = vpop.f32.mrf.mxu0
      %v1044 = vadd.f32 %v311, %v1043
      %v1045 = vpop.f32.mrf.mxu0
      %v1046 = vadd.f32 %v311, %v1045
      %1047 = vmatmul.bf16.gmra.mxu0 %v770
      %v1048 = vpop.f32.mrf.mxu0
      %v1049 = vadd.f32 %v311, %v1048
      %v1050 = vpop.f32.mrf.mxu0
      %v1051 = vadd.f32 %v311, %v1050
      %1052 = vmatmul.bf16.gmra.mxu0 %v773
      %v1053 = vpop.f32.mrf.mxu0
      %v1054 = vadd.f32 %v311, %v1053
      %v1055 = vpop.f32.mrf.mxu0
      %v1056 = vadd.f32 %v311, %v1055
      %1057 = vmatmul.bf16.gmra.mxu0 %v776
      %v1058 = vpop.f32.mrf.mxu0
      %v1059 = vadd.f32 %v311, %v1058
      %v1060 = vpop.f32.mrf.mxu0
      %v1061 = vadd.f32 %v311, %v1060
      %1062 = vmatmul.bf16.gmra.mxu0 %v779
      %v1063 = vpop.f32.mrf.mxu0
      %v1064 = vadd.f32 %v311, %v1063
      %v1065 = vpop.f32.mrf.mxu0
      %v1066 = vadd.f32 %v311, %v1065
      %1067 = vmatmul.bf16.gmra.mxu0 %v782
      %v1068 = vpop.f32.mrf.mxu0
      %v1069 = vadd.f32 %v311, %v1068
      %v1070 = vpop.f32.mrf.mxu0
      %v1071 = vadd.f32 %v311, %v1070
      %1072 = vmatmul.bf16.gmra.mxu0 %v785
      %v1073 = vpop.f32.mrf.mxu0
      %v1074 = vadd.f32 %v311, %v1073
      %v1075 = vpop.f32.mrf.mxu0
      %v1076 = vadd.f32 %v311, %v1075
      %1077 = vmatmul.bf16.gmra.mxu0 %v788
      %v1078 = vpop.f32.mrf.mxu0
      %v1079 = vadd.f32 %v311, %v1078
      %v1080 = vpop.f32.mrf.mxu0
      %v1081 = vadd.f32 %v311, %v1080
      %1082 = vmatmul.bf16.gmra.mxu0 %v791
      %v1083 = vpop.f32.mrf.mxu0
      %v1084 = vadd.f32 %v311, %v1083
      %v1085 = vpop.f32.mrf.mxu0
      %v1086 = vadd.f32 %v311, %v1085
      %1087 = vmatmul.bf16.gmra.mxu0 %v794
      %v1088 = vpop.f32.mrf.mxu0
      %v1089 = vadd.f32 %v311, %v1088
      %v1090 = vpop.f32.mrf.mxu0
      %v1091 = vadd.f32 %v311, %v1090
      %1092 = vmatmul.bf16.gmra.mxu0 %v797
      %v1093 = vpop.f32.mrf.mxu0
      %v1094 = vadd.f32 %v311, %v1093
      %v1095 = vpop.f32.mrf.mxu0
      %v1096 = vadd.f32 %v311, %v1095
      %1097 = vmatmul.bf16.gmra.mxu0 %v800
      %v1098 = vpop.f32.mrf.mxu0
      %v1099 = vadd.f32 %v311, %v1098
      %v1100 = vpop.f32.mrf.mxu0
      %v1101 = vadd.f32 %v311, %v1100
      %1102 = vmatmul.bf16.gmra.mxu0 %v803
      %v1103 = vpop.f32.mrf.mxu0
      %v1104 = vadd.f32 %v311, %v1103
      %v1105 = vpop.f32.mrf.mxu0
      %v1106 = vadd.f32 %v311, %v1105
      %1107 = vmatmul.bf16.gmra.mxu0 %v806
      %v1108 = vpop.f32.mrf.mxu0
      %v1109 = vadd.f32 %v311, %v1108
      %v1110 = vpop.f32.mrf.mxu0
      %v1111 = vadd.f32 %v311, %v1110
      %1112 = vmatmul.bf16.gmra.mxu0 %v809
      %v1113 = vpop.f32.mrf.mxu0
      %v1114 = vadd.f32 %v311, %v1113
      %v1115 = vpop.f32.mrf.mxu0
      %v1116 = vadd.f32 %v311, %v1115
      %1117 = vmatmul.bf16.gmra.mxu0 %v812
      %v1118 = vpop.f32.mrf.mxu0
      %v1119 = vadd.f32 %v311, %v1118
      %v1120 = vpop.f32.mrf.mxu0
      %v1121 = vadd.f32 %v311, %v1120
      %1122 = vmatmul.bf16.gmra.mxu0 %v815
      %v1123 = vpop.f32.mrf.mxu0
      %v1124 = vadd.f32 %v311, %v1123
      %v1125 = vpop.f32.mrf.mxu0
      %v1126 = vadd.f32 %v311, %v1125
      %1127 = vmatmul.bf16.gmra.mxu0 %v818
      %v1128 = vpop.f32.mrf.mxu0
      %v1129 = vadd.f32 %v311, %v1128
      %v1130 = vpop.f32.mrf.mxu0
      %v1131 = vadd.f32 %v311, %v1130
      %1132 = vmatmul.bf16.gmra.mxu0 %v821
      %v1133 = vpop.f32.mrf.mxu0
      %v1134 = vadd.f32 %v311, %v1133
      %v1135 = vpop.f32.mrf.mxu0
      %v1136 = vadd.f32 %v311, %v1135
      %1137 = vmatmul.bf16.gmra.mxu0 %v824
      %v1138 = vpop.f32.mrf.mxu0
      %v1139 = vadd.f32 %v311, %v1138
      %v1140 = vpop.f32.mrf.mxu0
      %v1141 = vadd.f32 %v311, %v1140
      %1142 = vmatmul.bf16.gmra.mxu0 %v827
      %v1143 = vpop.f32.mrf.mxu0
      %v1144 = vadd.f32 %v311, %v1143
      %v1145 = vpop.f32.mrf.mxu0
      %v1146 = vadd.f32 %v311, %v1145
      %1147 = vmatmul.bf16.gmra.mxu0 %v830
      %v1148 = vpop.f32.mrf.mxu0
      %v1149 = vadd.f32 %v311, %v1148
      %v1150 = vpop.f32.mrf.mxu0
      %v1151 = vadd.f32 %v311, %v1150
      %1152 = vmatmul.bf16.gmra.mxu0 %v833
      %v1153 = vpop.f32.mrf.mxu0
      %v1154 = vadd.f32 %v311, %v1153
      %v1155 = vpop.f32.mrf.mxu0
      %v1156 = vadd.f32 %v311, %v1155
      %1157 = vmatmul.bf16.gmra.mxu0 %v836
      %v1158 = vpop.f32.mrf.mxu0
      %v1159 = vadd.f32 %v311, %v1158
      %v1160 = vpop.f32.mrf.mxu0
      %v1161 = vadd.f32 %v311, %v1160
      %1162 = vmatmul.bf16.gmra.mxu0 %v839
      %v1163 = vpop.f32.mrf.mxu0
      %v1164 = vadd.f32 %v311, %v1163
      %v1165 = vpop.f32.mrf.mxu0
      %v1166 = vadd.f32 %v311, %v1165
      %1167 = vmatmul.bf16.gmra.mxu0 %v842
      %v1168 = vpop.f32.mrf.mxu0
      %v1169 = vadd.f32 %v311, %v1168
      %v1170 = vpop.f32.mrf.mxu0
      %v1171 = vadd.f32 %v311, %v1170
      %1172 = vdwg.mxu0
      %v1173 = vmax.f32 %v854, 0.0
      %v1174 = vmax.f32 %v856, 0.0
      %v1175 = vmax.f32 %v859, 0.0
      %v1176 = vmax.f32 %v861, 0.0
      %v1177 = vmax.f32 %v864, 0.0
      %v1178 = vmax.f32 %v866, 0.0
      %v1179 = vmax.f32 %v869, 0.0
      %v1180 = vmax.f32 %v871, 0.0
      %v1181 = vmax.f32 %v874, 0.0
      %v1182 = vmax.f32 %v876, 0.0
      %v1183 = vmax.f32 %v879, 0.0
      %v1184 = vmax.f32 %v881, 0.0
      %v1185 = vmax.f32 %v884, 0.0
      %v1186 = vmax.f32 %v886, 0.0
      %v1187 = vmax.f32 %v889, 0.0
      %v1188 = vmax.f32 %v891, 0.0
      %v1189 = vmax.f32 %v894, 0.0
      %v1190 = vmax.f32 %v896, 0.0
      %v1191 = vmax.f32 %v899, 0.0
      %v1192 = vmax.f32 %v901, 0.0
      %v1193 = vmax.f32 %v904, 0.0
      %v1194 = vmax.f32 %v906, 0.0
      %v1195 = vmax.f32 %v909, 0.0
      %v1196 = vmax.f32 %v911, 0.0
      %v1197 = vmax.f32 %v914, 0.0
      %v1198 = vmax.f32 %v916, 0.0
      %v1199 = vmax.f32 %v919, 0.0
      %v1200 = vmax.f32 %v921, 0.0
      %v1201 = vmax.f32 %v924, 0.0
      %v1202 = vmax.f32 %v926, 0.0
      %v1203 = vmax.f32 %v929, 0.0
      %v1204 = vmax.f32 %v931, 0.0
      %v1205 = vmax.f32 %v934, 0.0
      %v1206 = vmax.f32 %v936, 0.0
      %v1207 = vmax.f32 %v939, 0.0
      %v1208 = vmax.f32 %v941, 0.0
      %v1209 = vmax.f32 %v944, 0.0
      %v1210 = vmax.f32 %v946, 0.0
      %v1211 = vmax.f32 %v949, 0.0
      %v1212 = vmax.f32 %v951, 0.0
      %v1213 = vmax.f32 %v954, 0.0
      %v1214 = vmax.f32 %v956, 0.0
      %v1215 = vmax.f32 %v959, 0.0
      %v1216 = vmax.f32 %v961, 0.0
      %v1217 = vmax.f32 %v964, 0.0
      %v1218 = vmax.f32 %v966, 0.0
      %v1219 = vmax.f32 %v969, 0.0
      %v1220 = vmax.f32 %v971, 0.0
      %v1221 = vmax.f32 %v974, 0.0
      %v1222 = vmax.f32 %v976, 0.0
      %v1223 = vmax.f32 %v979, 0.0
      %v1224 = vmax.f32 %v981, 0.0
      %v1225 = vmax.f32 %v984, 0.0
      %v1226 = vmax.f32 %v986, 0.0
      %v1227 = vmax.f32 %v989, 0.0
      %v1228 = vmax.f32 %v991, 0.0
      %v1229 = vmax.f32 %v994, 0.0
      %v1230 = vmax.f32 %v996, 0.0
      %v1231 = vmax.f32 %v999, 0.0
      %v1232 = vmax.f32 %v1001, 0.0
      %v1233 = vmax.f32 %v1004, 0.0
      %v1234 = vmax.f32 %v1006, 0.0
      %v1235 = vmax.f32 %v1009, 0.0
      %v1236 = vmax.f32 %v1011, 0.0
      %v1237 = vmax.f32 %v1014, 0.0
      %v1238 = vmax.f32 %v1016, 0.0
      %v1239 = vmax.f32 %v1019, 0.0
      %v1240 = vmax.f32 %v1021, 0.0
      %v1241 = vmax.f32 %v1024, 0.0
      %v1242 = vmax.f32 %v1026, 0.0
      %v1243 = vmax.f32 %v1029, 0.0
      %v1244 = vmax.f32 %v1031, 0.0
      %v1245 = vmax.f32 %v1034, 0.0
      %v1246 = vmax.f32 %v1036, 0.0
      %v1247 = vmax.f32 %v1039, 0.0
      %v1248 = vmax.f32 %v1041, 0.0
      %v1249 = vmax.f32 %v1044, 0.0
      %v1250 = vmax.f32 %v1046, 0.0
      %v1251 = vmax.f32 %v1049, 0.0
      %v1252 = vmax.f32 %v1051, 0.0
      %v1253 = vmax.f32 %v1054, 0.0
      %v1254 = vmax.f32 %v1056, 0.0
      %v1255 = vmax.f32 %v1059, 0.0
      %v1256 = vmax.f32 %v1061, 0.0
      %v1257 = vmax.f32 %v1064, 0.0
      %v1258 = vmax.f32 %v1066, 0.0
      %v1259 = vmax.f32 %v1069, 0.0
      %v1260 = vmax.f32 %v1071, 0.0
      %v1261 = vmax.f32 %v1074, 0.0
      %v1262 = vmax.f32 %v1076, 0.0
      %v1263 = vmax.f32 %v1079, 0.0
      %v1264 = vmax.f32 %v1081, 0.0
      %v1265 = vmax.f32 %v1084, 0.0
      %v1266 = vmax.f32 %v1086, 0.0
      %v1267 = vmax.f32 %v1089, 0.0
      %v1268 = vmax.f32 %v1091, 0.0
      %v1269 = vmax.f32 %v1094, 0.0
      %v1270 = vmax.f32 %v1096, 0.0
      %v1271 = vmax.f32 %v1099, 0.0
      %v1272 = vmax.f32 %v1101, 0.0
      %v1273 = vmax.f32 %v1104, 0.0
      %v1274 = vmax.f32 %v1106, 0.0
      %v1275 = vmax.f32 %v1109, 0.0
      %v1276 = vmax.f32 %v1111, 0.0
      %v1277 = vmax.f32 %v1114, 0.0
      %v1278 = vmax.f32 %v1116, 0.0
      %v1279 = vmax.f32 %v1119, 0.0
      %v1280 = vmax.f32 %v1121, 0.0
      %v1281 = vmax.f32 %v1124, 0.0
      %v1282 = vmax.f32 %v1126, 0.0
      %v1283 = vmax.f32 %v1129, 0.0
      %v1284 = vmax.f32 %v1131, 0.0
      %v1285 = vmax.f32 %v1134, 0.0
      %v1286 = vmax.f32 %v1136, 0.0
      %v1287 = vmax.f32 %v1139, 0.0
      %v1288 = vmax.f32 %v1141, 0.0
      %v1289 = vmax.f32 %v1144, 0.0
      %v1290 = vmax.f32 %v1146, 0.0
      %v1291 = vmax.f32 %v1149, 0.0
      %v1292 = vmax.f32 %v1151, 0.0
      %v1293 = vmax.f32 %v1154, 0.0
      %v1294 = vmax.f32 %v1156, 0.0
      %v1295 = vmax.f32 %v1159, 0.0
      %v1296 = vmax.f32 %v1161, 0.0
      %v1297 = vmax.f32 %v1164, 0.0
      %v1298 = vmax.f32 %v1166, 0.0
      %v1299 = vmax.f32 %v1169, 0.0
      %v1300 = vmax.f32 %v1171, 0.0
      %vm1301 = vcmask 261120
      %1302 = vst.msk [vmem:[%s172] sm:$0xff] %vm1301, %v1173
      %1303 = vst.msk [vmem:[%s172 + $0x8] sm:$0xff] %vm1301, %v1174
      %1304 = vst.msk [vmem:[%s172 + $0x10] sm:$0xff] %vm1301, %v1175
      %1305 = vst.msk [vmem:[%s172 + $0x18] sm:$0xff] %vm1301, %v1176
      %1306 = vst.msk [vmem:[%s172 + $0x20] sm:$0xff] %vm1301, %v1177
      %1307 = vst.msk [vmem:[%s172 + $0x28] sm:$0xff] %vm1301, %v1178
      %1308 = vst.msk [vmem:[%s172 + $0x30] sm:$0xff] %vm1301, %v1179
      %1309 = vst.msk [vmem:[%s172 + $0x38] sm:$0xff] %vm1301, %v1180
      %1310 = vst.msk [vmem:[%s172 + $0x40] sm:$0xff] %vm1301, %v1181
      %1311 = vst.msk [vmem:[%s172 + $0x48] sm:$0xff] %vm1301, %v1182
      %1312 = vst.msk [vmem:[%s172 + $0x50] sm:$0xff] %vm1301, %v1183
      %1313 = vst.msk [vmem:[%s172 + $0x58] sm:$0xff] %vm1301, %v1184
      %1314 = vst.msk [vmem:[%s172 + $0x60] sm:$0xff] %vm1301, %v1185
      %1315 = vst.msk [vmem:[%s172 + $0x68] sm:$0xff] %vm1301, %v1186
      %1316 = vst.msk [vmem:[%s172 + $0x70] sm:$0xff] %vm1301, %v1187
      %1317 = vst.msk [vmem:[%s172 + $0x78] sm:$0xff] %vm1301, %v1188
      %1318 = vst.msk [vmem:[%s172 + $0x80] sm:$0xff] %vm1301, %v1189
      %1319 = vst.msk [vmem:[%s172 + $0x88] sm:$0xff] %vm1301, %v1190
      %1320 = vst.msk [vmem:[%s172 + $0x90] sm:$0xff] %vm1301, %v1191
      %1321 = vst.msk [vmem:[%s172 + $0x98] sm:$0xff] %vm1301, %v1192
      %1322 = vst.msk [vmem:[%s172 + $0xa0] sm:$0xff] %vm1301, %v1193
      %1323 = vst.msk [vmem:[%s172 + $0xa8] sm:$0xff] %vm1301, %v1194
      %1324 = vst.msk [vmem:[%s172 + $0xb0] sm:$0xff] %vm1301, %v1195
      %1325 = vst.msk [vmem:[%s172 + $0xb8] sm:$0xff] %vm1301, %v1196
      %1326 = vst.msk [vmem:[%s172 + $0xc0] sm:$0xff] %vm1301, %v1197
      %1327 = vst.msk [vmem:[%s172 + $0xc8] sm:$0xff] %vm1301, %v1198
      %1328 = vst.msk [vmem:[%s172 + $0xd0] sm:$0xff] %vm1301, %v1199
      %1329 = vst.msk [vmem:[%s172 + $0xd8] sm:$0xff] %vm1301, %v1200
      %1330 = vst.msk [vmem:[%s172 + $0xe0] sm:$0xff] %vm1301, %v1201
      %1331 = vst.msk [vmem:[%s172 + $0xe8] sm:$0xff] %vm1301, %v1202
      %1332 = vst.msk [vmem:[%s172 + $0xf0] sm:$0xff] %vm1301, %v1203
      %1333 = vst.msk [vmem:[%s172 + $0xf8] sm:$0xff] %vm1301, %v1204
      %1334 = vst.msk [vmem:[%s172 + $0x100] sm:$0xff] %vm1301, %v1205
      %1335 = vst.msk [vmem:[%s172 + $0x108] sm:$0xff] %vm1301, %v1206
      %1336 = vst.msk [vmem:[%s172 + $0x110] sm:$0xff] %vm1301, %v1207
      %1337 = vst.msk [vmem:[%s172 + $0x118] sm:$0xff] %vm1301, %v1208
      %1338 = vst.msk [vmem:[%s172 + $0x120] sm:$0xff] %vm1301, %v1209
      %1339 = vst.msk [vmem:[%s172 + $0x128] sm:$0xff] %vm1301, %v1210
      %1340 = vst.msk [vmem:[%s172 + $0x130] sm:$0xff] %vm1301, %v1211
      %1341 = vst.msk [vmem:[%s172 + $0x138] sm:$0xff] %vm1301, %v1212
      %1342 = vst.msk [vmem:[%s172 + $0x140] sm:$0xff] %vm1301, %v1213
      %1343 = vst.msk [vmem:[%s172 + $0x148] sm:$0xff] %vm1301, %v1214
      %1344 = vst.msk [vmem:[%s172 + $0x150] sm:$0xff] %vm1301, %v1215
      %1345 = vst.msk [vmem:[%s172 + $0x158] sm:$0xff] %vm1301, %v1216
      %1346 = vst.msk [vmem:[%s172 + $0x160] sm:$0xff] %vm1301, %v1217
      %1347 = vst.msk [vmem:[%s172 + $0x168] sm:$0xff] %vm1301, %v1218
      %1348 = vst.msk [vmem:[%s172 + $0x170] sm:$0xff] %vm1301, %v1219
      %1349 = vst.msk [vmem:[%s172 + $0x178] sm:$0xff] %vm1301, %v1220
      %1350 = vst.msk [vmem:[%s172 + $0x180] sm:$0xff] %vm1301, %v1221
      %1351 = vst.msk [vmem:[%s172 + $0x188] sm:$0xff] %vm1301, %v1222
      %1352 = vst.msk [vmem:[%s172 + $0x190] sm:$0xff] %vm1301, %v1223
      %1353 = vst.msk [vmem:[%s172 + $0x198] sm:$0xff] %vm1301, %v1224
      %1354 = vst.msk [vmem:[%s172 + $0x1a0] sm:$0xff] %vm1301, %v1225
      %1355 = vst.msk [vmem:[%s172 + $0x1a8] sm:$0xff] %vm1301, %v1226
      %1356 = vst.msk [vmem:[%s172 + $0x1b0] sm:$0xff] %vm1301, %v1227
      %1357 = vst.msk [vmem:[%s172 + $0x1b8] sm:$0xff] %vm1301, %v1228
      %1358 = vst.msk [vmem:[%s172 + $0x1c0] sm:$0xff] %vm1301, %v1229
      %1359 = vst.msk [vmem:[%s172 + $0x1c8] sm:$0xff] %vm1301, %v1230
      %1360 = vst.msk [vmem:[%s172 + $0x1d0] sm:$0xff] %vm1301, %v1231
      %1361 = vst.msk [vmem:[%s172 + $0x1d8] sm:$0xff] %vm1301, %v1232
      %1362 = vst.msk [vmem:[%s172 + $0x1e0] sm:$0xff] %vm1301, %v1233
      %1363 = vst.msk [vmem:[%s172 + $0x1e8] sm:$0xff] %vm1301, %v1234
      %1364 = vst.msk [vmem:[%s172 + $0x1f0] sm:$0xff] %vm1301, %v1235
      %1365 = vst.msk [vmem:[%s172 + $0x1f8] sm:$0xff] %vm1301, %v1236
      %1366 = vst.msk [vmem:[%s172 + $0x200] sm:$0xff] %vm1301, %v1237
      %1367 = vst.msk [vmem:[%s172 + $0x208] sm:$0xff] %vm1301, %v1238
      %1368 = vst.msk [vmem:[%s172 + $0x210] sm:$0xff] %vm1301, %v1239
      %1369 = vst.msk [vmem:[%s172 + $0x218] sm:$0xff] %vm1301, %v1240
      %1370 = vst.msk [vmem:[%s172 + $0x220] sm:$0xff] %vm1301, %v1241
      %1371 = vst.msk [vmem:[%s172 + $0x228] sm:$0xff] %vm1301, %v1242
      %1372 = vst.msk [vmem:[%s172 + $0x230] sm:$0xff] %vm1301, %v1243
      %1373 = vst.msk [vmem:[%s172 + $0x238] sm:$0xff] %vm1301, %v1244
      %1374 = vst.msk [vmem:[%s172 + $0x240] sm:$0xff] %vm1301, %v1245
      %1375 = vst.msk [vmem:[%s172 + $0x248] sm:$0xff] %vm1301, %v1246
      %1376 = vst.msk [vmem:[%s172 + $0x250] sm:$0xff] %vm1301, %v1247
      %1377 = vst.msk [vmem:[%s172 + $0x258] sm:$0xff] %vm1301, %v1248
      %1378 = vst.msk [vmem:[%s172 + $0x260] sm:$0xff] %vm1301, %v1249
      %1379 = vst.msk [vmem:[%s172 + $0x268] sm:$0xff] %vm1301, %v1250
      %1380 = vst.msk [vmem:[%s172 + $0x270] sm:$0xff] %vm1301, %v1251
      %1381 = vst.msk [vmem:[%s172 + $0x278] sm:$0xff] %vm1301, %v1252
      %1382 = vst.msk [vmem:[%s172 + $0x280] sm:$0xff] %vm1301, %v1253
      %1383 = vst.msk [vmem:[%s172 + $0x288] sm:$0xff] %vm1301, %v1254
      %1384 = vst.msk [vmem:[%s172 + $0x290] sm:$0xff] %vm1301, %v1255
      %1385 = vst.msk [vmem:[%s172 + $0x298] sm:$0xff] %vm1301, %v1256
      %1386 = vst.msk [vmem:[%s172 + $0x2a0] sm:$0xff] %vm1301, %v1257
      %1387 = vst.msk [vmem:[%s172 + $0x2a8] sm:$0xff] %vm1301, %v1258
      %1388 = vst.msk [vmem:[%s172 + $0x2b0] sm:$0xff] %vm1301, %v1259
      %1389 = vst.msk [vmem:[%s172 + $0x2b8] sm:$0xff] %vm1301, %v1260
      %1390 = vst.msk [vmem:[%s172 + $0x2c0] sm:$0xff] %vm1301, %v1261
      %1391 = vst.msk [vmem:[%s172 + $0x2c8] sm:$0xff] %vm1301, %v1262
      %1392 = vst.msk [vmem:[%s172 + $0x2d0] sm:$0xff] %vm1301, %v1263
      %1393 = vst.msk [vmem:[%s172 + $0x2d8] sm:$0xff] %vm1301, %v1264
      %1394 = vst.msk [vmem:[%s172 + $0x2e0] sm:$0xff] %vm1301, %v1265
      %1395 = vst.msk [vmem:[%s172 + $0x2e8] sm:$0xff] %vm1301, %v1266
      %1396 = vst.msk [vmem:[%s172 + $0x2f0] sm:$0xff] %vm1301, %v1267
      %1397 = vst.msk [vmem:[%s172 + $0x2f8] sm:$0xff] %vm1301, %v1268
      %1398 = vst.msk [vmem:[%s172 + $0x300] sm:$0xff] %vm1301, %v1269
      %1399 = vst.msk [vmem:[%s172 + $0x308] sm:$0xff] %vm1301, %v1270
      %1400 = vst.msk [vmem:[%s172 + $0x310] sm:$0xff] %vm1301, %v1271
      %1401 = vst.msk [vmem:[%s172 + $0x318] sm:$0xff] %vm1301, %v1272
      %1402 = vst.msk [vmem:[%s172 + $0x320] sm:$0xff] %vm1301, %v1273
      %1403 = vst.msk [vmem:[%s172 + $0x328] sm:$0xff] %vm1301, %v1274
      %1404 = vst.msk [vmem:[%s172 + $0x330] sm:$0xff] %vm1301, %v1275
      %1405 = vst.msk [vmem:[%s172 + $0x338] sm:$0xff] %vm1301, %v1276
      %1406 = vst.msk [vmem:[%s172 + $0x340] sm:$0xff] %vm1301, %v1277
      %1407 = vst.msk [vmem:[%s172 + $0x348] sm:$0xff] %vm1301, %v1278
      %1408 = vst.msk [vmem:[%s172 + $0x350] sm:$0xff] %vm1301, %v1279
      %1409 = vst.msk [vmem:[%s172 + $0x358] sm:$0xff] %vm1301, %v1280
      %1410 = vst.msk [vmem:[%s172 + $0x360] sm:$0xff] %vm1301, %v1281
      %1411 = vst.msk [vmem:[%s172 + $0x368] sm:$0xff] %vm1301, %v1282
      %1412 = vst.msk [vmem:[%s172 + $0x370] sm:$0xff] %vm1301, %v1283
      %1413 = vst.msk [vmem:[%s172 + $0x378] sm:$0xff] %vm1301, %v1284
      %1414 = vst.msk [vmem:[%s172 + $0x380] sm:$0xff] %vm1301, %v1285
      %1415 = vst.msk [vmem:[%s172 + $0x388] sm:$0xff] %vm1301, %v1286
      %1416 = vst.msk [vmem:[%s172 + $0x390] sm:$0xff] %vm1301, %v1287
      %1417 = vst.msk [vmem:[%s172 + $0x398] sm:$0xff] %vm1301, %v1288
      %1418 = vst.msk [vmem:[%s172 + $0x3a0] sm:$0xff] %vm1301, %v1289
      %1419 = vst.msk [vmem:[%s172 + $0x3a8] sm:$0xff] %vm1301, %v1290
      %1420 = vst.msk [vmem:[%s172 + $0x3b0] sm:$0xff] %vm1301, %v1291
      %1421 = vst.msk [vmem:[%s172 + $0x3b8] sm:$0xff] %vm1301, %v1292
      %1422 = vst.msk [vmem:[%s172 + $0x3c0] sm:$0xff] %vm1301, %v1293
      %1423 = vst.msk [vmem:[%s172 + $0x3c8] sm:$0xff] %vm1301, %v1294
      %1424 = vst.msk [vmem:[%s172 + $0x3d0] sm:$0xff] %vm1301, %v1295
      %1425 = vst.msk [vmem:[%s172 + $0x3d8] sm:$0xff] %vm1301, %v1296
      %1426 = vst.msk [vmem:[%s172 + $0x3e0] sm:$0xff] %vm1301, %v1297
      %1427 = vst.msk [vmem:[%s172 + $0x3e8] sm:$0xff] %vm1301, %v1298
      %1428 = vst.msk [vmem:[%s172 + $0x3f0] sm:$0xff] %vm1301, %v1299
      %1429 = vst.msk [vmem:[%s172 + $0x3f8] sm:$0xff] %vm1301, %v1300
      %s1430 = smul.u32 128, %s14
      %p1431 = scmp.lt.s32.totalorder %s1430, 639
      %s1432 = scalar_select %p1431, %s1430, 639
      %s1433 = smul.addr %s1432, 8
      %s1434 = scalar_lea.vmem %s3, %s1433
      // Predicated region
      $region33: #{reid_forward.6} parent=31 // pred_check
        %p1435 = pneg %p100
      $region34: #{reid_forward.6} parent=31 // pred_check_branch
        %1437 = sbr.rel (%p1435) target = $region36
      $region35: #{reid_forward.6} parent=31 // pred_region
        %s1438 = smul.u32 128, %s14
      $region36: #{reid_forward.6} parent=31 // pred_fallthru
        _
    $region32: #{reid_forward.6} parent=5 // pred_fallthru
      _
    %p1439 = scmp.le.s32.totalorder 2, %s9
    // Predicated region
    $region37: #{reid_forward.6} parent=5 // pred_check
      %p1440 = pneg %p1439
    $region38: #{reid_forward.6} parent=5 // pred_check_branch
      %1442 = sbr.rel (%p1440) target = $region40
    $region39: #{reid_forward.6} parent=5 // pred_region
      %s1443 = ssub.s32 %s9, 2
      // Predicated region
      $region41: #{reid_forward.6} parent=39 // pred_check
        %p1444 = pneg %p106
      $region42: #{reid_forward.6} parent=39 // pred_check_branch
        %1446 = sbr.rel (%p1444) target = $region44
      $region43: #{reid_forward.6} parent=39 // pred_region
        %s1447 = smul.u32 128, %s15
        %p1448 = scmp.lt.s32.totalorder %s1447, 639
        %s1449 = scalar_select %p1448, %s1447, 639
        %s1450 = smul.addr %s1449, 8
        %s1451 = scalar_lea.vmem %s3, %s1450
      $region44: #{reid_forward.6} parent=39 // pred_fallthru
        _
    $region40: #{reid_forward.6} parent=5 // pred_fallthru
      _
  $region6: #{reid_forward.6} parent=0 // loop_footer
    %s13 = sadd.s32 1, %s9
  $region7: #{reid_forward.6} parent=0 // loop_footer_branch
    %8 = sbr.rel target = $region3
  $region8: #{reid_forward.6} parent=0 // loop_exit
    _

// kernel: reid_forward.7
$region0: #{reid_forward.7}
  #allocation0 [shape = 'u32[]', space=smem, size = 0x4, offset = 0x4, fixed_abs, tag = 'smem constant byte address 0x4 - core index']
  #allocation1 [shape = 'u32[72,128]{1,0:T(1,128)}', space=vmem, size = 0x9000, scoped, tag = 'internal scratch']
  %s0 = inlined_call_operand.vmem [shape: bf16[1280,512], index: 0, kind: input, shape index: {}]
  %s1 = inlined_call_operand.vmem [shape: bf16[512,64], index: 1, kind: input, shape index: {}]
  %s2 = inlined_call_operand.vmem [shape: f32[1,64], index: 2, kind: input, shape index: {}]
  %s3 = inlined_call_operand.vmem [shape: f32[1280,64], index: 3, kind: output, shape index: {}]
  %s4 = sld [smem:[#allocation0]]
  $region45: #{reid_forward.7} parent=0
    _
  %s6 = ssub.s32 1, %s4
  %s7 = scalar_select 0, %s6, %s4
  loop: start=0, step=1, limit=7
  $region2: #{reid_forward.7} parent=0 // loop_pre_header
    _
  $region3: #{reid_forward.7} parent=0 // loop_header
    %s9 = sphi 0, %s13
    %p10 = scmp.ge.s32.totalorder %s9, 7
    %s19 = sphi 0, %s21
    %s22 = sphi 0, %s19
    %s23 = sphi 0, %s22
    %s39 = sphi 0, %s23
    %s43 = sphi 0, %s43
    %s45 = sphi 0, %s43
    %s46 = sphi 0, %s45
    %s60 = sphi 0, %s46
    %s64 = sphi 0, %s64
    %s66 = sphi 0, %s64
    %s67 = sphi 0, %s66
    %s81 = sphi 0, %s67
    %s87 = sphi 0, %s89
    %s90 = sphi 0, %s87
    %s91 = sphi 0, %s90
    %s107 = sphi 0, %s91
  $region4: #{reid_forward.7} parent=0 // loop_header_branch
    %12 = sbr.rel (%p10) target = $region8
  $region5: #{reid_forward.7} parent=0 // loop_body
    %s14 = ssub.s32 %s9, 1
    %s15 = ssub.s32 %s9, 2
    %s16 = sadd.s32 %s9, 1
    %s17 = ssub.s32 %s9, %s16
    %p18 = scmp.eq.s32.totalorder %s17, 0
    %s20 = sadd.s32 %s19, 1
    %s21 = scalar_select %p18, %s19, %s20
    %p24 = pneg %p18
    %p25 = scmp.eq.s32.totalorder %s9, 4
    %p26 = por %p24, %p25
    %p27 = scmp.ne.s32.totalorder %s19, %s22
    %p28 = scmp.eq.s32.totalorder %s9, 0
    %p29 = por %p27, %p28
    %p30 = scmp.ne.s32.totalorder %s19, %s22
    %p31 = scmp.eq.s32.totalorder %s14, 4
    %p32 = por %p30, %p31
    %p33 = scmp.ne.s32.totalorder %s22, %s23
    %p34 = scmp.eq.s32.totalorder %s14, 0
    %p35 = por %p33, %p34
    %p36 = scmp.ne.s32.totalorder %s22, %s23
    %p37 = scmp.eq.s32.totalorder %s15, 4
    %p38 = por %p36, %p37
    %p40 = scmp.ne.s32.totalorder %s23, %s39
    %p41 = scmp.eq.s32.totalorder %s15, 0
    %p42 = por %p40, %p41
    %s44 = sadd.s32 %s43, 1
    %p47 = scmp.eq.s32.totalorder %s9, 4
    %p48 = scmp.ne.s32.totalorder %s43, %s45
    %p49 = scmp.eq.s32.totalorder %s9, 0
    %p50 = por %p48, %p49
    %p51 = scmp.ne.s32.totalorder %s43, %s45
    %p52 = scmp.eq.s32.totalorder %s14, 4
    %p53 = por %p51, %p52
    %p54 = scmp.ne.s32.totalorder %s45, %s46
    %p55 = scmp.eq.s32.totalorder %s14, 0
    %p56 = por %p54, %p55
    %p57 = scmp.ne.s32.totalorder %s45, %s46
    %p58 = scmp.eq.s32.totalorder %s15, 4
    %p59 = por %p57, %p58
    %p61 = scmp.ne.s32.totalorder %s46, %s60
    %p62 = scmp.eq.s32.totalorder %s15, 0
    %p63 = por %p61, %p62
    %s65 = sadd.s32 %s64, 1
    %p68 = scmp.eq.s32.totalorder %s9, 4
    %p69 = scmp.ne.s32.totalorder %s64, %s66
    %p70 = scmp.eq.s32.totalorder %s9, 0
    %p71 = por %p69, %p70
    %p72 = scmp.ne.s32.totalorder %s64, %s66
    %p73 = scmp.eq.s32.totalorder %s14, 4
    %p74 = por %p72, %p73
    %p75 = scmp.ne.s32.totalorder %s66, %s67
    %p76 = scmp.eq.s32.totalorder %s14, 0
    %p77 = por %p75, %p76
    %p78 = scmp.ne.s32.totalorder %s66, %s67
    %p79 = scmp.eq.s32.totalorder %s15, 4
    %p80 = por %p78, %p79
    %p82 = scmp.ne.s32.totalorder %s67, %s81
    %p83 = scmp.eq.s32.totalorder %s15, 0
    %p84 = por %p82, %p83
    %s85 = ssub.s32 %s9, %s16
    %p86 = scmp.eq.s32.totalorder %s85, 0
    %s88 = sadd.s32 %s87, 1
    %s89 = scalar_select %p86, %s87, %s88
    %p92 = pneg %p86
    %p93 = scmp.eq.s32.totalorder %s9, 4
    %p94 = por %p92, %p93
    %p95 = scmp.ne.s32.totalorder %s87, %s90
    %p96 = scmp.eq.s32.totalorder %s9, 0
    %p97 = por %p95, %p96
    %p98 = scmp.ne.s32.totalorder %s87, %s90
    %p99 = scmp.eq.s32.totalorder %s14, 4
    %p100 = por %p98, %p99
    %p101 = scmp.ne.s32.totalorder %s90, %s91
    %p102 = scmp.eq.s32.totalorder %s14, 0
    %p103 = por %p101, %p102
    %p104 = scmp.ne.s32.totalorder %s90, %s91
    %p105 = scmp.eq.s32.totalorder %s15, 4
    %p106 = por %p104, %p105
    %p108 = scmp.ne.s32.totalorder %s91, %s107
    %p109 = scmp.eq.s32.totalorder %s15, 0
    %p110 = por %p108, %p109
    %p111 = scmp.le.s32.totalorder 1, %s9
    %p112 = scmp.lt.s32.totalorder %s9, 6
    %p113 = pnand %p111, %p112
    %p114 = pneg %p113
    // Predicated region
    $region9: #{reid_forward.7} parent=5 // pred_check
      _
    $region10: #{reid_forward.7} parent=5 // pred_check_branch
      %116 = sbr.rel (%p113) target = $region12
    $region11: #{reid_forward.7} parent=5 // pred_region
      %s117 = ssub.s32 %s9, 1
      // Predicated region
      $region13: #{reid_forward.7} parent=11 // pred_check
        %p118 = pneg %p56
      $region14: #{reid_forward.7} parent=11 // pred_check_branch
        %120 = sbr.rel (%p118) target = $region16
      $region15: #{reid_forward.7} parent=11 // pred_region
        _
      $region16: #{reid_forward.7} parent=11 // pred_fallthru
        _
      // Predicated region
      $region17: #{reid_forward.7} parent=11 // pred_check
        %p121 = pneg %p77
      $region18: #{reid_forward.7} parent=11 // pred_check_branch
        %123 = sbr.rel (%p121) target = $region20
      $region19: #{reid_forward.7} parent=11 // pred_region
        _
      $region20: #{reid_forward.7} parent=11 // pred_fallthru
        _
    $region12: #{reid_forward.7} parent=5 // pred_fallthru
      _
    %p124 = scmp.lt.s32.totalorder %s9, 5
    // Predicated region
    $region21: #{reid_forward.7} parent=5 // pred_check
      %p125 = pneg %p124
    $region22: #{reid_forward.7} parent=5 // pred_check_branch
      %127 = sbr.rel (%p125) target = $region24
    $region23: #{reid_forward.7} parent=5 // pred_region
      // Predicated region
      $region25: #{reid_forward.7} parent=23 // pred_check
        %p128 = pneg %p29
      $region26: #{reid_forward.7} parent=23 // pred_check_branch
        %130 = sbr.rel (%p128) target = $region28
      $region27: #{reid_forward.7} parent=23 // pred_region
        %s131 = smul.u32 32, %s9
        %p132 = scmp.lt.s32.totalorder %s131, 159
        %s133 = scalar_select %p132, %s131, 159
        %s134 = smul.addr %s133, 4
        %s135 = smul.addr %s134, 4
        %s136 = scalar_lea.vmem %s0, %s135
        %s137 = smul.u32 32, %s9
      $region28: #{reid_forward.7} parent=23 // pred_fallthru
        _
    $region24: #{reid_forward.7} parent=5 // pred_fallthru
      _
    %p138 = scmp.le.s32.totalorder 1, %s9
    %p139 = scmp.lt.s32.totalorder %s9, 6
    %p140 = pnand %p138, %p139
    %p141 = pneg %p140
    // Predicated region
    $region29: #{reid_forward.7} parent=5 // pred_check
      _
    $region30: #{reid_forward.7} parent=5 // pred_check_branch
      %143 = sbr.rel (%p140) target = $region32
    $region31: #{reid_forward.7} parent=5 // pred_region
      %s144 = ssub.s32 %s9, 1
      %s145 = smul.u32 32, %s14
      %p146 = scmp.lt.s32.totalorder %s145, 159
      %s147 = scalar_select %p146, %s145, 159
      %s148 = smul.addr %s147, 4
      %s149 = smul.addr %s148, 4
      %s150 = scalar_lea.vmem %s0, %s149
      %p151 = pneg %p35
      %p152 = pneg %p32
      %p153 = pneg %p56
      %p154 = pneg %p53
      %p155 = pneg %p77
      %p156 = pneg %p74
      %p157 = pneg %p103
      %p158 = pneg %p100
      %s159 = smul.u32 32, %s14
      %p160 = scmp.lt.s32.totalorder %s159, 159
      %s161 = scalar_select %p160, %s159, 159
      %s162 = smul.addr %s161, 8
      %s163 = scalar_lea.vmem %s3, %s162
      %s164 = smul.u32 32, %s14
      %p165 = scmp.lt.s32.totalorder %s164, 159
      %s166 = scalar_select %p165, %s164, 159
      %s167 = smul.addr %s166, 4
      %s168 = smul.addr %s167, 4
      %s169 = scalar_lea.vmem %s0, %s168
      %s170 = smul.u32 32, %s14
      %s171 = smul.u32 32, %s14
      %p172 = scmp.lt.s32.totalorder %s171, 159
      %s173 = scalar_select %p172, %s171, 159
      %s174 = smul.addr %s173, 8
      %s175 = scalar_lea.vmem %s3, %s174
      %s176 = smul.u32 32, %s14
      %v177 = vld [vmem:[%s169] sm:$0xff]
      %v178 = vld [vmem:[%s169 + $0x8] sm:$0xff]
      %v179 = vld [vmem:[%s169 + $0x10] sm:$0xff]
      %v180 = vld [vmem:[%s169 + $0x18] sm:$0xff]
      %v181 = vld [vmem:[%s169 + $0x20] sm:$0xff]
      %v182 = vld [vmem:[%s169 + $0x28] sm:$0xff]
      %v183 = vld [vmem:[%s169 + $0x30] sm:$0xff]
      %v184 = vld [vmem:[%s169 + $0x38] sm:$0xff]
      %v185 = vld [vmem:[%s169 + $0x40] sm:$0xff]
      %v186 = vld [vmem:[%s169 + $0x48] sm:$0xff]
      %v187 = vld [vmem:[%s169 + $0x50] sm:$0xff]
      %v188 = vld [vmem:[%s169 + $0x58] sm:$0xff]
      %v189 = vld [vmem:[%s169 + $0x60] sm:$0xff]
      %v190 = vld [vmem:[%s169 + $0x68] sm:$0xff]
      %v191 = vld [vmem:[%s169 + $0x70] sm:$0xff]
      %v192 = vld [vmem:[%s169 + $0x78] sm:$0xff]
      %v193 = vld [vmem:[%s169 + $0x80] sm:$0xff]
      %v194 = vld [vmem:[%s169 + $0x88] sm:$0xff]
      %v195 = vld [vmem:[%s169 + $0x90] sm:$0xff]
      %v196 = vld [vmem:[%s169 + $0x98] sm:$0xff]
      %v197 = vld [vmem:[%s169 + $0xa0] sm:$0xff]
      %v198 = vld [vmem:[%s169 + $0xa8] sm:$0xff]
      %v199 = vld [vmem:[%s169 + $0xb0] sm:$0xff]
      %v200 = vld [vmem:[%s169 + $0xb8] sm:$0xff]
      %v201 = vld [vmem:[%s169 + $0xc0] sm:$0xff]
      %v202 = vld [vmem:[%s169 + $0xc8] sm:$0xff]
      %v203 = vld [vmem:[%s169 + $0xd0] sm:$0xff]
      %v204 = vld [vmem:[%s169 + $0xd8] sm:$0xff]
      %v205 = vld [vmem:[%s169 + $0xe0] sm:$0xff]
      %v206 = vld [vmem:[%s169 + $0xe8] sm:$0xff]
      %v207 = vld [vmem:[%s169 + $0xf0] sm:$0xff]
      %v208 = vld [vmem:[%s169 + $0xf8] sm:$0xff]
      %v209 = vld [vmem:[%s169 + $0x100] sm:$0xff]
      %v210 = vld [vmem:[%s169 + $0x108] sm:$0xff]
      %v211 = vld [vmem:[%s169 + $0x110] sm:$0xff]
      %v212 = vld [vmem:[%s169 + $0x118] sm:$0xff]
      %v213 = vld [vmem:[%s169 + $0x120] sm:$0xff]
      %v214 = vld [vmem:[%s169 + $0x128] sm:$0xff]
      %v215 = vld [vmem:[%s169 + $0x130] sm:$0xff]
      %v216 = vld [vmem:[%s169 + $0x138] sm:$0xff]
      %v217 = vld [vmem:[%s169 + $0x140] sm:$0xff]
      %v218 = vld [vmem:[%s169 + $0x148] sm:$0xff]
      %v219 = vld [vmem:[%s169 + $0x150] sm:$0xff]
      %v220 = vld [vmem:[%s169 + $0x158] sm:$0xff]
      %v221 = vld [vmem:[%s169 + $0x160] sm:$0xff]
      %v222 = vld [vmem:[%s169 + $0x168] sm:$0xff]
      %v223 = vld [vmem:[%s169 + $0x170] sm:$0xff]
      %v224 = vld [vmem:[%s169 + $0x178] sm:$0xff]
      %v225 = vld [vmem:[%s169 + $0x180] sm:$0xff]
      %v226 = vld [vmem:[%s169 + $0x188] sm:$0xff]
      %v227 = vld [vmem:[%s169 + $0x190] sm:$0xff]
      %v228 = vld [vmem:[%s169 + $0x198] sm:$0xff]
      %v229 = vld [vmem:[%s169 + $0x1a0] sm:$0xff]
      %v230 = vld [vmem:[%s169 + $0x1a8] sm:$0xff]
      %v231 = vld [vmem:[%s169 + $0x1b0] sm:$0xff]
      %v232 = vld [vmem:[%s169 + $0x1b8] sm:$0xff]
      %v233 = vld [vmem:[%s169 + $0x1c0] sm:$0xff]
      %v234 = vld [vmem:[%s169 + $0x1c8] sm:$0xff]
      %v235 = vld [vmem:[%s169 + $0x1d0] sm:$0xff]
      %v236 = vld [vmem:[%s169 + $0x1d8] sm:$0xff]
      %v237 = vld [vmem:[%s169 + $0x1e0] sm:$0xff]
      %v238 = vld [vmem:[%s169 + $0x1e8] sm:$0xff]
      %v239 = vld [vmem:[%s169 + $0x1f0] sm:$0xff]
      %v240 = vld [vmem:[%s169 + $0x1f8] sm:$0xff]
      %v241 = vld [vmem:[%s1] sm:$0xf]
      %v242 = vld [vmem:[%s1 + $0x4] sm:$0xf]
      %v243 = vld [vmem:[%s1 + $0x8] sm:$0xf]
      %v244 = vld [vmem:[%s1 + $0xc] sm:$0xf]
      %v245 = vld [vmem:[%s1 + $0x10] sm:$0xf]
      %v246 = vld [vmem:[%s1 + $0x14] sm:$0xf]
      %v247 = vld [vmem:[%s1 + $0x18] sm:$0xf]
      %v248 = vld [vmem:[%s1 + $0x1c] sm:$0xf]
      %v249 = vld [vmem:[%s1 + $0x20] sm:$0xf]
      %v250 = vld [vmem:[%s1 + $0x24] sm:$0xf]
      %v251 = vld [vmem:[%s1 + $0x28] sm:$0xf]
      %v252 = vld [vmem:[%s1 + $0x2c] sm:$0xf]
      %v253 = vld [vmem:[%s1 + $0x30] sm:$0xf]
      %v254 = vld [vmem:[%s1 + $0x34] sm:$0xf]
      %v255 = vld [vmem:[%s1 + $0x38] sm:$0xf]
      %v256 = vld [vmem:[%s1 + $0x3c] sm:$0xf]
      %v257 = vld [vmem:[%s1 + $0x40] sm:$0xf]
      %v258 = vld [vmem:[%s1 + $0x44] sm:$0xf]
      %v259 = vld [vmem:[%s1 + $0x48] sm:$0xf]
      %v260 = vld [vmem:[%s1 + $0x4c] sm:$0xf]
      %v261 = vld [vmem:[%s1 + $0x50] sm:$0xf]
      %v262 = vld [vmem:[%s1 + $0x54] sm:$0xf]
      %v263 = vld [vmem:[%s1 + $0x58] sm:$0xf]
      %v264 = vld [vmem:[%s1 + $0x5c] sm:$0xf]
      %v265 = vld [vmem:[%s1 + $0x60] sm:$0xf]
      %v266 = vld [vmem:[%s1 + $0x64] sm:$0xf]
      %v267 = vld [vmem:[%s1 + $0x68] sm:$0xf]
      %v268 = vld [vmem:[%s1 + $0x6c] sm:$0xf]
      %v269 = vld [vmem:[%s1 + $0x70] sm:$0xf]
      %v270 = vld [vmem:[%s1 + $0x74] sm:$0xf]
      %v271 = vld [vmem:[%s1 + $0x78] sm:$0xf]
      %v272 = vld [vmem:[%s1 + $0x7c] sm:$0xf]
      %v273 = vld [vmem:[%s1 + $0x80] sm:$0xf]
      %v274 = vld [vmem:[%s1 + $0x84] sm:$0xf]
      %v275 = vld [vmem:[%s1 + $0x88] sm:$0xf]
      %v276 = vld [vmem:[%s1 + $0x8c] sm:$0xf]
      %v277 = vld [vmem:[%s1 + $0x90] sm:$0xf]
      %v278 = vld [vmem:[%s1 + $0x94] sm:$0xf]
      %v279 = vld [vmem:[%s1 + $0x98] sm:$0xf]
      %v280 = vld [vmem:[%s1 + $0x9c] sm:$0xf]
      %v281 = vld [vmem:[%s1 + $0xa0] sm:$0xf]
      %v282 = vld [vmem:[%s1 + $0xa4] sm:$0xf]
      %v283 = vld [vmem:[%s1 + $0xa8] sm:$0xf]
      %v284 = vld [vmem:[%s1 + $0xac] sm:$0xf]
      %v285 = vld [vmem:[%s1 + $0xb0] sm:$0xf]
      %v286 = vld [vmem:[%s1 + $0xb4] sm:$0xf]
      %v287 = vld [vmem:[%s1 + $0xb8] sm:$0xf]
      %v288 = vld [vmem:[%s1 + $0xbc] sm:$0xf]
      %v289 = vld [vmem:[%s1 + $0xc0] sm:$0xf]
      %v290 = vld [vmem:[%s1 + $0xc4] sm:$0xf]
      %v291 = vld [vmem:[%s1 + $0xc8] sm:$0xf]
      %v292 = vld [vmem:[%s1 + $0xcc] sm:$0xf]
      %v293 = vld [vmem:[%s1 + $0xd0] sm:$0xf]
      %v294 = vld [vmem:[%s1 + $0xd4] sm:$0xf]
      %v295 = vld [vmem:[%s1 + $0xd8] sm:$0xf]
      %v296 = vld [vmem:[%s1 + $0xdc] sm:$0xf]
      %v297 = vld [vmem:[%s1 + $0xe0] sm:$0xf]
      %v298 = vld [vmem:[%s1 + $0xe4] sm:$0xf]
      %v299 = vld [vmem:[%s1 + $0xe8] sm:$0xf]
      %v300 = vld [vmem:[%s1 + $0xec] sm:$0xf]
      %v301 = vld [vmem:[%s1 + $0xf0] sm:$0xf]
      %v302 = vld [vmem:[%s1 + $0xf4] sm:$0xf]
      %v303 = vld [vmem:[%s1 + $0xf8] sm:$0xf]
      %v304 = vld [vmem:[%s1 + $0xfc] sm:$0xf]
      %v305 = vld [vmem:[%s2] sm:$0x1]
      %v307 = vperm.slane %v305, 0
      %v373 = vunpack.c.l.b16 %v177
      %v374 = vunpack.c.h.b16 %v177
      %v375 = vunpack.c.l.b16 %v178
      %v376 = vunpack.c.h.b16 %v178
      %v377 = vunpack.c.l.b16 %v179
      %v378 = vunpack.c.h.b16 %v179
      %v379 = vunpack.c.l.b16 %v180
      %v380 = vunpack.c.h.b16 %v180
      %v381 = vunpack.c.l.b16 %v181
      %v382 = vunpack.c.h.b16 %v181
      %v383 = vunpack.c.l.b16 %v182
      %v384 = vunpack.c.h.b16 %v182
      %v385 = vunpack.c.l.b16 %v183
      %v386 = vunpack.c.h.b16 %v183
      %v387 = vunpack.c.l.b16 %v184
      %v388 = vunpack.c.h.b16 %v184
      %v389 = vunpack.c.l.b16 %v185
      %v390 = vunpack.c.h.b16 %v185
      %v391 = vunpack.c.l.b16 %v186
      %v392 = vunpack.c.h.b16 %v186
      %v393 = vunpack.c.l.b16 %v187
      %v394 = vunpack.c.h.b16 %v187
      %v395 = vunpack.c.l.b16 %v188
      %v396 = vunpack.c.h.b16 %v188
      %v397 = vunpack.c.l.b16 %v189
      %v398 = vunpack.c.h.b16 %v189
      %v399 = vunpack.c.l.b16 %v190
      %v400 = vunpack.c.h.b16 %v190
      %v401 = vunpack.c.l.b16 %v191
      %v402 = vunpack.c.h.b16 %v191
      %v403 = vunpack.c.l.b16 %v192
      %v404 = vunpack.c.h.b16 %v192
      %v405 = vunpack.c.l.b16 %v193
      %v406 = vunpack.c.h.b16 %v193
      %v407 = vunpack.c.l.b16 %v194
      %v408 = vunpack.c.h.b16 %v194
      %v409 = vunpack.c.l.b16 %v195
      %v410 = vunpack.c.h.b16 %v195
      %v411 = vunpack.c.l.b16 %v196
      %v412 = vunpack.c.h.b16 %v196
      %v413 = vunpack.c.l.b16 %v197
      %v414 = vunpack.c.h.b16 %v197
      %v415 = vunpack.c.l.b16 %v198
      %v416 = vunpack.c.h.b16 %v198
      %v417 = vunpack.c.l.b16 %v199
      %v418 = vunpack.c.h.b16 %v199
      %v419 = vunpack.c.l.b16 %v200
      %v420 = vunpack.c.h.b16 %v200
      %v421 = vunpack.c.l.b16 %v201
      %v422 = vunpack.c.h.b16 %v201
      %v423 = vunpack.c.l.b16 %v202
      %v424 = vunpack.c.h.b16 %v202
      %v425 = vunpack.c.l.b16 %v203
      %v426 = vunpack.c.h.b16 %v203
      %v427 = vunpack.c.l.b16 %v204
      %v428 = vunpack.c.h.b16 %v204
      %v429 = vunpack.c.l.b16 %v205
      %v430 = vunpack.c.h.b16 %v205
      %v431 = vunpack.c.l.b16 %v206
      %v432 = vunpack.c.h.b16 %v206
      %v433 = vunpack.c.l.b16 %v207
      %v434 = vunpack.c.h.b16 %v207
      %v435 = vunpack.c.l.b16 %v208
      %v436 = vunpack.c.h.b16 %v208
      %v437 = vunpack.c.l.b16 %v209
      %v438 = vunpack.c.h.b16 %v209
      %v439 = vunpack.c.l.b16 %v210
      %v440 = vunpack.c.h.b16 %v210
      %v441 = vunpack.c.l.b16 %v211
      %v442 = vunpack.c.h.b16 %v211
      %v443 = vunpack.c.l.b16 %v212
      %v444 = vunpack.c.h.b16 %v212
      %v445 = vunpack.c.l.b16 %v213
      %v446 = vunpack.c.h.b16 %v213
      %v447 = vunpack.c.l.b16 %v214
      %v448 = vunpack.c.h.b16 %v214
      %v449 = vunpack.c.l.b16 %v215
      %v450 = vunpack.c.h.b16 %v215
      %v451 = vunpack.c.l.b16 %v216
      %v452 = vunpack.c.h.b16 %v216
      %v453 = vunpack.c.l.b16 %v217
      %v454 = vunpack.c.h.b16 %v217
      %v455 = vunpack.c.l.b16 %v218
      %v456 = vunpack.c.h.b16 %v218
      %v457 = vunpack.c.l.b16 %v219
      %v458 = vunpack.c.h.b16 %v219
      %v459 = vunpack.c.l.b16 %v220
      %v460 = vunpack.c.h.b16 %v220
      %v461 = vunpack.c.l.b16 %v221
      %v462 = vunpack.c.h.b16 %v221
      %v463 = vunpack.c.l.b16 %v222
      %v464 = vunpack.c.h.b16 %v222
      %v465 = vunpack.c.l.b16 %v223
      %v466 = vunpack.c.h.b16 %v223
      %v467 = vunpack.c.l.b16 %v224
      %v468 = vunpack.c.h.b16 %v224
      %v469 = vunpack.c.l.b16 %v225
      %v470 = vunpack.c.h.b16 %v225
      %v471 = vunpack.c.l.b16 %v226
      %v472 = vunpack.c.h.b16 %v226
      %v473 = vunpack.c.l.b16 %v227
      %v474 = vunpack.c.h.b16 %v227
      %v475 = vunpack.c.l.b16 %v228
      %v476 = vunpack.c.h.b16 %v228
      %v477 = vunpack.c.l.b16 %v229
      %v478 = vunpack.c.h.b16 %v229
      %v479 = vunpack.c.l.b16 %v230
      %v480 = vunpack.c.h.b16 %v230
      %v481 = vunpack.c.l.b16 %v231
      %v482 = vunpack.c.h.b16 %v231
      %v483 = vunpack.c.l.b16 %v232
      %v484 = vunpack.c.h.b16 %v232
      %v485 = vunpack.c.l.b16 %v233
      %v486 = vunpack.c.h.b16 %v233
      %v487 = vunpack.c.l.b16 %v234
      %v488 = vunpack.c.h.b16 %v234
      %v489 = vunpack.c.l.b16 %v235
      %v490 = vunpack.c.h.b16 %v235
      %v491 = vunpack.c.l.b16 %v236
      %v492 = vunpack.c.h.b16 %v236
      %v493 = vunpack.c.l.b16 %v237
      %v494 = vunpack.c.h.b16 %v237
      %v495 = vunpack.c.l.b16 %v238
      %v496 = vunpack.c.h.b16 %v238
      %v497 = vunpack.c.l.b16 %v239
      %v498 = vunpack.c.h.b16 %v239
      %v499 = vunpack.c.l.b16 %v240
      %v500 = vunpack.c.h.b16 %v240
      %v501 = vpack.c.b16 %v377, %v373
      %v502 = vpack.c.b16 %v378, %v374
      %v503 = vpack.c.b16 %v379, %v375
      %v504 = vpack.c.b16 %v380, %v376
      %v505 = vpack.c.b16 %v385, %v381
      %v506 = vpack.c.b16 %v386, %v382
      %v507 = vpack.c.b16 %v387, %v383
      %v508 = vpack.c.b16 %v388, %v384
      %v509 = vpack.c.b16 %v393, %v389
      %v510 = vpack.c.b16 %v394, %v390
      %v511 = vpack.c.b16 %v395, %v391
      %v512 = vpack.c.b16 %v396, %v392
      %v513 = vpack.c.b16 %v401, %v397
      %v514 = vpack.c.b16 %v402, %v398
      %v515 = vpack.c.b16 %v403, %v399
      %v516 = vpack.c.b16 %v404, %v400
      %v517 = vpack.c.b16 %v409, %v405
      %v518 = vpack.c.b16 %v410, %v406
      %v519 = vpack.c.b16 %v411, %v407
      %v520 = vpack.c.b16 %v412, %v408
      %v521 = vpack.c.b16 %v417, %v413
      %v522 = vpack.c.b16 %v418, %v414
      %v523 = vpack.c.b16 %v419, %v415
      %v524 = vpack.c.b16 %v420, %v416
      %v525 = vpack.c.b16 %v425, %v421
      %v526 = vpack.c.b16 %v426, %v422
      %v527 = vpack.c.b16 %v427, %v423
      %v528 = vpack.c.b16 %v428, %v424
      %v529 = vpack.c.b16 %v433, %v429
      %v530 = vpack.c.b16 %v434, %v430
      %v531 = vpack.c.b16 %v435, %v431
      %v532 = vpack.c.b16 %v436, %v432
      %v533 = vpack.c.b16 %v441, %v437
      %v534 = vpack.c.b16 %v442, %v438
      %v535 = vpack.c.b16 %v443, %v439
      %v536 = vpack.c.b16 %v444, %v440
      %v537 = vpack.c.b16 %v449, %v445
      %v538 = vpack.c.b16 %v450, %v446
      %v539 = vpack.c.b16 %v451, %v447
      %v540 = vpack.c.b16 %v452, %v448
      %v541 = vpack.c.b16 %v457, %v453
      %v542 = vpack.c.b16 %v458, %v454
      %v543 = vpack.c.b16 %v459, %v455
      %v544 = vpack.c.b16 %v460, %v456
      %v545 = vpack.c.b16 %v465, %v461
      %v546 = vpack.c.b16 %v466, %v462
      %v547 = vpack.c.b16 %v467, %v463
      %v548 = vpack.c.b16 %v468, %v464
      %v549 = vpack.c.b16 %v473, %v469
      %v550 = vpack.c.b16 %v474, %v470
      %v551 = vpack.c.b16 %v475, %v471
      %v552 = vpack.c.b16 %v476, %v472
      %v553 = vpack.c.b16 %v481, %v477
      %v554 = vpack.c.b16 %v482, %v478
      %v555 = vpack.c.b16 %v483, %v479
      %v556 = vpack.c.b16 %v484, %v480
      %v557 = vpack.c.b16 %v489, %v485
      %v558 = vpack.c.b16 %v490, %v486
      %v559 = vpack.c.b16 %v491, %v487
      %v560 = vpack.c.b16 %v492, %v488
      %v561 = vpack.c.b16 %v497, %v493
      %v562 = vpack.c.b16 %v498, %v494
      %v563 = vpack.c.b16 %v499, %v495
      %v564 = vpack.c.b16 %v500, %v496
      %v693 = vunpack.c.l.b16 %v241
      %v694 = vunpack.c.l.b16 %v242
      %v695 = vunpack.c.l.b16 %v243
      %v696 = vunpack.c.l.b16 %v244
      %v697 = vunpack.c.l.b16 %v245
      %v698 = vunpack.c.l.b16 %v246
      %v699 = vunpack.c.l.b16 %v247
      %v700 = vunpack.c.l.b16 %v248
      %v701 = vunpack.c.l.b16 %v249
      %v702 = vunpack.c.l.b16 %v250
      %v703 = vunpack.c.l.b16 %v251
      %v704 = vunpack.c.l.b16 %v252
      %v705 = vunpack.c.l.b16 %v253
      %v706 = vunpack.c.l.b16 %v254
      %v707 = vunpack.c.l.b16 %v255
      %v708 = vunpack.c.l.b16 %v256
      %v709 = vunpack.c.l.b16 %v257
      %v710 = vunpack.c.l.b16 %v258
      %v711 = vunpack.c.l.b16 %v259
      %v712 = vunpack.c.l.b16 %v260
      %v713 = vunpack.c.l.b16 %v261
      %v714 = vunpack.c.l.b16 %v262
      %v715 = vunpack.c.l.b16 %v263
      %v716 = vunpack.c.l.b16 %v264
      %v717 = vunpack.c.l.b16 %v265
      %v718 = vunpack.c.l.b16 %v266
      %v719 = vunpack.c.l.b16 %v267
      %v720 = vunpack.c.l.b16 %v268
      %v721 = vunpack.c.l.b16 %v269
      %v722 = vunpack.c.l.b16 %v270
      %v723 = vunpack.c.l.b16 %v271
      %v724 = vunpack.c.l.b16 %v272
      %v725 = vunpack.c.l.b16 %v273
      %v726 = vunpack.c.l.b16 %v274
      %v727 = vunpack.c.l.b16 %v275
      %v728 = vunpack.c.l.b16 %v276
      %v729 = vunpack.c.l.b16 %v277
      %v730 = vunpack.c.l.b16 %v278
      %v731 = vunpack.c.l.b16 %v279
      %v732 = vunpack.c.l.b16 %v280
      %v733 = vunpack.c.l.b16 %v281
      %v734 = vunpack.c.l.b16 %v282
      %v735 = vunpack.c.l.b16 %v283
      %v736 = vunpack.c.l.b16 %v284
      %v737 = vunpack.c.l.b16 %v285
      %v738 = vunpack.c.l.b16 %v286
      %v739 = vunpack.c.l.b16 %v287
      %v740 = vunpack.c.l.b16 %v288
      %v741 = vunpack.c.l.b16 %v289
      %v742 = vunpack.c.l.b16 %v290
      %v743 = vunpack.c.l.b16 %v291
      %v744 = vunpack.c.l.b16 %v292
      %v745 = vunpack.c.l.b16 %v293
      %v746 = vunpack.c.l.b16 %v294
      %v747 = vunpack.c.l.b16 %v295
      %v748 = vunpack.c.l.b16 %v296
      %v749 = vunpack.c.l.b16 %v297
      %v750 = vunpack.c.l.b16 %v298
      %v751 = vunpack.c.l.b16 %v299
      %v752 = vunpack.c.l.b16 %v300
      %v753 = vunpack.c.l.b16 %v301
      %v754 = vunpack.c.l.b16 %v302
      %v755 = vunpack.c.l.b16 %v303
      %v756 = vunpack.c.l.b16 %v304
      %v757 = vpack.c.b16 %v694, %v693
      %v758 = vpack.c.b16 %v696, %v695
      %v759 = vpack.c.b16 %v698, %v697
      %v760 = vpack.c.b16 %v700, %v699
      %v761 = vpack.c.b16 %v702, %v701
      %v762 = vpack.c.b16 %v704, %v703
      %v763 = vpack.c.b16 %v706, %v705
      %v764 = vpack.c.b16 %v708, %v707
      %v765 = vpack.c.b16 %v710, %v709
      %v766 = vpack.c.b16 %v712, %v711
      %v767 = vpack.c.b16 %v714, %v713
      %v768 = vpack.c.b16 %v716, %v715
      %v769 = vpack.c.b16 %v718, %v717
      %v770 = vpack.c.b16 %v720, %v719
      %v771 = vpack.c.b16 %v722, %v721
      %v772 = vpack.c.b16 %v724, %v723
      %v773 = vpack.c.b16 %v726, %v725
      %v774 = vpack.c.b16 %v728, %v727
      %v775 = vpack.c.b16 %v730, %v729
      %v776 = vpack.c.b16 %v732, %v731
      %v777 = vpack.c.b16 %v734, %v733
      %v778 = vpack.c.b16 %v736, %v735
      %v779 = vpack.c.b16 %v738, %v737
      %v780 = vpack.c.b16 %v740, %v739
      %v781 = vpack.c.b16 %v742, %v741
      %v782 = vpack.c.b16 %v744, %v743
      %v783 = vpack.c.b16 %v746, %v745
      %v784 = vpack.c.b16 %v748, %v747
      %v785 = vpack.c.b16 %v750, %v749
      %v786 = vpack.c.b16 %v752, %v751
      %v787 = vpack.c.b16 %v754, %v753
      %v788 = vpack.c.b16 %v756, %v755
      %821 = vmatpush.bf16.msra.mxu0 %v764
      %822 = vmatpush.bf16.msra.mxu0 %v763
      %823 = vmatpush.bf16.msra.mxu0 %v762
      %824 = vmatpush.bf16.msra.mxu0 %v761
      %825 = vmatpush.bf16.msra.mxu0 %v760
      %826 = vmatpush.bf16.msra.mxu0 %v759
      %827 = vmatpush.bf16.msra.mxu0 %v758
      %828 = vmatpush.bf16.msra.mxu0 %v757
      %829 = vmatmul.bf16.gmra.mxu0 %v501
      %v830 = vpop.f32.mrf.mxu0
      %v831 = vadd.f32 %v307, %v830
      %v832 = vpop.f32.mrf.mxu0
      %v833 = vadd.f32 %v307, %v832
      %834 = vmatmul.bf16.gmra.mxu0 %v505
      %v835 = vpop.f32.mrf.mxu0
      %v836 = vadd.f32 %v307, %v835
      %v837 = vpop.f32.mrf.mxu0
      %v838 = vadd.f32 %v307, %v837
      %839 = vmatmul.bf16.gmra.mxu0 %v509
      %v840 = vpop.f32.mrf.mxu0
      %v841 = vadd.f32 %v307, %v840
      %v842 = vpop.f32.mrf.mxu0
      %v843 = vadd.f32 %v307, %v842
      %844 = vmatmul.bf16.gmra.mxu0 %v513
      %v845 = vpop.f32.mrf.mxu0
      %v846 = vadd.f32 %v307, %v845
      %v847 = vpop.f32.mrf.mxu0
      %v848 = vadd.f32 %v307, %v847
      %849 = vmatmul.bf16.gmra.mxu0 %v517
      %v850 = vpop.f32.mrf.mxu0
      %v851 = vadd.f32 %v307, %v850
      %v852 = vpop.f32.mrf.mxu0
      %v853 = vadd.f32 %v307, %v852
      %854 = vmatmul.bf16.gmra.mxu0 %v521
      %v855 = vpop.f32.mrf.mxu0
      %v856 = vadd.f32 %v307, %v855
      %v857 = vpop.f32.mrf.mxu0
      %v858 = vadd.f32 %v307, %v857
      %859 = vmatmul.bf16.gmra.mxu0 %v525
      %v860 = vpop.f32.mrf.mxu0
      %v861 = vadd.f32 %v307, %v860
      %v862 = vpop.f32.mrf.mxu0
      %v863 = vadd.f32 %v307, %v862
      %864 = vmatmul.bf16.gmra.mxu0 %v529
      %v865 = vpop.f32.mrf.mxu0
      %v866 = vadd.f32 %v307, %v865
      %v867 = vpop.f32.mrf.mxu0
      %v868 = vadd.f32 %v307, %v867
      %869 = vmatmul.bf16.gmra.mxu0 %v533
      %v870 = vpop.f32.mrf.mxu0
      %v871 = vadd.f32 %v307, %v870
      %v872 = vpop.f32.mrf.mxu0
      %v873 = vadd.f32 %v307, %v872
      %874 = vmatmul.bf16.gmra.mxu0 %v537
      %v875 = vpop.f32.mrf.mxu0
      %v876 = vadd.f32 %v307, %v875
      %v877 = vpop.f32.mrf.mxu0
      %v878 = vadd.f32 %v307, %v877
      %879 = vmatmul.bf16.gmra.mxu0 %v541
      %v880 = vpop.f32.mrf.mxu0
      %v881 = vadd.f32 %v307, %v880
      %v882 = vpop.f32.mrf.mxu0
      %v883 = vadd.f32 %v307, %v882
      %884 = vmatmul.bf16.gmra.mxu0 %v545
      %v885 = vpop.f32.mrf.mxu0
      %v886 = vadd.f32 %v307, %v885
      %v887 = vpop.f32.mrf.mxu0
      %v888 = vadd.f32 %v307, %v887
      %889 = vmatmul.bf16.gmra.mxu0 %v549
      %v890 = vpop.f32.mrf.mxu0
      %v891 = vadd.f32 %v307, %v890
      %v892 = vpop.f32.mrf.mxu0
      %v893 = vadd.f32 %v307, %v892
      %894 = vmatmul.bf16.gmra.mxu0 %v553
      %v895 = vpop.f32.mrf.mxu0
      %v896 = vadd.f32 %v307, %v895
      %v897 = vpop.f32.mrf.mxu0
      %v898 = vadd.f32 %v307, %v897
      %899 = vmatmul.bf16.gmra.mxu0 %v557
      %v900 = vpop.f32.mrf.mxu0
      %v901 = vadd.f32 %v307, %v900
      %v902 = vpop.f32.mrf.mxu0
      %v903 = vadd.f32 %v307, %v902
      %904 = vmatmul.bf16.gmra.mxu0 %v561
      %v905 = vpop.f32.mrf.mxu0
      %v906 = vadd.f32 %v307, %v905
      %v907 = vpop.f32.mrf.mxu0
      %v908 = vadd.f32 %v307, %v907
      %909 = vdwg.mxu0
      %910 = vmatpush.bf16.msra.mxu0 %v772
      %911 = vmatpush.bf16.msra.mxu0 %v771
      %912 = vmatpush.bf16.msra.mxu0 %v770
      %913 = vmatpush.bf16.msra.mxu0 %v769
      %914 = vmatpush.bf16.msra.mxu0 %v768
      %915 = vmatpush.bf16.msra.mxu0 %v767
      %916 = vmatpush.bf16.msra.mxu0 %v766
      %917 = vmatpush.bf16.msra.mxu0 %v765
      %918 = vmatmul.bf16.gmra.mxu0 %v502
      %v919 = vpop.f32.mrf.mxu0
      %v920 = vadd.f32 %v831, %v919
      %v921 = vpop.f32.mrf.mxu0
      %v922 = vadd.f32 %v833, %v921
      %923 = vmatmul.bf16.gmra.mxu0 %v506
      %v924 = vpop.f32.mrf.mxu0
      %v925 = vadd.f32 %v836, %v924
      %v926 = vpop.f32.mrf.mxu0
      %v927 = vadd.f32 %v838, %v926
      %928 = vmatmul.bf16.gmra.mxu0 %v510
      %v929 = vpop.f32.mrf.mxu0
      %v930 = vadd.f32 %v841, %v929
      %v931 = vpop.f32.mrf.mxu0
      %v932 = vadd.f32 %v843, %v931
      %933 = vmatmul.bf16.gmra.mxu0 %v514
      %v934 = vpop.f32.mrf.mxu0
      %v935 = vadd.f32 %v846, %v934
      %v936 = vpop.f32.mrf.mxu0
      %v937 = vadd.f32 %v848, %v936
      %938 = vmatmul.bf16.gmra.mxu0 %v518
      %v939 = vpop.f32.mrf.mxu0
      %v940 = vadd.f32 %v851, %v939
      %v941 = vpop.f32.mrf.mxu0
      %v942 = vadd.f32 %v853, %v941
      %943 = vmatmul.bf16.gmra.mxu0 %v522
      %v944 = vpop.f32.mrf.mxu0
      %v945 = vadd.f32 %v856, %v944
      %v946 = vpop.f32.mrf.mxu0
      %v947 = vadd.f32 %v858, %v946
      %948 = vmatmul.bf16.gmra.mxu0 %v526
      %v949 = vpop.f32.mrf.mxu0
      %v950 = vadd.f32 %v861, %v949
      %v951 = vpop.f32.mrf.mxu0
      %v952 = vadd.f32 %v863, %v951
      %953 = vmatmul.bf16.gmra.mxu0 %v530
      %v954 = vpop.f32.mrf.mxu0
      %v955 = vadd.f32 %v866, %v954
      %v956 = vpop.f32.mrf.mxu0
      %v957 = vadd.f32 %v868, %v956
      %958 = vmatmul.bf16.gmra.mxu0 %v534
      %v959 = vpop.f32.mrf.mxu0
      %v960 = vadd.f32 %v871, %v959
      %v961 = vpop.f32.mrf.mxu0
      %v962 = vadd.f32 %v873, %v961
      %963 = vmatmul.bf16.gmra.mxu0 %v538
      %v964 = vpop.f32.mrf.mxu0
      %v965 = vadd.f32 %v876, %v964
      %v966 = vpop.f32.mrf.mxu0
      %v967 = vadd.f32 %v878, %v966
      %968 = vmatmul.bf16.gmra.mxu0 %v542
      %v969 = vpop.f32.mrf.mxu0
      %v970 = vadd.f32 %v881, %v969
      %v971 = vpop.f32.mrf.mxu0
      %v972 = vadd.f32 %v883, %v971
      %973 = vmatmul.bf16.gmra.mxu0 %v546
      %v974 = vpop.f32.mrf.mxu0
      %v975 = vadd.f32 %v886, %v974
      %v976 = vpop.f32.mrf.mxu0
      %v977 = vadd.f32 %v888, %v976
      %978 = vmatmul.bf16.gmra.mxu0 %v550
      %v979 = vpop.f32.mrf.mxu0
      %v980 = vadd.f32 %v891, %v979
      %v981 = vpop.f32.mrf.mxu0
      %v982 = vadd.f32 %v893, %v981
      %983 = vmatmul.bf16.gmra.mxu0 %v554
      %v984 = vpop.f32.mrf.mxu0
      %v985 = vadd.f32 %v896, %v984
      %v986 = vpop.f32.mrf.mxu0
      %v987 = vadd.f32 %v898, %v986
      %988 = vmatmul.bf16.gmra.mxu0 %v558
      %v989 = vpop.f32.mrf.mxu0
      %v990 = vadd.f32 %v901, %v989
      %v991 = vpop.f32.mrf.mxu0
      %v992 = vadd.f32 %v903, %v991
      %993 = vmatmul.bf16.gmra.mxu0 %v562
      %v994 = vpop.f32.mrf.mxu0
      %v995 = vadd.f32 %v906, %v994
      %v996 = vpop.f32.mrf.mxu0
      %v997 = vadd.f32 %v908, %v996
      %998 = vdwg.mxu0
      %999 = vmatpush.bf16.msra.mxu0 %v780
      %1000 = vmatpush.bf16.msra.mxu0 %v779
      %1001 = vmatpush.bf16.msra.mxu0 %v778
      %1002 = vmatpush.bf16.msra.mxu0 %v777
      %1003 = vmatpush.bf16.msra.mxu0 %v776
      %1004 = vmatpush.bf16.msra.mxu0 %v775
      %1005 = vmatpush.bf16.msra.mxu0 %v774
      %1006 = vmatpush.bf16.msra.mxu0 %v773
      %1007 = vmatmul.bf16.gmra.mxu0 %v503
      %v1008 = vpop.f32.mrf.mxu0
      %v1009 = vadd.f32 %v920, %v1008
      %v1010 = vpop.f32.mrf.mxu0
      %v1011 = vadd.f32 %v922, %v1010
      %1012 = vmatmul.bf16.gmra.mxu0 %v507
      %v1013 = vpop.f32.mrf.mxu0
      %v1014 = vadd.f32 %v925, %v1013
      %v1015 = vpop.f32.mrf.mxu0
      %v1016 = vadd.f32 %v927, %v1015
      %1017 = vmatmul.bf16.gmra.mxu0 %v511
      %v1018 = vpop.f32.mrf.mxu0
      %v1019 = vadd.f32 %v930, %v1018
      %v1020 = vpop.f32.mrf.mxu0
      %v1021 = vadd.f32 %v932, %v1020
      %1022 = vmatmul.bf16.gmra.mxu0 %v515
      %v1023 = vpop.f32.mrf.mxu0
      %v1024 = vadd.f32 %v935, %v1023
      %v1025 = vpop.f32.mrf.mxu0
      %v1026 = vadd.f32 %v937, %v1025
      %1027 = vmatmul.bf16.gmra.mxu0 %v519
      %v1028 = vpop.f32.mrf.mxu0
      %v1029 = vadd.f32 %v940, %v1028
      %v1030 = vpop.f32.mrf.mxu0
      %v1031 = vadd.f32 %v942, %v1030
      %1032 = vmatmul.bf16.gmra.mxu0 %v523
      %v1033 = vpop.f32.mrf.mxu0
      %v1034 = vadd.f32 %v945, %v1033
      %v1035 = vpop.f32.mrf.mxu0
      %v1036 = vadd.f32 %v947, %v1035
      %1037 = vmatmul.bf16.gmra.mxu0 %v527
      %v1038 = vpop.f32.mrf.mxu0
      %v1039 = vadd.f32 %v950, %v1038
      %v1040 = vpop.f32.mrf.mxu0
      %v1041 = vadd.f32 %v952, %v1040
      %1042 = vmatmul.bf16.gmra.mxu0 %v531
      %v1043 = vpop.f32.mrf.mxu0
      %v1044 = vadd.f32 %v955, %v1043
      %v1045 = vpop.f32.mrf.mxu0
      %v1046 = vadd.f32 %v957, %v1045
      %1047 = vmatmul.bf16.gmra.mxu0 %v535
      %v1048 = vpop.f32.mrf.mxu0
      %v1049 = vadd.f32 %v960, %v1048
      %v1050 = vpop.f32.mrf.mxu0
      %v1051 = vadd.f32 %v962, %v1050
      %1052 = vmatmul.bf16.gmra.mxu0 %v539
      %v1053 = vpop.f32.mrf.mxu0
      %v1054 = vadd.f32 %v965, %v1053
      %v1055 = vpop.f32.mrf.mxu0
      %v1056 = vadd.f32 %v967, %v1055
      %1057 = vmatmul.bf16.gmra.mxu0 %v543
      %v1058 = vpop.f32.mrf.mxu0
      %v1059 = vadd.f32 %v970, %v1058
      %v1060 = vpop.f32.mrf.mxu0
      %v1061 = vadd.f32 %v972, %v1060
      %1062 = vmatmul.bf16.gmra.mxu0 %v547
      %v1063 = vpop.f32.mrf.mxu0
      %v1064 = vadd.f32 %v975, %v1063
      %v1065 = vpop.f32.mrf.mxu0
      %v1066 = vadd.f32 %v977, %v1065
      %1067 = vmatmul.bf16.gmra.mxu0 %v551
      %v1068 = vpop.f32.mrf.mxu0
      %v1069 = vadd.f32 %v980, %v1068
      %v1070 = vpop.f32.mrf.mxu0
      %v1071 = vadd.f32 %v982, %v1070
      %1072 = vmatmul.bf16.gmra.mxu0 %v555
      %v1073 = vpop.f32.mrf.mxu0
      %v1074 = vadd.f32 %v985, %v1073
      %v1075 = vpop.f32.mrf.mxu0
      %v1076 = vadd.f32 %v987, %v1075
      %1077 = vmatmul.bf16.gmra.mxu0 %v559
      %v1078 = vpop.f32.mrf.mxu0
      %v1079 = vadd.f32 %v990, %v1078
      %v1080 = vpop.f32.mrf.mxu0
      %v1081 = vadd.f32 %v992, %v1080
      %1082 = vmatmul.bf16.gmra.mxu0 %v563
      %v1083 = vpop.f32.mrf.mxu0
      %v1084 = vadd.f32 %v995, %v1083
      %v1085 = vpop.f32.mrf.mxu0
      %v1086 = vadd.f32 %v997, %v1085
      %1087 = vdwg.mxu0
      %1088 = vmatpush.bf16.msra.mxu0 %v788
      %1089 = vmatpush.bf16.msra.mxu0 %v787
      %1090 = vmatpush.bf16.msra.mxu0 %v786
      %1091 = vmatpush.bf16.msra.mxu0 %v785
      %1092 = vmatpush.bf16.msra.mxu0 %v784
      %1093 = vmatpush.bf16.msra.mxu0 %v783
      %1094 = vmatpush.bf16.msra.mxu0 %v782
      %1095 = vmatpush.bf16.msra.mxu0 %v781
      %1096 = vmatmul.bf16.gmra.mxu0 %v504
      %v1097 = vpop.f32.mrf.mxu0
      %v1098 = vadd.f32 %v1009, %v1097
      %v1099 = vpop.f32.mrf.mxu0
      %v1100 = vadd.f32 %v1011, %v1099
      %1101 = vmatmul.bf16.gmra.mxu0 %v508
      %v1102 = vpop.f32.mrf.mxu0
      %v1103 = vadd.f32 %v1014, %v1102
      %v1104 = vpop.f32.mrf.mxu0
      %v1105 = vadd.f32 %v1016, %v1104
      %1106 = vmatmul.bf16.gmra.mxu0 %v512
      %v1107 = vpop.f32.mrf.mxu0
      %v1108 = vadd.f32 %v1019, %v1107
      %v1109 = vpop.f32.mrf.mxu0
      %v1110 = vadd.f32 %v1021, %v1109
      %1111 = vmatmul.bf16.gmra.mxu0 %v516
      %v1112 = vpop.f32.mrf.mxu0
      %v1113 = vadd.f32 %v1024, %v1112
      %v1114 = vpop.f32.mrf.mxu0
      %v1115 = vadd.f32 %v1026, %v1114
      %1116 = vmatmul.bf16.gmra.mxu0 %v520
      %v1117 = vpop.f32.mrf.mxu0
      %v1118 = vadd.f32 %v1029, %v1117
      %v1119 = vpop.f32.mrf.mxu0
      %v1120 = vadd.f32 %v1031, %v1119
      %1121 = vmatmul.bf16.gmra.mxu0 %v524
      %v1122 = vpop.f32.mrf.mxu0
      %v1123 = vadd.f32 %v1034, %v1122
      %v1124 = vpop.f32.mrf.mxu0
      %v1125 = vadd.f32 %v1036, %v1124
      %1126 = vmatmul.bf16.gmra.mxu0 %v528
      %v1127 = vpop.f32.mrf.mxu0
      %v1128 = vadd.f32 %v1039, %v1127
      %v1129 = vpop.f32.mrf.mxu0
      %v1130 = vadd.f32 %v1041, %v1129
      %1131 = vmatmul.bf16.gmra.mxu0 %v532
      %v1132 = vpop.f32.mrf.mxu0
      %v1133 = vadd.f32 %v1044, %v1132
      %v1134 = vpop.f32.mrf.mxu0
      %v1135 = vadd.f32 %v1046, %v1134
      %1136 = vmatmul.bf16.gmra.mxu0 %v536
      %v1137 = vpop.f32.mrf.mxu0
      %v1138 = vadd.f32 %v1049, %v1137
      %v1139 = vpop.f32.mrf.mxu0
      %v1140 = vadd.f32 %v1051, %v1139
      %1141 = vmatmul.bf16.gmra.mxu0 %v540
      %v1142 = vpop.f32.mrf.mxu0
      %v1143 = vadd.f32 %v1054, %v1142
      %v1144 = vpop.f32.mrf.mxu0
      %v1145 = vadd.f32 %v1056, %v1144
      %1146 = vmatmul.bf16.gmra.mxu0 %v544
      %v1147 = vpop.f32.mrf.mxu0
      %v1148 = vadd.f32 %v1059, %v1147
      %v1149 = vpop.f32.mrf.mxu0
      %v1150 = vadd.f32 %v1061, %v1149
      %1151 = vmatmul.bf16.gmra.mxu0 %v548
      %v1152 = vpop.f32.mrf.mxu0
      %v1153 = vadd.f32 %v1064, %v1152
      %v1154 = vpop.f32.mrf.mxu0
      %v1155 = vadd.f32 %v1066, %v1154
      %1156 = vmatmul.bf16.gmra.mxu0 %v552
      %v1157 = vpop.f32.mrf.mxu0
      %v1158 = vadd.f32 %v1069, %v1157
      %v1159 = vpop.f32.mrf.mxu0
      %v1160 = vadd.f32 %v1071, %v1159
      %1161 = vmatmul.bf16.gmra.mxu0 %v556
      %v1162 = vpop.f32.mrf.mxu0
      %v1163 = vadd.f32 %v1074, %v1162
      %v1164 = vpop.f32.mrf.mxu0
      %v1165 = vadd.f32 %v1076, %v1164
      %1166 = vmatmul.bf16.gmra.mxu0 %v560
      %v1167 = vpop.f32.mrf.mxu0
      %v1168 = vadd.f32 %v1079, %v1167
      %v1169 = vpop.f32.mrf.mxu0
      %v1170 = vadd.f32 %v1081, %v1169
      %1171 = vmatmul.bf16.gmra.mxu0 %v564
      %v1172 = vpop.f32.mrf.mxu0
      %v1173 = vadd.f32 %v1084, %v1172
      %v1174 = vpop.f32.mrf.mxu0
      %v1175 = vadd.f32 %v1086, %v1174
      %1176 = vdwg.mxu0
      %v1177 = vmax.f32 %v1098, 0.0
      %v1178 = vmax.f32 %v1100, 0.0
      %v1179 = vmax.f32 %v1103, 0.0
      %v1180 = vmax.f32 %v1105, 0.0
      %v1181 = vmax.f32 %v1108, 0.0
      %v1182 = vmax.f32 %v1110, 0.0
      %v1183 = vmax.f32 %v1113, 0.0
      %v1184 = vmax.f32 %v1115, 0.0
      %v1185 = vmax.f32 %v1118, 0.0
      %v1186 = vmax.f32 %v1120, 0.0
      %v1187 = vmax.f32 %v1123, 0.0
      %v1188 = vmax.f32 %v1125, 0.0
      %v1189 = vmax.f32 %v1128, 0.0
      %v1190 = vmax.f32 %v1130, 0.0
      %v1191 = vmax.f32 %v1133, 0.0
      %v1192 = vmax.f32 %v1135, 0.0
      %v1193 = vmax.f32 %v1138, 0.0
      %v1194 = vmax.f32 %v1140, 0.0
      %v1195 = vmax.f32 %v1143, 0.0
      %v1196 = vmax.f32 %v1145, 0.0
      %v1197 = vmax.f32 %v1148, 0.0
      %v1198 = vmax.f32 %v1150, 0.0
      %v1199 = vmax.f32 %v1153, 0.0
      %v1200 = vmax.f32 %v1155, 0.0
      %v1201 = vmax.f32 %v1158, 0.0
      %v1202 = vmax.f32 %v1160, 0.0
      %v1203 = vmax.f32 %v1163, 0.0
      %v1204 = vmax.f32 %v1165, 0.0
      %v1205 = vmax.f32 %v1168, 0.0
      %v1206 = vmax.f32 %v1170, 0.0
      %v1207 = vmax.f32 %v1173, 0.0
      %v1208 = vmax.f32 %v1175, 0.0
      %vm1209 = vcmask 523264
      %1210 = vst.msk [vmem:[%s175] sm:$0xff] %vm1209, %v1177
      %1211 = vst.msk [vmem:[%s175 + $0x8] sm:$0xff] %vm1209, %v1178
      %1212 = vst.msk [vmem:[%s175 + $0x10] sm:$0xff] %vm1209, %v1179
      %1213 = vst.msk [vmem:[%s175 + $0x18] sm:$0xff] %vm1209, %v1180
      %1214 = vst.msk [vmem:[%s175 + $0x20] sm:$0xff] %vm1209, %v1181
      %1215 = vst.msk [vmem:[%s175 + $0x28] sm:$0xff] %vm1209, %v1182
      %1216 = vst.msk [vmem:[%s175 + $0x30] sm:$0xff] %vm1209, %v1183
      %1217 = vst.msk [vmem:[%s175 + $0x38] sm:$0xff] %vm1209, %v1184
      %1218 = vst.msk [vmem:[%s175 + $0x40] sm:$0xff] %vm1209, %v1185
      %1219 = vst.msk [vmem:[%s175 + $0x48] sm:$0xff] %vm1209, %v1186
      %1220 = vst.msk [vmem:[%s175 + $0x50] sm:$0xff] %vm1209, %v1187
      %1221 = vst.msk [vmem:[%s175 + $0x58] sm:$0xff] %vm1209, %v1188
      %1222 = vst.msk [vmem:[%s175 + $0x60] sm:$0xff] %vm1209, %v1189
      %1223 = vst.msk [vmem:[%s175 + $0x68] sm:$0xff] %vm1209, %v1190
      %1224 = vst.msk [vmem:[%s175 + $0x70] sm:$0xff] %vm1209, %v1191
      %1225 = vst.msk [vmem:[%s175 + $0x78] sm:$0xff] %vm1209, %v1192
      %1226 = vst.msk [vmem:[%s175 + $0x80] sm:$0xff] %vm1209, %v1193
      %1227 = vst.msk [vmem:[%s175 + $0x88] sm:$0xff] %vm1209, %v1194
      %1228 = vst.msk [vmem:[%s175 + $0x90] sm:$0xff] %vm1209, %v1195
      %1229 = vst.msk [vmem:[%s175 + $0x98] sm:$0xff] %vm1209, %v1196
      %1230 = vst.msk [vmem:[%s175 + $0xa0] sm:$0xff] %vm1209, %v1197
      %1231 = vst.msk [vmem:[%s175 + $0xa8] sm:$0xff] %vm1209, %v1198
      %1232 = vst.msk [vmem:[%s175 + $0xb0] sm:$0xff] %vm1209, %v1199
      %1233 = vst.msk [vmem:[%s175 + $0xb8] sm:$0xff] %vm1209, %v1200
      %1234 = vst.msk [vmem:[%s175 + $0xc0] sm:$0xff] %vm1209, %v1201
      %1235 = vst.msk [vmem:[%s175 + $0xc8] sm:$0xff] %vm1209, %v1202
      %1236 = vst.msk [vmem:[%s175 + $0xd0] sm:$0xff] %vm1209, %v1203
      %1237 = vst.msk [vmem:[%s175 + $0xd8] sm:$0xff] %vm1209, %v1204
      %1238 = vst.msk [vmem:[%s175 + $0xe0] sm:$0xff] %vm1209, %v1205
      %1239 = vst.msk [vmem:[%s175 + $0xe8] sm:$0xff] %vm1209, %v1206
      %1240 = vst.msk [vmem:[%s175 + $0xf0] sm:$0xff] %vm1209, %v1207
      %1241 = vst.msk [vmem:[%s175 + $0xf8] sm:$0xff] %vm1209, %v1208
      %s1242 = smul.u32 32, %s14
      %p1243 = scmp.lt.s32.totalorder %s1242, 159
      %s1244 = scalar_select %p1243, %s1242, 159
      %s1245 = smul.addr %s1244, 8
      %s1246 = scalar_lea.vmem %s3, %s1245
      // Predicated region
      $region33: #{reid_forward.7} parent=31 // pred_check
        %p1247 = pneg %p100
      $region34: #{reid_forward.7} parent=31 // pred_check_branch
        %1249 = sbr.rel (%p1247) target = $region36
      $region35: #{reid_forward.7} parent=31 // pred_region
        %s1250 = smul.u32 32, %s14
      $region36: #{reid_forward.7} parent=31 // pred_fallthru
        _
    $region32: #{reid_forward.7} parent=5 // pred_fallthru
      _
    %p1251 = scmp.le.s32.totalorder 2, %s9
    // Predicated region
    $region37: #{reid_forward.7} parent=5 // pred_check
      %p1252 = pneg %p1251
    $region38: #{reid_forward.7} parent=5 // pred_check_branch
      %1254 = sbr.rel (%p1252) target = $region40
    $region39: #{reid_forward.7} parent=5 // pred_region
      %s1255 = ssub.s32 %s9, 2
      // Predicated region
      $region41: #{reid_forward.7} parent=39 // pred_check
        %p1256 = pneg %p106
      $region42: #{reid_forward.7} parent=39 // pred_check_branch
        %1258 = sbr.rel (%p1256) target = $region44
      $region43: #{reid_forward.7} parent=39 // pred_region
        %s1259 = smul.u32 32, %s15
        %p1260 = scmp.lt.s32.totalorder %s1259, 159
        %s1261 = scalar_select %p1260, %s1259, 159
        %s1262 = smul.addr %s1261, 8
        %s1263 = scalar_lea.vmem %s3, %s1262
      $region44: #{reid_forward.7} parent=39 // pred_fallthru
        _
    $region40: #{reid_forward.7} parent=5 // pred_fallthru
      _
  $region6: #{reid_forward.7} parent=0 // loop_footer
    %s13 = sadd.s32 1, %s9
  $region7: #{reid_forward.7} parent=0 // loop_footer_branch
    %8 = sbr.rel target = $region3
  $region8: #{reid_forward.7} parent=0 // loop_exit
    _

// kernel: reid_forward.8
$region0: #{reid_forward.8}
  #allocation0 [shape = 'u32[]', space=smem, size = 0x4, offset = 0x4, fixed_abs, tag = 'smem constant byte address 0x4 - core index']
  #allocation1 [shape = 'u32[72,128]{1,0:T(1,128)}', space=vmem, size = 0x9000, scoped, tag = 'internal scratch']
  %s0 = inlined_call_operand.vmem [shape: bf16[320,1024], index: 0, kind: input, shape index: {}]
  %s1 = inlined_call_operand.vmem [shape: bf16[1024,64], index: 1, kind: input, shape index: {}]
  %s2 = inlined_call_operand.vmem [shape: f32[1,64], index: 2, kind: input, shape index: {}]
  %s3 = inlined_call_operand.vmem [shape: f32[320,64], index: 3, kind: output, shape index: {}]
  %s4 = sld [smem:[#allocation0]]
  $region22: #{reid_forward.8} parent=0
    _
  %s6 = ssub.s32 1, %s4
  %s7 = scalar_select 0, %s6, %s4
  // Predicated region
  $region2: #{reid_forward.8} parent=0 // pred_check
    _
  $region3: #{reid_forward.8} parent=0 // pred_check_branch
    %9 = sbr.rel (0) target = $region5
  $region4: #{reid_forward.8} parent=0 // pred_region
    _
  $region5: #{reid_forward.8} parent=0 // pred_fallthru
    _
  // Predicated region
  $region6: #{reid_forward.8} parent=0 // pred_check
    _
  $region7: #{reid_forward.8} parent=0 // pred_check_branch
    %11 = sbr.rel (0) target = $region9
  $region8: #{reid_forward.8} parent=0 // pred_region
    _
  $region9: #{reid_forward.8} parent=0 // pred_fallthru
    _
  // Predicated region
  $region10: #{reid_forward.8} parent=0 // pred_check
    _
  $region11: #{reid_forward.8} parent=0 // pred_check_branch
    %13 = sbr.rel (0) target = $region13
  $region12: #{reid_forward.8} parent=0 // pred_region
    _
  $region13: #{reid_forward.8} parent=0 // pred_fallthru
    _
  %v14 = vld [vmem:[%s0] sm:$0xff]
  %v15 = vld [vmem:[%s0 + $0x8] sm:$0xff]
  %v16 = vld [vmem:[%s0 + $0x10] sm:$0xff]
  %v17 = vld [vmem:[%s0 + $0x18] sm:$0xff]
  %v18 = vld [vmem:[%s0 + $0x20] sm:$0xff]
  %v19 = vld [vmem:[%s0 + $0x28] sm:$0xff]
  %v20 = vld [vmem:[%s0 + $0x30] sm:$0xff]
  %v21 = vld [vmem:[%s0 + $0x38] sm:$0xff]
  %v22 = vld [vmem:[%s0 + $0x40] sm:$0xff]
  %v23 = vld [vmem:[%s0 + $0x48] sm:$0xff]
  %v24 = vld [vmem:[%s0 + $0x50] sm:$0xff]
  %v25 = vld [vmem:[%s0 + $0x58] sm:$0xff]
  %v26 = vld [vmem:[%s0 + $0x60] sm:$0xff]
  %v27 = vld [vmem:[%s0 + $0x68] sm:$0xff]
  %v28 = vld [vmem:[%s0 + $0x70] sm:$0xff]
  %v29 = vld [vmem:[%s0 + $0x78] sm:$0xff]
  %v30 = vld [vmem:[%s0 + $0x80] sm:$0xff]
  %v31 = vld [vmem:[%s0 + $0x88] sm:$0xff]
  %v32 = vld [vmem:[%s0 + $0x90] sm:$0xff]
  %v33 = vld [vmem:[%s0 + $0x98] sm:$0xff]
  %v34 = vld [vmem:[%s0 + $0xa0] sm:$0xff]
  %v35 = vld [vmem:[%s0 + $0xa8] sm:$0xff]
  %v36 = vld [vmem:[%s0 + $0xb0] sm:$0xff]
  %v37 = vld [vmem:[%s0 + $0xb8] sm:$0xff]
  %v38 = vld [vmem:[%s0 + $0xc0] sm:$0xff]
  %v39 = vld [vmem:[%s0 + $0xc8] sm:$0xff]
  %v40 = vld [vmem:[%s0 + $0xd0] sm:$0xff]
  %v41 = vld [vmem:[%s0 + $0xd8] sm:$0xff]
  %v42 = vld [vmem:[%s0 + $0xe0] sm:$0xff]
  %v43 = vld [vmem:[%s0 + $0xe8] sm:$0xff]
  %v44 = vld [vmem:[%s0 + $0xf0] sm:$0xff]
  %v45 = vld [vmem:[%s0 + $0xf8] sm:$0xff]
  %v46 = vld [vmem:[%s0 + $0x100] sm:$0xff]
  %v47 = vld [vmem:[%s0 + $0x108] sm:$0xff]
  %v48 = vld [vmem:[%s0 + $0x110] sm:$0xff]
  %v49 = vld [vmem:[%s0 + $0x118] sm:$0xff]
  %v50 = vld [vmem:[%s0 + $0x120] sm:$0xff]
  %v51 = vld [vmem:[%s0 + $0x128] sm:$0xff]
  %v52 = vld [vmem:[%s0 + $0x130] sm:$0xff]
  %v53 = vld [vmem:[%s0 + $0x138] sm:$0xff]
  %v54 = vld [vmem:[%s0 + $0x140] sm:$0xff]
  %v55 = vld [vmem:[%s0 + $0x148] sm:$0xff]
  %v56 = vld [vmem:[%s0 + $0x150] sm:$0xff]
  %v57 = vld [vmem:[%s0 + $0x158] sm:$0xff]
  %v58 = vld [vmem:[%s0 + $0x160] sm:$0xff]
  %v59 = vld [vmem:[%s0 + $0x168] sm:$0xff]
  %v60 = vld [vmem:[%s0 + $0x170] sm:$0xff]
  %v61 = vld [vmem:[%s0 + $0x178] sm:$0xff]
  %v62 = vld [vmem:[%s0 + $0x180] sm:$0xff]
  %v63 = vld [vmem:[%s0 + $0x188] sm:$0xff]
  %v64 = vld [vmem:[%s0 + $0x190] sm:$0xff]
  %v65 = vld [vmem:[%s0 + $0x198] sm:$0xff]
  %v66 = vld [vmem:[%s0 + $0x1a0] sm:$0xff]
  %v67 = vld [vmem:[%s0 + $0x1a8] sm:$0xff]
  %v68 = vld [vmem:[%s0 + $0x1b0] sm:$0xff]
  %v69 = vld [vmem:[%s0 + $0x1b8] sm:$0xff]
  %v70 = vld [vmem:[%s0 + $0x1c0] sm:$0xff]
  %v71 = vld [vmem:[%s0 + $0x1c8] sm:$0xff]
  %v72 = vld [vmem:[%s0 + $0x1d0] sm:$0xff]
  %v73 = vld [vmem:[%s0 + $0x1d8] sm:$0xff]
  %v74 = vld [vmem:[%s0 + $0x1e0] sm:$0xff]
  %v75 = vld [vmem:[%s0 + $0x1e8] sm:$0xff]
  %v76 = vld [vmem:[%s0 + $0x1f0] sm:$0xff]
  %v77 = vld [vmem:[%s0 + $0x1f8] sm:$0xff]
  %v78 = vld [vmem:[%s0 + $0x200] sm:$0xff]
  %v79 = vld [vmem:[%s0 + $0x208] sm:$0xff]
  %v80 = vld [vmem:[%s0 + $0x210] sm:$0xff]
  %v81 = vld [vmem:[%s0 + $0x218] sm:$0xff]
  %v82 = vld [vmem:[%s0 + $0x220] sm:$0xff]
  %v83 = vld [vmem:[%s0 + $0x228] sm:$0xff]
  %v84 = vld [vmem:[%s0 + $0x230] sm:$0xff]
  %v85 = vld [vmem:[%s0 + $0x238] sm:$0xff]
  %v86 = vld [vmem:[%s0 + $0x240] sm:$0xff]
  %v87 = vld [vmem:[%s0 + $0x248] sm:$0xff]
  %v88 = vld [vmem:[%s0 + $0x250] sm:$0xff]
  %v89 = vld [vmem:[%s0 + $0x258] sm:$0xff]
  %v90 = vld [vmem:[%s0 + $0x260] sm:$0xff]
  %v91 = vld [vmem:[%s0 + $0x268] sm:$0xff]
  %v92 = vld [vmem:[%s0 + $0x270] sm:$0xff]
  %v93 = vld [vmem:[%s0 + $0x278] sm:$0xff]
  %v94 = vld [vmem:[%s0 + $0x280] sm:$0xff]
  %v95 = vld [vmem:[%s0 + $0x288] sm:$0xff]
  %v96 = vld [vmem:[%s0 + $0x290] sm:$0xff]
  %v97 = vld [vmem:[%s0 + $0x298] sm:$0xff]
  %v98 = vld [vmem:[%s0 + $0x2a0] sm:$0xff]
  %v99 = vld [vmem:[%s0 + $0x2a8] sm:$0xff]
  %v100 = vld [vmem:[%s0 + $0x2b0] sm:$0xff]
  %v101 = vld [vmem:[%s0 + $0x2b8] sm:$0xff]
  %v102 = vld [vmem:[%s0 + $0x2c0] sm:$0xff]
  %v103 = vld [vmem:[%s0 + $0x2c8] sm:$0xff]
  %v104 = vld [vmem:[%s0 + $0x2d0] sm:$0xff]
  %v105 = vld [vmem:[%s0 + $0x2d8] sm:$0xff]
  %v106 = vld [vmem:[%s0 + $0x2e0] sm:$0xff]
  %v107 = vld [vmem:[%s0 + $0x2e8] sm:$0xff]
  %v108 = vld [vmem:[%s0 + $0x2f0] sm:$0xff]
  %v109 = vld [vmem:[%s0 + $0x2f8] sm:$0xff]
  %v110 = vld [vmem:[%s0 + $0x300] sm:$0xff]
  %v111 = vld [vmem:[%s0 + $0x308] sm:$0xff]
  %v112 = vld [vmem:[%s0 + $0x310] sm:$0xff]
  %v113 = vld [vmem:[%s0 + $0x318] sm:$0xff]
  %v114 = vld [vmem:[%s0 + $0x320] sm:$0xff]
  %v115 = vld [vmem:[%s0 + $0x328] sm:$0xff]
  %v116 = vld [vmem:[%s0 + $0x330] sm:$0xff]
  %v117 = vld [vmem:[%s0 + $0x338] sm:$0xff]
  %v118 = vld [vmem:[%s0 + $0x340] sm:$0xff]
  %v119 = vld [vmem:[%s0 + $0x348] sm:$0xff]
  %v120 = vld [vmem:[%s0 + $0x350] sm:$0xff]
  %v121 = vld [vmem:[%s0 + $0x358] sm:$0xff]
  %v122 = vld [vmem:[%s0 + $0x360] sm:$0xff]
  %v123 = vld [vmem:[%s0 + $0x368] sm:$0xff]
  %v124 = vld [vmem:[%s0 + $0x370] sm:$0xff]
  %v125 = vld [vmem:[%s0 + $0x378] sm:$0xff]
  %v126 = vld [vmem:[%s0 + $0x380] sm:$0xff]
  %v127 = vld [vmem:[%s0 + $0x388] sm:$0xff]
  %v128 = vld [vmem:[%s0 + $0x390] sm:$0xff]
  %v129 = vld [vmem:[%s0 + $0x398] sm:$0xff]
  %v130 = vld [vmem:[%s0 + $0x3a0] sm:$0xff]
  %v131 = vld [vmem:[%s0 + $0x3a8] sm:$0xff]
  %v132 = vld [vmem:[%s0 + $0x3b0] sm:$0xff]
  %v133 = vld [vmem:[%s0 + $0x3b8] sm:$0xff]
  %v134 = vld [vmem:[%s0 + $0x3c0] sm:$0xff]
  %v135 = vld [vmem:[%s0 + $0x3c8] sm:$0xff]
  %v136 = vld [vmem:[%s0 + $0x3d0] sm:$0xff]
  %v137 = vld [vmem:[%s0 + $0x3d8] sm:$0xff]
  %v138 = vld [vmem:[%s0 + $0x3e0] sm:$0xff]
  %v139 = vld [vmem:[%s0 + $0x3e8] sm:$0xff]
  %v140 = vld [vmem:[%s0 + $0x3f0] sm:$0xff]
  %v141 = vld [vmem:[%s0 + $0x3f8] sm:$0xff]
  %v142 = vld [vmem:[%s0 + $0x400] sm:$0xff]
  %v143 = vld [vmem:[%s0 + $0x408] sm:$0xff]
  %v144 = vld [vmem:[%s0 + $0x410] sm:$0xff]
  %v145 = vld [vmem:[%s0 + $0x418] sm:$0xff]
  %v146 = vld [vmem:[%s0 + $0x420] sm:$0xff]
  %v147 = vld [vmem:[%s0 + $0x428] sm:$0xff]
  %v148 = vld [vmem:[%s0 + $0x430] sm:$0xff]
  %v149 = vld [vmem:[%s0 + $0x438] sm:$0xff]
  %v150 = vld [vmem:[%s0 + $0x440] sm:$0xff]
  %v151 = vld [vmem:[%s0 + $0x448] sm:$0xff]
  %v152 = vld [vmem:[%s0 + $0x450] sm:$0xff]
  %v153 = vld [vmem:[%s0 + $0x458] sm:$0xff]
  %v154 = vld [vmem:[%s0 + $0x460] sm:$0xff]
  %v155 = vld [vmem:[%s0 + $0x468] sm:$0xff]
  %v156 = vld [vmem:[%s0 + $0x470] sm:$0xff]
  %v157 = vld [vmem:[%s0 + $0x478] sm:$0xff]
  %v158 = vld [vmem:[%s0 + $0x480] sm:$0xff]
  %v159 = vld [vmem:[%s0 + $0x488] sm:$0xff]
  %v160 = vld [vmem:[%s0 + $0x490] sm:$0xff]
  %v161 = vld [vmem:[%s0 + $0x498] sm:$0xff]
  %v162 = vld [vmem:[%s0 + $0x4a0] sm:$0xff]
  %v163 = vld [vmem:[%s0 + $0x4a8] sm:$0xff]
  %v164 = vld [vmem:[%s0 + $0x4b0] sm:$0xff]
  %v165 = vld [vmem:[%s0 + $0x4b8] sm:$0xff]
  %v166 = vld [vmem:[%s0 + $0x4c0] sm:$0xff]
  %v167 = vld [vmem:[%s0 + $0x4c8] sm:$0xff]
  %v168 = vld [vmem:[%s0 + $0x4d0] sm:$0xff]
  %v169 = vld [vmem:[%s0 + $0x4d8] sm:$0xff]
  %v170 = vld [vmem:[%s0 + $0x4e0] sm:$0xff]
  %v171 = vld [vmem:[%s0 + $0x4e8] sm:$0xff]
  %v172 = vld [vmem:[%s0 + $0x4f0] sm:$0xff]
  %v173 = vld [vmem:[%s0 + $0x4f8] sm:$0xff]
  %v174 = vld [vmem:[%s1] sm:$0xf]
  %v175 = vld [vmem:[%s1 + $0x4] sm:$0xf]
  %v176 = vld [vmem:[%s1 + $0x8] sm:$0xf]
  %v177 = vld [vmem:[%s1 + $0xc] sm:$0xf]
  %v178 = vld [vmem:[%s1 + $0x10] sm:$0xf]
  %v179 = vld [vmem:[%s1 + $0x14] sm:$0xf]
  %v180 = vld [vmem:[%s1 + $0x18] sm:$0xf]
  %v181 = vld [vmem:[%s1 + $0x1c] sm:$0xf]
  %v182 = vld [vmem:[%s1 + $0x20] sm:$0xf]
  %v183 = vld [vmem:[%s1 + $0x24] sm:$0xf]
  %v184 = vld [vmem:[%s1 + $0x28] sm:$0xf]
  %v185 = vld [vmem:[%s1 + $0x2c] sm:$0xf]
  %v186 = vld [vmem:[%s1 + $0x30] sm:$0xf]
  %v187 = vld [vmem:[%s1 + $0x34] sm:$0xf]
  %v188 = vld [vmem:[%s1 + $0x38] sm:$0xf]
  %v189 = vld [vmem:[%s1 + $0x3c] sm:$0xf]
  %v190 = vld [vmem:[%s1 + $0x40] sm:$0xf]
  %v191 = vld [vmem:[%s1 + $0x44] sm:$0xf]
  %v192 = vld [vmem:[%s1 + $0x48] sm:$0xf]
  %v193 = vld [vmem:[%s1 + $0x4c] sm:$0xf]
  %v194 = vld [vmem:[%s1 + $0x50] sm:$0xf]
  %v195 = vld [vmem:[%s1 + $0x54] sm:$0xf]
  %v196 = vld [vmem:[%s1 + $0x58] sm:$0xf]
  %v197 = vld [vmem:[%s1 + $0x5c] sm:$0xf]
  %v198 = vld [vmem:[%s1 + $0x60] sm:$0xf]
  %v199 = vld [vmem:[%s1 + $0x64] sm:$0xf]
  %v200 = vld [vmem:[%s1 + $0x68] sm:$0xf]
  %v201 = vld [vmem:[%s1 + $0x6c] sm:$0xf]
  %v202 = vld [vmem:[%s1 + $0x70] sm:$0xf]
  %v203 = vld [vmem:[%s1 + $0x74] sm:$0xf]
  %v204 = vld [vmem:[%s1 + $0x78] sm:$0xf]
  %v205 = vld [vmem:[%s1 + $0x7c] sm:$0xf]
  %v206 = vld [vmem:[%s1 + $0x80] sm:$0xf]
  %v207 = vld [vmem:[%s1 + $0x84] sm:$0xf]
  %v208 = vld [vmem:[%s1 + $0x88] sm:$0xf]
  %v209 = vld [vmem:[%s1 + $0x8c] sm:$0xf]
  %v210 = vld [vmem:[%s1 + $0x90] sm:$0xf]
  %v211 = vld [vmem:[%s1 + $0x94] sm:$0xf]
  %v212 = vld [vmem:[%s1 + $0x98] sm:$0xf]
  %v213 = vld [vmem:[%s1 + $0x9c] sm:$0xf]
  %v214 = vld [vmem:[%s1 + $0xa0] sm:$0xf]
  %v215 = vld [vmem:[%s1 + $0xa4] sm:$0xf]
  %v216 = vld [vmem:[%s1 + $0xa8] sm:$0xf]
  %v217 = vld [vmem:[%s1 + $0xac] sm:$0xf]
  %v218 = vld [vmem:[%s1 + $0xb0] sm:$0xf]
  %v219 = vld [vmem:[%s1 + $0xb4] sm:$0xf]
  %v220 = vld [vmem:[%s1 + $0xb8] sm:$0xf]
  %v221 = vld [vmem:[%s1 + $0xbc] sm:$0xf]
  %v222 = vld [vmem:[%s1 + $0xc0] sm:$0xf]
  %v223 = vld [vmem:[%s1 + $0xc4] sm:$0xf]
  %v224 = vld [vmem:[%s1 + $0xc8] sm:$0xf]
  %v225 = vld [vmem:[%s1 + $0xcc] sm:$0xf]
  %v226 = vld [vmem:[%s1 + $0xd0] sm:$0xf]
  %v227 = vld [vmem:[%s1 + $0xd4] sm:$0xf]
  %v228 = vld [vmem:[%s1 + $0xd8] sm:$0xf]
  %v229 = vld [vmem:[%s1 + $0xdc] sm:$0xf]
  %v230 = vld [vmem:[%s1 + $0xe0] sm:$0xf]
  %v231 = vld [vmem:[%s1 + $0xe4] sm:$0xf]
  %v232 = vld [vmem:[%s1 + $0xe8] sm:$0xf]
  %v233 = vld [vmem:[%s1 + $0xec] sm:$0xf]
  %v234 = vld [vmem:[%s1 + $0xf0] sm:$0xf]
  %v235 = vld [vmem:[%s1 + $0xf4] sm:$0xf]
  %v236 = vld [vmem:[%s1 + $0xf8] sm:$0xf]
  %v237 = vld [vmem:[%s1 + $0xfc] sm:$0xf]
  %v238 = vld [vmem:[%s1 + $0x100] sm:$0xf]
  %v239 = vld [vmem:[%s1 + $0x104] sm:$0xf]
  %v240 = vld [vmem:[%s1 + $0x108] sm:$0xf]
  %v241 = vld [vmem:[%s1 + $0x10c] sm:$0xf]
  %v242 = vld [vmem:[%s1 + $0x110] sm:$0xf]
  %v243 = vld [vmem:[%s1 + $0x114] sm:$0xf]
  %v244 = vld [vmem:[%s1 + $0x118] sm:$0xf]
  %v245 = vld [vmem:[%s1 + $0x11c] sm:$0xf]
  %v246 = vld [vmem:[%s1 + $0x120] sm:$0xf]
  %v247 = vld [vmem:[%s1 + $0x124] sm:$0xf]
  %v248 = vld [vmem:[%s1 + $0x128] sm:$0xf]
  %v249 = vld [vmem:[%s1 + $0x12c] sm:$0xf]
  %v250 = vld [vmem:[%s1 + $0x130] sm:$0xf]
  %v251 = vld [vmem:[%s1 + $0x134] sm:$0xf]
  %v252 = vld [vmem:[%s1 + $0x138] sm:$0xf]
  %v253 = vld [vmem:[%s1 + $0x13c] sm:$0xf]
  %v254 = vld [vmem:[%s1 + $0x140] sm:$0xf]
  %v255 = vld [vmem:[%s1 + $0x144] sm:$0xf]
  %v256 = vld [vmem:[%s1 + $0x148] sm:$0xf]
  %v257 = vld [vmem:[%s1 + $0x14c] sm:$0xf]
  %v258 = vld [vmem:[%s1 + $0x150] sm:$0xf]
  %v259 = vld [vmem:[%s1 + $0x154] sm:$0xf]
  %v260 = vld [vmem:[%s1 + $0x158] sm:$0xf]
  %v261 = vld [vmem:[%s1 + $0x15c] sm:$0xf]
  %v262 = vld [vmem:[%s1 + $0x160] sm:$0xf]
  %v263 = vld [vmem:[%s1 + $0x164] sm:$0xf]
  %v264 = vld [vmem:[%s1 + $0x168] sm:$0xf]
  %v265 = vld [vmem:[%s1 + $0x16c] sm:$0xf]
  %v266 = vld [vmem:[%s1 + $0x170] sm:$0xf]
  %v267 = vld [vmem:[%s1 + $0x174] sm:$0xf]
  %v268 = vld [vmem:[%s1 + $0x178] sm:$0xf]
  %v269 = vld [vmem:[%s1 + $0x17c] sm:$0xf]
  %v270 = vld [vmem:[%s1 + $0x180] sm:$0xf]
  %v271 = vld [vmem:[%s1 + $0x184] sm:$0xf]
  %v272 = vld [vmem:[%s1 + $0x188] sm:$0xf]
  %v273 = vld [vmem:[%s1 + $0x18c] sm:$0xf]
  %v274 = vld [vmem:[%s1 + $0x190] sm:$0xf]
  %v275 = vld [vmem:[%s1 + $0x194] sm:$0xf]
  %v276 = vld [vmem:[%s1 + $0x198] sm:$0xf]
  %v277 = vld [vmem:[%s1 + $0x19c] sm:$0xf]
  %v278 = vld [vmem:[%s1 + $0x1a0] sm:$0xf]
  %v279 = vld [vmem:[%s1 + $0x1a4] sm:$0xf]
  %v280 = vld [vmem:[%s1 + $0x1a8] sm:$0xf]
  %v281 = vld [vmem:[%s1 + $0x1ac] sm:$0xf]
  %v282 = vld [vmem:[%s1 + $0x1b0] sm:$0xf]
  %v283 = vld [vmem:[%s1 + $0x1b4] sm:$0xf]
  %v284 = vld [vmem:[%s1 + $0x1b8] sm:$0xf]
  %v285 = vld [vmem:[%s1 + $0x1bc] sm:$0xf]
  %v286 = vld [vmem:[%s1 + $0x1c0] sm:$0xf]
  %v287 = vld [vmem:[%s1 + $0x1c4] sm:$0xf]
  %v288 = vld [vmem:[%s1 + $0x1c8] sm:$0xf]
  %v289 = vld [vmem:[%s1 + $0x1cc] sm:$0xf]
  %v290 = vld [vmem:[%s1 + $0x1d0] sm:$0xf]
  %v291 = vld [vmem:[%s1 + $0x1d4] sm:$0xf]
  %v292 = vld [vmem:[%s1 + $0x1d8] sm:$0xf]
  %v293 = vld [vmem:[%s1 + $0x1dc] sm:$0xf]
  %v294 = vld [vmem:[%s1 + $0x1e0] sm:$0xf]
  %v295 = vld [vmem:[%s1 + $0x1e4] sm:$0xf]
  %v296 = vld [vmem:[%s1 + $0x1e8] sm:$0xf]
  %v297 = vld [vmem:[%s1 + $0x1ec] sm:$0xf]
  %v298 = vld [vmem:[%s1 + $0x1f0] sm:$0xf]
  %v299 = vld [vmem:[%s1 + $0x1f4] sm:$0xf]
  %v300 = vld [vmem:[%s1 + $0x1f8] sm:$0xf]
  %v301 = vld [vmem:[%s1 + $0x1fc] sm:$0xf]
  %v302 = vld [vmem:[%s2] sm:$0x1]
  %v304 = vperm.slane %v302, 0
  %v466 = vunpack.c.l.b16 %v14
  %v467 = vunpack.c.h.b16 %v14
  %v468 = vunpack.c.l.b16 %v15
  %v469 = vunpack.c.h.b16 %v15
  %v470 = vunpack.c.l.b16 %v16
  %v471 = vunpack.c.h.b16 %v16
  %v472 = vunpack.c.l.b16 %v17
  %v473 = vunpack.c.h.b16 %v17
  %v474 = vunpack.c.l.b16 %v18
  %v475 = vunpack.c.h.b16 %v18
  %v476 = vunpack.c.l.b16 %v19
  %v477 = vunpack.c.h.b16 %v19
  %v478 = vunpack.c.l.b16 %v20
  %v479 = vunpack.c.h.b16 %v20
  %v480 = vunpack.c.l.b16 %v21
  %v481 = vunpack.c.h.b16 %v21
  %v482 = vunpack.c.l.b16 %v22
  %v483 = vunpack.c.h.b16 %v22
  %v484 = vunpack.c.l.b16 %v23
  %v485 = vunpack.c.h.b16 %v23
  %v486 = vunpack.c.l.b16 %v24
  %v487 = vunpack.c.h.b16 %v24
  %v488 = vunpack.c.l.b16 %v25
  %v489 = vunpack.c.h.b16 %v25
  %v490 = vunpack.c.l.b16 %v26
  %v491 = vunpack.c.h.b16 %v26
  %v492 = vunpack.c.l.b16 %v27
  %v493 = vunpack.c.h.b16 %v27
  %v494 = vunpack.c.l.b16 %v28
  %v495 = vunpack.c.h.b16 %v28
  %v496 = vunpack.c.l.b16 %v29
  %v497 = vunpack.c.h.b16 %v29
  %v498 = vunpack.c.l.b16 %v30
  %v499 = vunpack.c.h.b16 %v30
  %v500 = vunpack.c.l.b16 %v31
  %v501 = vunpack.c.h.b16 %v31
  %v502 = vunpack.c.l.b16 %v32
  %v503 = vunpack.c.h.b16 %v32
  %v504 = vunpack.c.l.b16 %v33
  %v505 = vunpack.c.h.b16 %v33
  %v506 = vunpack.c.l.b16 %v34
  %v507 = vunpack.c.h.b16 %v34
  %v508 = vunpack.c.l.b16 %v35
  %v509 = vunpack.c.h.b16 %v35
  %v510 = vunpack.c.l.b16 %v36
  %v511 = vunpack.c.h.b16 %v36
  %v512 = vunpack.c.l.b16 %v37
  %v513 = vunpack.c.h.b16 %v37
  %v514 = vunpack.c.l.b16 %v38
  %v515 = vunpack.c.h.b16 %v38
  %v516 = vunpack.c.l.b16 %v39
  %v517 = vunpack.c.h.b16 %v39
  %v518 = vunpack.c.l.b16 %v40
  %v519 = vunpack.c.h.b16 %v40
  %v520 = vunpack.c.l.b16 %v41
  %v521 = vunpack.c.h.b16 %v41
  %v522 = vunpack.c.l.b16 %v42
  %v523 = vunpack.c.h.b16 %v42
  %v524 = vunpack.c.l.b16 %v43
  %v525 = vunpack.c.h.b16 %v43
  %v526 = vunpack.c.l.b16 %v44
  %v527 = vunpack.c.h.b16 %v44
  %v528 = vunpack.c.l.b16 %v45
  %v529 = vunpack.c.h.b16 %v45
  %v530 = vunpack.c.l.b16 %v46
  %v531 = vunpack.c.h.b16 %v46
  %v532 = vunpack.c.l.b16 %v47
  %v533 = vunpack.c.h.b16 %v47
  %v534 = vunpack.c.l.b16 %v48
  %v535 = vunpack.c.h.b16 %v48
  %v536 = vunpack.c.l.b16 %v49
  %v537 = vunpack.c.h.b16 %v49
  %v538 = vunpack.c.l.b16 %v50
  %v539 = vunpack.c.h.b16 %v50
  %v540 = vunpack.c.l.b16 %v51
  %v541 = vunpack.c.h.b16 %v51
  %v542 = vunpack.c.l.b16 %v52
  %v543 = vunpack.c.h.b16 %v52
  %v544 = vunpack.c.l.b16 %v53
  %v545 = vunpack.c.h.b16 %v53
  %v546 = vunpack.c.l.b16 %v54
  %v547 = vunpack.c.h.b16 %v54
  %v548 = vunpack.c.l.b16 %v55
  %v549 = vunpack.c.h.b16 %v55
  %v550 = vunpack.c.l.b16 %v56
  %v551 = vunpack.c.h.b16 %v56
  %v552 = vunpack.c.l.b16 %v57
  %v553 = vunpack.c.h.b16 %v57
  %v554 = vunpack.c.l.b16 %v58
  %v555 = vunpack.c.h.b16 %v58
  %v556 = vunpack.c.l.b16 %v59
  %v557 = vunpack.c.h.b16 %v59
  %v558 = vunpack.c.l.b16 %v60
  %v559 = vunpack.c.h.b16 %v60
  %v560 = vunpack.c.l.b16 %v61
  %v561 = vunpack.c.h.b16 %v61
  %v562 = vunpack.c.l.b16 %v62
  %v563 = vunpack.c.h.b16 %v62
  %v564 = vunpack.c.l.b16 %v63
  %v565 = vunpack.c.h.b16 %v63
  %v566 = vunpack.c.l.b16 %v64
  %v567 = vunpack.c.h.b16 %v64
  %v568 = vunpack.c.l.b16 %v65
  %v569 = vunpack.c.h.b16 %v65
  %v570 = vunpack.c.l.b16 %v66
  %v571 = vunpack.c.h.b16 %v66
  %v572 = vunpack.c.l.b16 %v67
  %v573 = vunpack.c.h.b16 %v67
  %v574 = vunpack.c.l.b16 %v68
  %v575 = vunpack.c.h.b16 %v68
  %v576 = vunpack.c.l.b16 %v69
  %v577 = vunpack.c.h.b16 %v69
  %v578 = vunpack.c.l.b16 %v70
  %v579 = vunpack.c.h.b16 %v70
  %v580 = vunpack.c.l.b16 %v71
  %v581 = vunpack.c.h.b16 %v71
  %v582 = vunpack.c.l.b16 %v72
  %v583 = vunpack.c.h.b16 %v72
  %v584 = vunpack.c.l.b16 %v73
  %v585 = vunpack.c.h.b16 %v73
  %v586 = vunpack.c.l.b16 %v74
  %v587 = vunpack.c.h.b16 %v74
  %v588 = vunpack.c.l.b16 %v75
  %v589 = vunpack.c.h.b16 %v75
  %v590 = vunpack.c.l.b16 %v76
  %v591 = vunpack.c.h.b16 %v76
  %v592 = vunpack.c.l.b16 %v77
  %v593 = vunpack.c.h.b16 %v77
  %v594 = vunpack.c.l.b16 %v78
  %v595 = vunpack.c.h.b16 %v78
  %v596 = vunpack.c.l.b16 %v79
  %v597 = vunpack.c.h.b16 %v79
  %v598 = vunpack.c.l.b16 %v80
  %v599 = vunpack.c.h.b16 %v80
  %v600 = vunpack.c.l.b16 %v81
  %v601 = vunpack.c.h.b16 %v81
  %v602 = vunpack.c.l.b16 %v82
  %v603 = vunpack.c.h.b16 %v82
  %v604 = vunpack.c.l.b16 %v83
  %v605 = vunpack.c.h.b16 %v83
  %v606 = vunpack.c.l.b16 %v84
  %v607 = vunpack.c.h.b16 %v84
  %v608 = vunpack.c.l.b16 %v85
  %v609 = vunpack.c.h.b16 %v85
  %v610 = vunpack.c.l.b16 %v86
  %v611 = vunpack.c.h.b16 %v86
  %v612 = vunpack.c.l.b16 %v87
  %v613 = vunpack.c.h.b16 %v87
  %v614 = vunpack.c.l.b16 %v88
  %v615 = vunpack.c.h.b16 %v88
  %v616 = vunpack.c.l.b16 %v89
  %v617 = vunpack.c.h.b16 %v89
  %v618 = vunpack.c.l.b16 %v90
  %v619 = vunpack.c.h.b16 %v90
  %v620 = vunpack.c.l.b16 %v91
  %v621 = vunpack.c.h.b16 %v91
  %v622 = vunpack.c.l.b16 %v92
  %v623 = vunpack.c.h.b16 %v92
  %v624 = vunpack.c.l.b16 %v93
  %v625 = vunpack.c.h.b16 %v93
  %v626 = vunpack.c.l.b16 %v94
  %v627 = vunpack.c.h.b16 %v94
  %v628 = vunpack.c.l.b16 %v95
  %v629 = vunpack.c.h.b16 %v95
  %v630 = vunpack.c.l.b16 %v96
  %v631 = vunpack.c.h.b16 %v96
  %v632 = vunpack.c.l.b16 %v97
  %v633 = vunpack.c.h.b16 %v97
  %v634 = vunpack.c.l.b16 %v98
  %v635 = vunpack.c.h.b16 %v98
  %v636 = vunpack.c.l.b16 %v99
  %v637 = vunpack.c.h.b16 %v99
  %v638 = vunpack.c.l.b16 %v100
  %v639 = vunpack.c.h.b16 %v100
  %v640 = vunpack.c.l.b16 %v101
  %v641 = vunpack.c.h.b16 %v101
  %v642 = vunpack.c.l.b16 %v102
  %v643 = vunpack.c.h.b16 %v102
  %v644 = vunpack.c.l.b16 %v103
  %v645 = vunpack.c.h.b16 %v103
  %v646 = vunpack.c.l.b16 %v104
  %v647 = vunpack.c.h.b16 %v104
  %v648 = vunpack.c.l.b16 %v105
  %v649 = vunpack.c.h.b16 %v105
  %v650 = vunpack.c.l.b16 %v106
  %v651 = vunpack.c.h.b16 %v106
  %v652 = vunpack.c.l.b16 %v107
  %v653 = vunpack.c.h.b16 %v107
  %v654 = vunpack.c.l.b16 %v108
  %v655 = vunpack.c.h.b16 %v108
  %v656 = vunpack.c.l.b16 %v109
  %v657 = vunpack.c.h.b16 %v109
  %v658 = vunpack.c.l.b16 %v110
  %v659 = vunpack.c.h.b16 %v110
  %v660 = vunpack.c.l.b16 %v111
  %v661 = vunpack.c.h.b16 %v111
  %v662 = vunpack.c.l.b16 %v112
  %v663 = vunpack.c.h.b16 %v112
  %v664 = vunpack.c.l.b16 %v113
  %v665 = vunpack.c.h.b16 %v113
  %v666 = vunpack.c.l.b16 %v114
  %v667 = vunpack.c.h.b16 %v114
  %v668 = vunpack.c.l.b16 %v115
  %v669 = vunpack.c.h.b16 %v115
  %v670 = vunpack.c.l.b16 %v116
  %v671 = vunpack.c.h.b16 %v116
  %v672 = vunpack.c.l.b16 %v117
  %v673 = vunpack.c.h.b16 %v117
  %v674 = vunpack.c.l.b16 %v118
  %v675 = vunpack.c.h.b16 %v118
  %v676 = vunpack.c.l.b16 %v119
  %v677 = vunpack.c.h.b16 %v119
  %v678 = vunpack.c.l.b16 %v120
  %v679 = vunpack.c.h.b16 %v120
  %v680 = vunpack.c.l.b16 %v121
  %v681 = vunpack.c.h.b16 %v121
  %v682 = vunpack.c.l.b16 %v122
  %v683 = vunpack.c.h.b16 %v122
  %v684 = vunpack.c.l.b16 %v123
  %v685 = vunpack.c.h.b16 %v123
  %v686 = vunpack.c.l.b16 %v124
  %v687 = vunpack.c.h.b16 %v124
  %v688 = vunpack.c.l.b16 %v125
  %v689 = vunpack.c.h.b16 %v125
  %v690 = vunpack.c.l.b16 %v126
  %v691 = vunpack.c.h.b16 %v126
  %v692 = vunpack.c.l.b16 %v127
  %v693 = vunpack.c.h.b16 %v127
  %v694 = vunpack.c.l.b16 %v128
  %v695 = vunpack.c.h.b16 %v128
  %v696 = vunpack.c.l.b16 %v129
  %v697 = vunpack.c.h.b16 %v129
  %v698 = vunpack.c.l.b16 %v130
  %v699 = vunpack.c.h.b16 %v130
  %v700 = vunpack.c.l.b16 %v131
  %v701 = vunpack.c.h.b16 %v131
  %v702 = vunpack.c.l.b16 %v132
  %v703 = vunpack.c.h.b16 %v132
  %v704 = vunpack.c.l.b16 %v133
  %v705 = vunpack.c.h.b16 %v133
  %v706 = vunpack.c.l.b16 %v134
  %v707 = vunpack.c.h.b16 %v134
  %v708 = vunpack.c.l.b16 %v135
  %v709 = vunpack.c.h.b16 %v135
  %v710 = vunpack.c.l.b16 %v136
  %v711 = vunpack.c.h.b16 %v136
  %v712 = vunpack.c.l.b16 %v137
  %v713 = vunpack.c.h.b16 %v137
  %v714 = vunpack.c.l.b16 %v138
  %v715 = vunpack.c.h.b16 %v138
  %v716 = vunpack.c.l.b16 %v139
  %v717 = vunpack.c.h.b16 %v139
  %v718 = vunpack.c.l.b16 %v140
  %v719 = vunpack.c.h.b16 %v140
  %v720 = vunpack.c.l.b16 %v141
  %v721 = vunpack.c.h.b16 %v141
  %v722 = vunpack.c.l.b16 %v142
  %v723 = vunpack.c.h.b16 %v142
  %v724 = vunpack.c.l.b16 %v143
  %v725 = vunpack.c.h.b16 %v143
  %v726 = vunpack.c.l.b16 %v144
  %v727 = vunpack.c.h.b16 %v144
  %v728 = vunpack.c.l.b16 %v145
  %v729 = vunpack.c.h.b16 %v145
  %v730 = vunpack.c.l.b16 %v146
  %v731 = vunpack.c.h.b16 %v146
  %v732 = vunpack.c.l.b16 %v147
  %v733 = vunpack.c.h.b16 %v147
  %v734 = vunpack.c.l.b16 %v148
  %v735 = vunpack.c.h.b16 %v148
  %v736 = vunpack.c.l.b16 %v149
  %v737 = vunpack.c.h.b16 %v149
  %v738 = vunpack.c.l.b16 %v150
  %v739 = vunpack.c.h.b16 %v150
  %v740 = vunpack.c.l.b16 %v151
  %v741 = vunpack.c.h.b16 %v151
  %v742 = vunpack.c.l.b16 %v152
  %v743 = vunpack.c.h.b16 %v152
  %v744 = vunpack.c.l.b16 %v153
  %v745 = vunpack.c.h.b16 %v153
  %v746 = vunpack.c.l.b16 %v154
  %v747 = vunpack.c.h.b16 %v154
  %v748 = vunpack.c.l.b16 %v155
  %v749 = vunpack.c.h.b16 %v155
  %v750 = vunpack.c.l.b16 %v156
  %v751 = vunpack.c.h.b16 %v156
  %v752 = vunpack.c.l.b16 %v157
  %v753 = vunpack.c.h.b16 %v157
  %v754 = vunpack.c.l.b16 %v158
  %v755 = vunpack.c.h.b16 %v158
  %v756 = vunpack.c.l.b16 %v159
  %v757 = vunpack.c.h.b16 %v159
  %v758 = vunpack.c.l.b16 %v160
  %v759 = vunpack.c.h.b16 %v160
  %v760 = vunpack.c.l.b16 %v161
  %v761 = vunpack.c.h.b16 %v161
  %v762 = vunpack.c.l.b16 %v162
  %v763 = vunpack.c.h.b16 %v162
  %v764 = vunpack.c.l.b16 %v163
  %v765 = vunpack.c.h.b16 %v163
  %v766 = vunpack.c.l.b16 %v164
  %v767 = vunpack.c.h.b16 %v164
  %v768 = vunpack.c.l.b16 %v165
  %v769 = vunpack.c.h.b16 %v165
  %v770 = vunpack.c.l.b16 %v166
  %v771 = vunpack.c.h.b16 %v166
  %v772 = vunpack.c.l.b16 %v167
  %v773 = vunpack.c.h.b16 %v167
  %v774 = vunpack.c.l.b16 %v168
  %v775 = vunpack.c.h.b16 %v168
  %v776 = vunpack.c.l.b16 %v169
  %v777 = vunpack.c.h.b16 %v169
  %v778 = vunpack.c.l.b16 %v170
  %v779 = vunpack.c.h.b16 %v170
  %v780 = vunpack.c.l.b16 %v171
  %v781 = vunpack.c.h.b16 %v171
  %v782 = vunpack.c.l.b16 %v172
  %v783 = vunpack.c.h.b16 %v172
  %v784 = vunpack.c.l.b16 %v173
  %v785 = vunpack.c.h.b16 %v173
  %v786 = vpack.c.b16 %v474, %v466
  %v787 = vpack.c.b16 %v475, %v467
  %v788 = vpack.c.b16 %v476, %v468
  %v789 = vpack.c.b16 %v477, %v469
  %v790 = vpack.c.b16 %v478, %v470
  %v791 = vpack.c.b16 %v479, %v471
  %v792 = vpack.c.b16 %v480, %v472
  %v793 = vpack.c.b16 %v481, %v473
  %v794 = vpack.c.b16 %v490, %v482
  %v795 = vpack.c.b16 %v491, %v483
  %v796 = vpack.c.b16 %v492, %v484
  %v797 = vpack.c.b16 %v493, %v485
  %v798 = vpack.c.b16 %v494, %v486
  %v799 = vpack.c.b16 %v495, %v487
  %v800 = vpack.c.b16 %v496, %v488
  %v801 = vpack.c.b16 %v497, %v489
  %v802 = vpack.c.b16 %v506, %v498
  %v803 = vpack.c.b16 %v507, %v499
  %v804 = vpack.c.b16 %v508, %v500
  %v805 = vpack.c.b16 %v509, %v501
  %v806 = vpack.c.b16 %v510, %v502
  %v807 = vpack.c.b16 %v511, %v503
  %v808 = vpack.c.b16 %v512, %v504
  %v809 = vpack.c.b16 %v513, %v505
  %v810 = vpack.c.b16 %v522, %v514
  %v811 = vpack.c.b16 %v523, %v515
  %v812 = vpack.c.b16 %v524, %v516
  %v813 = vpack.c.b16 %v525, %v517
  %v814 = vpack.c.b16 %v526, %v518
  %v815 = vpack.c.b16 %v527, %v519
  %v816 = vpack.c.b16 %v528, %v520
  %v817 = vpack.c.b16 %v529, %v521
  %v818 = vpack.c.b16 %v538, %v530
  %v819 = vpack.c.b16 %v539, %v531
  %v820 = vpack.c.b16 %v540, %v532
  %v821 = vpack.c.b16 %v541, %v533
  %v822 = vpack.c.b16 %v542, %v534
  %v823 = vpack.c.b16 %v543, %v535
  %v824 = vpack.c.b16 %v544, %v536
  %v825 = vpack.c.b16 %v545, %v537
  %v826 = vpack.c.b16 %v554, %v546
  %v827 = vpack.c.b16 %v555, %v547
  %v828 = vpack.c.b16 %v556, %v548
  %v829 = vpack.c.b16 %v557, %v549
  %v830 = vpack.c.b16 %v558, %v550
  %v831 = vpack.c.b16 %v559, %v551
  %v832 = vpack.c.b16 %v560, %v552
  %v833 = vpack.c.b16 %v561, %v553
  %v834 = vpack.c.b16 %v570, %v562
  %v835 = vpack.c.b16 %v571, %v563
  %v836 = vpack.c.b16 %v572, %v564
  %v837 = vpack.c.b16 %v573, %v565
  %v838 = vpack.c.b16 %v574, %v566
  %v839 = vpack.c.b16 %v575, %v567
  %v840 = vpack.c.b16 %v576, %v568
  %v841 = vpack.c.b16 %v577, %v569
  %v842 = vpack.c.b16 %v586, %v578
  %v843 = vpack.c.b16 %v587, %v579
  %v844 = vpack.c.b16 %v588, %v580
  %v845 = vpack.c.b16 %v589, %v581
  %v846 = vpack.c.b16 %v590, %v582
  %v847 = vpack.c.b16 %v591, %v583
  %v848 = vpack.c.b16 %v592, %v584
  %v849 = vpack.c.b16 %v593, %v585
  %v850 = vpack.c.b16 %v602, %v594
  %v851 = vpack.c.b16 %v603, %v595
  %v852 = vpack.c.b16 %v604, %v596
  %v853 = vpack.c.b16 %v605, %v597
  %v854 = vpack.c.b16 %v606, %v598
  %v855 = vpack.c.b16 %v607, %v599
  %v856 = vpack.c.b16 %v608, %v600
  %v857 = vpack.c.b16 %v609, %v601
  %v858 = vpack.c.b16 %v618, %v610
  %v859 = vpack.c.b16 %v619, %v611
  %v860 = vpack.c.b16 %v620, %v612
  %v861 = vpack.c.b16 %v621, %v613
  %v862 = vpack.c.b16 %v622, %v614
  %v863 = vpack.c.b16 %v623, %v615
  %v864 = vpack.c.b16 %v624, %v616
  %v865 = vpack.c.b16 %v625, %v617
  %v866 = vpack.c.b16 %v634, %v626
  %v867 = vpack.c.b16 %v635, %v627
  %v868 = vpack.c.b16 %v636, %v628
  %v869 = vpack.c.b16 %v637, %v629
  %v870 = vpack.c.b16 %v638, %v630
  %v871 = vpack.c.b16 %v639, %v631
  %v872 = vpack.c.b16 %v640, %v632
  %v873 = vpack.c.b16 %v641, %v633
  %v874 = vpack.c.b16 %v650, %v642
  %v875 = vpack.c.b16 %v651, %v643
  %v876 = vpack.c.b16 %v652, %v644
  %v877 = vpack.c.b16 %v653, %v645
  %v878 = vpack.c.b16 %v654, %v646
  %v879 = vpack.c.b16 %v655, %v647
  %v880 = vpack.c.b16 %v656, %v648
  %v881 = vpack.c.b16 %v657, %v649
  %v882 = vpack.c.b16 %v666, %v658
  %v883 = vpack.c.b16 %v667, %v659
  %v884 = vpack.c.b16 %v668, %v660
  %v885 = vpack.c.b16 %v669, %v661
  %v886 = vpack.c.b16 %v670, %v662
  %v887 = vpack.c.b16 %v671, %v663
  %v888 = vpack.c.b16 %v672, %v664
  %v889 = vpack.c.b16 %v673, %v665
  %v890 = vpack.c.b16 %v682, %v674
  %v891 = vpack.c.b16 %v683, %v675
  %v892 = vpack.c.b16 %v684, %v676
  %v893 = vpack.c.b16 %v685, %v677
  %v894 = vpack.c.b16 %v686, %v678
  %v895 = vpack.c.b16 %v687, %v679
  %v896 = vpack.c.b16 %v688, %v680
  %v897 = vpack.c.b16 %v689, %v681
  %v898 = vpack.c.b16 %v698, %v690
  %v899 = vpack.c.b16 %v699, %v691
  %v900 = vpack.c.b16 %v700, %v692
  %v901 = vpack.c.b16 %v701, %v693
  %v902 = vpack.c.b16 %v702, %v694
  %v903 = vpack.c.b16 %v703, %v695
  %v904 = vpack.c.b16 %v704, %v696
  %v905 = vpack.c.b16 %v705, %v697
  %v906 = vpack.c.b16 %v714, %v706
  %v907 = vpack.c.b16 %v715, %v707
  %v908 = vpack.c.b16 %v716, %v708
  %v909 = vpack.c.b16 %v717, %v709
  %v910 = vpack.c.b16 %v718, %v710
  %v911 = vpack.c.b16 %v719, %v711
  %v912 = vpack.c.b16 %v720, %v712
  %v913 = vpack.c.b16 %v721, %v713
  %v914 = vpack.c.b16 %v730, %v722
  %v915 = vpack.c.b16 %v731, %v723
  %v916 = vpack.c.b16 %v732, %v724
  %v917 = vpack.c.b16 %v733, %v725
  %v918 = vpack.c.b16 %v734, %v726
  %v919 = vpack.c.b16 %v735, %v727
  %v920 = vpack.c.b16 %v736, %v728
  %v921 = vpack.c.b16 %v737, %v729
  %v922 = vpack.c.b16 %v746, %v738
  %v923 = vpack.c.b16 %v747, %v739
  %v924 = vpack.c.b16 %v748, %v740
  %v925 = vpack.c.b16 %v749, %v741
  %v926 = vpack.c.b16 %v750, %v742
  %v927 = vpack.c.b16 %v751, %v743
  %v928 = vpack.c.b16 %v752, %v744
  %v929 = vpack.c.b16 %v753, %v745
  %v930 = vpack.c.b16 %v762, %v754
  %v931 = vpack.c.b16 %v763, %v755
  %v932 = vpack.c.b16 %v764, %v756
  %v933 = vpack.c.b16 %v765, %v757
  %v934 = vpack.c.b16 %v766, %v758
  %v935 = vpack.c.b16 %v767, %v759
  %v936 = vpack.c.b16 %v768, %v760
  %v937 = vpack.c.b16 %v769, %v761
  %v938 = vpack.c.b16 %v778, %v770
  %v939 = vpack.c.b16 %v779, %v771
  %v940 = vpack.c.b16 %v780, %v772
  %v941 = vpack.c.b16 %v781, %v773
  %v942 = vpack.c.b16 %v782, %v774
  %v943 = vpack.c.b16 %v783, %v775
  %v944 = vpack.c.b16 %v784, %v776
  %v945 = vpack.c.b16 %v785, %v777
  %v1234 = vunpack.c.l.b16 %v174
  %v1235 = vunpack.c.l.b16 %v175
  %v1236 = vunpack.c.l.b16 %v176
  %v1237 = vunpack.c.l.b16 %v177
  %v1238 = vunpack.c.l.b16 %v178
  %v1239 = vunpack.c.l.b16 %v179
  %v1240 = vunpack.c.l.b16 %v180
  %v1241 = vunpack.c.l.b16 %v181
  %v1242 = vunpack.c.l.b16 %v182
  %v1243 = vunpack.c.l.b16 %v183
  %v1244 = vunpack.c.l.b16 %v184
  %v1245 = vunpack.c.l.b16 %v185
  %v1246 = vunpack.c.l.b16 %v186
  %v1247 = vunpack.c.l.b16 %v187
  %v1248 = vunpack.c.l.b16 %v188
  %v1249 = vunpack.c.l.b16 %v189
  %v1250 = vunpack.c.l.b16 %v190
  %v1251 = vunpack.c.l.b16 %v191
  %v1252 = vunpack.c.l.b16 %v192
  %v1253 = vunpack.c.l.b16 %v193
  %v1254 = vunpack.c.l.b16 %v194
  %v1255 = vunpack.c.l.b16 %v195
  %v1256 = vunpack.c.l.b16 %v196
  %v1257 = vunpack.c.l.b16 %v197
  %v1258 = vunpack.c.l.b16 %v198
  %v1259 = vunpack.c.l.b16 %v199
  %v1260 = vunpack.c.l.b16 %v200
  %v1261 = vunpack.c.l.b16 %v201
  %v1262 = vunpack.c.l.b16 %v202
  %v1263 = vunpack.c.l.b16 %v203
  %v1264 = vunpack.c.l.b16 %v204
  %v1265 = vunpack.c.l.b16 %v205
  %v1266 = vunpack.c.l.b16 %v206
  %v1267 = vunpack.c.l.b16 %v207
  %v1268 = vunpack.c.l.b16 %v208
  %v1269 = vunpack.c.l.b16 %v209
  %v1270 = vunpack.c.l.b16 %v210
  %v1271 = vunpack.c.l.b16 %v211
  %v1272 = vunpack.c.l.b16 %v212
  %v1273 = vunpack.c.l.b16 %v213
  %v1274 = vunpack.c.l.b16 %v214
  %v1275 = vunpack.c.l.b16 %v215
  %v1276 = vunpack.c.l.b16 %v216
  %v1277 = vunpack.c.l.b16 %v217
  %v1278 = vunpack.c.l.b16 %v218
  %v1279 = vunpack.c.l.b16 %v219
  %v1280 = vunpack.c.l.b16 %v220
  %v1281 = vunpack.c.l.b16 %v221
  %v1282 = vunpack.c.l.b16 %v222
  %v1283 = vunpack.c.l.b16 %v223
  %v1284 = vunpack.c.l.b16 %v224
  %v1285 = vunpack.c.l.b16 %v225
  %v1286 = vunpack.c.l.b16 %v226
  %v1287 = vunpack.c.l.b16 %v227
  %v1288 = vunpack.c.l.b16 %v228
  %v1289 = vunpack.c.l.b16 %v229
  %v1290 = vunpack.c.l.b16 %v230
  %v1291 = vunpack.c.l.b16 %v231
  %v1292 = vunpack.c.l.b16 %v232
  %v1293 = vunpack.c.l.b16 %v233
  %v1294 = vunpack.c.l.b16 %v234
  %v1295 = vunpack.c.l.b16 %v235
  %v1296 = vunpack.c.l.b16 %v236
  %v1297 = vunpack.c.l.b16 %v237
  %v1298 = vunpack.c.l.b16 %v238
  %v1299 = vunpack.c.l.b16 %v239
  %v1300 = vunpack.c.l.b16 %v240
  %v1301 = vunpack.c.l.b16 %v241
  %v1302 = vunpack.c.l.b16 %v242
  %v1303 = vunpack.c.l.b16 %v243
  %v1304 = vunpack.c.l.b16 %v244
  %v1305 = vunpack.c.l.b16 %v245
  %v1306 = vunpack.c.l.b16 %v246
  %v1307 = vunpack.c.l.b16 %v247
  %v1308 = vunpack.c.l.b16 %v248
  %v1309 = vunpack.c.l.b16 %v249
  %v1310 = vunpack.c.l.b16 %v250
  %v1311 = vunpack.c.l.b16 %v251
  %v1312 = vunpack.c.l.b16 %v252
  %v1313 = vunpack.c.l.b16 %v253
  %v1314 = vunpack.c.l.b16 %v254
  %v1315 = vunpack.c.l.b16 %v255
  %v1316 = vunpack.c.l.b16 %v256
  %v1317 = vunpack.c.l.b16 %v257
  %v1318 = vunpack.c.l.b16 %v258
  %v1319 = vunpack.c.l.b16 %v259
  %v1320 = vunpack.c.l.b16 %v260
  %v1321 = vunpack.c.l.b16 %v261
  %v1322 = vunpack.c.l.b16 %v262
  %v1323 = vunpack.c.l.b16 %v263
  %v1324 = vunpack.c.l.b16 %v264
  %v1325 = vunpack.c.l.b16 %v265
  %v1326 = vunpack.c.l.b16 %v266
  %v1327 = vunpack.c.l.b16 %v267
  %v1328 = vunpack.c.l.b16 %v268
  %v1329 = vunpack.c.l.b16 %v269
  %v1330 = vunpack.c.l.b16 %v270
  %v1331 = vunpack.c.l.b16 %v271
  %v1332 = vunpack.c.l.b16 %v272
  %v1333 = vunpack.c.l.b16 %v273
  %v1334 = vunpack.c.l.b16 %v274
  %v1335 = vunpack.c.l.b16 %v275
  %v1336 = vunpack.c.l.b16 %v276
  %v1337 = vunpack.c.l.b16 %v277
  %v1338 = vunpack.c.l.b16 %v278
  %v1339 = vunpack.c.l.b16 %v279
  %v1340 = vunpack.c.l.b16 %v280
  %v1341 = vunpack.c.l.b16 %v281
  %v1342 = vunpack.c.l.b16 %v282
  %v1343 = vunpack.c.l.b16 %v283
  %v1344 = vunpack.c.l.b16 %v284
  %v1345 = vunpack.c.l.b16 %v285
  %v1346 = vunpack.c.l.b16 %v286
  %v1347 = vunpack.c.l.b16 %v287
  %v1348 = vunpack.c.l.b16 %v288
  %v1349 = vunpack.c.l.b16 %v289
  %v1350 = vunpack.c.l.b16 %v290
  %v1351 = vunpack.c.l.b16 %v291
  %v1352 = vunpack.c.l.b16 %v292
  %v1353 = vunpack.c.l.b16 %v293
  %v1354 = vunpack.c.l.b16 %v294
  %v1355 = vunpack.c.l.b16 %v295
  %v1356 = vunpack.c.l.b16 %v296
  %v1357 = vunpack.c.l.b16 %v297
  %v1358 = vunpack.c.l.b16 %v298
  %v1359 = vunpack.c.l.b16 %v299
  %v1360 = vunpack.c.l.b16 %v300
  %v1361 = vunpack.c.l.b16 %v301
  %v1362 = vpack.c.b16 %v1235, %v1234
  %v1363 = vpack.c.b16 %v1237, %v1236
  %v1364 = vpack.c.b16 %v1239, %v1238
  %v1365 = vpack.c.b16 %v1241, %v1240
  %v1366 = vpack.c.b16 %v1243, %v1242
  %v1367 = vpack.c.b16 %v1245, %v1244
  %v1368 = vpack.c.b16 %v1247, %v1246
  %v1369 = vpack.c.b16 %v1249, %v1248
  %v1370 = vpack.c.b16 %v1251, %v1250
  %v1371 = vpack.c.b16 %v1253, %v1252
  %v1372 = vpack.c.b16 %v1255, %v1254
  %v1373 = vpack.c.b16 %v1257, %v1256
  %v1374 = vpack.c.b16 %v1259, %v1258
  %v1375 = vpack.c.b16 %v1261, %v1260
  %v1376 = vpack.c.b16 %v1263, %v1262
  %v1377 = vpack.c.b16 %v1265, %v1264
  %v1378 = vpack.c.b16 %v1267, %v1266
  %v1379 = vpack.c.b16 %v1269, %v1268
  %v1380 = vpack.c.b16 %v1271, %v1270
  %v1381 = vpack.c.b16 %v1273, %v1272
  %v1382 = vpack.c.b16 %v1275, %v1274
  %v1383 = vpack.c.b16 %v1277, %v1276
  %v1384 = vpack.c.b16 %v1279, %v1278
  %v1385 = vpack.c.b16 %v1281, %v1280
  %v1386 = vpack.c.b16 %v1283, %v1282
  %v1387 = vpack.c.b16 %v1285, %v1284
  %v1388 = vpack.c.b16 %v1287, %v1286
  %v1389 = vpack.c.b16 %v1289, %v1288
  %v1390 = vpack.c.b16 %v1291, %v1290
  %v1391 = vpack.c.b16 %v1293, %v1292
  %v1392 = vpack.c.b16 %v1295, %v1294
  %v1393 = vpack.c.b16 %v1297, %v1296
  %v1394 = vpack.c.b16 %v1299, %v1298
  %v1395 = vpack.c.b16 %v1301, %v1300
  %v1396 = vpack.c.b16 %v1303, %v1302
  %v1397 = vpack.c.b16 %v1305, %v1304
  %v1398 = vpack.c.b16 %v1307, %v1306
  %v1399 = vpack.c.b16 %v1309, %v1308
  %v1400 = vpack.c.b16 %v1311, %v1310
  %v1401 = vpack.c.b16 %v1313, %v1312
  %v1402 = vpack.c.b16 %v1315, %v1314
  %v1403 = vpack.c.b16 %v1317, %v1316
  %v1404 = vpack.c.b16 %v1319, %v1318
  %v1405 = vpack.c.b16 %v1321, %v1320
  %v1406 = vpack.c.b16 %v1323, %v1322
  %v1407 = vpack.c.b16 %v1325, %v1324
  %v1408 = vpack.c.b16 %v1327, %v1326
  %v1409 = vpack.c.b16 %v1329, %v1328
  %v1410 = vpack.c.b16 %v1331, %v1330
  %v1411 = vpack.c.b16 %v1333, %v1332
  %v1412 = vpack.c.b16 %v1335, %v1334
  %v1413 = vpack.c.b16 %v1337, %v1336
  %v1414 = vpack.c.b16 %v1339, %v1338
  %v1415 = vpack.c.b16 %v1341, %v1340
  %v1416 = vpack.c.b16 %v1343, %v1342
  %v1417 = vpack.c.b16 %v1345, %v1344
  %v1418 = vpack.c.b16 %v1347, %v1346
  %v1419 = vpack.c.b16 %v1349, %v1348
  %v1420 = vpack.c.b16 %v1351, %v1350
  %v1421 = vpack.c.b16 %v1353, %v1352
  %v1422 = vpack.c.b16 %v1355, %v1354
  %v1423 = vpack.c.b16 %v1357, %v1356
  %v1424 = vpack.c.b16 %v1359, %v1358
  %v1425 = vpack.c.b16 %v1361, %v1360
  %1490 = vmatpush.bf16.msra.mxu0 %v1369
  %1491 = vmatpush.bf16.msra.mxu0 %v1368
  %1492 = vmatpush.bf16.msra.mxu0 %v1367
  %1493 = vmatpush.bf16.msra.mxu0 %v1366
  %1494 = vmatpush.bf16.msra.mxu0 %v1365
  %1495 = vmatpush.bf16.msra.mxu0 %v1364
  %1496 = vmatpush.bf16.msra.mxu0 %v1363
  %1497 = vmatpush.bf16.msra.mxu0 %v1362
  %1498 = vmatmul.bf16.gmra.mxu0 %v786
  %v1499 = vpop.f32.mrf.mxu0
  %v1500 = vadd.f32 %v304, %v1499
  %v1501 = vpop.f32.mrf.mxu0
  %v1502 = vadd.f32 %v304, %v1501
  %1503 = vmatmul.bf16.gmra.mxu0 %v794
  %v1504 = vpop.f32.mrf.mxu0
  %v1505 = vadd.f32 %v304, %v1504
  %v1506 = vpop.f32.mrf.mxu0
  %v1507 = vadd.f32 %v304, %v1506
  %1508 = vmatmul.bf16.gmra.mxu0 %v802
  %v1509 = vpop.f32.mrf.mxu0
  %v1510 = vadd.f32 %v304, %v1509
  %v1511 = vpop.f32.mrf.mxu0
  %v1512 = vadd.f32 %v304, %v1511
  %1513 = vmatmul.bf16.gmra.mxu0 %v810
  %v1514 = vpop.f32.mrf.mxu0
  %v1515 = vadd.f32 %v304, %v1514
  %v1516 = vpop.f32.mrf.mxu0
  %v1517 = vadd.f32 %v304, %v1516
  %1518 = vmatmul.bf16.gmra.mxu0 %v818
  %v1519 = vpop.f32.mrf.mxu0
  %v1520 = vadd.f32 %v304, %v1519
  %v1521 = vpop.f32.mrf.mxu0
  %v1522 = vadd.f32 %v304, %v1521
  %1523 = vmatmul.bf16.gmra.mxu0 %v826
  %v1524 = vpop.f32.mrf.mxu0
  %v1525 = vadd.f32 %v304, %v1524
  %v1526 = vpop.f32.mrf.mxu0
  %v1527 = vadd.f32 %v304, %v1526
  %1528 = vmatmul.bf16.gmra.mxu0 %v834
  %v1529 = vpop.f32.mrf.mxu0
  %v1530 = vadd.f32 %v304, %v1529
  %v1531 = vpop.f32.mrf.mxu0
  %v1532 = vadd.f32 %v304, %v1531
  %1533 = vmatmul.bf16.gmra.mxu0 %v842
  %v1534 = vpop.f32.mrf.mxu0
  %v1535 = vadd.f32 %v304, %v1534
  %v1536 = vpop.f32.mrf.mxu0
  %v1537 = vadd.f32 %v304, %v1536
  %1538 = vmatmul.bf16.gmra.mxu0 %v850
  %v1539 = vpop.f32.mrf.mxu0
  %v1540 = vadd.f32 %v304, %v1539
  %v1541 = vpop.f32.mrf.mxu0
  %v1542 = vadd.f32 %v304, %v1541
  %1543 = vmatmul.bf16.gmra.mxu0 %v858
  %v1544 = vpop.f32.mrf.mxu0
  %v1545 = vadd.f32 %v304, %v1544
  %v1546 = vpop.f32.mrf.mxu0
  %v1547 = vadd.f32 %v304, %v1546
  %1548 = vmatmul.bf16.gmra.mxu0 %v866
  %v1549 = vpop.f32.mrf.mxu0
  %v1550 = vadd.f32 %v304, %v1549
  %v1551 = vpop.f32.mrf.mxu0
  %v1552 = vadd.f32 %v304, %v1551
  %1553 = vmatmul.bf16.gmra.mxu0 %v874
  %v1554 = vpop.f32.mrf.mxu0
  %v1555 = vadd.f32 %v304, %v1554
  %v1556 = vpop.f32.mrf.mxu0
  %v1557 = vadd.f32 %v304, %v1556
  %1558 = vmatmul.bf16.gmra.mxu0 %v882
  %v1559 = vpop.f32.mrf.mxu0
  %v1560 = vadd.f32 %v304, %v1559
  %v1561 = vpop.f32.mrf.mxu0
  %v1562 = vadd.f32 %v304, %v1561
  %1563 = vmatmul.bf16.gmra.mxu0 %v890
  %v1564 = vpop.f32.mrf.mxu0
  %v1565 = vadd.f32 %v304, %v1564
  %v1566 = vpop.f32.mrf.mxu0
  %v1567 = vadd.f32 %v304, %v1566
  %1568 = vmatmul.bf16.gmra.mxu0 %v898
  %v1569 = vpop.f32.mrf.mxu0
  %v1570 = vadd.f32 %v304, %v1569
  %v1571 = vpop.f32.mrf.mxu0
  %v1572 = vadd.f32 %v304, %v1571
  %1573 = vmatmul.bf16.gmra.mxu0 %v906
  %v1574 = vpop.f32.mrf.mxu0
  %v1575 = vadd.f32 %v304, %v1574
  %v1576 = vpop.f32.mrf.mxu0
  %v1577 = vadd.f32 %v304, %v1576
  %1578 = vmatmul.bf16.gmra.mxu0 %v914
  %v1579 = vpop.f32.mrf.mxu0
  %v1580 = vadd.f32 %v304, %v1579
  %v1581 = vpop.f32.mrf.mxu0
  %v1582 = vadd.f32 %v304, %v1581
  %1583 = vmatmul.bf16.gmra.mxu0 %v922
  %v1584 = vpop.f32.mrf.mxu0
  %v1585 = vadd.f32 %v304, %v1584
  %v1586 = vpop.f32.mrf.mxu0
  %v1587 = vadd.f32 %v304, %v1586
  %1588 = vmatmul.bf16.gmra.mxu0 %v930
  %v1589 = vpop.f32.mrf.mxu0
  %v1590 = vadd.f32 %v304, %v1589
  %v1591 = vpop.f32.mrf.mxu0
  %v1592 = vadd.f32 %v304, %v1591
  %1593 = vmatmul.bf16.gmra.mxu0 %v938
  %v1594 = vpop.f32.mrf.mxu0
  %v1595 = vadd.f32 %v304, %v1594
  %v1596 = vpop.f32.mrf.mxu0
  %v1597 = vadd.f32 %v304, %v1596
  %1598 = vdwg.mxu0
  %1599 = vmatpush.bf16.msra.mxu0 %v1377
  %1600 = vmatpush.bf16.msra.mxu0 %v1376
  %1601 = vmatpush.bf16.msra.mxu0 %v1375
  %1602 = vmatpush.bf16.msra.mxu0 %v1374
  %1603 = vmatpush.bf16.msra.mxu0 %v1373
  %1604 = vmatpush.bf16.msra.mxu0 %v1372
  %1605 = vmatpush.bf16.msra.mxu0 %v1371
  %1606 = vmatpush.bf16.msra.mxu0 %v1370
  %1607 = vmatmul.bf16.gmra.mxu0 %v787
  %v1608 = vpop.f32.mrf.mxu0
  %v1609 = vadd.f32 %v1500, %v1608
  %v1610 = vpop.f32.mrf.mxu0
  %v1611 = vadd.f32 %v1502, %v1610
  %1612 = vmatmul.bf16.gmra.mxu0 %v795
  %v1613 = vpop.f32.mrf.mxu0
  %v1614 = vadd.f32 %v1505, %v1613
  %v1615 = vpop.f32.mrf.mxu0
  %v1616 = vadd.f32 %v1507, %v1615
  %1617 = vmatmul.bf16.gmra.mxu0 %v803
  %v1618 = vpop.f32.mrf.mxu0
  %v1619 = vadd.f32 %v1510, %v1618
  %v1620 = vpop.f32.mrf.mxu0
  %v1621 = vadd.f32 %v1512, %v1620
  %1622 = vmatmul.bf16.gmra.mxu0 %v811
  %v1623 = vpop.f32.mrf.mxu0
  %v1624 = vadd.f32 %v1515, %v1623
  %v1625 = vpop.f32.mrf.mxu0
  %v1626 = vadd.f32 %v1517, %v1625
  %1627 = vmatmul.bf16.gmra.mxu0 %v819
  %v1628 = vpop.f32.mrf.mxu0
  %v1629 = vadd.f32 %v1520, %v1628
  %v1630 = vpop.f32.mrf.mxu0
  %v1631 = vadd.f32 %v1522, %v1630
  %1632 = vmatmul.bf16.gmra.mxu0 %v827
  %v1633 = vpop.f32.mrf.mxu0
  %v1634 = vadd.f32 %v1525, %v1633
  %v1635 = vpop.f32.mrf.mxu0
  %v1636 = vadd.f32 %v1527, %v1635
  %1637 = vmatmul.bf16.gmra.mxu0 %v835
  %v1638 = vpop.f32.mrf.mxu0
  %v1639 = vadd.f32 %v1530, %v1638
  %v1640 = vpop.f32.mrf.mxu0
  %v1641 = vadd.f32 %v1532, %v1640
  %1642 = vmatmul.bf16.gmra.mxu0 %v843
  %v1643 = vpop.f32.mrf.mxu0
  %v1644 = vadd.f32 %v1535, %v1643
  %v1645 = vpop.f32.mrf.mxu0
  %v1646 = vadd.f32 %v1537, %v1645
  %1647 = vmatmul.bf16.gmra.mxu0 %v851
  %v1648 = vpop.f32.mrf.mxu0
  %v1649 = vadd.f32 %v1540, %v1648
  %v1650 = vpop.f32.mrf.mxu0
  %v1651 = vadd.f32 %v1542, %v1650
  %1652 = vmatmul.bf16.gmra.mxu0 %v859
  %v1653 = vpop.f32.mrf.mxu0
  %v1654 = vadd.f32 %v1545, %v1653
  %v1655 = vpop.f32.mrf.mxu0
  %v1656 = vadd.f32 %v1547, %v1655
  %1657 = vmatmul.bf16.gmra.mxu0 %v867
  %v1658 = vpop.f32.mrf.mxu0
  %v1659 = vadd.f32 %v1550, %v1658
  %v1660 = vpop.f32.mrf.mxu0
  %v1661 = vadd.f32 %v1552, %v1660
  %1662 = vmatmul.bf16.gmra.mxu0 %v875
  %v1663 = vpop.f32.mrf.mxu0
  %v1664 = vadd.f32 %v1555, %v1663
  %v1665 = vpop.f32.mrf.mxu0
  %v1666 = vadd.f32 %v1557, %v1665
  %1667 = vmatmul.bf16.gmra.mxu0 %v883
  %v1668 = vpop.f32.mrf.mxu0
  %v1669 = vadd.f32 %v1560, %v1668
  %v1670 = vpop.f32.mrf.mxu0
  %v1671 = vadd.f32 %v1562, %v1670
  %1672 = vmatmul.bf16.gmra.mxu0 %v891
  %v1673 = vpop.f32.mrf.mxu0
  %v1674 = vadd.f32 %v1565, %v1673
  %v1675 = vpop.f32.mrf.mxu0
  %v1676 = vadd.f32 %v1567, %v1675
  %1677 = vmatmul.bf16.gmra.mxu0 %v899
  %v1678 = vpop.f32.mrf.mxu0
  %v1679 = vadd.f32 %v1570, %v1678
  %v1680 = vpop.f32.mrf.mxu0
  %v1681 = vadd.f32 %v1572, %v1680
  %1682 = vmatmul.bf16.gmra.mxu0 %v907
  %v1683 = vpop.f32.mrf.mxu0
  %v1684 = vadd.f32 %v1575, %v1683
  %v1685 = vpop.f32.mrf.mxu0
  %v1686 = vadd.f32 %v1577, %v1685
  %1687 = vmatmul.bf16.gmra.mxu0 %v915
  %v1688 = vpop.f32.mrf.mxu0
  %v1689 = vadd.f32 %v1580, %v1688
  %v1690 = vpop.f32.mrf.mxu0
  %v1691 = vadd.f32 %v1582, %v1690
  %1692 = vmatmul.bf16.gmra.mxu0 %v923
  %v1693 = vpop.f32.mrf.mxu0
  %v1694 = vadd.f32 %v1585, %v1693
  %v1695 = vpop.f32.mrf.mxu0
  %v1696 = vadd.f32 %v1587, %v1695
  %1697 = vmatmul.bf16.gmra.mxu0 %v931
  %v1698 = vpop.f32.mrf.mxu0
  %v1699 = vadd.f32 %v1590, %v1698
  %v1700 = vpop.f32.mrf.mxu0
  %v1701 = vadd.f32 %v1592, %v1700
  %1702 = vmatmul.bf16.gmra.mxu0 %v939
  %v1703 = vpop.f32.mrf.mxu0
  %v1704 = vadd.f32 %v1595, %v1703
  %v1705 = vpop.f32.mrf.mxu0
  %v1706 = vadd.f32 %v1597, %v1705
  %1707 = vdwg.mxu0
  %1708 = vmatpush.bf16.msra.mxu0 %v1385
  %1709 = vmatpush.bf16.msra.mxu0 %v1384
  %1710 = vmatpush.bf16.msra.mxu0 %v1383
  %1711 = vmatpush.bf16.msra.mxu0 %v1382
  %1712 = vmatpush.bf16.msra.mxu0 %v1381
  %1713 = vmatpush.bf16.msra.mxu0 %v1380
  %1714 = vmatpush.bf16.msra.mxu0 %v1379
  %1715 = vmatpush.bf16.msra.mxu0 %v1378
  %1716 = vmatmul.bf16.gmra.mxu0 %v788
  %v1717 = vpop.f32.mrf.mxu0
  %v1718 = vadd.f32 %v1609, %v1717
  %v1719 = vpop.f32.mrf.mxu0
  %v1720 = vadd.f32 %v1611, %v1719
  %1721 = vmatmul.bf16.gmra.mxu0 %v796
  %v1722 = vpop.f32.mrf.mxu0
  %v1723 = vadd.f32 %v1614, %v1722
  %v1724 = vpop.f32.mrf.mxu0
  %v1725 = vadd.f32 %v1616, %v1724
  %1726 = vmatmul.bf16.gmra.mxu0 %v804
  %v1727 = vpop.f32.mrf.mxu0
  %v1728 = vadd.f32 %v1619, %v1727
  %v1729 = vpop.f32.mrf.mxu0
  %v1730 = vadd.f32 %v1621, %v1729
  %1731 = vmatmul.bf16.gmra.mxu0 %v812
  %v1732 = vpop.f32.mrf.mxu0
  %v1733 = vadd.f32 %v1624, %v1732
  %v1734 = vpop.f32.mrf.mxu0
  %v1735 = vadd.f32 %v1626, %v1734
  %1736 = vmatmul.bf16.gmra.mxu0 %v820
  %v1737 = vpop.f32.mrf.mxu0
  %v1738 = vadd.f32 %v1629, %v1737
  %v1739 = vpop.f32.mrf.mxu0
  %v1740 = vadd.f32 %v1631, %v1739
  %1741 = vmatmul.bf16.gmra.mxu0 %v828
  %v1742 = vpop.f32.mrf.mxu0
  %v1743 = vadd.f32 %v1634, %v1742
  %v1744 = vpop.f32.mrf.mxu0
  %v1745 = vadd.f32 %v1636, %v1744
  %1746 = vmatmul.bf16.gmra.mxu0 %v836
  %v1747 = vpop.f32.mrf.mxu0
  %v1748 = vadd.f32 %v1639, %v1747
  %v1749 = vpop.f32.mrf.mxu0
  %v1750 = vadd.f32 %v1641, %v1749
  %1751 = vmatmul.bf16.gmra.mxu0 %v844
  %v1752 = vpop.f32.mrf.mxu0
  %v1753 = vadd.f32 %v1644, %v1752
  %v1754 = vpop.f32.mrf.mxu0
  %v1755 = vadd.f32 %v1646, %v1754
  %1756 = vmatmul.bf16.gmra.mxu0 %v852
  %v1757 = vpop.f32.mrf.mxu0
  %v1758 = vadd.f32 %v1649, %v1757
  %v1759 = vpop.f32.mrf.mxu0
  %v1760 = vadd.f32 %v1651, %v1759
  %1761 = vmatmul.bf16.gmra.mxu0 %v860
  %v1762 = vpop.f32.mrf.mxu0
  %v1763 = vadd.f32 %v1654, %v1762
  %v1764 = vpop.f32.mrf.mxu0
  %v1765 = vadd.f32 %v1656, %v1764
  %1766 = vmatmul.bf16.gmra.mxu0 %v868
  %v1767 = vpop.f32.mrf.mxu0
  %v1768 = vadd.f32 %v1659, %v1767
  %v1769 = vpop.f32.mrf.mxu0
  %v1770 = vadd.f32 %v1661, %v1769
  %1771 = vmatmul.bf16.gmra.mxu0 %v876
  %v1772 = vpop.f32.mrf.mxu0
  %v1773 = vadd.f32 %v1664, %v1772
  %v1774 = vpop.f32.mrf.mxu0
  %v1775 = vadd.f32 %v1666, %v1774
  %1776 = vmatmul.bf16.gmra.mxu0 %v884
  %v1777 = vpop.f32.mrf.mxu0
  %v1778 = vadd.f32 %v1669, %v1777
  %v1779 = vpop.f32.mrf.mxu0
  %v1780 = vadd.f32 %v1671, %v1779
  %1781 = vmatmul.bf16.gmra.mxu0 %v892
  %v1782 = vpop.f32.mrf.mxu0
  %v1783 = vadd.f32 %v1674, %v1782
  %v1784 = vpop.f32.mrf.mxu0
  %v1785 = vadd.f32 %v1676, %v1784
  %1786 = vmatmul.bf16.gmra.mxu0 %v900
  %v1787 = vpop.f32.mrf.mxu0
  %v1788 = vadd.f32 %v1679, %v1787
  %v1789 = vpop.f32.mrf.mxu0
  %v1790 = vadd.f32 %v1681, %v1789
  %1791 = vmatmul.bf16.gmra.mxu0 %v908
  %v1792 = vpop.f32.mrf.mxu0
  %v1793 = vadd.f32 %v1684, %v1792
  %v1794 = vpop.f32.mrf.mxu0
  %v1795 = vadd.f32 %v1686, %v1794
  %1796 = vmatmul.bf16.gmra.mxu0 %v916
  %v1797 = vpop.f32.mrf.mxu0
  %v1798 = vadd.f32 %v1689, %v1797
  %v1799 = vpop.f32.mrf.mxu0
  %v1800 = vadd.f32 %v1691, %v1799
  %1801 = vmatmul.bf16.gmra.mxu0 %v924
  %v1802 = vpop.f32.mrf.mxu0
  %v1803 = vadd.f32 %v1694, %v1802
  %v1804 = vpop.f32.mrf.mxu0
  %v1805 = vadd.f32 %v1696, %v1804
  %1806 = vmatmul.bf16.gmra.mxu0 %v932
  %v1807 = vpop.f32.mrf.mxu0
  %v1808 = vadd.f32 %v1699, %v1807
  %v1809 = vpop.f32.mrf.mxu0
  %v1810 = vadd.f32 %v1701, %v1809
  %1811 = vmatmul.bf16.gmra.mxu0 %v940
  %v1812 = vpop.f32.mrf.mxu0
  %v1813 = vadd.f32 %v1704, %v1812
  %v1814 = vpop.f32.mrf.mxu0
  %v1815 = vadd.f32 %v1706, %v1814
  %1816 = vdwg.mxu0
  %1817 = vmatpush.bf16.msra.mxu0 %v1393
  %1818 = vmatpush.bf16.msra.mxu0 %v1392
  %1819 = vmatpush.bf16.msra.mxu0 %v1391
  %1820 = vmatpush.bf16.msra.mxu0 %v1390
  %1821 = vmatpush.bf16.msra.mxu0 %v1389
  %1822 = vmatpush.bf16.msra.mxu0 %v1388
  %1823 = vmatpush.bf16.msra.mxu0 %v1387
  %1824 = vmatpush.bf16.msra.mxu0 %v1386
  %1825 = vmatmul.bf16.gmra.mxu0 %v789
  %v1826 = vpop.f32.mrf.mxu0
  %v1827 = vadd.f32 %v1718, %v1826
  %v1828 = vpop.f32.mrf.mxu0
  %v1829 = vadd.f32 %v1720, %v1828
  %1830 = vmatmul.bf16.gmra.mxu0 %v797
  %v1831 = vpop.f32.mrf.mxu0
  %v1832 = vadd.f32 %v1723, %v1831
  %v1833 = vpop.f32.mrf.mxu0
  %v1834 = vadd.f32 %v1725, %v1833
  %1835 = vmatmul.bf16.gmra.mxu0 %v805
  %v1836 = vpop.f32.mrf.mxu0
  %v1837 = vadd.f32 %v1728, %v1836
  %v1838 = vpop.f32.mrf.mxu0
  %v1839 = vadd.f32 %v1730, %v1838
  %1840 = vmatmul.bf16.gmra.mxu0 %v813
  %v1841 = vpop.f32.mrf.mxu0
  %v1842 = vadd.f32 %v1733, %v1841
  %v1843 = vpop.f32.mrf.mxu0
  %v1844 = vadd.f32 %v1735, %v1843
  %1845 = vmatmul.bf16.gmra.mxu0 %v821
  %v1846 = vpop.f32.mrf.mxu0
  %v1847 = vadd.f32 %v1738, %v1846
  %v1848 = vpop.f32.mrf.mxu0
  %v1849 = vadd.f32 %v1740, %v1848
  %1850 = vmatmul.bf16.gmra.mxu0 %v829
  %v1851 = vpop.f32.mrf.mxu0
  %v1852 = vadd.f32 %v1743, %v1851
  %v1853 = vpop.f32.mrf.mxu0
  %v1854 = vadd.f32 %v1745, %v1853
  %1855 = vmatmul.bf16.gmra.mxu0 %v837
  %v1856 = vpop.f32.mrf.mxu0
  %v1857 = vadd.f32 %v1748, %v1856
  %v1858 = vpop.f32.mrf.mxu0
  %v1859 = vadd.f32 %v1750, %v1858
  %1860 = vmatmul.bf16.gmra.mxu0 %v845
  %v1861 = vpop.f32.mrf.mxu0
  %v1862 = vadd.f32 %v1753, %v1861
  %v1863 = vpop.f32.mrf.mxu0
  %v1864 = vadd.f32 %v1755, %v1863
  %1865 = vmatmul.bf16.gmra.mxu0 %v853
  %v1866 = vpop.f32.mrf.mxu0
  %v1867 = vadd.f32 %v1758, %v1866
  %v1868 = vpop.f32.mrf.mxu0
  %v1869 = vadd.f32 %v1760, %v1868
  %1870 = vmatmul.bf16.gmra.mxu0 %v861
  %v1871 = vpop.f32.mrf.mxu0
  %v1872 = vadd.f32 %v1763, %v1871
  %v1873 = vpop.f32.mrf.mxu0
  %v1874 = vadd.f32 %v1765, %v1873
  %1875 = vmatmul.bf16.gmra.mxu0 %v869
  %v1876 = vpop.f32.mrf.mxu0
  %v1877 = vadd.f32 %v1768, %v1876
  %v1878 = vpop.f32.mrf.mxu0
  %v1879 = vadd.f32 %v1770, %v1878
  %1880 = vmatmul.bf16.gmra.mxu0 %v877
  %v1881 = vpop.f32.mrf.mxu0
  %v1882 = vadd.f32 %v1773, %v1881
  %v1883 = vpop.f32.mrf.mxu0
  %v1884 = vadd.f32 %v1775, %v1883
  %1885 = vmatmul.bf16.gmra.mxu0 %v885
  %v1886 = vpop.f32.mrf.mxu0
  %v1887 = vadd.f32 %v1778, %v1886
  %v1888 = vpop.f32.mrf.mxu0
  %v1889 = vadd.f32 %v1780, %v1888
  %1890 = vmatmul.bf16.gmra.mxu0 %v893
  %v1891 = vpop.f32.mrf.mxu0
  %v1892 = vadd.f32 %v1783, %v1891
  %v1893 = vpop.f32.mrf.mxu0
  %v1894 = vadd.f32 %v1785, %v1893
  %1895 = vmatmul.bf16.gmra.mxu0 %v901
  %v1896 = vpop.f32.mrf.mxu0
  %v1897 = vadd.f32 %v1788, %v1896
  %v1898 = vpop.f32.mrf.mxu0
  %v1899 = vadd.f32 %v1790, %v1898
  %1900 = vmatmul.bf16.gmra.mxu0 %v909
  %v1901 = vpop.f32.mrf.mxu0
  %v1902 = vadd.f32 %v1793, %v1901
  %v1903 = vpop.f32.mrf.mxu0
  %v1904 = vadd.f32 %v1795, %v1903
  %1905 = vmatmul.bf16.gmra.mxu0 %v917
  %v1906 = vpop.f32.mrf.mxu0
  %v1907 = vadd.f32 %v1798, %v1906
  %v1908 = vpop.f32.mrf.mxu0
  %v1909 = vadd.f32 %v1800, %v1908
  %1910 = vmatmul.bf16.gmra.mxu0 %v925
  %v1911 = vpop.f32.mrf.mxu0
  %v1912 = vadd.f32 %v1803, %v1911
  %v1913 = vpop.f32.mrf.mxu0
  %v1914 = vadd.f32 %v1805, %v1913
  %1915 = vmatmul.bf16.gmra.mxu0 %v933
  %v1916 = vpop.f32.mrf.mxu0
  %v1917 = vadd.f32 %v1808, %v1916
  %v1918 = vpop.f32.mrf.mxu0
  %v1919 = vadd.f32 %v1810, %v1918
  %1920 = vmatmul.bf16.gmra.mxu0 %v941
  %v1921 = vpop.f32.mrf.mxu0
  %v1922 = vadd.f32 %v1813, %v1921
  %v1923 = vpop.f32.mrf.mxu0
  %v1924 = vadd.f32 %v1815, %v1923
  %1925 = vdwg.mxu0
  %1926 = vmatpush.bf16.msra.mxu0 %v1401
  %1927 = vmatpush.bf16.msra.mxu0 %v1400
  %1928 = vmatpush.bf16.msra.mxu0 %v1399
  %1929 = vmatpush.bf16.msra.mxu0 %v1398
  %1930 = vmatpush.bf16.msra.mxu0 %v1397
  %1931 = vmatpush.bf16.msra.mxu0 %v1396
  %1932 = vmatpush.bf16.msra.mxu0 %v1395
  %1933 = vmatpush.bf16.msra.mxu0 %v1394
  %1934 = vmatmul.bf16.gmra.mxu0 %v790
  %v1935 = vpop.f32.mrf.mxu0
  %v1936 = vadd.f32 %v1827, %v1935
  %v1937 = vpop.f32.mrf.mxu0
  %v1938 = vadd.f32 %v1829, %v1937
  %1939 = vmatmul.bf16.gmra.mxu0 %v798
  %v1940 = vpop.f32.mrf.mxu0
  %v1941 = vadd.f32 %v1832, %v1940
  %v1942 = vpop.f32.mrf.mxu0
  %v1943 = vadd.f32 %v1834, %v1942
  %1944 = vmatmul.bf16.gmra.mxu0 %v806
  %v1945 = vpop.f32.mrf.mxu0
  %v1946 = vadd.f32 %v1837, %v1945
  %v1947 = vpop.f32.mrf.mxu0
  %v1948 = vadd.f32 %v1839, %v1947
  %1949 = vmatmul.bf16.gmra.mxu0 %v814
  %v1950 = vpop.f32.mrf.mxu0
  %v1951 = vadd.f32 %v1842, %v1950
  %v1952 = vpop.f32.mrf.mxu0
  %v1953 = vadd.f32 %v1844, %v1952
  %1954 = vmatmul.bf16.gmra.mxu0 %v822
  %v1955 = vpop.f32.mrf.mxu0
  %v1956 = vadd.f32 %v1847, %v1955
  %v1957 = vpop.f32.mrf.mxu0
  %v1958 = vadd.f32 %v1849, %v1957
  %1959 = vmatmul.bf16.gmra.mxu0 %v830
  %v1960 = vpop.f32.mrf.mxu0
  %v1961 = vadd.f32 %v1852, %v1960
  %v1962 = vpop.f32.mrf.mxu0
  %v1963 = vadd.f32 %v1854, %v1962
  %1964 = vmatmul.bf16.gmra.mxu0 %v838
  %v1965 = vpop.f32.mrf.mxu0
  %v1966 = vadd.f32 %v1857, %v1965
  %v1967 = vpop.f32.mrf.mxu0
  %v1968 = vadd.f32 %v1859, %v1967
  %1969 = vmatmul.bf16.gmra.mxu0 %v846
  %v1970 = vpop.f32.mrf.mxu0
  %v1971 = vadd.f32 %v1862, %v1970
  %v1972 = vpop.f32.mrf.mxu0
  %v1973 = vadd.f32 %v1864, %v1972
  %1974 = vmatmul.bf16.gmra.mxu0 %v854
  %v1975 = vpop.f32.mrf.mxu0
  %v1976 = vadd.f32 %v1867, %v1975
  %v1977 = vpop.f32.mrf.mxu0
  %v1978 = vadd.f32 %v1869, %v1977
  %1979 = vmatmul.bf16.gmra.mxu0 %v862
  %v1980 = vpop.f32.mrf.mxu0
  %v1981 = vadd.f32 %v1872, %v1980
  %v1982 = vpop.f32.mrf.mxu0
  %v1983 = vadd.f32 %v1874, %v1982
  %1984 = vmatmul.bf16.gmra.mxu0 %v870
  %v1985 = vpop.f32.mrf.mxu0
  %v1986 = vadd.f32 %v1877, %v1985
  %v1987 = vpop.f32.mrf.mxu0
  %v1988 = vadd.f32 %v1879, %v1987
  %1989 = vmatmul.bf16.gmra.mxu0 %v878
  %v1990 = vpop.f32.mrf.mxu0
  %v1991 = vadd.f32 %v1882, %v1990
  %v1992 = vpop.f32.mrf.mxu0
  %v1993 = vadd.f32 %v1884, %v1992
  %1994 = vmatmul.bf16.gmra.mxu0 %v886
  %v1995 = vpop.f32.mrf.mxu0
  %v1996 = vadd.f32 %v1887, %v1995
  %v1997 = vpop.f32.mrf.mxu0
  %v1998 = vadd.f32 %v1889, %v1997
  %1999 = vmatmul.bf16.gmra.mxu0 %v894
  %v2000 = vpop.f32.mrf.mxu0
  %v2001 = vadd.f32 %v1892, %v2000
  %v2002 = vpop.f32.mrf.mxu0
  %v2003 = vadd.f32 %v1894, %v2002
  %2004 = vmatmul.bf16.gmra.mxu0 %v902
  %v2005 = vpop.f32.mrf.mxu0
  %v2006 = vadd.f32 %v1897, %v2005
  %v2007 = vpop.f32.mrf.mxu0
  %v2008 = vadd.f32 %v1899, %v2007
  %2009 = vmatmul.bf16.gmra.mxu0 %v910
  %v2010 = vpop.f32.mrf.mxu0
  %v2011 = vadd.f32 %v1902, %v2010
  %v2012 = vpop.f32.mrf.mxu0
  %v2013 = vadd.f32 %v1904, %v2012
  %2014 = vmatmul.bf16.gmra.mxu0 %v918
  %v2015 = vpop.f32.mrf.mxu0
  %v2016 = vadd.f32 %v1907, %v2015
  %v2017 = vpop.f32.mrf.mxu0
  %v2018 = vadd.f32 %v1909, %v2017
  %2019 = vmatmul.bf16.gmra.mxu0 %v926
  %v2020 = vpop.f32.mrf.mxu0
  %v2021 = vadd.f32 %v1912, %v2020
  %v2022 = vpop.f32.mrf.mxu0
  %v2023 = vadd.f32 %v1914, %v2022
  %2024 = vmatmul.bf16.gmra.mxu0 %v934
  %v2025 = vpop.f32.mrf.mxu0
  %v2026 = vadd.f32 %v1917, %v2025
  %v2027 = vpop.f32.mrf.mxu0
  %v2028 = vadd.f32 %v1919, %v2027
  %2029 = vmatmul.bf16.gmra.mxu0 %v942
  %v2030 = vpop.f32.mrf.mxu0
  %v2031 = vadd.f32 %v1922, %v2030
  %v2032 = vpop.f32.mrf.mxu0
  %v2033 = vadd.f32 %v1924, %v2032
  %2034 = vdwg.mxu0
  %2035 = vmatpush.bf16.msra.mxu0 %v1409
  %2036 = vmatpush.bf16.msra.mxu0 %v1408
  %2037 = vmatpush.bf16.msra.mxu0 %v1407
  %2038 = vmatpush.bf16.msra.mxu0 %v1406
  %2039 = vmatpush.bf16.msra.mxu0 %v1405
  %2040 = vmatpush.bf16.msra.mxu0 %v1404
  %2041 = vmatpush.bf16.msra.mxu0 %v1403
  %2042 = vmatpush.bf16.msra.mxu0 %v1402
  %2043 = vmatmul.bf16.gmra.mxu0 %v791
  %v2044 = vpop.f32.mrf.mxu0
  %v2045 = vadd.f32 %v1936, %v2044
  %v2046 = vpop.f32.mrf.mxu0
  %v2047 = vadd.f32 %v1938, %v2046
  %2048 = vmatmul.bf16.gmra.mxu0 %v799
  %v2049 = vpop.f32.mrf.mxu0
  %v2050 = vadd.f32 %v1941, %v2049
  %v2051 = vpop.f32.mrf.mxu0
  %v2052 = vadd.f32 %v1943, %v2051
  %2053 = vmatmul.bf16.gmra.mxu0 %v807
  %v2054 = vpop.f32.mrf.mxu0
  %v2055 = vadd.f32 %v1946, %v2054
  %v2056 = vpop.f32.mrf.mxu0
  %v2057 = vadd.f32 %v1948, %v2056
  %2058 = vmatmul.bf16.gmra.mxu0 %v815
  %v2059 = vpop.f32.mrf.mxu0
  %v2060 = vadd.f32 %v1951, %v2059
  %v2061 = vpop.f32.mrf.mxu0
  %v2062 = vadd.f32 %v1953, %v2061
  %2063 = vmatmul.bf16.gmra.mxu0 %v823
  %v2064 = vpop.f32.mrf.mxu0
  %v2065 = vadd.f32 %v1956, %v2064
  %v2066 = vpop.f32.mrf.mxu0
  %v2067 = vadd.f32 %v1958, %v2066
  %2068 = vmatmul.bf16.gmra.mxu0 %v831
  %v2069 = vpop.f32.mrf.mxu0
  %v2070 = vadd.f32 %v1961, %v2069
  %v2071 = vpop.f32.mrf.mxu0
  %v2072 = vadd.f32 %v1963, %v2071
  %2073 = vmatmul.bf16.gmra.mxu0 %v839
  %v2074 = vpop.f32.mrf.mxu0
  %v2075 = vadd.f32 %v1966, %v2074
  %v2076 = vpop.f32.mrf.mxu0
  %v2077 = vadd.f32 %v1968, %v2076
  %2078 = vmatmul.bf16.gmra.mxu0 %v847
  %v2079 = vpop.f32.mrf.mxu0
  %v2080 = vadd.f32 %v1971, %v2079
  %v2081 = vpop.f32.mrf.mxu0
  %v2082 = vadd.f32 %v1973, %v2081
  %2083 = vmatmul.bf16.gmra.mxu0 %v855
  %v2084 = vpop.f32.mrf.mxu0
  %v2085 = vadd.f32 %v1976, %v2084
  %v2086 = vpop.f32.mrf.mxu0
  %v2087 = vadd.f32 %v1978, %v2086
  %2088 = vmatmul.bf16.gmra.mxu0 %v863
  %v2089 = vpop.f32.mrf.mxu0
  %v2090 = vadd.f32 %v1981, %v2089
  %v2091 = vpop.f32.mrf.mxu0
  %v2092 = vadd.f32 %v1983, %v2091
  %2093 = vmatmul.bf16.gmra.mxu0 %v871
  %v2094 = vpop.f32.mrf.mxu0
  %v2095 = vadd.f32 %v1986, %v2094
  %v2096 = vpop.f32.mrf.mxu0
  %v2097 = vadd.f32 %v1988, %v2096
  %2098 = vmatmul.bf16.gmra.mxu0 %v879
  %v2099 = vpop.f32.mrf.mxu0
  %v2100 = vadd.f32 %v1991, %v2099
  %v2101 = vpop.f32.mrf.mxu0
  %v2102 = vadd.f32 %v1993, %v2101
  %2103 = vmatmul.bf16.gmra.mxu0 %v887
  %v2104 = vpop.f32.mrf.mxu0
  %v2105 = vadd.f32 %v1996, %v2104
  %v2106 = vpop.f32.mrf.mxu0
  %v2107 = vadd.f32 %v1998, %v2106
  %2108 = vmatmul.bf16.gmra.mxu0 %v895
  %v2109 = vpop.f32.mrf.mxu0
  %v2110 = vadd.f32 %v2001, %v2109
  %v2111 = vpop.f32.mrf.mxu0
  %v2112 = vadd.f32 %v2003, %v2111
  %2113 = vmatmul.bf16.gmra.mxu0 %v903
  %v2114 = vpop.f32.mrf.mxu0
  %v2115 = vadd.f32 %v2006, %v2114
  %v2116 = vpop.f32.mrf.mxu0
  %v2117 = vadd.f32 %v2008, %v2116
  %2118 = vmatmul.bf16.gmra.mxu0 %v911
  %v2119 = vpop.f32.mrf.mxu0
  %v2120 = vadd.f32 %v2011, %v2119
  %v2121 = vpop.f32.mrf.mxu0
  %v2122 = vadd.f32 %v2013, %v2121
  %2123 = vmatmul.bf16.gmra.mxu0 %v919
  %v2124 = vpop.f32.mrf.mxu0
  %v2125 = vadd.f32 %v2016, %v2124
  %v2126 = vpop.f32.mrf.mxu0
  %v2127 = vadd.f32 %v2018, %v2126
  %2128 = vmatmul.bf16.gmra.mxu0 %v927
  %v2129 = vpop.f32.mrf.mxu0
  %v2130 = vadd.f32 %v2021, %v2129
  %v2131 = vpop.f32.mrf.mxu0
  %v2132 = vadd.f32 %v2023, %v2131
  %2133 = vmatmul.bf16.gmra.mxu0 %v935
  %v2134 = vpop.f32.mrf.mxu0
  %v2135 = vadd.f32 %v2026, %v2134
  %v2136 = vpop.f32.mrf.mxu0
  %v2137 = vadd.f32 %v2028, %v2136
  %2138 = vmatmul.bf16.gmra.mxu0 %v943
  %v2139 = vpop.f32.mrf.mxu0
  %v2140 = vadd.f32 %v2031, %v2139
  %v2141 = vpop.f32.mrf.mxu0
  %v2142 = vadd.f32 %v2033, %v2141
  %2143 = vdwg.mxu0
  %2144 = vmatpush.bf16.msra.mxu0 %v1417
  %2145 = vmatpush.bf16.msra.mxu0 %v1416
  %2146 = vmatpush.bf16.msra.mxu0 %v1415
  %2147 = vmatpush.bf16.msra.mxu0 %v1414
  %2148 = vmatpush.bf16.msra.mxu0 %v1413
  %2149 = vmatpush.bf16.msra.mxu0 %v1412
  %2150 = vmatpush.bf16.msra.mxu0 %v1411
  %2151 = vmatpush.bf16.msra.mxu0 %v1410
  %2152 = vmatmul.bf16.gmra.mxu0 %v792
  %v2153 = vpop.f32.mrf.mxu0
  %v2154 = vadd.f32 %v2045, %v2153
  %v2155 = vpop.f32.mrf.mxu0
  %v2156 = vadd.f32 %v2047, %v2155
  %2157 = vmatmul.bf16.gmra.mxu0 %v800
  %v2158 = vpop.f32.mrf.mxu0
  %v2159 = vadd.f32 %v2050, %v2158
  %v2160 = vpop.f32.mrf.mxu0
  %v2161 = vadd.f32 %v2052, %v2160
  %2162 = vmatmul.bf16.gmra.mxu0 %v808
  %v2163 = vpop.f32.mrf.mxu0
  %v2164 = vadd.f32 %v2055, %v2163
  %v2165 = vpop.f32.mrf.mxu0
  %v2166 = vadd.f32 %v2057, %v2165
  %2167 = vmatmul.bf16.gmra.mxu0 %v816
  %v2168 = vpop.f32.mrf.mxu0
  %v2169 = vadd.f32 %v2060, %v2168
  %v2170 = vpop.f32.mrf.mxu0
  %v2171 = vadd.f32 %v2062, %v2170
  %2172 = vmatmul.bf16.gmra.mxu0 %v824
  %v2173 = vpop.f32.mrf.mxu0
  %v2174 = vadd.f32 %v2065, %v2173
  %v2175 = vpop.f32.mrf.mxu0
  %v2176 = vadd.f32 %v2067, %v2175
  %2177 = vmatmul.bf16.gmra.mxu0 %v832
  %v2178 = vpop.f32.mrf.mxu0
  %v2179 = vadd.f32 %v2070, %v2178
  %v2180 = vpop.f32.mrf.mxu0
  %v2181 = vadd.f32 %v2072, %v2180
  %2182 = vmatmul.bf16.gmra.mxu0 %v840
  %v2183 = vpop.f32.mrf.mxu0
  %v2184 = vadd.f32 %v2075, %v2183
  %v2185 = vpop.f32.mrf.mxu0
  %v2186 = vadd.f32 %v2077, %v2185
  %2187 = vmatmul.bf16.gmra.mxu0 %v848
  %v2188 = vpop.f32.mrf.mxu0
  %v2189 = vadd.f32 %v2080, %v2188
  %v2190 = vpop.f32.mrf.mxu0
  %v2191 = vadd.f32 %v2082, %v2190
  %2192 = vmatmul.bf16.gmra.mxu0 %v856
  %v2193 = vpop.f32.mrf.mxu0
  %v2194 = vadd.f32 %v2085, %v2193
  %v2195 = vpop.f32.mrf.mxu0
  %v2196 = vadd.f32 %v2087, %v2195
  %2197 = vmatmul.bf16.gmra.mxu0 %v864
  %v2198 = vpop.f32.mrf.mxu0
  %v2199 = vadd.f32 %v2090, %v2198
  %v2200 = vpop.f32.mrf.mxu0
  %v2201 = vadd.f32 %v2092, %v2200
  %2202 = vmatmul.bf16.gmra.mxu0 %v872
  %v2203 = vpop.f32.mrf.mxu0
  %v2204 = vadd.f32 %v2095, %v2203
  %v2205 = vpop.f32.mrf.mxu0
  %v2206 = vadd.f32 %v2097, %v2205
  %2207 = vmatmul.bf16.gmra.mxu0 %v880
  %v2208 = vpop.f32.mrf.mxu0
  %v2209 = vadd.f32 %v2100, %v2208
  %v2210 = vpop.f32.mrf.mxu0
  %v2211 = vadd.f32 %v2102, %v2210
  %2212 = vmatmul.bf16.gmra.mxu0 %v888
  %v2213 = vpop.f32.mrf.mxu0
  %v2214 = vadd.f32 %v2105, %v2213
  %v2215 = vpop.f32.mrf.mxu0
  %v2216 = vadd.f32 %v2107, %v2215
  %2217 = vmatmul.bf16.gmra.mxu0 %v896
  %v2218 = vpop.f32.mrf.mxu0
  %v2219 = vadd.f32 %v2110, %v2218
  %v2220 = vpop.f32.mrf.mxu0
  %v2221 = vadd.f32 %v2112, %v2220
  %2222 = vmatmul.bf16.gmra.mxu0 %v904
  %v2223 = vpop.f32.mrf.mxu0
  %v2224 = vadd.f32 %v2115, %v2223
  %v2225 = vpop.f32.mrf.mxu0
  %v2226 = vadd.f32 %v2117, %v2225
  %2227 = vmatmul.bf16.gmra.mxu0 %v912
  %v2228 = vpop.f32.mrf.mxu0
  %v2229 = vadd.f32 %v2120, %v2228
  %v2230 = vpop.f32.mrf.mxu0
  %v2231 = vadd.f32 %v2122, %v2230
  %2232 = vmatmul.bf16.gmra.mxu0 %v920
  %v2233 = vpop.f32.mrf.mxu0
  %v2234 = vadd.f32 %v2125, %v2233
  %v2235 = vpop.f32.mrf.mxu0
  %v2236 = vadd.f32 %v2127, %v2235
  %2237 = vmatmul.bf16.gmra.mxu0 %v928
  %v2238 = vpop.f32.mrf.mxu0
  %v2239 = vadd.f32 %v2130, %v2238
  %v2240 = vpop.f32.mrf.mxu0
  %v2241 = vadd.f32 %v2132, %v2240
  %2242 = vmatmul.bf16.gmra.mxu0 %v936
  %v2243 = vpop.f32.mrf.mxu0
  %v2244 = vadd.f32 %v2135, %v2243
  %v2245 = vpop.f32.mrf.mxu0
  %v2246 = vadd.f32 %v2137, %v2245
  %2247 = vmatmul.bf16.gmra.mxu0 %v944
  %v2248 = vpop.f32.mrf.mxu0
  %v2249 = vadd.f32 %v2140, %v2248
  %v2250 = vpop.f32.mrf.mxu0
  %v2251 = vadd.f32 %v2142, %v2250
  %2252 = vdwg.mxu0
  %2253 = vmatpush.bf16.msra.mxu0 %v1425
  %2254 = vmatpush.bf16.msra.mxu0 %v1424
  %2255 = vmatpush.bf16.msra.mxu0 %v1423
  %2256 = vmatpush.bf16.msra.mxu0 %v1422
  %2257 = vmatpush.bf16.msra.mxu0 %v1421
  %2258 = vmatpush.bf16.msra.mxu0 %v1420
  %2259 = vmatpush.bf16.msra.mxu0 %v1419
  %2260 = vmatpush.bf16.msra.mxu0 %v1418
  %2261 = vmatmul.bf16.gmra.mxu0 %v793
  %v2262 = vpop.f32.mrf.mxu0
  %v2263 = vadd.f32 %v2154, %v2262
  %v2264 = vpop.f32.mrf.mxu0
  %v2265 = vadd.f32 %v2156, %v2264
  %2266 = vmatmul.bf16.gmra.mxu0 %v801
  %v2267 = vpop.f32.mrf.mxu0
  %v2268 = vadd.f32 %v2159, %v2267
  %v2269 = vpop.f32.mrf.mxu0
  %v2270 = vadd.f32 %v2161, %v2269
  %2271 = vmatmul.bf16.gmra.mxu0 %v809
  %v2272 = vpop.f32.mrf.mxu0
  %v2273 = vadd.f32 %v2164, %v2272
  %v2274 = vpop.f32.mrf.mxu0
  %v2275 = vadd.f32 %v2166, %v2274
  %2276 = vmatmul.bf16.gmra.mxu0 %v817
  %v2277 = vpop.f32.mrf.mxu0
  %v2278 = vadd.f32 %v2169, %v2277
  %v2279 = vpop.f32.mrf.mxu0
  %v2280 = vadd.f32 %v2171, %v2279
  %2281 = vmatmul.bf16.gmra.mxu0 %v825
  %v2282 = vpop.f32.mrf.mxu0
  %v2283 = vadd.f32 %v2174, %v2282
  %v2284 = vpop.f32.mrf.mxu0
  %v2285 = vadd.f32 %v2176, %v2284
  %2286 = vmatmul.bf16.gmra.mxu0 %v833
  %v2287 = vpop.f32.mrf.mxu0
  %v2288 = vadd.f32 %v2179, %v2287
  %v2289 = vpop.f32.mrf.mxu0
  %v2290 = vadd.f32 %v2181, %v2289
  %2291 = vmatmul.bf16.gmra.mxu0 %v841
  %v2292 = vpop.f32.mrf.mxu0
  %v2293 = vadd.f32 %v2184, %v2292
  %v2294 = vpop.f32.mrf.mxu0
  %v2295 = vadd.f32 %v2186, %v2294
  %2296 = vmatmul.bf16.gmra.mxu0 %v849
  %v2297 = vpop.f32.mrf.mxu0
  %v2298 = vadd.f32 %v2189, %v2297
  %v2299 = vpop.f32.mrf.mxu0
  %v2300 = vadd.f32 %v2191, %v2299
  %2301 = vmatmul.bf16.gmra.mxu0 %v857
  %v2302 = vpop.f32.mrf.mxu0
  %v2303 = vadd.f32 %v2194, %v2302
  %v2304 = vpop.f32.mrf.mxu0
  %v2305 = vadd.f32 %v2196, %v2304
  %2306 = vmatmul.bf16.gmra.mxu0 %v865
  %v2307 = vpop.f32.mrf.mxu0
  %v2308 = vadd.f32 %v2199, %v2307
  %v2309 = vpop.f32.mrf.mxu0
  %v2310 = vadd.f32 %v2201, %v2309
  %2311 = vmatmul.bf16.gmra.mxu0 %v873
  %v2312 = vpop.f32.mrf.mxu0
  %v2313 = vadd.f32 %v2204, %v2312
  %v2314 = vpop.f32.mrf.mxu0
  %v2315 = vadd.f32 %v2206, %v2314
  %2316 = vmatmul.bf16.gmra.mxu0 %v881
  %v2317 = vpop.f32.mrf.mxu0
  %v2318 = vadd.f32 %v2209, %v2317
  %v2319 = vpop.f32.mrf.mxu0
  %v2320 = vadd.f32 %v2211, %v2319
  %2321 = vmatmul.bf16.gmra.mxu0 %v889
  %v2322 = vpop.f32.mrf.mxu0
  %v2323 = vadd.f32 %v2214, %v2322
  %v2324 = vpop.f32.mrf.mxu0
  %v2325 = vadd.f32 %v2216, %v2324
  %2326 = vmatmul.bf16.gmra.mxu0 %v897
  %v2327 = vpop.f32.mrf.mxu0
  %v2328 = vadd.f32 %v2219, %v2327
  %v2329 = vpop.f32.mrf.mxu0
  %v2330 = vadd.f32 %v2221, %v2329
  %2331 = vmatmul.bf16.gmra.mxu0 %v905
  %v2332 = vpop.f32.mrf.mxu0
  %v2333 = vadd.f32 %v2224, %v2332
  %v2334 = vpop.f32.mrf.mxu0
  %v2335 = vadd.f32 %v2226, %v2334
  %2336 = vmatmul.bf16.gmra.mxu0 %v913
  %v2337 = vpop.f32.mrf.mxu0
  %v2338 = vadd.f32 %v2229, %v2337
  %v2339 = vpop.f32.mrf.mxu0
  %v2340 = vadd.f32 %v2231, %v2339
  %2341 = vmatmul.bf16.gmra.mxu0 %v921
  %v2342 = vpop.f32.mrf.mxu0
  %v2343 = vadd.f32 %v2234, %v2342
  %v2344 = vpop.f32.mrf.mxu0
  %v2345 = vadd.f32 %v2236, %v2344
  %2346 = vmatmul.bf16.gmra.mxu0 %v929
  %v2347 = vpop.f32.mrf.mxu0
  %v2348 = vadd.f32 %v2239, %v2347
  %v2349 = vpop.f32.mrf.mxu0
  %v2350 = vadd.f32 %v2241, %v2349
  %2351 = vmatmul.bf16.gmra.mxu0 %v937
  %v2352 = vpop.f32.mrf.mxu0
  %v2353 = vadd.f32 %v2244, %v2352
  %v2354 = vpop.f32.mrf.mxu0
  %v2355 = vadd.f32 %v2246, %v2354
  %2356 = vmatmul.bf16.gmra.mxu0 %v945
  %v2357 = vpop.f32.mrf.mxu0
  %v2358 = vadd.f32 %v2249, %v2357
  %v2359 = vpop.f32.mrf.mxu0
  %v2360 = vadd.f32 %v2251, %v2359
  %2361 = vdwg.mxu0
  %v2362 = vmax.f32 %v2263, 0.0
  %v2363 = vmax.f32 %v2265, 0.0
  %v2364 = vmax.f32 %v2268, 0.0
  %v2365 = vmax.f32 %v2270, 0.0
  %v2366 = vmax.f32 %v2273, 0.0
  %v2367 = vmax.f32 %v2275, 0.0
  %v2368 = vmax.f32 %v2278, 0.0
  %v2369 = vmax.f32 %v2280, 0.0
  %v2370 = vmax.f32 %v2283, 0.0
  %v2371 = vmax.f32 %v2285, 0.0
  %v2372 = vmax.f32 %v2288, 0.0
  %v2373 = vmax.f32 %v2290, 0.0
  %v2374 = vmax.f32 %v2293, 0.0
  %v2375 = vmax.f32 %v2295, 0.0
  %v2376 = vmax.f32 %v2298, 0.0
  %v2377 = vmax.f32 %v2300, 0.0
  %v2378 = vmax.f32 %v2303, 0.0
  %v2379 = vmax.f32 %v2305, 0.0
  %v2380 = vmax.f32 %v2308, 0.0
  %v2381 = vmax.f32 %v2310, 0.0
  %v2382 = vmax.f32 %v2313, 0.0
  %v2383 = vmax.f32 %v2315, 0.0
  %v2384 = vmax.f32 %v2318, 0.0
  %v2385 = vmax.f32 %v2320, 0.0
  %v2386 = vmax.f32 %v2323, 0.0
  %v2387 = vmax.f32 %v2325, 0.0
  %v2388 = vmax.f32 %v2328, 0.0
  %v2389 = vmax.f32 %v2330, 0.0
  %v2390 = vmax.f32 %v2333, 0.0
  %v2391 = vmax.f32 %v2335, 0.0
  %v2392 = vmax.f32 %v2338, 0.0
  %v2393 = vmax.f32 %v2340, 0.0
  %v2394 = vmax.f32 %v2343, 0.0
  %v2395 = vmax.f32 %v2345, 0.0
  %v2396 = vmax.f32 %v2348, 0.0
  %v2397 = vmax.f32 %v2350, 0.0
  %v2398 = vmax.f32 %v2353, 0.0
  %v2399 = vmax.f32 %v2355, 0.0
  %v2400 = vmax.f32 %v2358, 0.0
  %v2401 = vmax.f32 %v2360, 0.0
  %vm2402 = vcmask 523264
  %2403 = vst.msk [vmem:[%s3] sm:$0xff] %vm2402, %v2362
  %2404 = vst.msk [vmem:[%s3 + $0x8] sm:$0xff] %vm2402, %v2363
  %2405 = vst.msk [vmem:[%s3 + $0x10] sm:$0xff] %vm2402, %v2364
  %2406 = vst.msk [vmem:[%s3 + $0x18] sm:$0xff] %vm2402, %v2365
  %2407 = vst.msk [vmem:[%s3 + $0x20] sm:$0xff] %vm2402, %v2366
  %2408 = vst.msk [vmem:[%s3 + $0x28] sm:$0xff] %vm2402, %v2367
  %2409 = vst.msk [vmem:[%s3 + $0x30] sm:$0xff] %vm2402, %v2368
  %2410 = vst.msk [vmem:[%s3 + $0x38] sm:$0xff] %vm2402, %v2369
  %2411 = vst.msk [vmem:[%s3 + $0x40] sm:$0xff] %vm2402, %v2370
  %2412 = vst.msk [vmem:[%s3 + $0x48] sm:$0xff] %vm2402, %v2371
  %2413 = vst.msk [vmem:[%s3 + $0x50] sm:$0xff] %vm2402, %v2372
  %2414 = vst.msk [vmem:[%s3 + $0x58] sm:$0xff] %vm2402, %v2373
  %2415 = vst.msk [vmem:[%s3 + $0x60] sm:$0xff] %vm2402, %v2374
  %2416 = vst.msk [vmem:[%s3 + $0x68] sm:$0xff] %vm2402, %v2375
  %2417 = vst.msk [vmem:[%s3 + $0x70] sm:$0xff] %vm2402, %v2376
  %2418 = vst.msk [vmem:[%s3 + $0x78] sm:$0xff] %vm2402, %v2377
  %2419 = vst.msk [vmem:[%s3 + $0x80] sm:$0xff] %vm2402, %v2378
  %2420 = vst.msk [vmem:[%s3 + $0x88] sm:$0xff] %vm2402, %v2379
  %2421 = vst.msk [vmem:[%s3 + $0x90] sm:$0xff] %vm2402, %v2380
  %2422 = vst.msk [vmem:[%s3 + $0x98] sm:$0xff] %vm2402, %v2381
  %2423 = vst.msk [vmem:[%s3 + $0xa0] sm:$0xff] %vm2402, %v2382
  %2424 = vst.msk [vmem:[%s3 + $0xa8] sm:$0xff] %vm2402, %v2383
  %2425 = vst.msk [vmem:[%s3 + $0xb0] sm:$0xff] %vm2402, %v2384
  %2426 = vst.msk [vmem:[%s3 + $0xb8] sm:$0xff] %vm2402, %v2385
  %2427 = vst.msk [vmem:[%s3 + $0xc0] sm:$0xff] %vm2402, %v2386
  %2428 = vst.msk [vmem:[%s3 + $0xc8] sm:$0xff] %vm2402, %v2387
  %2429 = vst.msk [vmem:[%s3 + $0xd0] sm:$0xff] %vm2402, %v2388
  %2430 = vst.msk [vmem:[%s3 + $0xd8] sm:$0xff] %vm2402, %v2389
  %2431 = vst.msk [vmem:[%s3 + $0xe0] sm:$0xff] %vm2402, %v2390
  %2432 = vst.msk [vmem:[%s3 + $0xe8] sm:$0xff] %vm2402, %v2391
  %2433 = vst.msk [vmem:[%s3 + $0xf0] sm:$0xff] %vm2402, %v2392
  %2434 = vst.msk [vmem:[%s3 + $0xf8] sm:$0xff] %vm2402, %v2393
  %2435 = vst.msk [vmem:[%s3 + $0x100] sm:$0xff] %vm2402, %v2394
  %2436 = vst.msk [vmem:[%s3 + $0x108] sm:$0xff] %vm2402, %v2395
  %2437 = vst.msk [vmem:[%s3 + $0x110] sm:$0xff] %vm2402, %v2396
  %2438 = vst.msk [vmem:[%s3 + $0x118] sm:$0xff] %vm2402, %v2397
  %2439 = vst.msk [vmem:[%s3 + $0x120] sm:$0xff] %vm2402, %v2398
  %2440 = vst.msk [vmem:[%s3 + $0x128] sm:$0xff] %vm2402, %v2399
  %2441 = vst.msk [vmem:[%s3 + $0x130] sm:$0xff] %vm2402, %v2400
  %2442 = vst.msk [vmem:[%s3 + $0x138] sm:$0xff] %vm2402, %v2401
  // Predicated region
  $region14: #{reid_forward.8} parent=0 // pred_check
    _
  $region15: #{reid_forward.8} parent=0 // pred_check_branch
    %2444 = sbr.rel (0) target = $region17
  $region16: #{reid_forward.8} parent=0 // pred_region
    _
  $region17: #{reid_forward.8} parent=0 // pred_fallthru
    _
  // Predicated region
  $region18: #{reid_forward.8} parent=0 // pred_check
    _
  $region19: #{reid_forward.8} parent=0 // pred_check_branch
    %2446 = sbr.rel (0) target = $region21
  $region20: #{reid_forward.8} parent=0 // pred_region
    _
  $region21: #{reid_forward.8} parent=0 // pred_fallthru
    _

// kernel: reid_forward.9
$region0: #{reid_forward.9}
  #allocation0 [shape = 'u32[]', space=smem, size = 0x4, offset = 0x4, fixed_abs, tag = 'smem constant byte address 0x4 - core index']
  #allocation1 [shape = 'u32[72,128]{1,0:T(1,128)}', space=vmem, size = 0x9000, scoped, tag = 'internal scratch']
  %s0 = inlined_call_operand.vmem [shape: bf16[80,1024], index: 0, kind: input, shape index: {}]
  %s1 = inlined_call_operand.vmem [shape: bf16[1024,64], index: 1, kind: input, shape index: {}]
  %s2 = inlined_call_operand.vmem [shape: f32[1,64], index: 2, kind: input, shape index: {}]
  %s3 = inlined_call_operand.vmem [shape: f32[80,64], index: 3, kind: output, shape index: {}]
  %s4 = sld [smem:[#allocation0]]
  $region22: #{reid_forward.9} parent=0
    _
  %s6 = ssub.s32 1, %s4
  %s7 = scalar_select 0, %s6, %s4
  // Predicated region
  $region2: #{reid_forward.9} parent=0 // pred_check
    _
  $region3: #{reid_forward.9} parent=0 // pred_check_branch
    %9 = sbr.rel (0) target = $region5
  $region4: #{reid_forward.9} parent=0 // pred_region
    _
  $region5: #{reid_forward.9} parent=0 // pred_fallthru
    _
  // Predicated region
  $region6: #{reid_forward.9} parent=0 // pred_check
    _
  $region7: #{reid_forward.9} parent=0 // pred_check_branch
    %11 = sbr.rel (0) target = $region9
  $region8: #{reid_forward.9} parent=0 // pred_region
    _
  $region9: #{reid_forward.9} parent=0 // pred_fallthru
    _
  // Predicated region
  $region10: #{reid_forward.9} parent=0 // pred_check
    _
  $region11: #{reid_forward.9} parent=0 // pred_check_branch
    %13 = sbr.rel (0) target = $region13
  $region12: #{reid_forward.9} parent=0 // pred_region
    _
  $region13: #{reid_forward.9} parent=0 // pred_fallthru
    _
  %v14 = vld [vmem:[%s0] sm:$0xff]
  %v15 = vld [vmem:[%s0 + $0x8] sm:$0xff]
  %v16 = vld [vmem:[%s0 + $0x10] sm:$0xff]
  %v17 = vld [vmem:[%s0 + $0x18] sm:$0xff]
  %v18 = vld [vmem:[%s0 + $0x20] sm:$0xff]
  %v19 = vld [vmem:[%s0 + $0x28] sm:$0xff]
  %v20 = vld [vmem:[%s0 + $0x30] sm:$0xff]
  %v21 = vld [vmem:[%s0 + $0x38] sm:$0xff]
  %v22 = vld [vmem:[%s0 + $0x40] sm:$0xff]
  %v23 = vld [vmem:[%s0 + $0x48] sm:$0xff]
  %v24 = vld [vmem:[%s0 + $0x50] sm:$0xff]
  %v25 = vld [vmem:[%s0 + $0x58] sm:$0xff]
  %v26 = vld [vmem:[%s0 + $0x60] sm:$0xff]
  %v27 = vld [vmem:[%s0 + $0x68] sm:$0xff]
  %v28 = vld [vmem:[%s0 + $0x70] sm:$0xff]
  %v29 = vld [vmem:[%s0 + $0x78] sm:$0xff]
  %v30 = vld [vmem:[%s0 + $0x80] sm:$0xff]
  %v31 = vld [vmem:[%s0 + $0x88] sm:$0xff]
  %v32 = vld [vmem:[%s0 + $0x90] sm:$0xff]
  %v33 = vld [vmem:[%s0 + $0x98] sm:$0xff]
  %v34 = vld [vmem:[%s0 + $0xa0] sm:$0xff]
  %v35 = vld [vmem:[%s0 + $0xa8] sm:$0xff]
  %v36 = vld [vmem:[%s0 + $0xb0] sm:$0xff]
  %v37 = vld [vmem:[%s0 + $0xb8] sm:$0xff]
  %v38 = vld [vmem:[%s0 + $0xc0] sm:$0xff]
  %v39 = vld [vmem:[%s0 + $0xc8] sm:$0xff]
  %v40 = vld [vmem:[%s0 + $0xd0] sm:$0xff]
  %v41 = vld [vmem:[%s0 + $0xd8] sm:$0xff]
  %v42 = vld [vmem:[%s0 + $0xe0] sm:$0xff]
  %v43 = vld [vmem:[%s0 + $0xe8] sm:$0xff]
  %v44 = vld [vmem:[%s0 + $0xf0] sm:$0xff]
  %v45 = vld [vmem:[%s0 + $0xf8] sm:$0xff]
  %v46 = vld [vmem:[%s0 + $0x100] sm:$0xff]
  %v47 = vld [vmem:[%s0 + $0x108] sm:$0xff]
  %v48 = vld [vmem:[%s0 + $0x110] sm:$0xff]
  %v49 = vld [vmem:[%s0 + $0x118] sm:$0xff]
  %v50 = vld [vmem:[%s0 + $0x120] sm:$0xff]
  %v51 = vld [vmem:[%s0 + $0x128] sm:$0xff]
  %v52 = vld [vmem:[%s0 + $0x130] sm:$0xff]
  %v53 = vld [vmem:[%s0 + $0x138] sm:$0xff]
  %v54 = vld [vmem:[%s1] sm:$0xf]
  %v55 = vld [vmem:[%s1 + $0x4] sm:$0xf]
  %v56 = vld [vmem:[%s1 + $0x8] sm:$0xf]
  %v57 = vld [vmem:[%s1 + $0xc] sm:$0xf]
  %v58 = vld [vmem:[%s1 + $0x10] sm:$0xf]
  %v59 = vld [vmem:[%s1 + $0x14] sm:$0xf]
  %v60 = vld [vmem:[%s1 + $0x18] sm:$0xf]
  %v61 = vld [vmem:[%s1 + $0x1c] sm:$0xf]
  %v62 = vld [vmem:[%s1 + $0x20] sm:$0xf]
  %v63 = vld [vmem:[%s1 + $0x24] sm:$0xf]
  %v64 = vld [vmem:[%s1 + $0x28] sm:$0xf]
  %v65 = vld [vmem:[%s1 + $0x2c] sm:$0xf]
  %v66 = vld [vmem:[%s1 + $0x30] sm:$0xf]
  %v67 = vld [vmem:[%s1 + $0x34] sm:$0xf]
  %v68 = vld [vmem:[%s1 + $0x38] sm:$0xf]
  %v69 = vld [vmem:[%s1 + $0x3c] sm:$0xf]
  %v70 = vld [vmem:[%s1 + $0x40] sm:$0xf]
  %v71 = vld [vmem:[%s1 + $0x44] sm:$0xf]
  %v72 = vld [vmem:[%s1 + $0x48] sm:$0xf]
  %v73 = vld [vmem:[%s1 + $0x4c] sm:$0xf]
  %v74 = vld [vmem:[%s1 + $0x50] sm:$0xf]
  %v75 = vld [vmem:[%s1 + $0x54] sm:$0xf]
  %v76 = vld [vmem:[%s1 + $0x58] sm:$0xf]
  %v77 = vld [vmem:[%s1 + $0x5c] sm:$0xf]
  %v78 = vld [vmem:[%s1 + $0x60] sm:$0xf]
  %v79 = vld [vmem:[%s1 + $0x64] sm:$0xf]
  %v80 = vld [vmem:[%s1 + $0x68] sm:$0xf]
  %v81 = vld [vmem:[%s1 + $0x6c] sm:$0xf]
  %v82 = vld [vmem:[%s1 + $0x70] sm:$0xf]
  %v83 = vld [vmem:[%s1 + $0x74] sm:$0xf]
  %v84 = vld [vmem:[%s1 + $0x78] sm:$0xf]
  %v85 = vld [vmem:[%s1 + $0x7c] sm:$0xf]
  %v86 = vld [vmem:[%s1 + $0x80] sm:$0xf]
  %v87 = vld [vmem:[%s1 + $0x84] sm:$0xf]
  %v88 = vld [vmem:[%s1 + $0x88] sm:$0xf]
  %v89 = vld [vmem:[%s1 + $0x8c] sm:$0xf]
  %v90 = vld [vmem:[%s1 + $0x90] sm:$0xf]
  %v91 = vld [vmem:[%s1 + $0x94] sm:$0xf]
  %v92 = vld [vmem:[%s1 + $0x98] sm:$0xf]
  %v93 = vld [vmem:[%s1 + $0x9c] sm:$0xf]
  %v94 = vld [vmem:[%s1 + $0xa0] sm:$0xf]
  %v95 = vld [vmem:[%s1 + $0xa4] sm:$0xf]
  %v96 = vld [vmem:[%s1 + $0xa8] sm:$0xf]
  %v97 = vld [vmem:[%s1 + $0xac] sm:$0xf]
  %v98 = vld [vmem:[%s1 + $0xb0] sm:$0xf]
  %v99 = vld [vmem:[%s1 + $0xb4] sm:$0xf]
  %v100 = vld [vmem:[%s1 + $0xb8] sm:$0xf]
  %v101 = vld [vmem:[%s1 + $0xbc] sm:$0xf]
  %v102 = vld [vmem:[%s1 + $0xc0] sm:$0xf]
  %v103 = vld [vmem:[%s1 + $0xc4] sm:$0xf]
  %v104 = vld [vmem:[%s1 + $0xc8] sm:$0xf]
  %v105 = vld [vmem:[%s1 + $0xcc] sm:$0xf]
  %v106 = vld [vmem:[%s1 + $0xd0] sm:$0xf]
  %v107 = vld [vmem:[%s1 + $0xd4] sm:$0xf]
  %v108 = vld [vmem:[%s1 + $0xd8] sm:$0xf]
  %v109 = vld [vmem:[%s1 + $0xdc] sm:$0xf]
  %v110 = vld [vmem:[%s1 + $0xe0] sm:$0xf]
  %v111 = vld [vmem:[%s1 + $0xe4] sm:$0xf]
  %v112 = vld [vmem:[%s1 + $0xe8] sm:$0xf]
  %v113 = vld [vmem:[%s1 + $0xec] sm:$0xf]
  %v114 = vld [vmem:[%s1 + $0xf0] sm:$0xf]
  %v115 = vld [vmem:[%s1 + $0xf4] sm:$0xf]
  %v116 = vld [vmem:[%s1 + $0xf8] sm:$0xf]
  %v117 = vld [vmem:[%s1 + $0xfc] sm:$0xf]
  %v118 = vld [vmem:[%s1 + $0x100] sm:$0xf]
  %v119 = vld [vmem:[%s1 + $0x104] sm:$0xf]
  %v120 = vld [vmem:[%s1 + $0x108] sm:$0xf]
  %v121 = vld [vmem:[%s1 + $0x10c] sm:$0xf]
  %v122 = vld [vmem:[%s1 + $0x110] sm:$0xf]
  %v123 = vld [vmem:[%s1 + $0x114] sm:$0xf]
  %v124 = vld [vmem:[%s1 + $0x118] sm:$0xf]
  %v125 = vld [vmem:[%s1 + $0x11c] sm:$0xf]
  %v126 = vld [vmem:[%s1 + $0x120] sm:$0xf]
  %v127 = vld [vmem:[%s1 + $0x124] sm:$0xf]
  %v128 = vld [vmem:[%s1 + $0x128] sm:$0xf]
  %v129 = vld [vmem:[%s1 + $0x12c] sm:$0xf]
  %v130 = vld [vmem:[%s1 + $0x130] sm:$0xf]
  %v131 = vld [vmem:[%s1 + $0x134] sm:$0xf]
  %v132 = vld [vmem:[%s1 + $0x138] sm:$0xf]
  %v133 = vld [vmem:[%s1 + $0x13c] sm:$0xf]
  %v134 = vld [vmem:[%s1 + $0x140] sm:$0xf]
  %v135 = vld [vmem:[%s1 + $0x144] sm:$0xf]
  %v136 = vld [vmem:[%s1 + $0x148] sm:$0xf]
  %v137 = vld [vmem:[%s1 + $0x14c] sm:$0xf]
  %v138 = vld [vmem:[%s1 + $0x150] sm:$0xf]
  %v139 = vld [vmem:[%s1 + $0x154] sm:$0xf]
  %v140 = vld [vmem:[%s1 + $0x158] sm:$0xf]
  %v141 = vld [vmem:[%s1 + $0x15c] sm:$0xf]
  %v142 = vld [vmem:[%s1 + $0x160] sm:$0xf]
  %v143 = vld [vmem:[%s1 + $0x164] sm:$0xf]
  %v144 = vld [vmem:[%s1 + $0x168] sm:$0xf]
  %v145 = vld [vmem:[%s1 + $0x16c] sm:$0xf]
  %v146 = vld [vmem:[%s1 + $0x170] sm:$0xf]
  %v147 = vld [vmem:[%s1 + $0x174] sm:$0xf]
  %v148 = vld [vmem:[%s1 + $0x178] sm:$0xf]
  %v149 = vld [vmem:[%s1 + $0x17c] sm:$0xf]
  %v150 = vld [vmem:[%s1 + $0x180] sm:$0xf]
  %v151 = vld [vmem:[%s1 + $0x184] sm:$0xf]
  %v152 = vld [vmem:[%s1 + $0x188] sm:$0xf]
  %v153 = vld [vmem:[%s1 + $0x18c] sm:$0xf]
  %v154 = vld [vmem:[%s1 + $0x190] sm:$0xf]
  %v155 = vld [vmem:[%s1 + $0x194] sm:$0xf]
  %v156 = vld [vmem:[%s1 + $0x198] sm:$0xf]
  %v157 = vld [vmem:[%s1 + $0x19c] sm:$0xf]
  %v158 = vld [vmem:[%s1 + $0x1a0] sm:$0xf]
  %v159 = vld [vmem:[%s1 + $0x1a4] sm:$0xf]
  %v160 = vld [vmem:[%s1 + $0x1a8] sm:$0xf]
  %v161 = vld [vmem:[%s1 + $0x1ac] sm:$0xf]
  %v162 = vld [vmem:[%s1 + $0x1b0] sm:$0xf]
  %v163 = vld [vmem:[%s1 + $0x1b4] sm:$0xf]
  %v164 = vld [vmem:[%s1 + $0x1b8] sm:$0xf]
  %v165 = vld [vmem:[%s1 + $0x1bc] sm:$0xf]
  %v166 = vld [vmem:[%s1 + $0x1c0] sm:$0xf]
  %v167 = vld [vmem:[%s1 + $0x1c4] sm:$0xf]
  %v168 = vld [vmem:[%s1 + $0x1c8] sm:$0xf]
  %v169 = vld [vmem:[%s1 + $0x1cc] sm:$0xf]
  %v170 = vld [vmem:[%s1 + $0x1d0] sm:$0xf]
  %v171 = vld [vmem:[%s1 + $0x1d4] sm:$0xf]
  %v172 = vld [vmem:[%s1 + $0x1d8] sm:$0xf]
  %v173 = vld [vmem:[%s1 + $0x1dc] sm:$0xf]
  %v174 = vld [vmem:[%s1 + $0x1e0] sm:$0xf]
  %v175 = vld [vmem:[%s1 + $0x1e4] sm:$0xf]
  %v176 = vld [vmem:[%s1 + $0x1e8] sm:$0xf]
  %v177 = vld [vmem:[%s1 + $0x1ec] sm:$0xf]
  %v178 = vld [vmem:[%s1 + $0x1f0] sm:$0xf]
  %v179 = vld [vmem:[%s1 + $0x1f4] sm:$0xf]
  %v180 = vld [vmem:[%s1 + $0x1f8] sm:$0xf]
  %v181 = vld [vmem:[%s1 + $0x1fc] sm:$0xf]
  %v182 = vld [vmem:[%s2] sm:$0x1]
  %v184 = vperm.slane %v182, 0
  %v226 = vunpack.c.l.b16 %v14
  %v227 = vunpack.c.h.b16 %v14
  %v228 = vunpack.c.l.b16 %v15
  %v229 = vunpack.c.h.b16 %v15
  %v230 = vunpack.c.l.b16 %v16
  %v231 = vunpack.c.h.b16 %v16
  %v232 = vunpack.c.l.b16 %v17
  %v233 = vunpack.c.h.b16 %v17
  %v234 = vunpack.c.l.b16 %v18
  %v235 = vunpack.c.h.b16 %v18
  %v236 = vunpack.c.l.b16 %v19
  %v237 = vunpack.c.h.b16 %v19
  %v238 = vunpack.c.l.b16 %v20
  %v239 = vunpack.c.h.b16 %v20
  %v240 = vunpack.c.l.b16 %v21
  %v241 = vunpack.c.h.b16 %v21
  %v242 = vunpack.c.l.b16 %v22
  %v243 = vunpack.c.h.b16 %v22
  %v244 = vunpack.c.l.b16 %v23
  %v245 = vunpack.c.h.b16 %v23
  %v246 = vunpack.c.l.b16 %v24
  %v247 = vunpack.c.h.b16 %v24
  %v248 = vunpack.c.l.b16 %v25
  %v249 = vunpack.c.h.b16 %v25
  %v250 = vunpack.c.l.b16 %v26
  %v251 = vunpack.c.h.b16 %v26
  %v252 = vunpack.c.l.b16 %v27
  %v253 = vunpack.c.h.b16 %v27
  %v254 = vunpack.c.l.b16 %v28
  %v255 = vunpack.c.h.b16 %v28
  %v256 = vunpack.c.l.b16 %v29
  %v257 = vunpack.c.h.b16 %v29
  %v258 = vunpack.c.l.b16 %v30
  %v259 = vunpack.c.h.b16 %v30
  %v260 = vunpack.c.l.b16 %v31
  %v261 = vunpack.c.h.b16 %v31
  %v262 = vunpack.c.l.b16 %v32
  %v263 = vunpack.c.h.b16 %v32
  %v264 = vunpack.c.l.b16 %v33
  %v265 = vunpack.c.h.b16 %v33
  %v266 = vunpack.c.l.b16 %v34
  %v267 = vunpack.c.h.b16 %v34
  %v268 = vunpack.c.l.b16 %v35
  %v269 = vunpack.c.h.b16 %v35
  %v270 = vunpack.c.l.b16 %v36
  %v271 = vunpack.c.h.b16 %v36
  %v272 = vunpack.c.l.b16 %v37
  %v273 = vunpack.c.h.b16 %v37
  %v274 = vunpack.c.l.b16 %v38
  %v275 = vunpack.c.h.b16 %v38
  %v276 = vunpack.c.l.b16 %v39
  %v277 = vunpack.c.h.b16 %v39
  %v278 = vunpack.c.l.b16 %v40
  %v279 = vunpack.c.h.b16 %v40
  %v280 = vunpack.c.l.b16 %v41
  %v281 = vunpack.c.h.b16 %v41
  %v282 = vunpack.c.l.b16 %v42
  %v283 = vunpack.c.h.b16 %v42
  %v284 = vunpack.c.l.b16 %v43
  %v285 = vunpack.c.h.b16 %v43
  %v286 = vunpack.c.l.b16 %v44
  %v287 = vunpack.c.h.b16 %v44
  %v288 = vunpack.c.l.b16 %v45
  %v289 = vunpack.c.h.b16 %v45
  %v290 = vunpack.c.l.b16 %v46
  %v291 = vunpack.c.h.b16 %v46
  %v292 = vunpack.c.l.b16 %v47
  %v293 = vunpack.c.h.b16 %v47
  %v294 = vunpack.c.l.b16 %v48
  %v295 = vunpack.c.h.b16 %v48
  %v296 = vunpack.c.l.b16 %v49
  %v297 = vunpack.c.h.b16 %v49
  %v298 = vunpack.c.l.b16 %v50
  %v299 = vunpack.c.h.b16 %v50
  %v300 = vunpack.c.l.b16 %v51
  %v301 = vunpack.c.h.b16 %v51
  %v302 = vunpack.c.l.b16 %v52
  %v303 = vunpack.c.h.b16 %v52
  %v304 = vunpack.c.l.b16 %v53
  %v305 = vunpack.c.h.b16 %v53
  %v306 = vpack.c.b16 %v234, %v226
  %v307 = vpack.c.b16 %v235, %v227
  %v308 = vpack.c.b16 %v236, %v228
  %v309 = vpack.c.b16 %v237, %v229
  %v310 = vpack.c.b16 %v238, %v230
  %v311 = vpack.c.b16 %v239, %v231
  %v312 = vpack.c.b16 %v240, %v232
  %v313 = vpack.c.b16 %v241, %v233
  %v314 = vpack.c.b16 %v250, %v242
  %v315 = vpack.c.b16 %v251, %v243
  %v316 = vpack.c.b16 %v252, %v244
  %v317 = vpack.c.b16 %v253, %v245
  %v318 = vpack.c.b16 %v254, %v246
  %v319 = vpack.c.b16 %v255, %v247
  %v320 = vpack.c.b16 %v256, %v248
  %v321 = vpack.c.b16 %v257, %v249
  %v322 = vpack.c.b16 %v266, %v258
  %v323 = vpack.c.b16 %v267, %v259
  %v324 = vpack.c.b16 %v268, %v260
  %v325 = vpack.c.b16 %v269, %v261
  %v326 = vpack.c.b16 %v270, %v262
  %v327 = vpack.c.b16 %v271, %v263
  %v328 = vpack.c.b16 %v272, %v264
  %v329 = vpack.c.b16 %v273, %v265
  %v330 = vpack.c.b16 %v282, %v274
  %v331 = vpack.c.b16 %v283, %v275
  %v332 = vpack.c.b16 %v284, %v276
  %v333 = vpack.c.b16 %v285, %v277
  %v334 = vpack.c.b16 %v286, %v278
  %v335 = vpack.c.b16 %v287, %v279
  %v336 = vpack.c.b16 %v288, %v280
  %v337 = vpack.c.b16 %v289, %v281
  %v338 = vpack.c.b16 %v298, %v290
  %v339 = vpack.c.b16 %v299, %v291
  %v340 = vpack.c.b16 %v300, %v292
  %v341 = vpack.c.b16 %v301, %v293
  %v342 = vpack.c.b16 %v302, %v294
  %v343 = vpack.c.b16 %v303, %v295
  %v344 = vpack.c.b16 %v304, %v296
  %v345 = vpack.c.b16 %v305, %v297
  %v514 = vunpack.c.l.b16 %v54
  %v515 = vunpack.c.l.b16 %v55
  %v516 = vunpack.c.l.b16 %v56
  %v517 = vunpack.c.l.b16 %v57
  %v518 = vunpack.c.l.b16 %v58
  %v519 = vunpack.c.l.b16 %v59
  %v520 = vunpack.c.l.b16 %v60
  %v521 = vunpack.c.l.b16 %v61
  %v522 = vunpack.c.l.b16 %v62
  %v523 = vunpack.c.l.b16 %v63
  %v524 = vunpack.c.l.b16 %v64
  %v525 = vunpack.c.l.b16 %v65
  %v526 = vunpack.c.l.b16 %v66
  %v527 = vunpack.c.l.b16 %v67
  %v528 = vunpack.c.l.b16 %v68
  %v529 = vunpack.c.l.b16 %v69
  %v530 = vunpack.c.l.b16 %v70
  %v531 = vunpack.c.l.b16 %v71
  %v532 = vunpack.c.l.b16 %v72
  %v533 = vunpack.c.l.b16 %v73
  %v534 = vunpack.c.l.b16 %v74
  %v535 = vunpack.c.l.b16 %v75
  %v536 = vunpack.c.l.b16 %v76
  %v537 = vunpack.c.l.b16 %v77
  %v538 = vunpack.c.l.b16 %v78
  %v539 = vunpack.c.l.b16 %v79
  %v540 = vunpack.c.l.b16 %v80
  %v541 = vunpack.c.l.b16 %v81
  %v542 = vunpack.c.l.b16 %v82
  %v543 = vunpack.c.l.b16 %v83
  %v544 = vunpack.c.l.b16 %v84
  %v545 = vunpack.c.l.b16 %v85
  %v546 = vunpack.c.l.b16 %v86
  %v547 = vunpack.c.l.b16 %v87
  %v548 = vunpack.c.l.b16 %v88
  %v549 = vunpack.c.l.b16 %v89
  %v550 = vunpack.c.l.b16 %v90
  %v551 = vunpack.c.l.b16 %v91
  %v552 = vunpack.c.l.b16 %v92
  %v553 = vunpack.c.l.b16 %v93
  %v554 = vunpack.c.l.b16 %v94
  %v555 = vunpack.c.l.b16 %v95
  %v556 = vunpack.c.l.b16 %v96
  %v557 = vunpack.c.l.b16 %v97
  %v558 = vunpack.c.l.b16 %v98
  %v559 = vunpack.c.l.b16 %v99
  %v560 = vunpack.c.l.b16 %v100
  %v561 = vunpack.c.l.b16 %v101
  %v562 = vunpack.c.l.b16 %v102
  %v563 = vunpack.c.l.b16 %v103
  %v564 = vunpack.c.l.b16 %v104
  %v565 = vunpack.c.l.b16 %v105
  %v566 = vunpack.c.l.b16 %v106
  %v567 = vunpack.c.l.b16 %v107
  %v568 = vunpack.c.l.b16 %v108
  %v569 = vunpack.c.l.b16 %v109
  %v570 = vunpack.c.l.b16 %v110
  %v571 = vunpack.c.l.b16 %v111
  %v572 = vunpack.c.l.b16 %v112
  %v573 = vunpack.c.l.b16 %v113
  %v574 = vunpack.c.l.b16 %v114
  %v575 = vunpack.c.l.b16 %v115
  %v576 = vunpack.c.l.b16 %v116
  %v577 = vunpack.c.l.b16 %v117
  %v578 = vunpack.c.l.b16 %v118
  %v579 = vunpack.c.l.b16 %v119
  %v580 = vunpack.c.l.b16 %v120
  %v581 = vunpack.c.l.b16 %v121
  %v582 = vunpack.c.l.b16 %v122
  %v583 = vunpack.c.l.b16 %v123
  %v584 = vunpack.c.l.b16 %v124
  %v585 = vunpack.c.l.b16 %v125
  %v586 = vunpack.c.l.b16 %v126
  %v587 = vunpack.c.l.b16 %v127
  %v588 = vunpack.c.l.b16 %v128
  %v589 = vunpack.c.l.b16 %v129
  %v590 = vunpack.c.l.b16 %v130
  %v591 = vunpack.c.l.b16 %v131
  %v592 = vunpack.c.l.b16 %v132
  %v593 = vunpack.c.l.b16 %v133
  %v594 = vunpack.c.l.b16 %v134
  %v595 = vunpack.c.l.b16 %v135
  %v596 = vunpack.c.l.b16 %v136
  %v597 = vunpack.c.l.b16 %v137
  %v598 = vunpack.c.l.b16 %v138
  %v599 = vunpack.c.l.b16 %v139
  %v600 = vunpack.c.l.b16 %v140
  %v601 = vunpack.c.l.b16 %v141
  %v602 = vunpack.c.l.b16 %v142
  %v603 = vunpack.c.l.b16 %v143
  %v604 = vunpack.c.l.b16 %v144
  %v605 = vunpack.c.l.b16 %v145
  %v606 = vunpack.c.l.b16 %v146
  %v607 = vunpack.c.l.b16 %v147
  %v608 = vunpack.c.l.b16 %v148
  %v609 = vunpack.c.l.b16 %v149
  %v610 = vunpack.c.l.b16 %v150
  %v611 = vunpack.c.l.b16 %v151
  %v612 = vunpack.c.l.b16 %v152
  %v613 = vunpack.c.l.b16 %v153
  %v614 = vunpack.c.l.b16 %v154
  %v615 = vunpack.c.l.b16 %v155
  %v616 = vunpack.c.l.b16 %v156
  %v617 = vunpack.c.l.b16 %v157
  %v618 = vunpack.c.l.b16 %v158
  %v619 = vunpack.c.l.b16 %v159
  %v620 = vunpack.c.l.b16 %v160
  %v621 = vunpack.c.l.b16 %v161
  %v622 = vunpack.c.l.b16 %v162
  %v623 = vunpack.c.l.b16 %v163
  %v624 = vunpack.c.l.b16 %v164
  %v625 = vunpack.c.l.b16 %v165
  %v626 = vunpack.c.l.b16 %v166
  %v627 = vunpack.c.l.b16 %v167
  %v628 = vunpack.c.l.b16 %v168
  %v629 = vunpack.c.l.b16 %v169
  %v630 = vunpack.c.l.b16 %v170
  %v631 = vunpack.c.l.b16 %v171
  %v632 = vunpack.c.l.b16 %v172
  %v633 = vunpack.c.l.b16 %v173
  %v634 = vunpack.c.l.b16 %v174
  %v635 = vunpack.c.l.b16 %v175
  %v636 = vunpack.c.l.b16 %v176
  %v637 = vunpack.c.l.b16 %v177
  %v638 = vunpack.c.l.b16 %v178
  %v639 = vunpack.c.l.b16 %v179
  %v640 = vunpack.c.l.b16 %v180
  %v641 = vunpack.c.l.b16 %v181
  %v642 = vpack.c.b16 %v515, %v514
  %v643 = vpack.c.b16 %v517, %v516
  %v644 = vpack.c.b16 %v519, %v518
  %v645 = vpack.c.b16 %v521, %v520
  %v646 = vpack.c.b16 %v523, %v522
  %v647 = vpack.c.b16 %v525, %v524
  %v648 = vpack.c.b16 %v527, %v526
  %v649 = vpack.c.b16 %v529, %v528
  %v650 = vpack.c.b16 %v531, %v530
  %v651 = vpack.c.b16 %v533, %v532
  %v652 = vpack.c.b16 %v535, %v534
  %v653 = vpack.c.b16 %v537, %v536
  %v654 = vpack.c.b16 %v539, %v538
  %v655 = vpack.c.b16 %v541, %v540
  %v656 = vpack.c.b16 %v543, %v542
  %v657 = vpack.c.b16 %v545, %v544
  %v658 = vpack.c.b16 %v547, %v546
  %v659 = vpack.c.b16 %v549, %v548
  %v660 = vpack.c.b16 %v551, %v550
  %v661 = vpack.c.b16 %v553, %v552
  %v662 = vpack.c.b16 %v555, %v554
  %v663 = vpack.c.b16 %v557, %v556
  %v664 = vpack.c.b16 %v559, %v558
  %v665 = vpack.c.b16 %v561, %v560
  %v666 = vpack.c.b16 %v563, %v562
  %v667 = vpack.c.b16 %v565, %v564
  %v668 = vpack.c.b16 %v567, %v566
  %v669 = vpack.c.b16 %v569, %v568
  %v670 = vpack.c.b16 %v571, %v570
  %v671 = vpack.c.b16 %v573, %v572
  %v672 = vpack.c.b16 %v575, %v574
  %v673 = vpack.c.b16 %v577, %v576
  %v674 = vpack.c.b16 %v579, %v578
  %v675 = vpack.c.b16 %v581, %v580
  %v676 = vpack.c.b16 %v583, %v582
  %v677 = vpack.c.b16 %v585, %v584
  %v678 = vpack.c.b16 %v587, %v586
  %v679 = vpack.c.b16 %v589, %v588
  %v680 = vpack.c.b16 %v591, %v590
  %v681 = vpack.c.b16 %v593, %v592
  %v682 = vpack.c.b16 %v595, %v594
  %v683 = vpack.c.b16 %v597, %v596
  %v684 = vpack.c.b16 %v599, %v598
  %v685 = vpack.c.b16 %v601, %v600
  %v686 = vpack.c.b16 %v603, %v602
  %v687 = vpack.c.b16 %v605, %v604
  %v688 = vpack.c.b16 %v607, %v606
  %v689 = vpack.c.b16 %v609, %v608
  %v690 = vpack.c.b16 %v611, %v610
  %v691 = vpack.c.b16 %v613, %v612
  %v692 = vpack.c.b16 %v615, %v614
  %v693 = vpack.c.b16 %v617, %v616
  %v694 = vpack.c.b16 %v619, %v618
  %v695 = vpack.c.b16 %v621, %v620
  %v696 = vpack.c.b16 %v623, %v622
  %v697 = vpack.c.b16 %v625, %v624
  %v698 = vpack.c.b16 %v627, %v626
  %v699 = vpack.c.b16 %v629, %v628
  %v700 = vpack.c.b16 %v631, %v630
  %v701 = vpack.c.b16 %v633, %v632
  %v702 = vpack.c.b16 %v635, %v634
  %v703 = vpack.c.b16 %v637, %v636
  %v704 = vpack.c.b16 %v639, %v638
  %v705 = vpack.c.b16 %v641, %v640
  %770 = vmatpush.bf16.msra.mxu0 %v649
  %771 = vmatpush.bf16.msra.mxu0 %v648
  %772 = vmatpush.bf16.msra.mxu0 %v647
  %773 = vmatpush.bf16.msra.mxu0 %v646
  %774 = vmatpush.bf16.msra.mxu0 %v645
  %775 = vmatpush.bf16.msra.mxu0 %v644
  %776 = vmatpush.bf16.msra.mxu0 %v643
  %777 = vmatpush.bf16.msra.mxu0 %v642
  %778 = vmatmul.bf16.gmra.mxu0 %v306
  %v779 = vpop.f32.mrf.mxu0
  %v780 = vadd.f32 %v184, %v779
  %v781 = vpop.f32.mrf.mxu0
  %v782 = vadd.f32 %v184, %v781
  %783 = vmatmul.bf16.gmra.mxu0 %v314
  %v784 = vpop.f32.mrf.mxu0
  %v785 = vadd.f32 %v184, %v784
  %v786 = vpop.f32.mrf.mxu0
  %v787 = vadd.f32 %v184, %v786
  %788 = vmatmul.bf16.gmra.mxu0 %v322
  %v789 = vpop.f32.mrf.mxu0
  %v790 = vadd.f32 %v184, %v789
  %v791 = vpop.f32.mrf.mxu0
  %v792 = vadd.f32 %v184, %v791
  %793 = vmatmul.bf16.gmra.mxu0 %v330
  %v794 = vpop.f32.mrf.mxu0
  %v795 = vadd.f32 %v184, %v794
  %v796 = vpop.f32.mrf.mxu0
  %v797 = vadd.f32 %v184, %v796
  %798 = vmatmul.bf16.gmra.mxu0 %v338
  %v799 = vpop.f32.mrf.mxu0
  %v800 = vadd.f32 %v184, %v799
  %v801 = vpop.f32.mrf.mxu0
  %v802 = vadd.f32 %v184, %v801
  %803 = vdwg.mxu0
  %804 = vmatpush.bf16.msra.mxu0 %v657
  %805 = vmatpush.bf16.msra.mxu0 %v656
  %806 = vmatpush.bf16.msra.mxu0 %v655
  %807 = vmatpush.bf16.msra.mxu0 %v654
  %808 = vmatpush.bf16.msra.mxu0 %v653
  %809 = vmatpush.bf16.msra.mxu0 %v652
  %810 = vmatpush.bf16.msra.mxu0 %v651
  %811 = vmatpush.bf16.msra.mxu0 %v650
  %812 = vmatmul.bf16.gmra.mxu0 %v307
  %v813 = vpop.f32.mrf.mxu0
  %v814 = vadd.f32 %v780, %v813
  %v815 = vpop.f32.mrf.mxu0
  %v816 = vadd.f32 %v782, %v815
  %817 = vmatmul.bf16.gmra.mxu0 %v315
  %v818 = vpop.f32.mrf.mxu0
  %v819 = vadd.f32 %v785, %v818
  %v820 = vpop.f32.mrf.mxu0
  %v821 = vadd.f32 %v787, %v820
  %822 = vmatmul.bf16.gmra.mxu0 %v323
  %v823 = vpop.f32.mrf.mxu0
  %v824 = vadd.f32 %v790, %v823
  %v825 = vpop.f32.mrf.mxu0
  %v826 = vadd.f32 %v792, %v825
  %827 = vmatmul.bf16.gmra.mxu0 %v331
  %v828 = vpop.f32.mrf.mxu0
  %v829 = vadd.f32 %v795, %v828
  %v830 = vpop.f32.mrf.mxu0
  %v831 = vadd.f32 %v797, %v830
  %832 = vmatmul.bf16.gmra.mxu0 %v339
  %v833 = vpop.f32.mrf.mxu0
  %v834 = vadd.f32 %v800, %v833
  %v835 = vpop.f32.mrf.mxu0
  %v836 = vadd.f32 %v802, %v835
  %837 = vdwg.mxu0
  %838 = vmatpush.bf16.msra.mxu0 %v665
  %839 = vmatpush.bf16.msra.mxu0 %v664
  %840 = vmatpush.bf16.msra.mxu0 %v663
  %841 = vmatpush.bf16.msra.mxu0 %v662
  %842 = vmatpush.bf16.msra.mxu0 %v661
  %843 = vmatpush.bf16.msra.mxu0 %v660
  %844 = vmatpush.bf16.msra.mxu0 %v659
  %845 = vmatpush.bf16.msra.mxu0 %v658
  %846 = vmatmul.bf16.gmra.mxu0 %v308
  %v847 = vpop.f32.mrf.mxu0
  %v848 = vadd.f32 %v814, %v847
  %v849 = vpop.f32.mrf.mxu0
  %v850 = vadd.f32 %v816, %v849
  %851 = vmatmul.bf16.gmra.mxu0 %v316
  %v852 = vpop.f32.mrf.mxu0
  %v853 = vadd.f32 %v819, %v852
  %v854 = vpop.f32.mrf.mxu0
  %v855 = vadd.f32 %v821, %v854
  %856 = vmatmul.bf16.gmra.mxu0 %v324
  %v857 = vpop.f32.mrf.mxu0
  %v858 = vadd.f32 %v824, %v857
  %v859 = vpop.f32.mrf.mxu0
  %v860 = vadd.f32 %v826, %v859
  %861 = vmatmul.bf16.gmra.mxu0 %v332
  %v862 = vpop.f32.mrf.mxu0
  %v863 = vadd.f32 %v829, %v862
  %v864 = vpop.f32.mrf.mxu0
  %v865 = vadd.f32 %v831, %v864
  %866 = vmatmul.bf16.gmra.mxu0 %v340
  %v867 = vpop.f32.mrf.mxu0
  %v868 = vadd.f32 %v834, %v867
  %v869 = vpop.f32.mrf.mxu0
  %v870 = vadd.f32 %v836, %v869
  %871 = vdwg.mxu0
  %872 = vmatpush.bf16.msra.mxu0 %v673
  %873 = vmatpush.bf16.msra.mxu0 %v672
  %874 = vmatpush.bf16.msra.mxu0 %v671
  %875 = vmatpush.bf16.msra.mxu0 %v670
  %876 = vmatpush.bf16.msra.mxu0 %v669
  %877 = vmatpush.bf16.msra.mxu0 %v668
  %878 = vmatpush.bf16.msra.mxu0 %v667
  %879 = vmatpush.bf16.msra.mxu0 %v666
  %880 = vmatmul.bf16.gmra.mxu0 %v309
  %v881 = vpop.f32.mrf.mxu0
  %v882 = vadd.f32 %v848, %v881
  %v883 = vpop.f32.mrf.mxu0
  %v884 = vadd.f32 %v850, %v883
  %885 = vmatmul.bf16.gmra.mxu0 %v317
  %v886 = vpop.f32.mrf.mxu0
  %v887 = vadd.f32 %v853, %v886
  %v888 = vpop.f32.mrf.mxu0
  %v889 = vadd.f32 %v855, %v888
  %890 = vmatmul.bf16.gmra.mxu0 %v325
  %v891 = vpop.f32.mrf.mxu0
  %v892 = vadd.f32 %v858, %v891
  %v893 = vpop.f32.mrf.mxu0
  %v894 = vadd.f32 %v860, %v893
  %895 = vmatmul.bf16.gmra.mxu0 %v333
  %v896 = vpop.f32.mrf.mxu0
  %v897 = vadd.f32 %v863, %v896
  %v898 = vpop.f32.mrf.mxu0
  %v899 = vadd.f32 %v865, %v898
  %900 = vmatmul.bf16.gmra.mxu0 %v341
  %v901 = vpop.f32.mrf.mxu0
  %v902 = vadd.f32 %v868, %v901
  %v903 = vpop.f32.mrf.mxu0
  %v904 = vadd.f32 %v870, %v903
  %905 = vdwg.mxu0
  %906 = vmatpush.bf16.msra.mxu0 %v681
  %907 = vmatpush.bf16.msra.mxu0 %v680
  %908 = vmatpush.bf16.msra.mxu0 %v679
  %909 = vmatpush.bf16.msra.mxu0 %v678
  %910 = vmatpush.bf16.msra.mxu0 %v677
  %911 = vmatpush.bf16.msra.mxu0 %v676
  %912 = vmatpush.bf16.msra.mxu0 %v675
  %913 = vmatpush.bf16.msra.mxu0 %v674
  %914 = vmatmul.bf16.gmra.mxu0 %v310
  %v915 = vpop.f32.mrf.mxu0
  %v916 = vadd.f32 %v882, %v915
  %v917 = vpop.f32.mrf.mxu0
  %v918 = vadd.f32 %v884, %v917
  %919 = vmatmul.bf16.gmra.mxu0 %v318
  %v920 = vpop.f32.mrf.mxu0
  %v921 = vadd.f32 %v887, %v920
  %v922 = vpop.f32.mrf.mxu0
  %v923 = vadd.f32 %v889, %v922
  %924 = vmatmul.bf16.gmra.mxu0 %v326
  %v925 = vpop.f32.mrf.mxu0
  %v926 = vadd.f32 %v892, %v925
  %v927 = vpop.f32.mrf.mxu0
  %v928 = vadd.f32 %v894, %v927
  %929 = vmatmul.bf16.gmra.mxu0 %v334
  %v930 = vpop.f32.mrf.mxu0
  %v931 = vadd.f32 %v897, %v930
  %v932 = vpop.f32.mrf.mxu0
  %v933 = vadd.f32 %v899, %v932
  %934 = vmatmul.bf16.gmra.mxu0 %v342
  %v935 = vpop.f32.mrf.mxu0
  %v936 = vadd.f32 %v902, %v935
  %v937 = vpop.f32.mrf.mxu0
  %v938 = vadd.f32 %v904, %v937
  %939 = vdwg.mxu0
  %940 = vmatpush.bf16.msra.mxu0 %v689
  %941 = vmatpush.bf16.msra.mxu0 %v688
  %942 = vmatpush.bf16.msra.mxu0 %v687
  %943 = vmatpush.bf16.msra.mxu0 %v686
  %944 = vmatpush.bf16.msra.mxu0 %v685
  %945 = vmatpush.bf16.msra.mxu0 %v684
  %946 = vmatpush.bf16.msra.mxu0 %v683
  %947 = vmatpush.bf16.msra.mxu0 %v682
  %948 = vmatmul.bf16.gmra.mxu0 %v311
  %v949 = vpop.f32.mrf.mxu0
  %v950 = vadd.f32 %v916, %v949
  %v951 = vpop.f32.mrf.mxu0
  %v952 = vadd.f32 %v918, %v951
  %953 = vmatmul.bf16.gmra.mxu0 %v319
  %v954 = vpop.f32.mrf.mxu0
  %v955 = vadd.f32 %v921, %v954
  %v956 = vpop.f32.mrf.mxu0
  %v957 = vadd.f32 %v923, %v956
  %958 = vmatmul.bf16.gmra.mxu0 %v327
  %v959 = vpop.f32.mrf.mxu0
  %v960 = vadd.f32 %v926, %v959
  %v961 = vpop.f32.mrf.mxu0
  %v962 = vadd.f32 %v928, %v961
  %963 = vmatmul.bf16.gmra.mxu0 %v335
  %v964 = vpop.f32.mrf.mxu0
  %v965 = vadd.f32 %v931, %v964
  %v966 = vpop.f32.mrf.mxu0
  %v967 = vadd.f32 %v933, %v966
  %968 = vmatmul.bf16.gmra.mxu0 %v343
  %v969 = vpop.f32.mrf.mxu0
  %v970 = vadd.f32 %v936, %v969
  %v971 = vpop.f32.mrf.mxu0
  %v972 = vadd.f32 %v938, %v971
  %973 = vdwg.mxu0
  %974 = vmatpush.bf16.msra.mxu0 %v697
  %975 = vmatpush.bf16.msra.mxu0 %v696
  %976 = vmatpush.bf16.msra.mxu0 %v695
  %977 = vmatpush.bf16.msra.mxu0 %v694
  %978 = vmatpush.bf16.msra.mxu0 %v693
  %979 = vmatpush.bf16.msra.mxu0 %v692
  %980 = vmatpush.bf16.msra.mxu0 %v691
  %981 = vmatpush.bf16.msra.mxu0 %v690
  %982 = vmatmul.bf16.gmra.mxu0 %v312
  %v983 = vpop.f32.mrf.mxu0
  %v984 = vadd.f32 %v950, %v983
  %v985 = vpop.f32.mrf.mxu0
  %v986 = vadd.f32 %v952, %v985
  %987 = vmatmul.bf16.gmra.mxu0 %v320
  %v988 = vpop.f32.mrf.mxu0
  %v989 = vadd.f32 %v955, %v988
  %v990 = vpop.f32.mrf.mxu0
  %v991 = vadd.f32 %v957, %v990
  %992 = vmatmul.bf16.gmra.mxu0 %v328
  %v993 = vpop.f32.mrf.mxu0
  %v994 = vadd.f32 %v960, %v993
  %v995 = vpop.f32.mrf.mxu0
  %v996 = vadd.f32 %v962, %v995
  %997 = vmatmul.bf16.gmra.mxu0 %v336
  %v998 = vpop.f32.mrf.mxu0
  %v999 = vadd.f32 %v965, %v998
  %v1000 = vpop.f32.mrf.mxu0
  %v1001 = vadd.f32 %v967, %v1000
  %1002 = vmatmul.bf16.gmra.mxu0 %v344
  %v1003 = vpop.f32.mrf.mxu0
  %v1004 = vadd.f32 %v970, %v1003
  %v1005 = vpop.f32.mrf.mxu0
  %v1006 = vadd.f32 %v972, %v1005
  %1007 = vdwg.mxu0
  %1008 = vmatpush.bf16.msra.mxu0 %v705
  %1009 = vmatpush.bf16.msra.mxu0 %v704
  %1010 = vmatpush.bf16.msra.mxu0 %v703
  %1011 = vmatpush.bf16.msra.mxu0 %v702
  %1012 = vmatpush.bf16.msra.mxu0 %v701
  %1013 = vmatpush.bf16.msra.mxu0 %v700
  %1014 = vmatpush.bf16.msra.mxu0 %v699
  %1015 = vmatpush.bf16.msra.mxu0 %v698
  %1016 = vmatmul.bf16.gmra.mxu0 %v313
  %v1017 = vpop.f32.mrf.mxu0
  %v1018 = vadd.f32 %v984, %v1017
  %v1019 = vpop.f32.mrf.mxu0
  %v1020 = vadd.f32 %v986, %v1019
  %1021 = vmatmul.bf16.gmra.mxu0 %v321
  %v1022 = vpop.f32.mrf.mxu0
  %v1023 = vadd.f32 %v989, %v1022
  %v1024 = vpop.f32.mrf.mxu0
  %v1025 = vadd.f32 %v991, %v1024
  %1026 = vmatmul.bf16.gmra.mxu0 %v329
  %v1027 = vpop.f32.mrf.mxu0
  %v1028 = vadd.f32 %v994, %v1027
  %v1029 = vpop.f32.mrf.mxu0
  %v1030 = vadd.f32 %v996, %v1029
  %1031 = vmatmul.bf16.gmra.mxu0 %v337
  %v1032 = vpop.f32.mrf.mxu0
  %v1033 = vadd.f32 %v999, %v1032
  %v1034 = vpop.f32.mrf.mxu0
  %v1035 = vadd.f32 %v1001, %v1034
  %1036 = vmatmul.bf16.gmra.mxu0 %v345
  %v1037 = vpop.f32.mrf.mxu0
  %v1038 = vadd.f32 %v1004, %v1037
  %v1039 = vpop.f32.mrf.mxu0
  %v1040 = vadd.f32 %v1006, %v1039
  %1041 = vdwg.mxu0
  %v1042 = vmax.f32 %v1018, 0.0
  %v1043 = vmax.f32 %v1020, 0.0
  %v1044 = vmax.f32 %v1023, 0.0
  %v1045 = vmax.f32 %v1025, 0.0
  %v1046 = vmax.f32 %v1028, 0.0
  %v1047 = vmax.f32 %v1030, 0.0
  %v1048 = vmax.f32 %v1033, 0.0
  %v1049 = vmax.f32 %v1035, 0.0
  %v1050 = vmax.f32 %v1038, 0.0
  %v1051 = vmax.f32 %v1040, 0.0
  %vm1052 = vcmask 523264
  %1053 = vst.msk [vmem:[%s3] sm:$0xff] %vm1052, %v1042
  %1054 = vst.msk [vmem:[%s3 + $0x8] sm:$0xff] %vm1052, %v1043
  %1055 = vst.msk [vmem:[%s3 + $0x10] sm:$0xff] %vm1052, %v1044
  %1056 = vst.msk [vmem:[%s3 + $0x18] sm:$0xff] %vm1052, %v1045
  %1057 = vst.msk [vmem:[%s3 + $0x20] sm:$0xff] %vm1052, %v1046
  %1058 = vst.msk [vmem:[%s3 + $0x28] sm:$0xff] %vm1052, %v1047
  %1059 = vst.msk [vmem:[%s3 + $0x30] sm:$0xff] %vm1052, %v1048
  %1060 = vst.msk [vmem:[%s3 + $0x38] sm:$0xff] %vm1052, %v1049
  %1061 = vst.msk [vmem:[%s3 + $0x40] sm:$0xff] %vm1052, %v1050
  %1062 = vst.msk [vmem:[%s3 + $0x48] sm:$0xff] %vm1052, %v1051
  // Predicated region
  $region14: #{reid_forward.9} parent=0 // pred_check
    _
  $region15: #{reid_forward.9} parent=0 // pred_check_branch
    %1064 = sbr.rel (0) target = $region17
  $region16: #{reid_forward.9} parent=0 // pred_region
    _
  $region17: #{reid_forward.9} parent=0 // pred_fallthru
    _
  // Predicated region
  $region18: #{reid_forward.9} parent=0 // pred_check
    _
  $region19: #{reid_forward.9} parent=0 // pred_check_branch
    %1066 = sbr.rel (0) target = $region21
  $region20: #{reid_forward.9} parent=0 // pred_region
    _
  $region21: #{reid_forward.9} parent=0 // pred_fallthru
    _

// kernel: reid_forward.10
$region0: #{reid_forward.10}
  #allocation0 [shape = 'u32[]', space=smem, size = 0x4, offset = 0x4, fixed_abs, tag = 'smem constant byte address 0x4 - core index']
  #allocation1 [shape = 'u32[72,128]{1,0:T(1,128)}', space=vmem, size = 0x9000, scoped, tag = 'internal scratch']
  %s0 = inlined_call_operand.vmem [shape: bf16[20,1024], index: 0, kind: input, shape index: {}]
  %s1 = inlined_call_operand.vmem [shape: bf16[1024,64], index: 1, kind: input, shape index: {}]
  %s2 = inlined_call_operand.vmem [shape: f32[1,64], index: 2, kind: input, shape index: {}]
  %s3 = inlined_call_operand.vmem [shape: f32[20,64], index: 3, kind: output, shape index: {}]
  %s4 = sld [smem:[#allocation0]]
  $region22: #{reid_forward.10} parent=0
    _
  %s6 = ssub.s32 1, %s4
  %s7 = scalar_select 0, %s6, %s4
  // Predicated region
  $region2: #{reid_forward.10} parent=0 // pred_check
    _
  $region3: #{reid_forward.10} parent=0 // pred_check_branch
    %9 = sbr.rel (0) target = $region5
  $region4: #{reid_forward.10} parent=0 // pred_region
    _
  $region5: #{reid_forward.10} parent=0 // pred_fallthru
    _
  // Predicated region
  $region6: #{reid_forward.10} parent=0 // pred_check
    _
  $region7: #{reid_forward.10} parent=0 // pred_check_branch
    %11 = sbr.rel (0) target = $region9
  $region8: #{reid_forward.10} parent=0 // pred_region
    _
  $region9: #{reid_forward.10} parent=0 // pred_fallthru
    _
  // Predicated region
  $region10: #{reid_forward.10} parent=0 // pred_check
    _
  $region11: #{reid_forward.10} parent=0 // pred_check_branch
    %13 = sbr.rel (0) target = $region13
  $region12: #{reid_forward.10} parent=0 // pred_region
    _
  $region13: #{reid_forward.10} parent=0 // pred_fallthru
    _
  %v14 = vld [vmem:[%s0] sm:$0xff]
  %v15 = vld [vmem:[%s0 + $0x8] sm:$0xff]
  %v16 = vld [vmem:[%s0 + $0x10] sm:$0xff]
  %v17 = vld [vmem:[%s0 + $0x18] sm:$0xff]
  %v18 = vld [vmem:[%s0 + $0x20] sm:$0xff]
  %v19 = vld [vmem:[%s0 + $0x28] sm:$0xff]
  %v20 = vld [vmem:[%s0 + $0x30] sm:$0xff]
  %v21 = vld [vmem:[%s0 + $0x38] sm:$0xff]
  %v22 = vld [vmem:[%s0 + $0x40] sm:$0x33]
  %v23 = vld [vmem:[%s0 + $0x48] sm:$0x33]
  %v24 = vld [vmem:[%s0 + $0x50] sm:$0x33]
  %v25 = vld [vmem:[%s0 + $0x58] sm:$0x33]
  %v26 = vld [vmem:[%s1] sm:$0xf]
  %v27 = vld [vmem:[%s1 + $0x4] sm:$0xf]
  %v28 = vld [vmem:[%s1 + $0x8] sm:$0xf]
  %v29 = vld [vmem:[%s1 + $0xc] sm:$0xf]
  %v30 = vld [vmem:[%s1 + $0x10] sm:$0xf]
  %v31 = vld [vmem:[%s1 + $0x14] sm:$0xf]
  %v32 = vld [vmem:[%s1 + $0x18] sm:$0xf]
  %v33 = vld [vmem:[%s1 + $0x1c] sm:$0xf]
  %v34 = vld [vmem:[%s1 + $0x20] sm:$0xf]
  %v35 = vld [vmem:[%s1 + $0x24] sm:$0xf]
  %v36 = vld [vmem:[%s1 + $0x28] sm:$0xf]
  %v37 = vld [vmem:[%s1 + $0x2c] sm:$0xf]
  %v38 = vld [vmem:[%s1 + $0x30] sm:$0xf]
  %v39 = vld [vmem:[%s1 + $0x34] sm:$0xf]
  %v40 = vld [vmem:[%s1 + $0x38] sm:$0xf]
  %v41 = vld [vmem:[%s1 + $0x3c] sm:$0xf]
  %v42 = vld [vmem:[%s1 + $0x40] sm:$0xf]
  %v43 = vld [vmem:[%s1 + $0x44] sm:$0xf]
  %v44 = vld [vmem:[%s1 + $0x48] sm:$0xf]
  %v45 = vld [vmem:[%s1 + $0x4c] sm:$0xf]
  %v46 = vld [vmem:[%s1 + $0x50] sm:$0xf]
  %v47 = vld [vmem:[%s1 + $0x54] sm:$0xf]
  %v48 = vld [vmem:[%s1 + $0x58] sm:$0xf]
  %v49 = vld [vmem:[%s1 + $0x5c] sm:$0xf]
  %v50 = vld [vmem:[%s1 + $0x60] sm:$0xf]
  %v51 = vld [vmem:[%s1 + $0x64] sm:$0xf]
  %v52 = vld [vmem:[%s1 + $0x68] sm:$0xf]
  %v53 = vld [vmem:[%s1 + $0x6c] sm:$0xf]
  %v54 = vld [vmem:[%s1 + $0x70] sm:$0xf]
  %v55 = vld [vmem:[%s1 + $0x74] sm:$0xf]
  %v56 = vld [vmem:[%s1 + $0x78] sm:$0xf]
  %v57 = vld [vmem:[%s1 + $0x7c] sm:$0xf]
  %v58 = vld [vmem:[%s1 + $0x80] sm:$0xf]
  %v59 = vld [vmem:[%s1 + $0x84] sm:$0xf]
  %v60 = vld [vmem:[%s1 + $0x88] sm:$0xf]
  %v61 = vld [vmem:[%s1 + $0x8c] sm:$0xf]
  %v62 = vld [vmem:[%s1 + $0x90] sm:$0xf]
  %v63 = vld [vmem:[%s1 + $0x94] sm:$0xf]
  %v64 = vld [vmem:[%s1 + $0x98] sm:$0xf]
  %v65 = vld [vmem:[%s1 + $0x9c] sm:$0xf]
  %v66 = vld [vmem:[%s1 + $0xa0] sm:$0xf]
  %v67 = vld [vmem:[%s1 + $0xa4] sm:$0xf]
  %v68 = vld [vmem:[%s1 + $0xa8] sm:$0xf]
  %v69 = vld [vmem:[%s1 + $0xac] sm:$0xf]
  %v70 = vld [vmem:[%s1 + $0xb0] sm:$0xf]
  %v71 = vld [vmem:[%s1 + $0xb4] sm:$0xf]
  %v72 = vld [vmem:[%s1 + $0xb8] sm:$0xf]
  %v73 = vld [vmem:[%s1 + $0xbc] sm:$0xf]
  %v74 = vld [vmem:[%s1 + $0xc0] sm:$0xf]
  %v75 = vld [vmem:[%s1 + $0xc4] sm:$0xf]
  %v76 = vld [vmem:[%s1 + $0xc8] sm:$0xf]
  %v77 = vld [vmem:[%s1 + $0xcc] sm:$0xf]
  %v78 = vld [vmem:[%s1 + $0xd0] sm:$0xf]
  %v79 = vld [vmem:[%s1 + $0xd4] sm:$0xf]
  %v80 = vld [vmem:[%s1 + $0xd8] sm:$0xf]
  %v81 = vld [vmem:[%s1 + $0xdc] sm:$0xf]
  %v82 = vld [vmem:[%s1 + $0xe0] sm:$0xf]
  %v83 = vld [vmem:[%s1 + $0xe4] sm:$0xf]
  %v84 = vld [vmem:[%s1 + $0xe8] sm:$0xf]
  %v85 = vld [vmem:[%s1 + $0xec] sm:$0xf]
  %v86 = vld [vmem:[%s1 + $0xf0] sm:$0xf]
  %v87 = vld [vmem:[%s1 + $0xf4] sm:$0xf]
  %v88 = vld [vmem:[%s1 + $0xf8] sm:$0xf]
  %v89 = vld [vmem:[%s1 + $0xfc] sm:$0xf]
  %v90 = vld [vmem:[%s1 + $0x100] sm:$0xf]
  %v91 = vld [vmem:[%s1 + $0x104] sm:$0xf]
  %v92 = vld [vmem:[%s1 + $0x108] sm:$0xf]
  %v93 = vld [vmem:[%s1 + $0x10c] sm:$0xf]
  %v94 = vld [vmem:[%s1 + $0x110] sm:$0xf]
  %v95 = vld [vmem:[%s1 + $0x114] sm:$0xf]
  %v96 = vld [vmem:[%s1 + $0x118] sm:$0xf]
  %v97 = vld [vmem:[%s1 + $0x11c] sm:$0xf]
  %v98 = vld [vmem:[%s1 + $0x120] sm:$0xf]
  %v99 = vld [vmem:[%s1 + $0x124] sm:$0xf]
  %v100 = vld [vmem:[%s1 + $0x128] sm:$0xf]
  %v101 = vld [vmem:[%s1 + $0x12c] sm:$0xf]
  %v102 = vld [vmem:[%s1 + $0x130] sm:$0xf]
  %v103 = vld [vmem:[%s1 + $0x134] sm:$0xf]
  %v104 = vld [vmem:[%s1 + $0x138] sm:$0xf]
  %v105 = vld [vmem:[%s1 + $0x13c] sm:$0xf]
  %v106 = vld [vmem:[%s1 + $0x140] sm:$0xf]
  %v107 = vld [vmem:[%s1 + $0x144] sm:$0xf]
  %v108 = vld [vmem:[%s1 + $0x148] sm:$0xf]
  %v109 = vld [vmem:[%s1 + $0x14c] sm:$0xf]
  %v110 = vld [vmem:[%s1 + $0x150] sm:$0xf]
  %v111 = vld [vmem:[%s1 + $0x154] sm:$0xf]
  %v112 = vld [vmem:[%s1 + $0x158] sm:$0xf]
  %v113 = vld [vmem:[%s1 + $0x15c] sm:$0xf]
  %v114 = vld [vmem:[%s1 + $0x160] sm:$0xf]
  %v115 = vld [vmem:[%s1 + $0x164] sm:$0xf]
  %v116 = vld [vmem:[%s1 + $0x168] sm:$0xf]
  %v117 = vld [vmem:[%s1 + $0x16c] sm:$0xf]
  %v118 = vld [vmem:[%s1 + $0x170] sm:$0xf]
  %v119 = vld [vmem:[%s1 + $0x174] sm:$0xf]
  %v120 = vld [vmem:[%s1 + $0x178] sm:$0xf]
  %v121 = vld [vmem:[%s1 + $0x17c] sm:$0xf]
  %v122 = vld [vmem:[%s1 + $0x180] sm:$0xf]
  %v123 = vld [vmem:[%s1 + $0x184] sm:$0xf]
  %v124 = vld [vmem:[%s1 + $0x188] sm:$0xf]
  %v125 = vld [vmem:[%s1 + $0x18c] sm:$0xf]
  %v126 = vld [vmem:[%s1 + $0x190] sm:$0xf]
  %v127 = vld [vmem:[%s1 + $0x194] sm:$0xf]
  %v128 = vld [vmem:[%s1 + $0x198] sm:$0xf]
  %v129 = vld [vmem:[%s1 + $0x19c] sm:$0xf]
  %v130 = vld [vmem:[%s1 + $0x1a0] sm:$0xf]
  %v131 = vld [vmem:[%s1 + $0x1a4] sm:$0xf]
  %v132 = vld [vmem:[%s1 + $0x1a8] sm:$0xf]
  %v133 = vld [vmem:[%s1 + $0x1ac] sm:$0xf]
  %v134 = vld [vmem:[%s1 + $0x1b0] sm:$0xf]
  %v135 = vld [vmem:[%s1 + $0x1b4] sm:$0xf]
  %v136 = vld [vmem:[%s1 + $0x1b8] sm:$0xf]
  %v137 = vld [vmem:[%s1 + $0x1bc] sm:$0xf]
  %v138 = vld [vmem:[%s1 + $0x1c0] sm:$0xf]
  %v139 = vld [vmem:[%s1 + $0x1c4] sm:$0xf]
  %v140 = vld [vmem:[%s1 + $0x1c8] sm:$0xf]
  %v141 = vld [vmem:[%s1 + $0x1cc] sm:$0xf]
  %v142 = vld [vmem:[%s1 + $0x1d0] sm:$0xf]
  %v143 = vld [vmem:[%s1 + $0x1d4] sm:$0xf]
  %v144 = vld [vmem:[%s1 + $0x1d8] sm:$0xf]
  %v145 = vld [vmem:[%s1 + $0x1dc] sm:$0xf]
  %v146 = vld [vmem:[%s1 + $0x1e0] sm:$0xf]
  %v147 = vld [vmem:[%s1 + $0x1e4] sm:$0xf]
  %v148 = vld [vmem:[%s1 + $0x1e8] sm:$0xf]
  %v149 = vld [vmem:[%s1 + $0x1ec] sm:$0xf]
  %v150 = vld [vmem:[%s1 + $0x1f0] sm:$0xf]
  %v151 = vld [vmem:[%s1 + $0x1f4] sm:$0xf]
  %v152 = vld [vmem:[%s1 + $0x1f8] sm:$0xf]
  %v153 = vld [vmem:[%s1 + $0x1fc] sm:$0xf]
  %v154 = vld [vmem:[%s2] sm:$0x1]
  %v156 = vperm.slane %v154, 0
  %v170 = vunpack.c.l.b16 %v14
  %v171 = vunpack.c.h.b16 %v14
  %v172 = vunpack.c.l.b16 %v15
  %v173 = vunpack.c.h.b16 %v15
  %v174 = vunpack.c.l.b16 %v16
  %v175 = vunpack.c.h.b16 %v16
  %v176 = vunpack.c.l.b16 %v17
  %v177 = vunpack.c.h.b16 %v17
  %v178 = vunpack.c.l.b16 %v18
  %v179 = vunpack.c.h.b16 %v18
  %v180 = vunpack.c.l.b16 %v19
  %v181 = vunpack.c.h.b16 %v19
  %v182 = vunpack.c.l.b16 %v20
  %v183 = vunpack.c.h.b16 %v20
  %v184 = vunpack.c.l.b16 %v21
  %v185 = vunpack.c.h.b16 %v21
  %v186 = vunpack.c.l.b16 %v22
  %v187 = vunpack.c.h.b16 %v22
  %v188 = vunpack.c.l.b16 %v23
  %v189 = vunpack.c.h.b16 %v23
  %v190 = vunpack.c.l.b16 %v24
  %v191 = vunpack.c.h.b16 %v24
  %v192 = vunpack.c.l.b16 %v25
  %v193 = vunpack.c.h.b16 %v25
  %v194 = vpack.c.b16 %v178, %v170
  %v195 = vpack.c.b16 %v179, %v171
  %v196 = vpack.c.b16 %v180, %v172
  %v197 = vpack.c.b16 %v181, %v173
  %v198 = vpack.c.b16 %v182, %v174
  %v199 = vpack.c.b16 %v183, %v175
  %v200 = vpack.c.b16 %v184, %v176
  %v201 = vpack.c.b16 %v185, %v177
  %v202 = vpack.c.b16 %v186, %v186
  %v203 = vpack.c.b16 %v187, %v187
  %v204 = vpack.c.b16 %v188, %v188
  %v205 = vpack.c.b16 %v189, %v189
  %v206 = vpack.c.b16 %v190, %v190
  %v207 = vpack.c.b16 %v191, %v191
  %v208 = vpack.c.b16 %v192, %v192
  %v209 = vpack.c.b16 %v193, %v193
  %v354 = vunpack.c.l.b16 %v26
  %v355 = vunpack.c.l.b16 %v27
  %v356 = vunpack.c.l.b16 %v28
  %v357 = vunpack.c.l.b16 %v29
  %v358 = vunpack.c.l.b16 %v30
  %v359 = vunpack.c.l.b16 %v31
  %v360 = vunpack.c.l.b16 %v32
  %v361 = vunpack.c.l.b16 %v33
  %v362 = vunpack.c.l.b16 %v34
  %v363 = vunpack.c.l.b16 %v35
  %v364 = vunpack.c.l.b16 %v36
  %v365 = vunpack.c.l.b16 %v37
  %v366 = vunpack.c.l.b16 %v38
  %v367 = vunpack.c.l.b16 %v39
  %v368 = vunpack.c.l.b16 %v40
  %v369 = vunpack.c.l.b16 %v41
  %v370 = vunpack.c.l.b16 %v42
  %v371 = vunpack.c.l.b16 %v43
  %v372 = vunpack.c.l.b16 %v44
  %v373 = vunpack.c.l.b16 %v45
  %v374 = vunpack.c.l.b16 %v46
  %v375 = vunpack.c.l.b16 %v47
  %v376 = vunpack.c.l.b16 %v48
  %v377 = vunpack.c.l.b16 %v49
  %v378 = vunpack.c.l.b16 %v50
  %v379 = vunpack.c.l.b16 %v51
  %v380 = vunpack.c.l.b16 %v52
  %v381 = vunpack.c.l.b16 %v53
  %v382 = vunpack.c.l.b16 %v54
  %v383 = vunpack.c.l.b16 %v55
  %v384 = vunpack.c.l.b16 %v56
  %v385 = vunpack.c.l.b16 %v57
  %v386 = vunpack.c.l.b16 %v58
  %v387 = vunpack.c.l.b16 %v59
  %v388 = vunpack.c.l.b16 %v60
  %v389 = vunpack.c.l.b16 %v61
  %v390 = vunpack.c.l.b16 %v62
  %v391 = vunpack.c.l.b16 %v63
  %v392 = vunpack.c.l.b16 %v64
  %v393 = vunpack.c.l.b16 %v65
  %v394 = vunpack.c.l.b16 %v66
  %v395 = vunpack.c.l.b16 %v67
  %v396 = vunpack.c.l.b16 %v68
  %v397 = vunpack.c.l.b16 %v69
  %v398 = vunpack.c.l.b16 %v70
  %v399 = vunpack.c.l.b16 %v71
  %v400 = vunpack.c.l.b16 %v72
  %v401 = vunpack.c.l.b16 %v73
  %v402 = vunpack.c.l.b16 %v74
  %v403 = vunpack.c.l.b16 %v75
  %v404 = vunpack.c.l.b16 %v76
  %v405 = vunpack.c.l.b16 %v77
  %v406 = vunpack.c.l.b16 %v78
  %v407 = vunpack.c.l.b16 %v79
  %v408 = vunpack.c.l.b16 %v80
  %v409 = vunpack.c.l.b16 %v81
  %v410 = vunpack.c.l.b16 %v82
  %v411 = vunpack.c.l.b16 %v83
  %v412 = vunpack.c.l.b16 %v84
  %v413 = vunpack.c.l.b16 %v85
  %v414 = vunpack.c.l.b16 %v86
  %v415 = vunpack.c.l.b16 %v87
  %v416 = vunpack.c.l.b16 %v88
  %v417 = vunpack.c.l.b16 %v89
  %v418 = vunpack.c.l.b16 %v90
  %v419 = vunpack.c.l.b16 %v91
  %v420 = vunpack.c.l.b16 %v92
  %v421 = vunpack.c.l.b16 %v93
  %v422 = vunpack.c.l.b16 %v94
  %v423 = vunpack.c.l.b16 %v95
  %v424 = vunpack.c.l.b16 %v96
  %v425 = vunpack.c.l.b16 %v97
  %v426 = vunpack.c.l.b16 %v98
  %v427 = vunpack.c.l.b16 %v99
  %v428 = vunpack.c.l.b16 %v100
  %v429 = vunpack.c.l.b16 %v101
  %v430 = vunpack.c.l.b16 %v102
  %v431 = vunpack.c.l.b16 %v103
  %v432 = vunpack.c.l.b16 %v104
  %v433 = vunpack.c.l.b16 %v105
  %v434 = vunpack.c.l.b16 %v106
  %v435 = vunpack.c.l.b16 %v107
  %v436 = vunpack.c.l.b16 %v108
  %v437 = vunpack.c.l.b16 %v109
  %v438 = vunpack.c.l.b16 %v110
  %v439 = vunpack.c.l.b16 %v111
  %v440 = vunpack.c.l.b16 %v112
  %v441 = vunpack.c.l.b16 %v113
  %v442 = vunpack.c.l.b16 %v114
  %v443 = vunpack.c.l.b16 %v115
  %v444 = vunpack.c.l.b16 %v116
  %v445 = vunpack.c.l.b16 %v117
  %v446 = vunpack.c.l.b16 %v118
  %v447 = vunpack.c.l.b16 %v119
  %v448 = vunpack.c.l.b16 %v120
  %v449 = vunpack.c.l.b16 %v121
  %v450 = vunpack.c.l.b16 %v122
  %v451 = vunpack.c.l.b16 %v123
  %v452 = vunpack.c.l.b16 %v124
  %v453 = vunpack.c.l.b16 %v125
  %v454 = vunpack.c.l.b16 %v126
  %v455 = vunpack.c.l.b16 %v127
  %v456 = vunpack.c.l.b16 %v128
  %v457 = vunpack.c.l.b16 %v129
  %v458 = vunpack.c.l.b16 %v130
  %v459 = vunpack.c.l.b16 %v131
  %v460 = vunpack.c.l.b16 %v132
  %v461 = vunpack.c.l.b16 %v133
  %v462 = vunpack.c.l.b16 %v134
  %v463 = vunpack.c.l.b16 %v135
  %v464 = vunpack.c.l.b16 %v136
  %v465 = vunpack.c.l.b16 %v137
  %v466 = vunpack.c.l.b16 %v138
  %v467 = vunpack.c.l.b16 %v139
  %v468 = vunpack.c.l.b16 %v140
  %v469 = vunpack.c.l.b16 %v141
  %v470 = vunpack.c.l.b16 %v142
  %v471 = vunpack.c.l.b16 %v143
  %v472 = vunpack.c.l.b16 %v144
  %v473 = vunpack.c.l.b16 %v145
  %v474 = vunpack.c.l.b16 %v146
  %v475 = vunpack.c.l.b16 %v147
  %v476 = vunpack.c.l.b16 %v148
  %v477 = vunpack.c.l.b16 %v149
  %v478 = vunpack.c.l.b16 %v150
  %v479 = vunpack.c.l.b16 %v151
  %v480 = vunpack.c.l.b16 %v152
  %v481 = vunpack.c.l.b16 %v153
  %v482 = vpack.c.b16 %v355, %v354
  %v483 = vpack.c.b16 %v357, %v356
  %v484 = vpack.c.b16 %v359, %v358
  %v485 = vpack.c.b16 %v361, %v360
  %v486 = vpack.c.b16 %v363, %v362
  %v487 = vpack.c.b16 %v365, %v364
  %v488 = vpack.c.b16 %v367, %v366
  %v489 = vpack.c.b16 %v369, %v368
  %v490 = vpack.c.b16 %v371, %v370
  %v491 = vpack.c.b16 %v373, %v372
  %v492 = vpack.c.b16 %v375, %v374
  %v493 = vpack.c.b16 %v377, %v376
  %v494 = vpack.c.b16 %v379, %v378
  %v495 = vpack.c.b16 %v381, %v380
  %v496 = vpack.c.b16 %v383, %v382
  %v497 = vpack.c.b16 %v385, %v384
  %v498 = vpack.c.b16 %v387, %v386
  %v499 = vpack.c.b16 %v389, %v388
  %v500 = vpack.c.b16 %v391, %v390
  %v501 = vpack.c.b16 %v393, %v392
  %v502 = vpack.c.b16 %v395, %v394
  %v503 = vpack.c.b16 %v397, %v396
  %v504 = vpack.c.b16 %v399, %v398
  %v505 = vpack.c.b16 %v401, %v400
  %v506 = vpack.c.b16 %v403, %v402
  %v507 = vpack.c.b16 %v405, %v404
  %v508 = vpack.c.b16 %v407, %v406
  %v509 = vpack.c.b16 %v409, %v408
  %v510 = vpack.c.b16 %v411, %v410
  %v511 = vpack.c.b16 %v413, %v412
  %v512 = vpack.c.b16 %v415, %v414
  %v513 = vpack.c.b16 %v417, %v416
  %v514 = vpack.c.b16 %v419, %v418
  %v515 = vpack.c.b16 %v421, %v420
  %v516 = vpack.c.b16 %v423, %v422
  %v517 = vpack.c.b16 %v425, %v424
  %v518 = vpack.c.b16 %v427, %v426
  %v519 = vpack.c.b16 %v429, %v428
  %v520 = vpack.c.b16 %v431, %v430
  %v521 = vpack.c.b16 %v433, %v432
  %v522 = vpack.c.b16 %v435, %v434
  %v523 = vpack.c.b16 %v437, %v436
  %v524 = vpack.c.b16 %v439, %v438
  %v525 = vpack.c.b16 %v441, %v440
  %v526 = vpack.c.b16 %v443, %v442
  %v527 = vpack.c.b16 %v445, %v444
  %v528 = vpack.c.b16 %v447, %v446
  %v529 = vpack.c.b16 %v449, %v448
  %v530 = vpack.c.b16 %v451, %v450
  %v531 = vpack.c.b16 %v453, %v452
  %v532 = vpack.c.b16 %v455, %v454
  %v533 = vpack.c.b16 %v457, %v456
  %v534 = vpack.c.b16 %v459, %v458
  %v535 = vpack.c.b16 %v461, %v460
  %v536 = vpack.c.b16 %v463, %v462
  %v537 = vpack.c.b16 %v465, %v464
  %v538 = vpack.c.b16 %v467, %v466
  %v539 = vpack.c.b16 %v469, %v468
  %v540 = vpack.c.b16 %v471, %v470
  %v541 = vpack.c.b16 %v473, %v472
  %v542 = vpack.c.b16 %v475, %v474
  %v543 = vpack.c.b16 %v477, %v476
  %v544 = vpack.c.b16 %v479, %v478
  %v545 = vpack.c.b16 %v481, %v480
  %610 = vmatpush.bf16.msra.mxu0 %v489
  %611 = vmatpush.bf16.msra.mxu0 %v488
  %612 = vmatpush.bf16.msra.mxu0 %v487
  %613 = vmatpush.bf16.msra.mxu0 %v486
  %614 = vmatpush.bf16.msra.mxu0 %v485
  %615 = vmatpush.bf16.msra.mxu0 %v484
  %616 = vmatpush.bf16.msra.mxu0 %v483
  %617 = vmatpush.bf16.msra.mxu0 %v482
  %618 = vmatmul.bf16.gmra.mxu0 %v194
  %v619 = vpop.f32.mrf.mxu0
  %v620 = vadd.f32 %v156, %v619
  %v621 = vpop.f32.mrf.mxu0
  %v622 = vadd.f32 %v156, %v621
  %623 = vmatmul.bf16.gmra.mxu0 %v202
  %v624 = vpop.f32.mrf.mxu0
  %v625 = vadd.f32 %v156, %v624
  %v626 = vpop.f32.mrf.mxu0
  %627 = vdwg.mxu0
  %628 = vmatpush.bf16.msra.mxu0 %v497
  %629 = vmatpush.bf16.msra.mxu0 %v496
  %630 = vmatpush.bf16.msra.mxu0 %v495
  %631 = vmatpush.bf16.msra.mxu0 %v494
  %632 = vmatpush.bf16.msra.mxu0 %v493
  %633 = vmatpush.bf16.msra.mxu0 %v492
  %634 = vmatpush.bf16.msra.mxu0 %v491
  %635 = vmatpush.bf16.msra.mxu0 %v490
  %636 = vmatmul.bf16.gmra.mxu0 %v195
  %v637 = vpop.f32.mrf.mxu0
  %v638 = vadd.f32 %v620, %v637
  %v639 = vpop.f32.mrf.mxu0
  %v640 = vadd.f32 %v622, %v639
  %641 = vmatmul.bf16.gmra.mxu0 %v203
  %v642 = vpop.f32.mrf.mxu0
  %v643 = vadd.f32 %v625, %v642
  %v644 = vpop.f32.mrf.mxu0
  %645 = vdwg.mxu0
  %646 = vmatpush.bf16.msra.mxu0 %v505
  %647 = vmatpush.bf16.msra.mxu0 %v504
  %648 = vmatpush.bf16.msra.mxu0 %v503
  %649 = vmatpush.bf16.msra.mxu0 %v502
  %650 = vmatpush.bf16.msra.mxu0 %v501
  %651 = vmatpush.bf16.msra.mxu0 %v500
  %652 = vmatpush.bf16.msra.mxu0 %v499
  %653 = vmatpush.bf16.msra.mxu0 %v498
  %654 = vmatmul.bf16.gmra.mxu0 %v196
  %v655 = vpop.f32.mrf.mxu0
  %v656 = vadd.f32 %v638, %v655
  %v657 = vpop.f32.mrf.mxu0
  %v658 = vadd.f32 %v640, %v657
  %659 = vmatmul.bf16.gmra.mxu0 %v204
  %v660 = vpop.f32.mrf.mxu0
  %v661 = vadd.f32 %v643, %v660
  %v662 = vpop.f32.mrf.mxu0
  %663 = vdwg.mxu0
  %664 = vmatpush.bf16.msra.mxu0 %v513
  %665 = vmatpush.bf16.msra.mxu0 %v512
  %666 = vmatpush.bf16.msra.mxu0 %v511
  %667 = vmatpush.bf16.msra.mxu0 %v510
  %668 = vmatpush.bf16.msra.mxu0 %v509
  %669 = vmatpush.bf16.msra.mxu0 %v508
  %670 = vmatpush.bf16.msra.mxu0 %v507
  %671 = vmatpush.bf16.msra.mxu0 %v506
  %672 = vmatmul.bf16.gmra.mxu0 %v197
  %v673 = vpop.f32.mrf.mxu0
  %v674 = vadd.f32 %v656, %v673
  %v675 = vpop.f32.mrf.mxu0
  %v676 = vadd.f32 %v658, %v675
  %677 = vmatmul.bf16.gmra.mxu0 %v205
  %v678 = vpop.f32.mrf.mxu0
  %v679 = vadd.f32 %v661, %v678
  %v680 = vpop.f32.mrf.mxu0
  %681 = vdwg.mxu0
  %682 = vmatpush.bf16.msra.mxu0 %v521
  %683 = vmatpush.bf16.msra.mxu0 %v520
  %684 = vmatpush.bf16.msra.mxu0 %v519
  %685 = vmatpush.bf16.msra.mxu0 %v518
  %686 = vmatpush.bf16.msra.mxu0 %v517
  %687 = vmatpush.bf16.msra.mxu0 %v516
  %688 = vmatpush.bf16.msra.mxu0 %v515
  %689 = vmatpush.bf16.msra.mxu0 %v514
  %690 = vmatmul.bf16.gmra.mxu0 %v198
  %v691 = vpop.f32.mrf.mxu0
  %v692 = vadd.f32 %v674, %v691
  %v693 = vpop.f32.mrf.mxu0
  %v694 = vadd.f32 %v676, %v693
  %695 = vmatmul.bf16.gmra.mxu0 %v206
  %v696 = vpop.f32.mrf.mxu0
  %v697 = vadd.f32 %v679, %v696
  %v698 = vpop.f32.mrf.mxu0
  %699 = vdwg.mxu0
  %700 = vmatpush.bf16.msra.mxu0 %v529
  %701 = vmatpush.bf16.msra.mxu0 %v528
  %702 = vmatpush.bf16.msra.mxu0 %v527
  %703 = vmatpush.bf16.msra.mxu0 %v526
  %704 = vmatpush.bf16.msra.mxu0 %v525
  %705 = vmatpush.bf16.msra.mxu0 %v524
  %706 = vmatpush.bf16.msra.mxu0 %v523
  %707 = vmatpush.bf16.msra.mxu0 %v522
  %708 = vmatmul.bf16.gmra.mxu0 %v199
  %v709 = vpop.f32.mrf.mxu0
  %v710 = vadd.f32 %v692, %v709
  %v711 = vpop.f32.mrf.mxu0
  %v712 = vadd.f32 %v694, %v711
  %713 = vmatmul.bf16.gmra.mxu0 %v207
  %v714 = vpop.f32.mrf.mxu0
  %v715 = vadd.f32 %v697, %v714
  %v716 = vpop.f32.mrf.mxu0
  %717 = vdwg.mxu0
  %718 = vmatpush.bf16.msra.mxu0 %v537
  %719 = vmatpush.bf16.msra.mxu0 %v536
  %720 = vmatpush.bf16.msra.mxu0 %v535
  %721 = vmatpush.bf16.msra.mxu0 %v534
  %722 = vmatpush.bf16.msra.mxu0 %v533
  %723 = vmatpush.bf16.msra.mxu0 %v532
  %724 = vmatpush.bf16.msra.mxu0 %v531
  %725 = vmatpush.bf16.msra.mxu0 %v530
  %726 = vmatmul.bf16.gmra.mxu0 %v200
  %v727 = vpop.f32.mrf.mxu0
  %v728 = vadd.f32 %v710, %v727
  %v729 = vpop.f32.mrf.mxu0
  %v730 = vadd.f32 %v712, %v729
  %731 = vmatmul.bf16.gmra.mxu0 %v208
  %v732 = vpop.f32.mrf.mxu0
  %v733 = vadd.f32 %v715, %v732
  %v734 = vpop.f32.mrf.mxu0
  %735 = vdwg.mxu0
  %736 = vmatpush.bf16.msra.mxu0 %v545
  %737 = vmatpush.bf16.msra.mxu0 %v544
  %738 = vmatpush.bf16.msra.mxu0 %v543
  %739 = vmatpush.bf16.msra.mxu0 %v542
  %740 = vmatpush.bf16.msra.mxu0 %v541
  %741 = vmatpush.bf16.msra.mxu0 %v540
  %742 = vmatpush.bf16.msra.mxu0 %v539
  %743 = vmatpush.bf16.msra.mxu0 %v538
  %744 = vmatmul.bf16.gmra.mxu0 %v201
  %v745 = vpop.f32.mrf.mxu0
  %v746 = vadd.f32 %v728, %v745
  %v747 = vpop.f32.mrf.mxu0
  %v748 = vadd.f32 %v730, %v747
  %749 = vmatmul.bf16.gmra.mxu0 %v209
  %v750 = vpop.f32.mrf.mxu0
  %v751 = vadd.f32 %v733, %v750
  %v752 = vpop.f32.mrf.mxu0
  %753 = vdwg.mxu0
  %v754 = vmax.f32 %v746, 0.0
  %v755 = vmax.f32 %v748, 0.0
  %v756 = vmax.f32 %v751, 0.0
  %vm757 = vcmask 523264
  %758 = vst.msk [vmem:[%s3] sm:$0xff] %vm757, %v754
  %759 = vst.msk [vmem:[%s3 + $0x8] sm:$0xff] %vm757, %v755
  %vm760 = vcmask 519168
  %761 = vst.msk [vmem:[%s3 + $0x10] sm:$0xf] %vm760, %v756
  // Predicated region
  $region14: #{reid_forward.10} parent=0 // pred_check
    _
  $region15: #{reid_forward.10} parent=0 // pred_check_branch
    %763 = sbr.rel (0) target = $region17
  $region16: #{reid_forward.10} parent=0 // pred_region
    _
  $region17: #{reid_forward.10} parent=0 // pred_fallthru
    _
  // Predicated region
  $region18: #{reid_forward.10} parent=0 // pred_check
    _
  $region19: #{reid_forward.10} parent=0 // pred_check_branch
    %765 = sbr.rel (0) target = $region21
  $region20: #{reid_forward.10} parent=0 // pred_region
    _
  $region21: #{reid_forward.10} parent=0 // pred_fallthru
    _

// kernel: reid_forward.11
$region0: #{reid_forward.11}
  #allocation0 [shape = 'u32[]', space=smem, size = 0x4, offset = 0x4, fixed_abs, tag = 'smem constant byte address 0x4 - core index']
  #allocation1 [shape = 'u32[72,128]{1,0:T(1,128)}', space=vmem, size = 0x9000, scoped, tag = 'internal scratch']
  #allocation2 [shape = 'f32[1,1]{1,0:T(1,128)S(1)}', space=vmem, size = 0x200, scoped, tag = 'scoped memory for reid_forward.11']
  %s0 = inlined_call_operand.vmem [shape: f32[2,256], index: 0, kind: input, shape index: {}]
  %s1 = inlined_call_operand.vmem [shape: f32[3,256], index: 1, kind: input, shape index: {}]
  %s2 = inlined_call_operand.vmem [shape: f32[256,64], index: 2, kind: input, shape index: {}]
  %s3 = inlined_call_operand.vmem [shape: f32[1,64], index: 3, kind: input, shape index: {}]
  %s4 = inlined_call_operand.vmem [shape: f32[64,256], index: 4, kind: input, shape index: {}]
  %s5 = inlined_call_operand.vmem [shape: f32[64,256], index: 5, kind: input, shape index: {}]
  %s6 = inlined_call_operand.vmem [shape: f32[1,256], index: 6, kind: input, shape index: {}]
  %s7 = inlined_call_operand.vmem [shape: f32[256,256], index: 7, kind: input, shape index: {}]
  %s8 = inlined_call_operand.vmem [shape: f32[1,256], index: 8, kind: input, shape index: {}]
  %s9 = inlined_call_operand.vmem [shape: f32[256,256], index: 9, kind: input, shape index: {}]
  %s10 = inlined_call_operand.vmem [shape: f32[1,256], index: 10, kind: input, shape index: {}]
  %s11 = inlined_call_operand.vmem [shape: f32[256,1], index: 11, kind: input, shape index: {}]
  %s12 = inlined_call_operand.<no memory space> [shape: f32[1,1], index: 12, kind: input, shape index: {}]
  %s13 = inlined_call_operand.hbm [shape: f32[2,3], index: 13, kind: output, shape index: {0}]
  %s14 = inlined_call_operand.hbm [shape: f32[2,3], index: 14, kind: output, shape index: {1}]
  %15 = xla_tuple %s13, %s14
  %s16 = sld [smem:[#allocation0]]
  $region70: #{reid_forward.11} parent=0
    _
  %s18 = ssub.s32 1, %s16
  %s19 = scalar_select 0, %s18, %s16
  %v20 = vstv %s12
  %21 = vst [vmem:[#allocation2] sm:$0x1] %v20
  $region1: #{reid_forward.11} parent=0
    #allocation3 [shape = 'u8[1024]{0}', space=vmem, size = 0x400, scoped, tag = 'output window, operand 0, single buffered']
    #allocation4 [shape = 's32[1]{0}', space=sflag, size = 0x4, scoped, tag = 'scoped memory for reid_forward.11']
    #allocation5 [shape = 'u8[1024]{0}', space=vmem, size = 0x400, scoped, tag = 'output window, operand 1, single buffered']
    #allocation6 [shape = 's32[1]{0}', space=sflag, size = 0x4, scoped, tag = 'scoped memory for reid_forward.11']
    %22 = vsyncpa [#allocation4], 0
    %23 = vsyncpa [#allocation6], 0
    // Predicated region
    $region2: #{reid_forward.11} parent=1 // pred_check
      _
    $region3: #{reid_forward.11} parent=1 // pred_check_branch
      %25 = sbr.rel (0) target = $region5
    $region4: #{reid_forward.11} parent=1 // pred_region
      _
    $region5: #{reid_forward.11} parent=1 // pred_fallthru
      _
    // Predicated region
    $region6: #{reid_forward.11} parent=1 // pred_check
      _
    $region7: #{reid_forward.11} parent=1 // pred_check_branch
      %27 = sbr.rel (0) target = $region9
    $region8: #{reid_forward.11} parent=1 // pred_region
      _
    $region9: #{reid_forward.11} parent=1 // pred_fallthru
      _
    // Predicated region
    $region10: #{reid_forward.11} parent=1 // pred_check
      _
    $region11: #{reid_forward.11} parent=1 // pred_check_branch
      %29 = sbr.rel (0) target = $region13
    $region12: #{reid_forward.11} parent=1 // pred_region
      _
    $region13: #{reid_forward.11} parent=1 // pred_fallthru
      _
    // Predicated region
    $region14: #{reid_forward.11} parent=1 // pred_check
      _
    $region15: #{reid_forward.11} parent=1 // pred_check_branch
      %31 = sbr.rel (0) target = $region17
    $region16: #{reid_forward.11} parent=1 // pred_region
      _
    $region17: #{reid_forward.11} parent=1 // pred_fallthru
      _
    // Predicated region
    $region18: #{reid_forward.11} parent=1 // pred_check
      _
    $region19: #{reid_forward.11} parent=1 // pred_check_branch
      %33 = sbr.rel (0) target = $region21
    $region20: #{reid_forward.11} parent=1 // pred_region
      _
    $region21: #{reid_forward.11} parent=1 // pred_fallthru
      _
    // Predicated region
    $region22: #{reid_forward.11} parent=1 // pred_check
      _
    $region23: #{reid_forward.11} parent=1 // pred_check_branch
      %35 = sbr.rel (0) target = $region25
    $region24: #{reid_forward.11} parent=1 // pred_region
      _
    $region25: #{reid_forward.11} parent=1 // pred_fallthru
      _
    // Predicated region
    $region26: #{reid_forward.11} parent=1 // pred_check
      _
    $region27: #{reid_forward.11} parent=1 // pred_check_branch
      %37 = sbr.rel (0) target = $region29
    $region28: #{reid_forward.11} parent=1 // pred_region
      _
    $region29: #{reid_forward.11} parent=1 // pred_fallthru
      _
    // Predicated region
    $region30: #{reid_forward.11} parent=1 // pred_check
      _
    $region31: #{reid_forward.11} parent=1 // pred_check_branch
      %39 = sbr.rel (0) target = $region33
    $region32: #{reid_forward.11} parent=1 // pred_region
      _
    $region33: #{reid_forward.11} parent=1 // pred_fallthru
      _
    // Predicated region
    $region34: #{reid_forward.11} parent=1 // pred_check
      _
    $region35: #{reid_forward.11} parent=1 // pred_check_branch
      %41 = sbr.rel (0) target = $region37
    $region36: #{reid_forward.11} parent=1 // pred_region
      _
    $region37: #{reid_forward.11} parent=1 // pred_fallthru
      _
    // Predicated region
    $region38: #{reid_forward.11} parent=1 // pred_check
      _
    $region39: #{reid_forward.11} parent=1 // pred_check_branch
      %43 = sbr.rel (0) target = $region41
    $region40: #{reid_forward.11} parent=1 // pred_region
      _
    $region41: #{reid_forward.11} parent=1 // pred_fallthru
      _
    // Predicated region
    $region42: #{reid_forward.11} parent=1 // pred_check
      _
    $region43: #{reid_forward.11} parent=1 // pred_check_branch
      %45 = sbr.rel (0) target = $region45
    $region44: #{reid_forward.11} parent=1 // pred_region
      _
    $region45: #{reid_forward.11} parent=1 // pred_fallthru
      _
    // Predicated region
    $region46: #{reid_forward.11} parent=1 // pred_check
      _
    $region47: #{reid_forward.11} parent=1 // pred_check_branch
      %47 = sbr.rel (0) target = $region49
    $region48: #{reid_forward.11} parent=1 // pred_region
      _
    $region49: #{reid_forward.11} parent=1 // pred_fallthru
      _
    // Predicated region
    $region50: #{reid_forward.11} parent=1 // pred_check
      _
    $region51: #{reid_forward.11} parent=1 // pred_check_branch
      %49 = sbr.rel (0) target = $region53
    $region52: #{reid_forward.11} parent=1 // pred_region
      _
    $region53: #{reid_forward.11} parent=1 // pred_fallthru
      _
    %v50 = vld [vmem:[%s0] sm:$0xf]
    %v51 = vld [vmem:[%s2] sm:$0xff]
    %v52 = vld [vmem:[%s2 + $0x8] sm:$0xff]
    %v53 = vld [vmem:[%s2 + $0x10] sm:$0xff]
    %v54 = vld [vmem:[%s2 + $0x18] sm:$0xff]
    %v55 = vld [vmem:[%s2 + $0x20] sm:$0xff]
    %v56 = vld [vmem:[%s2 + $0x28] sm:$0xff]
    %v57 = vld [vmem:[%s2 + $0x30] sm:$0xff]
    %v58 = vld [vmem:[%s2 + $0x38] sm:$0xff]
    %v59 = vld [vmem:[%s2 + $0x40] sm:$0xff]
    %v60 = vld [vmem:[%s2 + $0x48] sm:$0xff]
    %v61 = vld [vmem:[%s2 + $0x50] sm:$0xff]
    %v62 = vld [vmem:[%s2 + $0x58] sm:$0xff]
    %v63 = vld [vmem:[%s2 + $0x60] sm:$0xff]
    %v64 = vld [vmem:[%s2 + $0x68] sm:$0xff]
    %v65 = vld [vmem:[%s2 + $0x70] sm:$0xff]
    %v66 = vld [vmem:[%s2 + $0x78] sm:$0xff]
    %v67 = vld [vmem:[%s2 + $0x80] sm:$0xff]
    %v68 = vld [vmem:[%s2 + $0x88] sm:$0xff]
    %v69 = vld [vmem:[%s2 + $0x90] sm:$0xff]
    %v70 = vld [vmem:[%s2 + $0x98] sm:$0xff]
    %v71 = vld [vmem:[%s2 + $0xa0] sm:$0xff]
    %v72 = vld [vmem:[%s2 + $0xa8] sm:$0xff]
    %v73 = vld [vmem:[%s2 + $0xb0] sm:$0xff]
    %v74 = vld [vmem:[%s2 + $0xb8] sm:$0xff]
    %v75 = vld [vmem:[%s2 + $0xc0] sm:$0xff]
    %v76 = vld [vmem:[%s2 + $0xc8] sm:$0xff]
    %v77 = vld [vmem:[%s2 + $0xd0] sm:$0xff]
    %v78 = vld [vmem:[%s2 + $0xd8] sm:$0xff]
    %v79 = vld [vmem:[%s2 + $0xe0] sm:$0xff]
    %v80 = vld [vmem:[%s2 + $0xe8] sm:$0xff]
    %v81 = vld [vmem:[%s2 + $0xf0] sm:$0xff]
    %v82 = vld [vmem:[%s2 + $0xf8] sm:$0xff]
    %v83 = vld [vmem:[%s3] sm:$0x1]
    %v85 = vperm.slane %v83, 0
    %88 = vst [vmem:[#allocation1] ss:$4 sm:$0xff] %v50
    %v89 = vld.sshfl [vmem:[#allocation1] sm:$0xff pattern:$0x73625140]
    %v90 = vld.sshfl [vmem:[#allocation1 + $0x8] sm:$0xff pattern:$0x73625140]
    %93 = vmatpush.msra.mxu0 %v66
    %94 = vmatpush.msra.mxu0 %v65
    %95 = vmatpush.msra.mxu0 %v64
    %96 = vmatpush.msra.mxu0 %v63
    %97 = vmatpush.msra.mxu0 %v62
    %98 = vmatpush.msra.mxu0 %v61
    %99 = vmatpush.msra.mxu0 %v60
    %100 = vmatpush.msra.mxu0 %v59
    %101 = vmatpush.msra.mxu0 %v58
    %102 = vmatpush.msra.mxu0 %v57
    %103 = vmatpush.msra.mxu0 %v56
    %104 = vmatpush.msra.mxu0 %v55
    %105 = vmatpush.msra.mxu0 %v54
    %106 = vmatpush.msra.mxu0 %v53
    %107 = vmatpush.msra.mxu0 %v52
    %108 = vmatpush.msra.mxu0 %v51
    %109 = vmatmul.f32.gmra.mxu0 %v89
    %v110 = vpop.f32.mrf.mxu0
    %v111 = vadd.f32 %v85, %v110
    %112 = vdwg.mxu0
    %113 = vmatpush.msra.mxu0 %v82
    %114 = vmatpush.msra.mxu0 %v81
    %115 = vmatpush.msra.mxu0 %v80
    %116 = vmatpush.msra.mxu0 %v79
    %117 = vmatpush.msra.mxu0 %v78
    %118 = vmatpush.msra.mxu0 %v77
    %119 = vmatpush.msra.mxu0 %v76
    %120 = vmatpush.msra.mxu0 %v75
    %121 = vmatpush.msra.mxu0 %v74
    %122 = vmatpush.msra.mxu0 %v73
    %123 = vmatpush.msra.mxu0 %v72
    %124 = vmatpush.msra.mxu0 %v71
    %125 = vmatpush.msra.mxu0 %v70
    %126 = vmatpush.msra.mxu0 %v69
    %127 = vmatpush.msra.mxu0 %v68
    %128 = vmatpush.msra.mxu0 %v67
    %129 = vmatmul.f32.gmra.mxu0 %v90
    %v130 = vpop.f32.mrf.mxu0
    %v131 = vadd.f32 %v111, %v130
    %132 = vdwg.mxu0
    %v133 = vld [vmem:[%s1] sm:$0x77]
    %135 = vst [vmem:[#allocation1] ss:$2 sm:$0xff] %v133
    %v136 = vld.sshfl [vmem:[#allocation1] sm:$0xff pattern:$0x75316420]
    %v137 = vld.sshfl [vmem:[#allocation1 + $0x8] sm:$0xff pattern:$0x75316420]
    %140 = vmatpush.msra.mxu0 %v66
    %141 = vmatpush.msra.mxu0 %v65
    %142 = vmatpush.msra.mxu0 %v64
    %143 = vmatpush.msra.mxu0 %v63
    %144 = vmatpush.msra.mxu0 %v62
    %145 = vmatpush.msra.mxu0 %v61
    %146 = vmatpush.msra.mxu0 %v60
    %147 = vmatpush.msra.mxu0 %v59
    %148 = vmatpush.msra.mxu0 %v58
    %149 = vmatpush.msra.mxu0 %v57
    %150 = vmatpush.msra.mxu0 %v56
    %151 = vmatpush.msra.mxu0 %v55
    %152 = vmatpush.msra.mxu0 %v54
    %153 = vmatpush.msra.mxu0 %v53
    %154 = vmatpush.msra.mxu0 %v52
    %155 = vmatpush.msra.mxu0 %v51
    %156 = vmatmul.f32.gmra.mxu0 %v136
    %v157 = vpop.f32.mrf.mxu0
    %v158 = vadd.f32 %v85, %v157
    %159 = vdwg.mxu0
    %160 = vmatpush.msra.mxu0 %v82
    %161 = vmatpush.msra.mxu0 %v81
    %162 = vmatpush.msra.mxu0 %v80
    %163 = vmatpush.msra.mxu0 %v79
    %164 = vmatpush.msra.mxu0 %v78
    %165 = vmatpush.msra.mxu0 %v77
    %166 = vmatpush.msra.mxu0 %v76
    %167 = vmatpush.msra.mxu0 %v75
    %168 = vmatpush.msra.mxu0 %v74
    %169 = vmatpush.msra.mxu0 %v73
    %170 = vmatpush.msra.mxu0 %v72
    %171 = vmatpush.msra.mxu0 %v71
    %172 = vmatpush.msra.mxu0 %v70
    %173 = vmatpush.msra.mxu0 %v69
    %174 = vmatpush.msra.mxu0 %v68
    %175 = vmatpush.msra.mxu0 %v67
    %176 = vmatmul.f32.gmra.mxu0 %v137
    %v177 = vpop.f32.mrf.mxu0
    %v178 = vadd.f32 %v158, %v177
    %179 = vdwg.mxu0
    %v180 = vld [vmem:[%s4] sm:$0xff]
    %v181 = vld [vmem:[%s4 + $0x8] sm:$0xff]
    %v182 = vld [vmem:[%s4 + $0x10] sm:$0xff]
    %v183 = vld [vmem:[%s4 + $0x18] sm:$0xff]
    %v184 = vld [vmem:[%s4 + $0x20] sm:$0xff]
    %v185 = vld [vmem:[%s4 + $0x28] sm:$0xff]
    %v186 = vld [vmem:[%s4 + $0x30] sm:$0xff]
    %v187 = vld [vmem:[%s4 + $0x38] sm:$0xff]
    %v188 = vld [vmem:[%s4 + $0x40] sm:$0xff]
    %v189 = vld [vmem:[%s4 + $0x48] sm:$0xff]
    %v190 = vld [vmem:[%s4 + $0x50] sm:$0xff]
    %v191 = vld [vmem:[%s4 + $0x58] sm:$0xff]
    %v192 = vld [vmem:[%s4 + $0x60] sm:$0xff]
    %v193 = vld [vmem:[%s4 + $0x68] sm:$0xff]
    %v194 = vld [vmem:[%s4 + $0x70] sm:$0xff]
    %v195 = vld [vmem:[%s4 + $0x78] sm:$0xff]
    %vm196 = vcmask 523264
    %v198 = vsel %vm196, %v131, 0
    %200 = vmatpush.msra.mxu0 0.0
    %201 = vmatpush.msra.mxu0 0.0
    %202 = vmatpush.msra.mxu0 0.0
    %203 = vmatpush.msra.mxu0 0.0
    %204 = vmatpush.msra.mxu0 0.0
    %205 = vmatpush.msra.mxu0 0.0
    %206 = vmatpush.msra.mxu0 0.0
    %207 = vmatpush.msra.mxu0 0.0
    %208 = vmatpush.msra.mxu0 %v194
    %209 = vmatpush.msra.mxu0 %v192
    %210 = vmatpush.msra.mxu0 %v190
    %211 = vmatpush.msra.mxu0 %v188
    %212 = vmatpush.msra.mxu0 %v186
    %213 = vmatpush.msra.mxu0 %v184
    %214 = vmatpush.msra.mxu0 %v182
    %215 = vmatpush.msra.mxu0 %v180
    %216 = vmatmul.f32.gmra.mxu0 %v198
    %v217 = vpop.f32.mrf.mxu0
    %v218 = vadd.f32 0.0, %v217
    %219 = vdwg.mxu0
    %220 = vmatpush.msra.mxu0 0.0
    %221 = vmatpush.msra.mxu0 0.0
    %222 = vmatpush.msra.mxu0 0.0
    %223 = vmatpush.msra.mxu0 0.0
    %224 = vmatpush.msra.mxu0 0.0
    %225 = vmatpush.msra.mxu0 0.0
    %226 = vmatpush.msra.mxu0 0.0
    %227 = vmatpush.msra.mxu0 0.0
    %228 = vmatpush.msra.mxu0 %v195
    %229 = vmatpush.msra.mxu0 %v193
    %230 = vmatpush.msra.mxu0 %v191
    %231 = vmatpush.msra.mxu0 %v189
    %232 = vmatpush.msra.mxu0 %v187
    %233 = vmatpush.msra.mxu0 %v185
    %234 = vmatpush.msra.mxu0 %v183
    %235 = vmatpush.msra.mxu0 %v181
    %236 = vmatmul.f32.gmra.mxu0 %v198
    %v237 = vpop.f32.mrf.mxu0
    %v238 = vadd.f32 0.0, %v237
    %239 = vdwg.mxu0
    %v240 = vld [vmem:[%s5] sm:$0xff]
    %v241 = vld [vmem:[%s5 + $0x8] sm:$0xff]
    %v242 = vld [vmem:[%s5 + $0x10] sm:$0xff]
    %v243 = vld [vmem:[%s5 + $0x18] sm:$0xff]
    %v244 = vld [vmem:[%s5 + $0x20] sm:$0xff]
    %v245 = vld [vmem:[%s5 + $0x28] sm:$0xff]
    %v246 = vld [vmem:[%s5 + $0x30] sm:$0xff]
    %v247 = vld [vmem:[%s5 + $0x38] sm:$0xff]
    %v248 = vld [vmem:[%s5 + $0x40] sm:$0xff]
    %v249 = vld [vmem:[%s5 + $0x48] sm:$0xff]
    %v250 = vld [vmem:[%s5 + $0x50] sm:$0xff]
    %v251 = vld [vmem:[%s5 + $0x58] sm:$0xff]
    %v252 = vld [vmem:[%s5 + $0x60] sm:$0xff]
    %v253 = vld [vmem:[%s5 + $0x68] sm:$0xff]
    %v254 = vld [vmem:[%s5 + $0x70] sm:$0xff]
    %v255 = vld [vmem:[%s5 + $0x78] sm:$0xff]
    %v257 = vsel %vm196, %v178, 0
    %259 = vmatpush.msra.mxu0 0.0
    %260 = vmatpush.msra.mxu0 0.0
    %261 = vmatpush.msra.mxu0 0.0
    %262 = vmatpush.msra.mxu0 0.0
    %263 = vmatpush.msra.mxu0 0.0
    %264 = vmatpush.msra.mxu0 0.0
    %265 = vmatpush.msra.mxu0 0.0
    %266 = vmatpush.msra.mxu0 0.0
    %267 = vmatpush.msra.mxu0 %v254
    %268 = vmatpush.msra.mxu0 %v252
    %269 = vmatpush.msra.mxu0 %v250
    %270 = vmatpush.msra.mxu0 %v248
    %271 = vmatpush.msra.mxu0 %v246
    %272 = vmatpush.msra.mxu0 %v244
    %273 = vmatpush.msra.mxu0 %v242
    %274 = vmatpush.msra.mxu0 %v240
    %275 = vmatmul.f32.gmra.mxu0 %v257
    %v276 = vpop.f32.mrf.mxu0
    %v277 = vadd.f32 0.0, %v276
    %278 = vdwg.mxu0
    %279 = vmatpush.msra.mxu0 0.0
    %280 = vmatpush.msra.mxu0 0.0
    %281 = vmatpush.msra.mxu0 0.0
    %282 = vmatpush.msra.mxu0 0.0
    %283 = vmatpush.msra.mxu0 0.0
    %284 = vmatpush.msra.mxu0 0.0
    %285 = vmatpush.msra.mxu0 0.0
    %286 = vmatpush.msra.mxu0 0.0
    %287 = vmatpush.msra.mxu0 %v255
    %288 = vmatpush.msra.mxu0 %v253
    %289 = vmatpush.msra.mxu0 %v251
    %290 = vmatpush.msra.mxu0 %v249
    %291 = vmatpush.msra.mxu0 %v247
    %292 = vmatpush.msra.mxu0 %v245
    %293 = vmatpush.msra.mxu0 %v243
    %294 = vmatpush.msra.mxu0 %v241
    %295 = vmatmul.f32.gmra.mxu0 %v257
    %v296 = vpop.f32.mrf.mxu0
    %v297 = vadd.f32 0.0, %v296
    %298 = vdwg.mxu0
    %v299 = vperm.slane %v277, 0
    %v300 = vperm.slane %v297, 0
    %v301 = vadd.f32 %v218, %v299
    %v302 = vadd.f32 %v238, %v300
    %v303 = vld [vmem:[%s6] sm:$0x3]
    %v305 = vperm.slane %v303, 0
    %v306 = vperm.slane %v303, 1
    %v309 = vadd.f32 %v301, %v305
    %v310 = vadd.f32 %v302, %v306
    %v311 = vmax.f32 %v309, 0.0
    %v312 = vmax.f32 %v310, 0.0
    %v313 = vld [vmem:[%s7] sm:$0xff]
    %v314 = vld [vmem:[%s7 + $0x8] sm:$0xff]
    %v315 = vld [vmem:[%s7 + $0x10] sm:$0xff]
    %v316 = vld [vmem:[%s7 + $0x18] sm:$0xff]
    %v317 = vld [vmem:[%s7 + $0x20] sm:$0xff]
    %v318 = vld [vmem:[%s7 + $0x28] sm:$0xff]
    %v319 = vld [vmem:[%s7 + $0x30] sm:$0xff]
    %v320 = vld [vmem:[%s7 + $0x38] sm:$0xff]
    %v321 = vld [vmem:[%s7 + $0x40] sm:$0xff]
    %v322 = vld [vmem:[%s7 + $0x48] sm:$0xff]
    %v323 = vld [vmem:[%s7 + $0x50] sm:$0xff]
    %v324 = vld [vmem:[%s7 + $0x58] sm:$0xff]
    %v325 = vld [vmem:[%s7 + $0x60] sm:$0xff]
    %v326 = vld [vmem:[%s7 + $0x68] sm:$0xff]
    %v327 = vld [vmem:[%s7 + $0x70] sm:$0xff]
    %v328 = vld [vmem:[%s7 + $0x78] sm:$0xff]
    %v329 = vld [vmem:[%s7 + $0x80] sm:$0xff]
    %v330 = vld [vmem:[%s7 + $0x88] sm:$0xff]
    %v331 = vld [vmem:[%s7 + $0x90] sm:$0xff]
    %v332 = vld [vmem:[%s7 + $0x98] sm:$0xff]
    %v333 = vld [vmem:[%s7 + $0xa0] sm:$0xff]
    %v334 = vld [vmem:[%s7 + $0xa8] sm:$0xff]
    %v335 = vld [vmem:[%s7 + $0xb0] sm:$0xff]
    %v336 = vld [vmem:[%s7 + $0xb8] sm:$0xff]
    %v337 = vld [vmem:[%s7 + $0xc0] sm:$0xff]
    %v338 = vld [vmem:[%s7 + $0xc8] sm:$0xff]
    %v339 = vld [vmem:[%s7 + $0xd0] sm:$0xff]
    %v340 = vld [vmem:[%s7 + $0xd8] sm:$0xff]
    %v341 = vld [vmem:[%s7 + $0xe0] sm:$0xff]
    %v342 = vld [vmem:[%s7 + $0xe8] sm:$0xff]
    %v343 = vld [vmem:[%s7 + $0xf0] sm:$0xff]
    %v344 = vld [vmem:[%s7 + $0xf8] sm:$0xff]
    %v345 = vld [vmem:[%s7 + $0x100] sm:$0xff]
    %v346 = vld [vmem:[%s7 + $0x108] sm:$0xff]
    %v347 = vld [vmem:[%s7 + $0x110] sm:$0xff]
    %v348 = vld [vmem:[%s7 + $0x118] sm:$0xff]
    %v349 = vld [vmem:[%s7 + $0x120] sm:$0xff]
    %v350 = vld [vmem:[%s7 + $0x128] sm:$0xff]
    %v351 = vld [vmem:[%s7 + $0x130] sm:$0xff]
    %v352 = vld [vmem:[%s7 + $0x138] sm:$0xff]
    %v353 = vld [vmem:[%s7 + $0x140] sm:$0xff]
    %v354 = vld [vmem:[%s7 + $0x148] sm:$0xff]
    %v355 = vld [vmem:[%s7 + $0x150] sm:$0xff]
    %v356 = vld [vmem:[%s7 + $0x158] sm:$0xff]
    %v357 = vld [vmem:[%s7 + $0x160] sm:$0xff]
    %v358 = vld [vmem:[%s7 + $0x168] sm:$0xff]
    %v359 = vld [vmem:[%s7 + $0x170] sm:$0xff]
    %v360 = vld [vmem:[%s7 + $0x178] sm:$0xff]
    %v361 = vld [vmem:[%s7 + $0x180] sm:$0xff]
    %v362 = vld [vmem:[%s7 + $0x188] sm:$0xff]
    %v363 = vld [vmem:[%s7 + $0x190] sm:$0xff]
    %v364 = vld [vmem:[%s7 + $0x198] sm:$0xff]
    %v365 = vld [vmem:[%s7 + $0x1a0] sm:$0xff]
    %v366 = vld [vmem:[%s7 + $0x1a8] sm:$0xff]
    %v367 = vld [vmem:[%s7 + $0x1b0] sm:$0xff]
    %v368 = vld [vmem:[%s7 + $0x1b8] sm:$0xff]
    %v369 = vld [vmem:[%s7 + $0x1c0] sm:$0xff]
    %v370 = vld [vmem:[%s7 + $0x1c8] sm:$0xff]
    %v371 = vld [vmem:[%s7 + $0x1d0] sm:$0xff]
    %v372 = vld [vmem:[%s7 + $0x1d8] sm:$0xff]
    %v373 = vld [vmem:[%s7 + $0x1e0] sm:$0xff]
    %v374 = vld [vmem:[%s7 + $0x1e8] sm:$0xff]
    %v375 = vld [vmem:[%s7 + $0x1f0] sm:$0xff]
    %v376 = vld [vmem:[%s7 + $0x1f8] sm:$0xff]
    %v377 = vld [vmem:[%s8] sm:$0x3]
    %v379 = vperm.slane %v377, 0
    %v380 = vperm.slane %v377, 1
    %383 = vmatpush.msra.mxu0 %v343
    %384 = vmatpush.msra.mxu0 %v341
    %385 = vmatpush.msra.mxu0 %v339
    %386 = vmatpush.msra.mxu0 %v337
    %387 = vmatpush.msra.mxu0 %v335
    %388 = vmatpush.msra.mxu0 %v333
    %389 = vmatpush.msra.mxu0 %v331
    %390 = vmatpush.msra.mxu0 %v329
    %391 = vmatpush.msra.mxu0 %v327
    %392 = vmatpush.msra.mxu0 %v325
    %393 = vmatpush.msra.mxu0 %v323
    %394 = vmatpush.msra.mxu0 %v321
    %395 = vmatpush.msra.mxu0 %v319
    %396 = vmatpush.msra.mxu0 %v317
    %397 = vmatpush.msra.mxu0 %v315
    %398 = vmatpush.msra.mxu0 %v313
    %399 = vmatmul.f32.gmra.mxu0 %v311
    %v400 = vpop.f32.mrf.mxu0
    %v401 = vadd.f32 %v379, %v400
    %402 = vdwg.mxu0
    %403 = vmatpush.msra.mxu0 %v375
    %404 = vmatpush.msra.mxu0 %v373
    %405 = vmatpush.msra.mxu0 %v371
    %406 = vmatpush.msra.mxu0 %v369
    %407 = vmatpush.msra.mxu0 %v367
    %408 = vmatpush.msra.mxu0 %v365
    %409 = vmatpush.msra.mxu0 %v363
    %410 = vmatpush.msra.mxu0 %v361
    %411 = vmatpush.msra.mxu0 %v359
    %412 = vmatpush.msra.mxu0 %v357
    %413 = vmatpush.msra.mxu0 %v355
    %414 = vmatpush.msra.mxu0 %v353
    %415 = vmatpush.msra.mxu0 %v351
    %416 = vmatpush.msra.mxu0 %v349
    %417 = vmatpush.msra.mxu0 %v347
    %418 = vmatpush.msra.mxu0 %v345
    %419 = vmatmul.f32.gmra.mxu0 %v312
    %v420 = vpop.f32.mrf.mxu0
    %v421 = vadd.f32 %v401, %v420
    %422 = vdwg.mxu0
    %423 = vmatpush.msra.mxu0 %v344
    %424 = vmatpush.msra.mxu0 %v342
    %425 = vmatpush.msra.mxu0 %v340
    %426 = vmatpush.msra.mxu0 %v338
    %427 = vmatpush.msra.mxu0 %v336
    %428 = vmatpush.msra.mxu0 %v334
    %429 = vmatpush.msra.mxu0 %v332
    %430 = vmatpush.msra.mxu0 %v330
    %431 = vmatpush.msra.mxu0 %v328
    %432 = vmatpush.msra.mxu0 %v326
    %433 = vmatpush.msra.mxu0 %v324
    %434 = vmatpush.msra.mxu0 %v322
    %435 = vmatpush.msra.mxu0 %v320
    %436 = vmatpush.msra.mxu0 %v318
    %437 = vmatpush.msra.mxu0 %v316
    %438 = vmatpush.msra.mxu0 %v314
    %439 = vmatmul.f32.gmra.mxu0 %v311
    %v440 = vpop.f32.mrf.mxu0
    %v441 = vadd.f32 %v380, %v440
    %442 = vdwg.mxu0
    %443 = vmatpush.msra.mxu0 %v376
    %444 = vmatpush.msra.mxu0 %v374
    %445 = vmatpush.msra.mxu0 %v372
    %446 = vmatpush.msra.mxu0 %v370
    %447 = vmatpush.msra.mxu0 %v368
    %448 = vmatpush.msra.mxu0 %v366
    %449 = vmatpush.msra.mxu0 %v364
    %450 = vmatpush.msra.mxu0 %v362
    %451 = vmatpush.msra.mxu0 %v360
    %452 = vmatpush.msra.mxu0 %v358
    %453 = vmatpush.msra.mxu0 %v356
    %454 = vmatpush.msra.mxu0 %v354
    %455 = vmatpush.msra.mxu0 %v352
    %456 = vmatpush.msra.mxu0 %v350
    %457 = vmatpush.msra.mxu0 %v348
    %458 = vmatpush.msra.mxu0 %v346
    %459 = vmatmul.f32.gmra.mxu0 %v312
    %v460 = vpop.f32.mrf.mxu0
    %v461 = vadd.f32 %v441, %v460
    %462 = vdwg.mxu0
    %v463 = vmax.f32 %v421, 0.0
    %v464 = vmax.f32 %v461, 0.0
    %v465 = vld [vmem:[%s9] sm:$0xff]
    %v466 = vld [vmem:[%s9 + $0x8] sm:$0xff]
    %v467 = vld [vmem:[%s9 + $0x10] sm:$0xff]
    %v468 = vld [vmem:[%s9 + $0x18] sm:$0xff]
    %v469 = vld [vmem:[%s9 + $0x20] sm:$0xff]
    %v470 = vld [vmem:[%s9 + $0x28] sm:$0xff]
    %v471 = vld [vmem:[%s9 + $0x30] sm:$0xff]
    %v472 = vld [vmem:[%s9 + $0x38] sm:$0xff]
    %v473 = vld [vmem:[%s9 + $0x40] sm:$0xff]
    %v474 = vld [vmem:[%s9 + $0x48] sm:$0xff]
    %v475 = vld [vmem:[%s9 + $0x50] sm:$0xff]
    %v476 = vld [vmem:[%s9 + $0x58] sm:$0xff]
    %v477 = vld [vmem:[%s9 + $0x60] sm:$0xff]
    %v478 = vld [vmem:[%s9 + $0x68] sm:$0xff]
    %v479 = vld [vmem:[%s9 + $0x70] sm:$0xff]
    %v480 = vld [vmem:[%s9 + $0x78] sm:$0xff]
    %v481 = vld [vmem:[%s9 + $0x80] sm:$0xff]
    %v482 = vld [vmem:[%s9 + $0x88] sm:$0xff]
    %v483 = vld [vmem:[%s9 + $0x90] sm:$0xff]
    %v484 = vld [vmem:[%s9 + $0x98] sm:$0xff]
    %v485 = vld [vmem:[%s9 + $0xa0] sm:$0xff]
    %v486 = vld [vmem:[%s9 + $0xa8] sm:$0xff]
    %v487 = vld [vmem:[%s9 + $0xb0] sm:$0xff]
    %v488 = vld [vmem:[%s9 + $0xb8] sm:$0xff]
    %v489 = vld [vmem:[%s9 + $0xc0] sm:$0xff]
    %v490 = vld [vmem:[%s9 + $0xc8] sm:$0xff]
    %v491 = vld [vmem:[%s9 + $0xd0] sm:$0xff]
    %v492 = vld [vmem:[%s9 + $0xd8] sm:$0xff]
    %v493 = vld [vmem:[%s9 + $0xe0] sm:$0xff]
    %v494 = vld [vmem:[%s9 + $0xe8] sm:$0xff]
    %v495 = vld [vmem:[%s9 + $0xf0] sm:$0xff]
    %v496 = vld [vmem:[%s9 + $0xf8] sm:$0xff]
    %v497 = vld [vmem:[%s9 + $0x100] sm:$0xff]
    %v498 = vld [vmem:[%s9 + $0x108] sm:$0xff]
    %v499 = vld [vmem:[%s9 + $0x110] sm:$0xff]
    %v500 = vld [vmem:[%s9 + $0x118] sm:$0xff]
    %v501 = vld [vmem:[%s9 + $0x120] sm:$0xff]
    %v502 = vld [vmem:[%s9 + $0x128] sm:$0xff]
    %v503 = vld [vmem:[%s9 + $0x130] sm:$0xff]
    %v504 = vld [vmem:[%s9 + $0x138] sm:$0xff]
    %v505 = vld [vmem:[%s9 + $0x140] sm:$0xff]
    %v506 = vld [vmem:[%s9 + $0x148] sm:$0xff]
    %v507 = vld [vmem:[%s9 + $0x150] sm:$0xff]
    %v508 = vld [vmem:[%s9 + $0x158] sm:$0xff]
    %v509 = vld [vmem:[%s9 + $0x160] sm:$0xff]
    %v510 = vld [vmem:[%s9 + $0x168] sm:$0xff]
    %v511 = vld [vmem:[%s9 + $0x170] sm:$0xff]
    %v512 = vld [vmem:[%s9 + $0x178] sm:$0xff]
    %v513 = vld [vmem:[%s9 + $0x180] sm:$0xff]
    %v514 = vld [vmem:[%s9 + $0x188] sm:$0xff]
    %v515 = vld [vmem:[%s9 + $0x190] sm:$0xff]
    %v516 = vld [vmem:[%s9 + $0x198] sm:$0xff]
    %v517 = vld [vmem:[%s9 + $0x1a0] sm:$0xff]
    %v518 = vld [vmem:[%s9 + $0x1a8] sm:$0xff]
    %v519 = vld [vmem:[%s9 + $0x1b0] sm:$0xff]
    %v520 = vld [vmem:[%s9 + $0x1b8] sm:$0xff]
    %v521 = vld [vmem:[%s9 + $0x1c0] sm:$0xff]
    %v522 = vld [vmem:[%s9 + $0x1c8] sm:$0xff]
    %v523 = vld [vmem:[%s9 + $0x1d0] sm:$0xff]
    %v524 = vld [vmem:[%s9 + $0x1d8] sm:$0xff]
    %v525 = vld [vmem:[%s9 + $0x1e0] sm:$0xff]
    %v526 = vld [vmem:[%s9 + $0x1e8] sm:$0xff]
    %v527 = vld [vmem:[%s9 + $0x1f0] sm:$0xff]
    %v528 = vld [vmem:[%s9 + $0x1f8] sm:$0xff]
    %v529 = vld [vmem:[%s10] sm:$0x3]
    %v531 = vperm.slane %v529, 0
    %v532 = vperm.slane %v529, 1
    %535 = vmatpush.msra.mxu0 %v495
    %536 = vmatpush.msra.mxu0 %v493
    %537 = vmatpush.msra.mxu0 %v491
    %538 = vmatpush.msra.mxu0 %v489
    %539 = vmatpush.msra.mxu0 %v487
    %540 = vmatpush.msra.mxu0 %v485
    %541 = vmatpush.msra.mxu0 %v483
    %542 = vmatpush.msra.mxu0 %v481
    %543 = vmatpush.msra.mxu0 %v479
    %544 = vmatpush.msra.mxu0 %v477
    %545 = vmatpush.msra.mxu0 %v475
    %546 = vmatpush.msra.mxu0 %v473
    %547 = vmatpush.msra.mxu0 %v471
    %548 = vmatpush.msra.mxu0 %v469
    %549 = vmatpush.msra.mxu0 %v467
    %550 = vmatpush.msra.mxu0 %v465
    %551 = vmatmul.f32.gmra.mxu0 %v463
    %v552 = vpop.f32.mrf.mxu0
    %v553 = vadd.f32 %v531, %v552
    %554 = vdwg.mxu0
    %555 = vmatpush.msra.mxu0 %v527
    %556 = vmatpush.msra.mxu0 %v525
    %557 = vmatpush.msra.mxu0 %v523
    %558 = vmatpush.msra.mxu0 %v521
    %559 = vmatpush.msra.mxu0 %v519
    %560 = vmatpush.msra.mxu0 %v517
    %561 = vmatpush.msra.mxu0 %v515
    %562 = vmatpush.msra.mxu0 %v513
    %563 = vmatpush.msra.mxu0 %v511
    %564 = vmatpush.msra.mxu0 %v509
    %565 = vmatpush.msra.mxu0 %v507
    %566 = vmatpush.msra.mxu0 %v505
    %567 = vmatpush.msra.mxu0 %v503
    %568 = vmatpush.msra.mxu0 %v501
    %569 = vmatpush.msra.mxu0 %v499
    %570 = vmatpush.msra.mxu0 %v497
    %571 = vmatmul.f32.gmra.mxu0 %v464
    %v572 = vpop.f32.mrf.mxu0
    %v573 = vadd.f32 %v553, %v572
    %574 = vdwg.mxu0
    %575 = vmatpush.msra.mxu0 %v496
    %576 = vmatpush.msra.mxu0 %v494
    %577 = vmatpush.msra.mxu0 %v492
    %578 = vmatpush.msra.mxu0 %v490
    %579 = vmatpush.msra.mxu0 %v488
    %580 = vmatpush.msra.mxu0 %v486
    %581 = vmatpush.msra.mxu0 %v484
    %582 = vmatpush.msra.mxu0 %v482
    %583 = vmatpush.msra.mxu0 %v480
    %584 = vmatpush.msra.mxu0 %v478
    %585 = vmatpush.msra.mxu0 %v476
    %586 = vmatpush.msra.mxu0 %v474
    %587 = vmatpush.msra.mxu0 %v472
    %588 = vmatpush.msra.mxu0 %v470
    %589 = vmatpush.msra.mxu0 %v468
    %590 = vmatpush.msra.mxu0 %v466
    %591 = vmatmul.f32.gmra.mxu0 %v463
    %v592 = vpop.f32.mrf.mxu0
    %v593 = vadd.f32 %v532, %v592
    %594 = vdwg.mxu0
    %595 = vmatpush.msra.mxu0 %v528
    %596 = vmatpush.msra.mxu0 %v526
    %597 = vmatpush.msra.mxu0 %v524
    %598 = vmatpush.msra.mxu0 %v522
    %599 = vmatpush.msra.mxu0 %v520
    %600 = vmatpush.msra.mxu0 %v518
    %601 = vmatpush.msra.mxu0 %v516
    %602 = vmatpush.msra.mxu0 %v514
    %603 = vmatpush.msra.mxu0 %v512
    %604 = vmatpush.msra.mxu0 %v510
    %605 = vmatpush.msra.mxu0 %v508
    %606 = vmatpush.msra.mxu0 %v506
    %607 = vmatpush.msra.mxu0 %v504
    %608 = vmatpush.msra.mxu0 %v502
    %609 = vmatpush.msra.mxu0 %v500
    %610 = vmatpush.msra.mxu0 %v498
    %611 = vmatmul.f32.gmra.mxu0 %v464
    %v612 = vpop.f32.mrf.mxu0
    %v613 = vadd.f32 %v593, %v612
    %614 = vdwg.mxu0
    %v615 = vmax.f32 %v573, 0.0
    %v616 = vmax.f32 %v613, 0.0
    %v617 = vld [vmem:[%s11] sm:$0xff]
    %v618 = vld [vmem:[%s11 + $0x8] sm:$0xff]
    %v619 = vld [vmem:[%s11 + $0x10] sm:$0xff]
    %v620 = vld [vmem:[%s11 + $0x18] sm:$0xff]
    %v621 = vld [vmem:[%s11 + $0x20] sm:$0xff]
    %v622 = vld [vmem:[%s11 + $0x28] sm:$0xff]
    %v623 = vld [vmem:[%s11 + $0x30] sm:$0xff]
    %v624 = vld [vmem:[%s11 + $0x38] sm:$0xff]
    %v625 = vld [vmem:[%s11 + $0x40] sm:$0xff]
    %v626 = vld [vmem:[%s11 + $0x48] sm:$0xff]
    %v627 = vld [vmem:[%s11 + $0x50] sm:$0xff]
    %v628 = vld [vmem:[%s11 + $0x58] sm:$0xff]
    %v629 = vld [vmem:[%s11 + $0x60] sm:$0xff]
    %v630 = vld [vmem:[%s11 + $0x68] sm:$0xff]
    %v631 = vld [vmem:[%s11 + $0x70] sm:$0xff]
    %v632 = vld [vmem:[%s11 + $0x78] sm:$0xff]
    %v633 = vld [vmem:[%s11 + $0x80] sm:$0xff]
    %v634 = vld [vmem:[%s11 + $0x88] sm:$0xff]
    %v635 = vld [vmem:[%s11 + $0x90] sm:$0xff]
    %v636 = vld [vmem:[%s11 + $0x98] sm:$0xff]
    %v637 = vld [vmem:[%s11 + $0xa0] sm:$0xff]
    %v638 = vld [vmem:[%s11 + $0xa8] sm:$0xff]
    %v639 = vld [vmem:[%s11 + $0xb0] sm:$0xff]
    %v640 = vld [vmem:[%s11 + $0xb8] sm:$0xff]
    %v641 = vld [vmem:[%s11 + $0xc0] sm:$0xff]
    %v642 = vld [vmem:[%s11 + $0xc8] sm:$0xff]
    %v643 = vld [vmem:[%s11 + $0xd0] sm:$0xff]
    %v644 = vld [vmem:[%s11 + $0xd8] sm:$0xff]
    %v645 = vld [vmem:[%s11 + $0xe0] sm:$0xff]
    %v646 = vld [vmem:[%s11 + $0xe8] sm:$0xff]
    %v647 = vld [vmem:[%s11 + $0xf0] sm:$0xff]
    %v648 = vld [vmem:[%s11 + $0xf8] sm:$0xff]
    %v649 = vld [vmem:[#allocation2] sm:$0x1]
    %v651 = vperm.slane %v649, 0
    %653 = vmatpush.msra.mxu0 %v632
    %654 = vmatpush.msra.mxu0 %v631
    %655 = vmatpush.msra.mxu0 %v630
    %656 = vmatpush.msra.mxu0 %v629
    %657 = vmatpush.msra.mxu0 %v628
    %658 = vmatpush.msra.mxu0 %v627
    %659 = vmatpush.msra.mxu0 %v626
    %660 = vmatpush.msra.mxu0 %v625
    %661 = vmatpush.msra.mxu0 %v624
    %662 = vmatpush.msra.mxu0 %v623
    %663 = vmatpush.msra.mxu0 %v622
    %664 = vmatpush.msra.mxu0 %v621
    %665 = vmatpush.msra.mxu0 %v620
    %666 = vmatpush.msra.mxu0 %v619
    %667 = vmatpush.msra.mxu0 %v618
    %668 = vmatpush.msra.mxu0 %v617
    %669 = vmatmul.f32.gmra.mxu0 %v615
    %v670 = vpop.f32.mrf.mxu0
    %v671 = vadd.f32 %v651, %v670
    %672 = vdwg.mxu0
    %673 = vmatpush.msra.mxu0 %v648
    %674 = vmatpush.msra.mxu0 %v647
    %675 = vmatpush.msra.mxu0 %v646
    %676 = vmatpush.msra.mxu0 %v645
    %677 = vmatpush.msra.mxu0 %v644
    %678 = vmatpush.msra.mxu0 %v643
    %679 = vmatpush.msra.mxu0 %v642
    %680 = vmatpush.msra.mxu0 %v641
    %681 = vmatpush.msra.mxu0 %v640
    %682 = vmatpush.msra.mxu0 %v639
    %683 = vmatpush.msra.mxu0 %v638
    %684 = vmatpush.msra.mxu0 %v637
    %685 = vmatpush.msra.mxu0 %v636
    %686 = vmatpush.msra.mxu0 %v635
    %687 = vmatpush.msra.mxu0 %v634
    %688 = vmatpush.msra.mxu0 %v633
    %689 = vmatmul.f32.gmra.mxu0 %v616
    %v690 = vpop.f32.mrf.mxu0
    %v691 = vadd.f32 %v671, %v690
    %692 = vdwg.mxu0
    %vm693 = vcmask 1024
    %694 = vst.msk [vmem:[#allocation3] sm:$0x3] %vm693, %v691
    %v695 = vperm.slane %v277, 1
    %v696 = vperm.slane %v297, 1
    %v697 = vadd.f32 %v218, %v695
    %v698 = vadd.f32 %v238, %v696
    %v699 = vld [vmem:[%s6] sm:$0x3]
    %v701 = vperm.slane %v699, 0
    %v702 = vperm.slane %v699, 1
    %v705 = vadd.f32 %v697, %v701
    %v706 = vadd.f32 %v698, %v702
    %v707 = vmax.f32 %v705, 0.0
    %v708 = vmax.f32 %v706, 0.0
    %v709 = vld [vmem:[%s7] sm:$0xff]
    %v710 = vld [vmem:[%s7 + $0x8] sm:$0xff]
    %v711 = vld [vmem:[%s7 + $0x10] sm:$0xff]
    %v712 = vld [vmem:[%s7 + $0x18] sm:$0xff]
    %v713 = vld [vmem:[%s7 + $0x20] sm:$0xff]
    %v714 = vld [vmem:[%s7 + $0x28] sm:$0xff]
    %v715 = vld [vmem:[%s7 + $0x30] sm:$0xff]
    %v716 = vld [vmem:[%s7 + $0x38] sm:$0xff]
    %v717 = vld [vmem:[%s7 + $0x40] sm:$0xff]
    %v718 = vld [vmem:[%s7 + $0x48] sm:$0xff]
    %v719 = vld [vmem:[%s7 + $0x50] sm:$0xff]
    %v720 = vld [vmem:[%s7 + $0x58] sm:$0xff]
    %v721 = vld [vmem:[%s7 + $0x60] sm:$0xff]
    %v722 = vld [vmem:[%s7 + $0x68] sm:$0xff]
    %v723 = vld [vmem:[%s7 + $0x70] sm:$0xff]
    %v724 = vld [vmem:[%s7 + $0x78] sm:$0xff]
    %v725 = vld [vmem:[%s7 + $0x80] sm:$0xff]
    %v726 = vld [vmem:[%s7 + $0x88] sm:$0xff]
    %v727 = vld [vmem:[%s7 + $0x90] sm:$0xff]
    %v728 = vld [vmem:[%s7 + $0x98] sm:$0xff]
    %v729 = vld [vmem:[%s7 + $0xa0] sm:$0xff]
    %v730 = vld [vmem:[%s7 + $0xa8] sm:$0xff]
    %v731 = vld [vmem:[%s7 + $0xb0] sm:$0xff]
    %v732 = vld [vmem:[%s7 + $0xb8] sm:$0xff]
    %v733 = vld [vmem:[%s7 + $0xc0] sm:$0xff]
    %v734 = vld [vmem:[%s7 + $0xc8] sm:$0xff]
    %v735 = vld [vmem:[%s7 + $0xd0] sm:$0xff]
    %v736 = vld [vmem:[%s7 + $0xd8] sm:$0xff]
    %v737 = vld [vmem:[%s7 + $0xe0] sm:$0xff]
    %v738 = vld [vmem:[%s7 + $0xe8] sm:$0xff]
    %v739 = vld [vmem:[%s7 + $0xf0] sm:$0xff]
    %v740 = vld [vmem:[%s7 + $0xf8] sm:$0xff]
    %v741 = vld [vmem:[%s7 + $0x100] sm:$0xff]
    %v742 = vld [vmem:[%s7 + $0x108] sm:$0xff]
    %v743 = vld [vmem:[%s7 + $0x110] sm:$0xff]
    %v744 = vld [vmem:[%s7 + $0x118] sm:$0xff]
    %v745 = vld [vmem:[%s7 + $0x120] sm:$0xff]
    %v746 = vld [vmem:[%s7 + $0x128] sm:$0xff]
    %v747 = vld [vmem:[%s7 + $0x130] sm:$0xff]
    %v748 = vld [vmem:[%s7 + $0x138] sm:$0xff]
    %v749 = vld [vmem:[%s7 + $0x140] sm:$0xff]
    %v750 = vld [vmem:[%s7 + $0x148] sm:$0xff]
    %v751 = vld [vmem:[%s7 + $0x150] sm:$0xff]
    %v752 = vld [vmem:[%s7 + $0x158] sm:$0xff]
    %v753 = vld [vmem:[%s7 + $0x160] sm:$0xff]
    %v754 = vld [vmem:[%s7 + $0x168] sm:$0xff]
    %v755 = vld [vmem:[%s7 + $0x170] sm:$0xff]
    %v756 = vld [vmem:[%s7 + $0x178] sm:$0xff]
    %v757 = vld [vmem:[%s7 + $0x180] sm:$0xff]
    %v758 = vld [vmem:[%s7 + $0x188] sm:$0xff]
    %v759 = vld [vmem:[%s7 + $0x190] sm:$0xff]
    %v760 = vld [vmem:[%s7 + $0x198] sm:$0xff]
    %v761 = vld [vmem:[%s7 + $0x1a0] sm:$0xff]
    %v762 = vld [vmem:[%s7 + $0x1a8] sm:$0xff]
    %v763 = vld [vmem:[%s7 + $0x1b0] sm:$0xff]
    %v764 = vld [vmem:[%s7 + $0x1b8] sm:$0xff]
    %v765 = vld [vmem:[%s7 + $0x1c0] sm:$0xff]
    %v766 = vld [vmem:[%s7 + $0x1c8] sm:$0xff]
    %v767 = vld [vmem:[%s7 + $0x1d0] sm:$0xff]
    %v768 = vld [vmem:[%s7 + $0x1d8] sm:$0xff]
    %v769 = vld [vmem:[%s7 + $0x1e0] sm:$0xff]
    %v770 = vld [vmem:[%s7 + $0x1e8] sm:$0xff]
    %v771 = vld [vmem:[%s7 + $0x1f0] sm:$0xff]
    %v772 = vld [vmem:[%s7 + $0x1f8] sm:$0xff]
    %v773 = vld [vmem:[%s8] sm:$0x3]
    %v775 = vperm.slane %v773, 0
    %v776 = vperm.slane %v773, 1
    %779 = vmatpush.msra.mxu0 %v739
    %780 = vmatpush.msra.mxu0 %v737
    %781 = vmatpush.msra.mxu0 %v735
    %782 = vmatpush.msra.mxu0 %v733
    %783 = vmatpush.msra.mxu0 %v731
    %784 = vmatpush.msra.mxu0 %v729
    %785 = vmatpush.msra.mxu0 %v727
    %786 = vmatpush.msra.mxu0 %v725
    %787 = vmatpush.msra.mxu0 %v723
    %788 = vmatpush.msra.mxu0 %v721
    %789 = vmatpush.msra.mxu0 %v719
    %790 = vmatpush.msra.mxu0 %v717
    %791 = vmatpush.msra.mxu0 %v715
    %792 = vmatpush.msra.mxu0 %v713
    %793 = vmatpush.msra.mxu0 %v711
    %794 = vmatpush.msra.mxu0 %v709
    %795 = vmatmul.f32.gmra.mxu0 %v707
    %v796 = vpop.f32.mrf.mxu0
    %v797 = vadd.f32 %v775, %v796
    %798 = vdwg.mxu0
    %799 = vmatpush.msra.mxu0 %v771
    %800 = vmatpush.msra.mxu0 %v769
    %801 = vmatpush.msra.mxu0 %v767
    %802 = vmatpush.msra.mxu0 %v765
    %803 = vmatpush.msra.mxu0 %v763
    %804 = vmatpush.msra.mxu0 %v761
    %805 = vmatpush.msra.mxu0 %v759
    %806 = vmatpush.msra.mxu0 %v757
    %807 = vmatpush.msra.mxu0 %v755
    %808 = vmatpush.msra.mxu0 %v753
    %809 = vmatpush.msra.mxu0 %v751
    %810 = vmatpush.msra.mxu0 %v749
    %811 = vmatpush.msra.mxu0 %v747
    %812 = vmatpush.msra.mxu0 %v745
    %813 = vmatpush.msra.mxu0 %v743
    %814 = vmatpush.msra.mxu0 %v741
    %815 = vmatmul.f32.gmra.mxu0 %v708
    %v816 = vpop.f32.mrf.mxu0
    %v817 = vadd.f32 %v797, %v816
    %818 = vdwg.mxu0
    %819 = vmatpush.msra.mxu0 %v740
    %820 = vmatpush.msra.mxu0 %v738
    %821 = vmatpush.msra.mxu0 %v736
    %822 = vmatpush.msra.mxu0 %v734
    %823 = vmatpush.msra.mxu0 %v732
    %824 = vmatpush.msra.mxu0 %v730
    %825 = vmatpush.msra.mxu0 %v728
    %826 = vmatpush.msra.mxu0 %v726
    %827 = vmatpush.msra.mxu0 %v724
    %828 = vmatpush.msra.mxu0 %v722
    %829 = vmatpush.msra.mxu0 %v720
    %830 = vmatpush.msra.mxu0 %v718
    %831 = vmatpush.msra.mxu0 %v716
    %832 = vmatpush.msra.mxu0 %v714
    %833 = vmatpush.msra.mxu0 %v712
    %834 = vmatpush.msra.mxu0 %v710
    %835 = vmatmul.f32.gmra.mxu0 %v707
    %v836 = vpop.f32.mrf.mxu0
    %v837 = vadd.f32 %v776, %v836
    %838 = vdwg.mxu0
    %839 = vmatpush.msra.mxu0 %v772
    %840 = vmatpush.msra.mxu0 %v770
    %841 = vmatpush.msra.mxu0 %v768
    %842 = vmatpush.msra.mxu0 %v766
    %843 = vmatpush.msra.mxu0 %v764
    %844 = vmatpush.msra.mxu0 %v762
    %845 = vmatpush.msra.mxu0 %v760
    %846 = vmatpush.msra.mxu0 %v758
    %847 = vmatpush.msra.mxu0 %v756
    %848 = vmatpush.msra.mxu0 %v754
    %849 = vmatpush.msra.mxu0 %v752
    %850 = vmatpush.msra.mxu0 %v750
    %851 = vmatpush.msra.mxu0 %v748
    %852 = vmatpush.msra.mxu0 %v746
    %853 = vmatpush.msra.mxu0 %v744
    %854 = vmatpush.msra.mxu0 %v742
    %855 = vmatmul.f32.gmra.mxu0 %v708
    %v856 = vpop.f32.mrf.mxu0
    %v857 = vadd.f32 %v837, %v856
    %858 = vdwg.mxu0
    %v859 = vmax.f32 %v817, 0.0
    %v860 = vmax.f32 %v857, 0.0
    %v861 = vld [vmem:[%s9] sm:$0xff]
    %v862 = vld [vmem:[%s9 + $0x8] sm:$0xff]
    %v863 = vld [vmem:[%s9 + $0x10] sm:$0xff]
    %v864 = vld [vmem:[%s9 + $0x18] sm:$0xff]
    %v865 = vld [vmem:[%s9 + $0x20] sm:$0xff]
    %v866 = vld [vmem:[%s9 + $0x28] sm:$0xff]
    %v867 = vld [vmem:[%s9 + $0x30] sm:$0xff]
    %v868 = vld [vmem:[%s9 + $0x38] sm:$0xff]
    %v869 = vld [vmem:[%s9 + $0x40] sm:$0xff]
    %v870 = vld [vmem:[%s9 + $0x48] sm:$0xff]
    %v871 = vld [vmem:[%s9 + $0x50] sm:$0xff]
    %v872 = vld [vmem:[%s9 + $0x58] sm:$0xff]
    %v873 = vld [vmem:[%s9 + $0x60] sm:$0xff]
    %v874 = vld [vmem:[%s9 + $0x68] sm:$0xff]
    %v875 = vld [vmem:[%s9 + $0x70] sm:$0xff]
    %v876 = vld [vmem:[%s9 + $0x78] sm:$0xff]
    %v877 = vld [vmem:[%s9 + $0x80] sm:$0xff]
    %v878 = vld [vmem:[%s9 + $0x88] sm:$0xff]
    %v879 = vld [vmem:[%s9 + $0x90] sm:$0xff]
    %v880 = vld [vmem:[%s9 + $0x98] sm:$0xff]
    %v881 = vld [vmem:[%s9 + $0xa0] sm:$0xff]
    %v882 = vld [vmem:[%s9 + $0xa8] sm:$0xff]
    %v883 = vld [vmem:[%s9 + $0xb0] sm:$0xff]
    %v884 = vld [vmem:[%s9 + $0xb8] sm:$0xff]
    %v885 = vld [vmem:[%s9 + $0xc0] sm:$0xff]
    %v886 = vld [vmem:[%s9 + $0xc8] sm:$0xff]
    %v887 = vld [vmem:[%s9 + $0xd0] sm:$0xff]
    %v888 = vld [vmem:[%s9 + $0xd8] sm:$0xff]
    %v889 = vld [vmem:[%s9 + $0xe0] sm:$0xff]
    %v890 = vld [vmem:[%s9 + $0xe8] sm:$0xff]
    %v891 = vld [vmem:[%s9 + $0xf0] sm:$0xff]
    %v892 = vld [vmem:[%s9 + $0xf8] sm:$0xff]
    %v893 = vld [vmem:[%s9 + $0x100] sm:$0xff]
    %v894 = vld [vmem:[%s9 + $0x108] sm:$0xff]
    %v895 = vld [vmem:[%s9 + $0x110] sm:$0xff]
    %v896 = vld [vmem:[%s9 + $0x118] sm:$0xff]
    %v897 = vld [vmem:[%s9 + $0x120] sm:$0xff]
    %v898 = vld [vmem:[%s9 + $0x128] sm:$0xff]
    %v899 = vld [vmem:[%s9 + $0x130] sm:$0xff]
    %v900 = vld [vmem:[%s9 + $0x138] sm:$0xff]
    %v901 = vld [vmem:[%s9 + $0x140] sm:$0xff]
    %v902 = vld [vmem:[%s9 + $0x148] sm:$0xff]
    %v903 = vld [vmem:[%s9 + $0x150] sm:$0xff]
    %v904 = vld [vmem:[%s9 + $0x158] sm:$0xff]
    %v905 = vld [vmem:[%s9 + $0x160] sm:$0xff]
    %v906 = vld [vmem:[%s9 + $0x168] sm:$0xff]
    %v907 = vld [vmem:[%s9 + $0x170] sm:$0xff]
    %v908 = vld [vmem:[%s9 + $0x178] sm:$0xff]
    %v909 = vld [vmem:[%s9 + $0x180] sm:$0xff]
    %v910 = vld [vmem:[%s9 + $0x188] sm:$0xff]
    %v911 = vld [vmem:[%s9 + $0x190] sm:$0xff]
    %v912 = vld [vmem:[%s9 + $0x198] sm:$0xff]
    %v913 = vld [vmem:[%s9 + $0x1a0] sm:$0xff]
    %v914 = vld [vmem:[%s9 + $0x1a8] sm:$0xff]
    %v915 = vld [vmem:[%s9 + $0x1b0] sm:$0xff]
    %v916 = vld [vmem:[%s9 + $0x1b8] sm:$0xff]
    %v917 = vld [vmem:[%s9 + $0x1c0] sm:$0xff]
    %v918 = vld [vmem:[%s9 + $0x1c8] sm:$0xff]
    %v919 = vld [vmem:[%s9 + $0x1d0] sm:$0xff]
    %v920 = vld [vmem:[%s9 + $0x1d8] sm:$0xff]
    %v921 = vld [vmem:[%s9 + $0x1e0] sm:$0xff]
    %v922 = vld [vmem:[%s9 + $0x1e8] sm:$0xff]
    %v923 = vld [vmem:[%s9 + $0x1f0] sm:$0xff]
    %v924 = vld [vmem:[%s9 + $0x1f8] sm:$0xff]
    %v925 = vld [vmem:[%s10] sm:$0x3]
    %v927 = vperm.slane %v925, 0
    %v928 = vperm.slane %v925, 1
    %931 = vmatpush.msra.mxu0 %v891
    %932 = vmatpush.msra.mxu0 %v889
    %933 = vmatpush.msra.mxu0 %v887
    %934 = vmatpush.msra.mxu0 %v885
    %935 = vmatpush.msra.mxu0 %v883
    %936 = vmatpush.msra.mxu0 %v881
    %937 = vmatpush.msra.mxu0 %v879
    %938 = vmatpush.msra.mxu0 %v877
    %939 = vmatpush.msra.mxu0 %v875
    %940 = vmatpush.msra.mxu0 %v873
    %941 = vmatpush.msra.mxu0 %v871
    %942 = vmatpush.msra.mxu0 %v869
    %943 = vmatpush.msra.mxu0 %v867
    %944 = vmatpush.msra.mxu0 %v865
    %945 = vmatpush.msra.mxu0 %v863
    %946 = vmatpush.msra.mxu0 %v861
    %947 = vmatmul.f32.gmra.mxu0 %v859
    %v948 = vpop.f32.mrf.mxu0
    %v949 = vadd.f32 %v927, %v948
    %950 = vdwg.mxu0
    %951 = vmatpush.msra.mxu0 %v923
    %952 = vmatpush.msra.mxu0 %v921
    %953 = vmatpush.msra.mxu0 %v919
    %954 = vmatpush.msra.mxu0 %v917
    %955 = vmatpush.msra.mxu0 %v915
    %956 = vmatpush.msra.mxu0 %v913
    %957 = vmatpush.msra.mxu0 %v911
    %958 = vmatpush.msra.mxu0 %v909
    %959 = vmatpush.msra.mxu0 %v907
    %960 = vmatpush.msra.mxu0 %v905
    %961 = vmatpush.msra.mxu0 %v903
    %962 = vmatpush.msra.mxu0 %v901
    %963 = vmatpush.msra.mxu0 %v899
    %964 = vmatpush.msra.mxu0 %v897
    %965 = vmatpush.msra.mxu0 %v895
    %966 = vmatpush.msra.mxu0 %v893
    %967 = vmatmul.f32.gmra.mxu0 %v860
    %v968 = vpop.f32.mrf.mxu0
    %v969 = vadd.f32 %v949, %v968
    %970 = vdwg.mxu0
    %971 = vmatpush.msra.mxu0 %v892
    %972 = vmatpush.msra.mxu0 %v890
    %973 = vmatpush.msra.mxu0 %v888
    %974 = vmatpush.msra.mxu0 %v886
    %975 = vmatpush.msra.mxu0 %v884
    %976 = vmatpush.msra.mxu0 %v882
    %977 = vmatpush.msra.mxu0 %v880
    %978 = vmatpush.msra.mxu0 %v878
    %979 = vmatpush.msra.mxu0 %v876
    %980 = vmatpush.msra.mxu0 %v874
    %981 = vmatpush.msra.mxu0 %v872
    %982 = vmatpush.msra.mxu0 %v870
    %983 = vmatpush.msra.mxu0 %v868
    %984 = vmatpush.msra.mxu0 %v866
    %985 = vmatpush.msra.mxu0 %v864
    %986 = vmatpush.msra.mxu0 %v862
    %987 = vmatmul.f32.gmra.mxu0 %v859
    %v988 = vpop.f32.mrf.mxu0
    %v989 = vadd.f32 %v928, %v988
    %990 = vdwg.mxu0
    %991 = vmatpush.msra.mxu0 %v924
    %992 = vmatpush.msra.mxu0 %v922
    %993 = vmatpush.msra.mxu0 %v920
    %994 = vmatpush.msra.mxu0 %v918
    %995 = vmatpush.msra.mxu0 %v916
    %996 = vmatpush.msra.mxu0 %v914
    %997 = vmatpush.msra.mxu0 %v912
    %998 = vmatpush.msra.mxu0 %v910
    %999 = vmatpush.msra.mxu0 %v908
    %1000 = vmatpush.msra.mxu0 %v906
    %1001 = vmatpush.msra.mxu0 %v904
    %1002 = vmatpush.msra.mxu0 %v902
    %1003 = vmatpush.msra.mxu0 %v900
    %1004 = vmatpush.msra.mxu0 %v898
    %1005 = vmatpush.msra.mxu0 %v896
    %1006 = vmatpush.msra.mxu0 %v894
    %1007 = vmatmul.f32.gmra.mxu0 %v860
    %v1008 = vpop.f32.mrf.mxu0
    %v1009 = vadd.f32 %v989, %v1008
    %1010 = vdwg.mxu0
    %v1011 = vmax.f32 %v969, 0.0
    %v1012 = vmax.f32 %v1009, 0.0
    %v1013 = vld [vmem:[%s11] sm:$0xff]
    %v1014 = vld [vmem:[%s11 + $0x8] sm:$0xff]
    %v1015 = vld [vmem:[%s11 + $0x10] sm:$0xff]
    %v1016 = vld [vmem:[%s11 + $0x18] sm:$0xff]
    %v1017 = vld [vmem:[%s11 + $0x20] sm:$0xff]
    %v1018 = vld [vmem:[%s11 + $0x28] sm:$0xff]
    %v1019 = vld [vmem:[%s11 + $0x30] sm:$0xff]
    %v1020 = vld [vmem:[%s11 + $0x38] sm:$0xff]
    %v1021 = vld [vmem:[%s11 + $0x40] sm:$0xff]
    %v1022 = vld [vmem:[%s11 + $0x48] sm:$0xff]
    %v1023 = vld [vmem:[%s11 + $0x50] sm:$0xff]
    %v1024 = vld [vmem:[%s11 + $0x58] sm:$0xff]
    %v1025 = vld [vmem:[%s11 + $0x60] sm:$0xff]
    %v1026 = vld [vmem:[%s11 + $0x68] sm:$0xff]
    %v1027 = vld [vmem:[%s11 + $0x70] sm:$0xff]
    %v1028 = vld [vmem:[%s11 + $0x78] sm:$0xff]
    %v1029 = vld [vmem:[%s11 + $0x80] sm:$0xff]
    %v1030 = vld [vmem:[%s11 + $0x88] sm:$0xff]
    %v1031 = vld [vmem:[%s11 + $0x90] sm:$0xff]
    %v1032 = vld [vmem:[%s11 + $0x98] sm:$0xff]
    %v1033 = vld [vmem:[%s11 + $0xa0] sm:$0xff]
    %v1034 = vld [vmem:[%s11 + $0xa8] sm:$0xff]
    %v1035 = vld [vmem:[%s11 + $0xb0] sm:$0xff]
    %v1036 = vld [vmem:[%s11 + $0xb8] sm:$0xff]
    %v1037 = vld [vmem:[%s11 + $0xc0] sm:$0xff]
    %v1038 = vld [vmem:[%s11 + $0xc8] sm:$0xff]
    %v1039 = vld [vmem:[%s11 + $0xd0] sm:$0xff]
    %v1040 = vld [vmem:[%s11 + $0xd8] sm:$0xff]
    %v1041 = vld [vmem:[%s11 + $0xe0] sm:$0xff]
    %v1042 = vld [vmem:[%s11 + $0xe8] sm:$0xff]
    %v1043 = vld [vmem:[%s11 + $0xf0] sm:$0xff]
    %v1044 = vld [vmem:[%s11 + $0xf8] sm:$0xff]
    %v1045 = vld [vmem:[#allocation2] sm:$0x1]
    %v1047 = vperm.slane %v1045, 0
    %1049 = vmatpush.msra.mxu0 %v1028
    %1050 = vmatpush.msra.mxu0 %v1027
    %1051 = vmatpush.msra.mxu0 %v1026
    %1052 = vmatpush.msra.mxu0 %v1025
    %1053 = vmatpush.msra.mxu0 %v1024
    %1054 = vmatpush.msra.mxu0 %v1023
    %1055 = vmatpush.msra.mxu0 %v1022
    %1056 = vmatpush.msra.mxu0 %v1021
    %1057 = vmatpush.msra.mxu0 %v1020
    %1058 = vmatpush.msra.mxu0 %v1019
    %1059 = vmatpush.msra.mxu0 %v1018
    %1060 = vmatpush.msra.mxu0 %v1017
    %1061 = vmatpush.msra.mxu0 %v1016
    %1062 = vmatpush.msra.mxu0 %v1015
    %1063 = vmatpush.msra.mxu0 %v1014
    %1064 = vmatpush.msra.mxu0 %v1013
    %1065 = vmatmul.f32.gmra.mxu0 %v1011
    %v1066 = vpop.f32.mrf.mxu0
    %v1067 = vadd.f32 %v1047, %v1066
    %1068 = vdwg.mxu0
    %1069 = vmatpush.msra.mxu0 %v1044
    %1070 = vmatpush.msra.mxu0 %v1043
    %1071 = vmatpush.msra.mxu0 %v1042
    %1072 = vmatpush.msra.mxu0 %v1041
    %1073 = vmatpush.msra.mxu0 %v1040
    %1074 = vmatpush.msra.mxu0 %v1039
    %1075 = vmatpush.msra.mxu0 %v1038
    %1076 = vmatpush.msra.mxu0 %v1037
    %1077 = vmatpush.msra.mxu0 %v1036
    %1078 = vmatpush.msra.mxu0 %v1035
    %1079 = vmatpush.msra.mxu0 %v1034
    %1080 = vmatpush.msra.mxu0 %v1033
    %1081 = vmatpush.msra.mxu0 %v1032
    %1082 = vmatpush.msra.mxu0 %v1031
    %1083 = vmatpush.msra.mxu0 %v1030
    %1084 = vmatpush.msra.mxu0 %v1029
    %1085 = vmatmul.f32.gmra.mxu0 %v1012
    %v1086 = vpop.f32.mrf.mxu0
    %v1087 = vadd.f32 %v1067, %v1086
    %1088 = vdwg.mxu0
    %1090 = vrot.lane.b32.xlu0 %v1087, 1
    %v1091 = vpop.permute.xlu0 %1090
    %vm1093 = vcmask 9224
    %1094 = vst.msk [vmem:[#allocation3] sm:$0x3] %vm1093, %v1091
    %v1095 = vperm.slane %v277, 2
    %v1096 = vperm.slane %v297, 2
    %v1097 = vadd.f32 %v218, %v1095
    %v1098 = vadd.f32 %v238, %v1096
    %v1099 = vld [vmem:[%s6] sm:$0x3]
    %v1101 = vperm.slane %v1099, 0
    %v1102 = vperm.slane %v1099, 1
    %v1105 = vadd.f32 %v1097, %v1101
    %v1106 = vadd.f32 %v1098, %v1102
    %v1107 = vmax.f32 %v1105, 0.0
    %v1108 = vmax.f32 %v1106, 0.0
    %v1109 = vld [vmem:[%s7] sm:$0xff]
    %v1110 = vld [vmem:[%s7 + $0x8] sm:$0xff]
    %v1111 = vld [vmem:[%s7 + $0x10] sm:$0xff]
    %v1112 = vld [vmem:[%s7 + $0x18] sm:$0xff]
    %v1113 = vld [vmem:[%s7 + $0x20] sm:$0xff]
    %v1114 = vld [vmem:[%s7 + $0x28] sm:$0xff]
    %v1115 = vld [vmem:[%s7 + $0x30] sm:$0xff]
    %v1116 = vld [vmem:[%s7 + $0x38] sm:$0xff]
    %v1117 = vld [vmem:[%s7 + $0x40] sm:$0xff]
    %v1118 = vld [vmem:[%s7 + $0x48] sm:$0xff]
    %v1119 = vld [vmem:[%s7 + $0x50] sm:$0xff]
    %v1120 = vld [vmem:[%s7 + $0x58] sm:$0xff]
    %v1121 = vld [vmem:[%s7 + $0x60] sm:$0xff]
    %v1122 = vld [vmem:[%s7 + $0x68] sm:$0xff]
    %v1123 = vld [vmem:[%s7 + $0x70] sm:$0xff]
    %v1124 = vld [vmem:[%s7 + $0x78] sm:$0xff]
    %v1125 = vld [vmem:[%s7 + $0x80] sm:$0xff]
    %v1126 = vld [vmem:[%s7 + $0x88] sm:$0xff]
    %v1127 = vld [vmem:[%s7 + $0x90] sm:$0xff]
    %v1128 = vld [vmem:[%s7 + $0x98] sm:$0xff]
    %v1129 = vld [vmem:[%s7 + $0xa0] sm:$0xff]
    %v1130 = vld [vmem:[%s7 + $0xa8] sm:$0xff]
    %v1131 = vld [vmem:[%s7 + $0xb0] sm:$0xff]
    %v1132 = vld [vmem:[%s7 + $0xb8] sm:$0xff]
    %v1133 = vld [vmem:[%s7 + $0xc0] sm:$0xff]
    %v1134 = vld [vmem:[%s7 + $0xc8] sm:$0xff]
    %v1135 = vld [vmem:[%s7 + $0xd0] sm:$0xff]
    %v1136 = vld [vmem:[%s7 + $0xd8] sm:$0xff]
    %v1137 = vld [vmem:[%s7 + $0xe0] sm:$0xff]
    %v1138 = vld [vmem:[%s7 + $0xe8] sm:$0xff]
    %v1139 = vld [vmem:[%s7 + $0xf0] sm:$0xff]
    %v1140 = vld [vmem:[%s7 + $0xf8] sm:$0xff]
    %v1141 = vld [vmem:[%s7 + $0x100] sm:$0xff]
    %v1142 = vld [vmem:[%s7 + $0x108] sm:$0xff]
    %v1143 = vld [vmem:[%s7 + $0x110] sm:$0xff]
    %v1144 = vld [vmem:[%s7 + $0x118] sm:$0xff]
    %v1145 = vld [vmem:[%s7 + $0x120] sm:$0xff]
    %v1146 = vld [vmem:[%s7 + $0x128] sm:$0xff]
    %v1147 = vld [vmem:[%s7 + $0x130] sm:$0xff]
    %v1148 = vld [vmem:[%s7 + $0x138] sm:$0xff]
    %v1149 = vld [vmem:[%s7 + $0x140] sm:$0xff]
    %v1150 = vld [vmem:[%s7 + $0x148] sm:$0xff]
    %v1151 = vld [vmem:[%s7 + $0x150] sm:$0xff]
    %v1152 = vld [vmem:[%s7 + $0x158] sm:$0xff]
    %v1153 = vld [vmem:[%s7 + $0x160] sm:$0xff]
    %v1154 = vld [vmem:[%s7 + $0x168] sm:$0xff]
    %v1155 = vld [vmem:[%s7 + $0x170] sm:$0xff]
    %v1156 = vld [vmem:[%s7 + $0x178] sm:$0xff]
    %v1157 = vld [vmem:[%s7 + $0x180] sm:$0xff]
    %v1158 = vld [vmem:[%s7 + $0x188] sm:$0xff]
    %v1159 = vld [vmem:[%s7 + $0x190] sm:$0xff]
    %v1160 = vld [vmem:[%s7 + $0x198] sm:$0xff]
    %v1161 = vld [vmem:[%s7 + $0x1a0] sm:$0xff]
    %v1162 = vld [vmem:[%s7 + $0x1a8] sm:$0xff]
    %v1163 = vld [vmem:[%s7 + $0x1b0] sm:$0xff]
    %v1164 = vld [vmem:[%s7 + $0x1b8] sm:$0xff]
    %v1165 = vld [vmem:[%s7 + $0x1c0] sm:$0xff]
    %v1166 = vld [vmem:[%s7 + $0x1c8] sm:$0xff]
    %v1167 = vld [vmem:[%s7 + $0x1d0] sm:$0xff]
    %v1168 = vld [vmem:[%s7 + $0x1d8] sm:$0xff]
    %v1169 = vld [vmem:[%s7 + $0x1e0] sm:$0xff]
    %v1170 = vld [vmem:[%s7 + $0x1e8] sm:$0xff]
    %v1171 = vld [vmem:[%s7 + $0x1f0] sm:$0xff]
    %v1172 = vld [vmem:[%s7 + $0x1f8] sm:$0xff]
    %v1173 = vld [vmem:[%s8] sm:$0x3]
    %v1175 = vperm.slane %v1173, 0
    %v1176 = vperm.slane %v1173, 1
    %1179 = vmatpush.msra.mxu0 %v1139
    %1180 = vmatpush.msra.mxu0 %v1137
    %1181 = vmatpush.msra.mxu0 %v1135
    %1182 = vmatpush.msra.mxu0 %v1133
    %1183 = vmatpush.msra.mxu0 %v1131
    %1184 = vmatpush.msra.mxu0 %v1129
    %1185 = vmatpush.msra.mxu0 %v1127
    %1186 = vmatpush.msra.mxu0 %v1125
    %1187 = vmatpush.msra.mxu0 %v1123
    %1188 = vmatpush.msra.mxu0 %v1121
    %1189 = vmatpush.msra.mxu0 %v1119
    %1190 = vmatpush.msra.mxu0 %v1117
    %1191 = vmatpush.msra.mxu0 %v1115
    %1192 = vmatpush.msra.mxu0 %v1113
    %1193 = vmatpush.msra.mxu0 %v1111
    %1194 = vmatpush.msra.mxu0 %v1109
    %1195 = vmatmul.f32.gmra.mxu0 %v1107
    %v1196 = vpop.f32.mrf.mxu0
    %v1197 = vadd.f32 %v1175, %v1196
    %1198 = vdwg.mxu0
    %1199 = vmatpush.msra.mxu0 %v1171
    %1200 = vmatpush.msra.mxu0 %v1169
    %1201 = vmatpush.msra.mxu0 %v1167
    %1202 = vmatpush.msra.mxu0 %v1165
    %1203 = vmatpush.msra.mxu0 %v1163
    %1204 = vmatpush.msra.mxu0 %v1161
    %1205 = vmatpush.msra.mxu0 %v1159
    %1206 = vmatpush.msra.mxu0 %v1157
    %1207 = vmatpush.msra.mxu0 %v1155
    %1208 = vmatpush.msra.mxu0 %v1153
    %1209 = vmatpush.msra.mxu0 %v1151
    %1210 = vmatpush.msra.mxu0 %v1149
    %1211 = vmatpush.msra.mxu0 %v1147
    %1212 = vmatpush.msra.mxu0 %v1145
    %1213 = vmatpush.msra.mxu0 %v1143
    %1214 = vmatpush.msra.mxu0 %v1141
    %1215 = vmatmul.f32.gmra.mxu0 %v1108
    %v1216 = vpop.f32.mrf.mxu0
    %v1217 = vadd.f32 %v1197, %v1216
    %1218 = vdwg.mxu0
    %1219 = vmatpush.msra.mxu0 %v1140
    %1220 = vmatpush.msra.mxu0 %v1138
    %1221 = vmatpush.msra.mxu0 %v1136
    %1222 = vmatpush.msra.mxu0 %v1134
    %1223 = vmatpush.msra.mxu0 %v1132
    %1224 = vmatpush.msra.mxu0 %v1130
    %1225 = vmatpush.msra.mxu0 %v1128
    %1226 = vmatpush.msra.mxu0 %v1126
    %1227 = vmatpush.msra.mxu0 %v1124
    %1228 = vmatpush.msra.mxu0 %v1122
    %1229 = vmatpush.msra.mxu0 %v1120
    %1230 = vmatpush.msra.mxu0 %v1118
    %1231 = vmatpush.msra.mxu0 %v1116
    %1232 = vmatpush.msra.mxu0 %v1114
    %1233 = vmatpush.msra.mxu0 %v1112
    %1234 = vmatpush.msra.mxu0 %v1110
    %1235 = vmatmul.f32.gmra.mxu0 %v1107
    %v1236 = vpop.f32.mrf.mxu0
    %v1237 = vadd.f32 %v1176, %v1236
    %1238 = vdwg.mxu0
    %1239 = vmatpush.msra.mxu0 %v1172
    %1240 = vmatpush.msra.mxu0 %v1170
    %1241 = vmatpush.msra.mxu0 %v1168
    %1242 = vmatpush.msra.mxu0 %v1166
    %1243 = vmatpush.msra.mxu0 %v1164
    %1244 = vmatpush.msra.mxu0 %v1162
    %1245 = vmatpush.msra.mxu0 %v1160
    %1246 = vmatpush.msra.mxu0 %v1158
    %1247 = vmatpush.msra.mxu0 %v1156
    %1248 = vmatpush.msra.mxu0 %v1154
    %1249 = vmatpush.msra.mxu0 %v1152
    %1250 = vmatpush.msra.mxu0 %v1150
    %1251 = vmatpush.msra.mxu0 %v1148
    %1252 = vmatpush.msra.mxu0 %v1146
    %1253 = vmatpush.msra.mxu0 %v1144
    %1254 = vmatpush.msra.mxu0 %v1142
    %1255 = vmatmul.f32.gmra.mxu0 %v1108
    %v1256 = vpop.f32.mrf.mxu0
    %v1257 = vadd.f32 %v1237, %v1256
    %1258 = vdwg.mxu0
    %v1259 = vmax.f32 %v1217, 0.0
    %v1260 = vmax.f32 %v1257, 0.0
    %v1261 = vld [vmem:[%s9] sm:$0xff]
    %v1262 = vld [vmem:[%s9 + $0x8] sm:$0xff]
    %v1263 = vld [vmem:[%s9 + $0x10] sm:$0xff]
    %v1264 = vld [vmem:[%s9 + $0x18] sm:$0xff]
    %v1265 = vld [vmem:[%s9 + $0x20] sm:$0xff]
    %v1266 = vld [vmem:[%s9 + $0x28] sm:$0xff]
    %v1267 = vld [vmem:[%s9 + $0x30] sm:$0xff]
    %v1268 = vld [vmem:[%s9 + $0x38] sm:$0xff]
    %v1269 = vld [vmem:[%s9 + $0x40] sm:$0xff]
    %v1270 = vld [vmem:[%s9 + $0x48] sm:$0xff]
    %v1271 = vld [vmem:[%s9 + $0x50] sm:$0xff]
    %v1272 = vld [vmem:[%s9 + $0x58] sm:$0xff]
    %v1273 = vld [vmem:[%s9 + $0x60] sm:$0xff]
    %v1274 = vld [vmem:[%s9 + $0x68] sm:$0xff]
    %v1275 = vld [vmem:[%s9 + $0x70] sm:$0xff]
    %v1276 = vld [vmem:[%s9 + $0x78] sm:$0xff]
    %v1277 = vld [vmem:[%s9 + $0x80] sm:$0xff]
    %v1278 = vld [vmem:[%s9 + $0x88] sm:$0xff]
    %v1279 = vld [vmem:[%s9 + $0x90] sm:$0xff]
    %v1280 = vld [vmem:[%s9 + $0x98] sm:$0xff]
    %v1281 = vld [vmem:[%s9 + $0xa0] sm:$0xff]
    %v1282 = vld [vmem:[%s9 + $0xa8] sm:$0xff]
    %v1283 = vld [vmem:[%s9 + $0xb0] sm:$0xff]
    %v1284 = vld [vmem:[%s9 + $0xb8] sm:$0xff]
    %v1285 = vld [vmem:[%s9 + $0xc0] sm:$0xff]
    %v1286 = vld [vmem:[%s9 + $0xc8] sm:$0xff]
    %v1287 = vld [vmem:[%s9 + $0xd0] sm:$0xff]
    %v1288 = vld [vmem:[%s9 + $0xd8] sm:$0xff]
    %v1289 = vld [vmem:[%s9 + $0xe0] sm:$0xff]
    %v1290 = vld [vmem:[%s9 + $0xe8] sm:$0xff]
    %v1291 = vld [vmem:[%s9 + $0xf0] sm:$0xff]
    %v1292 = vld [vmem:[%s9 + $0xf8] sm:$0xff]
    %v1293 = vld [vmem:[%s9 + $0x100] sm:$0xff]
    %v1294 = vld [vmem:[%s9 + $0x108] sm:$0xff]
    %v1295 = vld [vmem:[%s9 + $0x110] sm:$0xff]
    %v1296 = vld [vmem:[%s9 + $0x118] sm:$0xff]
    %v1297 = vld [vmem:[%s9 + $0x120] sm:$0xff]
    %v1298 = vld [vmem:[%s9 + $0x128] sm:$0xff]
    %v1299 = vld [vmem:[%s9 + $0x130] sm:$0xff]
    %v1300 = vld [vmem:[%s9 + $0x138] sm:$0xff]
    %v1301 = vld [vmem:[%s9 + $0x140] sm:$0xff]
    %v1302 = vld [vmem:[%s9 + $0x148] sm:$0xff]
    %v1303 = vld [vmem:[%s9 + $0x150] sm:$0xff]
    %v1304 = vld [vmem:[%s9 + $0x158] sm:$0xff]
    %v1305 = vld [vmem:[%s9 + $0x160] sm:$0xff]
    %v1306 = vld [vmem:[%s9 + $0x168] sm:$0xff]
    %v1307 = vld [vmem:[%s9 + $0x170] sm:$0xff]
    %v1308 = vld [vmem:[%s9 + $0x178] sm:$0xff]
    %v1309 = vld [vmem:[%s9 + $0x180] sm:$0xff]
    %v1310 = vld [vmem:[%s9 + $0x188] sm:$0xff]
    %v1311 = vld [vmem:[%s9 + $0x190] sm:$0xff]
    %v1312 = vld [vmem:[%s9 + $0x198] sm:$0xff]
    %v1313 = vld [vmem:[%s9 + $0x1a0] sm:$0xff]
    %v1314 = vld [vmem:[%s9 + $0x1a8] sm:$0xff]
    %v1315 = vld [vmem:[%s9 + $0x1b0] sm:$0xff]
    %v1316 = vld [vmem:[%s9 + $0x1b8] sm:$0xff]
    %v1317 = vld [vmem:[%s9 + $0x1c0] sm:$0xff]
    %v1318 = vld [vmem:[%s9 + $0x1c8] sm:$0xff]
    %v1319 = vld [vmem:[%s9 + $0x1d0] sm:$0xff]
    %v1320 = vld [vmem:[%s9 + $0x1d8] sm:$0xff]
    %v1321 = vld [vmem:[%s9 + $0x1e0] sm:$0xff]
    %v1322 = vld [vmem:[%s9 + $0x1e8] sm:$0xff]
    %v1323 = vld [vmem:[%s9 + $0x1f0] sm:$0xff]
    %v1324 = vld [vmem:[%s9 + $0x1f8] sm:$0xff]
    %v1325 = vld [vmem:[%s10] sm:$0x3]
    %v1327 = vperm.slane %v1325, 0
    %v1328 = vperm.slane %v1325, 1
    %1331 = vmatpush.msra.mxu0 %v1291
    %1332 = vmatpush.msra.mxu0 %v1289
    %1333 = vmatpush.msra.mxu0 %v1287
    %1334 = vmatpush.msra.mxu0 %v1285
    %1335 = vmatpush.msra.mxu0 %v1283
    %1336 = vmatpush.msra.mxu0 %v1281
    %1337 = vmatpush.msra.mxu0 %v1279
    %1338 = vmatpush.msra.mxu0 %v1277
    %1339 = vmatpush.msra.mxu0 %v1275
    %1340 = vmatpush.msra.mxu0 %v1273
    %1341 = vmatpush.msra.mxu0 %v1271
    %1342 = vmatpush.msra.mxu0 %v1269
    %1343 = vmatpush.msra.mxu0 %v1267
    %1344 = vmatpush.msra.mxu0 %v1265
    %1345 = vmatpush.msra.mxu0 %v1263
    %1346 = vmatpush.msra.mxu0 %v1261
    %1347 = vmatmul.f32.gmra.mxu0 %v1259
    %v1348 = vpop.f32.mrf.mxu0
    %v1349 = vadd.f32 %v1327, %v1348
    %1350 = vdwg.mxu0
    %1351 = vmatpush.msra.mxu0 %v1323
    %1352 = vmatpush.msra.mxu0 %v1321
    %1353 = vmatpush.msra.mxu0 %v1319
    %1354 = vmatpush.msra.mxu0 %v1317
    %1355 = vmatpush.msra.mxu0 %v1315
    %1356 = vmatpush.msra.mxu0 %v1313
    %1357 = vmatpush.msra.mxu0 %v1311
    %1358 = vmatpush.msra.mxu0 %v1309
    %1359 = vmatpush.msra.mxu0 %v1307
    %1360 = vmatpush.msra.mxu0 %v1305
    %1361 = vmatpush.msra.mxu0 %v1303
    %1362 = vmatpush.msra.mxu0 %v1301
    %1363 = vmatpush.msra.mxu0 %v1299
    %1364 = vmatpush.msra.mxu0 %v1297
    %1365 = vmatpush.msra.mxu0 %v1295
    %1366 = vmatpush.msra.mxu0 %v1293
    %1367 = vmatmul.f32.gmra.mxu0 %v1260
    %v1368 = vpop.f32.mrf.mxu0
    %v1369 = vadd.f32 %v1349, %v1368
    %1370 = vdwg.mxu0
    %1371 = vmatpush.msra.mxu0 %v1292
    %1372 = vmatpush.msra.mxu0 %v1290
    %1373 = vmatpush.msra.mxu0 %v1288
    %1374 = vmatpush.msra.mxu0 %v1286
    %1375 = vmatpush.msra.mxu0 %v1284
    %1376 = vmatpush.msra.mxu0 %v1282
    %1377 = vmatpush.msra.mxu0 %v1280
    %1378 = vmatpush.msra.mxu0 %v1278
    %1379 = vmatpush.msra.mxu0 %v1276
    %1380 = vmatpush.msra.mxu0 %v1274
    %1381 = vmatpush.msra.mxu0 %v1272
    %1382 = vmatpush.msra.mxu0 %v1270
    %1383 = vmatpush.msra.mxu0 %v1268
    %1384 = vmatpush.msra.mxu0 %v1266
    %1385 = vmatpush.msra.mxu0 %v1264
    %1386 = vmatpush.msra.mxu0 %v1262
    %1387 = vmatmul.f32.gmra.mxu0 %v1259
    %v1388 = vpop.f32.mrf.mxu0
    %v1389 = vadd.f32 %v1328, %v1388
    %1390 = vdwg.mxu0
    %1391 = vmatpush.msra.mxu0 %v1324
    %1392 = vmatpush.msra.mxu0 %v1322
    %1393 = vmatpush.msra.mxu0 %v1320
    %1394 = vmatpush.msra.mxu0 %v1318
    %1395 = vmatpush.msra.mxu0 %v1316
    %1396 = vmatpush.msra.mxu0 %v1314
    %1397 = vmatpush.msra.mxu0 %v1312
    %1398 = vmatpush.msra.mxu0 %v1310
    %1399 = vmatpush.msra.mxu0 %v1308
    %1400 = vmatpush.msra.mxu0 %v1306
    %1401 = vmatpush.msra.mxu0 %v1304
    %1402 = vmatpush.msra.mxu0 %v1302
    %1403 = vmatpush.msra.mxu0 %v1300
    %1404 = vmatpush.msra.mxu0 %v1298
    %1405 = vmatpush.msra.mxu0 %v1296
    %1406 = vmatpush.msra.mxu0 %v1294
    %1407 = vmatmul.f32.gmra.mxu0 %v1260
    %v1408 = vpop.f32.mrf.mxu0
    %v1409 = vadd.f32 %v1389, %v1408
    %1410 = vdwg.mxu0
    %v1411 = vmax.f32 %v1369, 0.0
    %v1412 = vmax.f32 %v1409, 0.0
    %v1413 = vld [vmem:[%s11] sm:$0xff]
    %v1414 = vld [vmem:[%s11 + $0x8] sm:$0xff]
    %v1415 = vld [vmem:[%s11 + $0x10] sm:$0xff]
    %v1416 = vld [vmem:[%s11 + $0x18] sm:$0xff]
    %v1417 = vld [vmem:[%s11 + $0x20] sm:$0xff]
    %v1418 = vld [vmem:[%s11 + $0x28] sm:$0xff]
    %v1419 = vld [vmem:[%s11 + $0x30] sm:$0xff]
    %v1420 = vld [vmem:[%s11 + $0x38] sm:$0xff]
    %v1421 = vld [vmem:[%s11 + $0x40] sm:$0xff]
    %v1422 = vld [vmem:[%s11 + $0x48] sm:$0xff]
    %v1423 = vld [vmem:[%s11 + $0x50] sm:$0xff]
    %v1424 = vld [vmem:[%s11 + $0x58] sm:$0xff]
    %v1425 = vld [vmem:[%s11 + $0x60] sm:$0xff]
    %v1426 = vld [vmem:[%s11 + $0x68] sm:$0xff]
    %v1427 = vld [vmem:[%s11 + $0x70] sm:$0xff]
    %v1428 = vld [vmem:[%s11 + $0x78] sm:$0xff]
    %v1429 = vld [vmem:[%s11 + $0x80] sm:$0xff]
    %v1430 = vld [vmem:[%s11 + $0x88] sm:$0xff]
    %v1431 = vld [vmem:[%s11 + $0x90] sm:$0xff]
    %v1432 = vld [vmem:[%s11 + $0x98] sm:$0xff]
    %v1433 = vld [vmem:[%s11 + $0xa0] sm:$0xff]
    %v1434 = vld [vmem:[%s11 + $0xa8] sm:$0xff]
    %v1435 = vld [vmem:[%s11 + $0xb0] sm:$0xff]
    %v1436 = vld [vmem:[%s11 + $0xb8] sm:$0xff]
    %v1437 = vld [vmem:[%s11 + $0xc0] sm:$0xff]
    %v1438 = vld [vmem:[%s11 + $0xc8] sm:$0xff]
    %v1439 = vld [vmem:[%s11 + $0xd0] sm:$0xff]
    %v1440 = vld [vmem:[%s11 + $0xd8] sm:$0xff]
    %v1441 = vld [vmem:[%s11 + $0xe0] sm:$0xff]
    %v1442 = vld [vmem:[%s11 + $0xe8] sm:$0xff]
    %v1443 = vld [vmem:[%s11 + $0xf0] sm:$0xff]
    %v1444 = vld [vmem:[%s11 + $0xf8] sm:$0xff]
    %v1445 = vld [vmem:[#allocation2] sm:$0x1]
    %v1447 = vperm.slane %v1445, 0
    %1449 = vmatpush.msra.mxu0 %v1428
    %1450 = vmatpush.msra.mxu0 %v1427
    %1451 = vmatpush.msra.mxu0 %v1426
    %1452 = vmatpush.msra.mxu0 %v1425
    %1453 = vmatpush.msra.mxu0 %v1424
    %1454 = vmatpush.msra.mxu0 %v1423
    %1455 = vmatpush.msra.mxu0 %v1422
    %1456 = vmatpush.msra.mxu0 %v1421
    %1457 = vmatpush.msra.mxu0 %v1420
    %1458 = vmatpush.msra.mxu0 %v1419
    %1459 = vmatpush.msra.mxu0 %v1418
    %1460 = vmatpush.msra.mxu0 %v1417
    %1461 = vmatpush.msra.mxu0 %v1416
    %1462 = vmatpush.msra.mxu0 %v1415
    %1463 = vmatpush.msra.mxu0 %v1414
    %1464 = vmatpush.msra.mxu0 %v1413
    %1465 = vmatmul.f32.gmra.mxu0 %v1411
    %v1466 = vpop.f32.mrf.mxu0
    %v1467 = vadd.f32 %v1447, %v1466
    %1468 = vdwg.mxu0
    %1469 = vmatpush.msra.mxu0 %v1444
    %1470 = vmatpush.msra.mxu0 %v1443
    %1471 = vmatpush.msra.mxu0 %v1442
    %1472 = vmatpush.msra.mxu0 %v1441
    %1473 = vmatpush.msra.mxu0 %v1440
    %1474 = vmatpush.msra.mxu0 %v1439
    %1475 = vmatpush.msra.mxu0 %v1438
    %1476 = vmatpush.msra.mxu0 %v1437
    %1477 = vmatpush.msra.mxu0 %v1436
    %1478 = vmatpush.msra.mxu0 %v1435
    %1479 = vmatpush.msra.mxu0 %v1434
    %1480 = vmatpush.msra.mxu0 %v1433
    %1481 = vmatpush.msra.mxu0 %v1432
    %1482 = vmatpush.msra.mxu0 %v1431
    %1483 = vmatpush.msra.mxu0 %v1430
    %1484 = vmatpush.msra.mxu0 %v1429
    %1485 = vmatmul.f32.gmra.mxu0 %v1412
    %v1486 = vpop.f32.mrf.mxu0
    %v1487 = vadd.f32 %v1467, %v1486
    %1488 = vdwg.mxu0
    %1490 = vrot.lane.b32.xlu0 %v1487, 2
    %v1491 = vpop.permute.xlu0 %1490
    %vm1493 = vcmask 17424
    %1494 = vst.msk [vmem:[#allocation3] sm:$0x3] %vm1493, %v1491
    %v1495 = vld [vmem:[#allocation3] sm:$0x3]
    %vm1496 = vcmask 17408
    %v1497 = vsel %vm1496, %v1495, -inf
    %1498 = vmax.xlane.f32.xlu0 %v1497
    %v1499 = vpop.xlane.xlu0 %1498
    %v1500 = vsub.f32 %v1495, %v1499
    %v1501 = vmul.f32 %v1500, 1.442695
    %v1502 = vpow.pop %v1501
    %v1503 = vsel %vm1496, %v1502, 0.0
    %1504 = vadd.xlane.f32.xlu0 %v1503
    %v1505 = vpop.xlane.xlu0 %1504
    %v1506 = vrcp.pop %v1505
    %v1507 = vmul.f32 %v1505, %v1506
    %v1508 = vsub.f32 1.0, %v1507
    %v1509 = vmul.f32 %v1506, %v1508
    %v1510 = vadd.f32 %v1506, %v1509
    %vm1511 = vweird.f32 %v1505
    %vm1512 = vweird.f32 %v1506
    %vm1513 = vmor %vm1511, %vm1512
    %v1514 = vsel %vm1513, %v1506, %v1510
    %v1515 = vand.u32 2147483647, %v1505
    %vm1516 = vcmp.eq.f32.partialorder %v1515, 8.507059e+37
    %v1517 = vand.u32 %v1505, 2147483648
    %v1518 = vor.u32 1.1754944e-38, %v1517
    %v1519 = vsel %vm1516, %v1518, %v1514
    %v1520 = vmul.f32 %v1502, %v1519
    %v1521 = vrot.slane %v1497, 4
    %v1522 = vmax.f32 %v1497, %v1521
    %v1523 = vrot.slane %v1522, 2
    %v1524 = vmax.f32 %v1522, %v1523
    %v1525 = vrot.slane %v1524, 1
    %v1526 = vmax.f32 %v1524, %v1525
    %v1527 = vsub.f32 %v1495, %v1526
    %v1528 = vmul.f32 %v1527, 1.442695
    %v1529 = vpow.pop %v1528
    %v1530 = vsel %vm1496, %v1529, 0.0
    %v1531 = vrot.slane %v1530, 4
    %v1532 = vadd.f32 %v1530, %v1531
    %v1533 = vrot.slane %v1532, 2
    %v1534 = vadd.f32 %v1532, %v1533
    %v1535 = vrot.slane %v1534, 1
    %v1536 = vadd.f32 %v1534, %v1535
    %v1537 = vrcp.pop %v1536
    %v1538 = vmul.f32 %v1536, %v1537
    %v1539 = vsub.f32 1.0, %v1538
    %v1540 = vmul.f32 %v1537, %v1539
    %v1541 = vadd.f32 %v1537, %v1540
    %vm1542 = vweird.f32 %v1536
    %vm1543 = vweird.f32 %v1537
    %vm1544 = vmor %vm1542, %vm1543
    %v1545 = vsel %vm1544, %v1537, %v1541
    %v1546 = vand.u32 2147483647, %v1536
    %vm1547 = vcmp.eq.f32.partialorder %v1546, 8.507059e+37
    %v1548 = vand.u32 %v1536, 2147483648
    %v1549 = vor.u32 1.1754944e-38, %v1548
    %v1550 = vsel %vm1547, %v1549, %v1545
    %v1551 = vmul.f32 %v1529, %v1550
    %v1552 = vmin.f32 %v1520, %v1551
    %1553 = vst.msk [vmem:[#allocation5] sm:$0x3] %vm1496, %v1552
    // Predicated region
    $region54: #{reid_forward.11} parent=1 // pred_check
      _
    $region55: #{reid_forward.11} parent=1 // pred_check_branch
      %1555 = sbr.rel (0) target = $region57
    $region56: #{reid_forward.11} parent=1 // pred_region
      %1557 = vsyncadd [#allocation4], 0
      %s1559 = sshll.u32 [#allocation3], 4
      %s1560 = int_to_ptr.vmem [resolvable:$true] %s1559
      %s1561 = sshll.u32 %s13, 4
      %s1562 = int_to_ptr.hbm [resolvable:$true] %s1561
      %1564 = dma.vmem_to_hbm [thread:$0]  %s1560, 32, %s1562, [#allocation4]
    $region57: #{reid_forward.11} parent=1 // pred_fallthru
      _
    // Predicated region
    $region58: #{reid_forward.11} parent=1 // pred_check
      _
    $region59: #{reid_forward.11} parent=1 // pred_check_branch
      %1566 = sbr.rel (0) target = $region61
    $region60: #{reid_forward.11} parent=1 // pred_region
      %1568 = vsyncadd [#allocation6], 0
      %s1570 = sshll.u32 [#allocation5], 4
      %s1571 = int_to_ptr.vmem [resolvable:$true] %s1570
      %s1572 = sshll.u32 %s14, 4
      %s1573 = int_to_ptr.hbm [resolvable:$true] %s1572
      %1575 = dma.vmem_to_hbm [thread:$0]  %s1571, 32, %s1573, [#allocation6]
    $region61: #{reid_forward.11} parent=1 // pred_fallthru
      _
    // Predicated region
    $region62: #{reid_forward.11} parent=1 // pred_check
      _
    $region63: #{reid_forward.11} parent=1 // pred_check_branch
      %1577 = sbr.rel (0) target = $region65
    $region64: #{reid_forward.11} parent=1 // pred_region
      %1579 = dma.done [#allocation4], 32
    $region65: #{reid_forward.11} parent=1 // pred_fallthru
      _
    // Predicated region
    $region66: #{reid_forward.11} parent=1 // pred_check
      _
    $region67: #{reid_forward.11} parent=1 // pred_check_branch
      %1581 = sbr.rel (0) target = $region69
    $region68: #{reid_forward.11} parent=1 // pred_region
      %1583 = dma.done [#allocation6], 32
    $region69: #{reid_forward.11} parent=1 // pred_fallthru
      _
    %1584 = vsyncpa [#allocation4], 1
    %1585 = vsyncpa [#allocation6], 1

</llo_original>
